<compile_context>
chip_gen: v5e
topology: v5e:2x2
jax: 0.10.0
libtpu: 0.0.40
codegen_flags: <defaults>
</compile_context>

<pallas_src>
import jax
import jax.numpy as jnp
from jax import lax
from jax.experimental import pallas as pl
from jax.experimental.pallas import tpu as pltpu

EPS = 1e-5          # BatchNorm2d default eps
NUM_CLASSES = 6
C_HID = 4           # channels of every conv layer


def _layer(P, wp_ref, b_ref, g_ref, be_ref, cin, cout):
    """Conv2d(3x3, valid) -> BatchNorm2d (train stats) -> ReLU -> MaxPool2d(2, stride=1).

    P:      (N, H, cin*W) f32, input channels packed along lanes.
    wp_ref: (cout*9, cin*W-2) f32 VMEM lane-vector weights:
            wp[co*9 + di*3 + dj, ci*W + w] = conv_w[co, ci, di, dj].
    b/g/be: (cout,) f32 SMEM (conv bias, BN gamma, BN beta).
    Returns (N, H-3, cout*(W-3)) packed the same way for the next layer.
    """
    N, H, CW = P.shape
    W = CW // cin
    Ho, Wo = H - 2, W - 2
    Hp, Wp = Ho - 1, Wo - 1
    CWm2 = CW - 2
    inv_cnt = 1.0 / float(N * Ho * Wo)

    # --- Conv accumulation on the packed slab.  dj (lane) shift hoisted: only 3
    #     lane relayouts per layer; di taps are sublane slices of those.  One
    #     multiply-add per (tap, cout) covers all cin input channels at once. ---
    accs = [jnp.zeros((N, Ho, CWm2), jnp.float32) for _ in range(cout)]
    for dj in range(3):
        sdj = P[:, :, dj:dj + CWm2]                       # one lane shift
        for di in range(3):
            sh = sdj[:, di:di + Ho, :]                    # cheap sublane slice
            t = di * 3 + dj
            for co in range(cout):
                wrow = wp_ref[co * 9 + t:co * 9 + t + 1, :]        # (1, CWm2)
                accs[co] = accs[co] + sh * wrow

    pooled = []
    for co in range(cout):
        a = accs[co]
        # cross-input-channel reduction (+ conv bias added once)
        c = a[:, :, 0:Wo] + b_ref[co]
        for ci in range(1, cin):
            c = c + a[:, :, ci * W:ci * W + Wo]
        # BatchNorm2d training-mode forward (biased batch stats), one pass:
        #   var = E[x^2] - mean^2, folded into a single scale+shift (rsqrt -> EUP).
        s1 = jnp.sum(c)
        s2 = jnp.sum(c * c)
        mean = s1 * inv_cnt
        var = s2 * inv_cnt - mean * mean
        s = g_ref[co] * lax.rsqrt(var + EPS)
        t_ = be_ref[co] - mean * s
        y = jnp.maximum(c * s + t_, 0.0)                  # BN affine + ReLU fused
        # MaxPool2d(2, stride=1): horizontal max (one lane shift) then vertical.
        m = jnp.maximum(y[:, :, :Wp], y[:, :, 1:])
        pooled.append(jnp.maximum(m[:, :Hp, :], m[:, 1:, :]))
    return jnp.concatenate(pooled, axis=-1)               # (N, Hp, cout*Wp)


def convnet_kernel(x_ref,
                   wp1, b1, g1, be1,
                   wp2, b2, g2, be2,
                   wp3, b3, g3, be3,
                   wp4, b4, g4, be4,
                   wfc_ref, bfc_ref,
                   out_ref):
    P = x_ref[...]                                        # (N, H, W) f32 (cin=1)
    P = _layer(P, wp1, b1, g1, be1, 1, C_HID)             # layer1
    P = _layer(P, wp2, b2, g2, be2, C_HID, C_HID)         # layer2
    P = _layer(P, wp3, b3, g3, be3, C_HID, C_HID)         # layer3
    P = _layer(P, wp4, b4, g4, be4, C_HID, C_HID)         # layer4

    # --- Linear on the MXU.  P is (N, Hf, C*Wf); wfc_ref is (Hf*K, C*Wf) where
    #     row h*K + k is fc.weight[k] reorganized (for free, in the wrapper) to
    #     the same (c, w) lane order, so the contraction is a short sum over Hf of
    #     plain A @ B^T dots: no in-kernel flatten/transpose, lane-dense weight,
    #     and the (N, K) result is a single vector store. ---
    N = P.shape[0]
    Hf = P.shape[1]
    K = out_ref.shape[1]
    acc = jnp.zeros((N, K), jnp.float32)
    for h in range(Hf):
        acc = acc + lax.dot_general(P[:, h, :], wfc_ref[h * K:(h + 1) * K, :],
                                    (((1,), (1,)), ((), ())),
                                    preferred_element_type=jnp.float32)
    out_ref[...] = acc + bfc_ref[...]


def _pack_conv_weight(w, w_in):
    """(cout, cin, 3, 3) -> (cout*9, cin*w_in - 2) lane-vector weights matching the
    packed feature layout: row co*9 + di*3+dj, lane ci*w_in + wo -> w[co, ci, di, dj]."""
    cout, cin = w.shape[0], w.shape[1]
    cw = cin * w_in
    ci_of_lane = jnp.arange(cw - 2) // w_in                         # (cw-2,)
    w_t = jnp.transpose(w, (0, 2, 3, 1)).reshape(cout, 9, cin)      # [co, tap, ci]
    return jnp.take(w_t, ci_of_lane, axis=2).reshape(cout * 9, cw - 2)


def init_params(key, flat_features):
    """Deterministic parameter init matching the module's shapes.
    NOTE: fc in_features is derived from the (small) input spatial size instead of
    the hard-coded 240100 (which corresponds to 257x257 inputs)."""
    p = {}
    cins = [1, C_HID, C_HID, C_HID]
    keys = jax.random.split(key, 5)
    for l in range(4):
        cin = cins[l]
        bound = 1.0 / float(cin * 9) ** 0.5
        kw, kb = jax.random.split(keys[l])
        p[f"w{l + 1}"] = jax.random.uniform(kw, (C_HID, cin, 3, 3), jnp.float32,
                                            -bound, bound)
        p[f"b{l + 1}"] = jax.random.uniform(kb, (C_HID,), jnp.float32, -bound, bound)
        p[f"g{l + 1}"] = jnp.ones((C_HID,), jnp.float32)       # BN weight (gamma)
        p[f"beta{l + 1}"] = jnp.zeros((C_HID,), jnp.float32)   # BN bias (beta)
    kwf, kbf = jax.random.split(keys[4])
    bound = 1.0 / float(flat_features) ** 0.5
    p["wfc"] = jax.random.uniform(kwf, (NUM_CLASSES, flat_features), jnp.float32,
                                  -bound, bound)
    p["bfc"] = jax.random.uniform(kbf, (NUM_CLASSES,), jnp.float32, -bound, bound)
    return p


def convnet_forward(x, params):
    """x: (N, 1, H, W) float32, NCHW like PyTorch."""
    N, cin, H, W = x.shape
    assert cin == 1
    Hf, Wf = H - 12, W - 12        # each of the 4 layers shrinks H/W by 3
    K = NUM_CLASSES

    vmem = pl.BlockSpec(memory_space=pltpu.MemorySpace.VMEM)
    smem = pl.BlockSpec(memory_space=pltpu.MemorySpace.SMEM)

    args, in_specs = [], [vmem]
    widths = [W, W - 3, W - 6, W - 9]          # per-layer spatial input width
    for l in range(4):
        args += [_pack_conv_weight(params[f"w{l + 1}"], widths[l]),
                 params[f"b{l + 1}"], params[f"g{l + 1}"], params[f"beta{l + 1}"]]
        in_specs += [vmem, smem, smem, smem]

    # fc.weight (K, C*Hf*Wf) -> (Hf*K, C*Wf) in the kernel's (h, c, w) lane order:
    # pure index permutation done by XLA outside the kernel (no numerics change).
    wfc = (params["wfc"].reshape(K, C_HID, Hf, Wf)
           .transpose(2, 0, 1, 3).reshape(Hf * K, C_HID * Wf))
    args += [wfc, params["bfc"].reshape(1, K)]
    in_specs += [vmem, vmem]

    return pl.pallas_call(
        convnet_kernel,
        out_shape=jax.ShapeDtypeStruct((N, K), jnp.float32),
        in_specs=in_specs,
        out_specs=vmem,
    )(x[:, 0].astype(jnp.float32), *args)


def _reference_forward(x, params):
    """Pure-JAX reference equal to the PyTorch module in train() mode."""
    h = x.astype(jnp.float32)
    for l in range(1, 5):
        h = lax.conv_general_dilated(h, params[f"w{l}"], (1, 1), "VALID",
                                     dimension_numbers=("NCHW", "OIHW", "NCHW"),
                                     precision=lax.Precision.HIGHEST)
        h = h + params[f"b{l}"][None, :, None, None]
        mean = jnp.mean(h, axis=(0, 2, 3), keepdims=True)
        var = jnp.mean((h - mean) ** 2, axis=(0, 2, 3), keepdims=True)
        h = (h - mean) * lax.rsqrt(var + EPS)
        h = h * params[f"g{l}"][None, :, None, None] + params[f"beta{l}"][None, :, None, None]
        h = jnp.maximum(h, 0.0)
        h = jnp.maximum(jnp.maximum(h[:, :, :-1, :-1], h[:, :, :-1, 1:]),
                        jnp.maximum(h[:, :, 1:, :-1], h[:, :, 1:, 1:]))
    flat = h.reshape(h.shape[0], -1)
    return jnp.dot(flat, params["wfc"].T, precision=lax.Precision.HIGHEST) + params["bfc"]


if __name__ == "__main__":
    key = jax.random.PRNGKey(0)
    k_x, k_p = jax.random.split(key)

    N, H, W = 2, 20, 20                          # small input consistent with the forward
    flat_features = C_HID * (H - 12) * (W - 12)  # = 256 for 20x20 input
    x = jax.random.normal(k_x, (N, 1, H, W), dtype=jnp.float32)
    params = init_params(k_p, flat_features)

    out = jax.jit(convnet_forward)(x, params)
    jax.block_until_ready(out)
    assert out.shape == (N, NUM_CLASSES)

    ref = _reference_forward(x, params)
    max_err = float(jnp.max(jnp.abs(out - ref)))
    assert max_err < 1e-2, f"mismatch vs reference: {max_err}"
    print("KERNEL_OK")
</pallas_src>

<mosaic_0001>
module attributes {stable_mosaic.version = 11 : i64} {
  func.func @convnet_kernel(%arg0: memref<2x20x20xf32, #tpu.memory_space<vmem>>, %arg1: memref<36x18xf32, #tpu.memory_space<vmem>>, %arg2: memref<4xf32, #tpu.memory_space<smem>>, %arg3: memref<4xf32, #tpu.memory_space<smem>>, %arg4: memref<4xf32, #tpu.memory_space<smem>>, %arg5: memref<36x66xf32, #tpu.memory_space<vmem>>, %arg6: memref<4xf32, #tpu.memory_space<smem>>, %arg7: memref<4xf32, #tpu.memory_space<smem>>, %arg8: memref<4xf32, #tpu.memory_space<smem>>, %arg9: memref<36x54xf32, #tpu.memory_space<vmem>>, %arg10: memref<4xf32, #tpu.memory_space<smem>>, %arg11: memref<4xf32, #tpu.memory_space<smem>>, %arg12: memref<4xf32, #tpu.memory_space<smem>>, %arg13: memref<36x42xf32, #tpu.memory_space<vmem>>, %arg14: memref<4xf32, #tpu.memory_space<smem>>, %arg15: memref<4xf32, #tpu.memory_space<smem>>, %arg16: memref<4xf32, #tpu.memory_space<smem>>, %arg17: memref<48x32xf32, #tpu.memory_space<vmem>>, %arg18: memref<1x6xf32, #tpu.memory_space<vmem>>, %arg19: memref<2x6xf32, #tpu.memory_space<vmem>>) attributes {dimension_semantics = [], scalar_prefetch = 0 : i64, scratch_operands = 0 : i64, tpu.core_type = #tpu.core_type<tc>} {
    %c0 = arith.constant 0 : index
    %c0_0 = arith.constant 0 : index
    %c0_1 = arith.constant 0 : index
    %0 = vector.load %arg0[%c0, %c0_0, %c0_1] : memref<2x20x20xf32, #tpu.memory_space<vmem>>, vector<2x20x20xf32>
    %cst = arith.constant 0.000000e+00 : f32
    %1 = vector.broadcast %cst : f32 to vector<2x18x18xf32>
    %cst_2 = arith.constant 0.000000e+00 : f32
    %2 = vector.broadcast %cst_2 : f32 to vector<2x18x18xf32>
    %cst_3 = arith.constant 0.000000e+00 : f32
    %3 = vector.broadcast %cst_3 : f32 to vector<2x18x18xf32>
    %cst_4 = arith.constant 0.000000e+00 : f32
    %4 = vector.broadcast %cst_4 : f32 to vector<2x18x18xf32>
    %5 = vector.extract_strided_slice %0 {offsets = [0, 0, 0], sizes = [2, 20, 18], strides = [1, 1, 1]} : vector<2x20x20xf32> to vector<2x20x18xf32>
    %6 = vector.extract_strided_slice %5 {offsets = [0, 0, 0], sizes = [2, 18, 18], strides = [1, 1, 1]} : vector<2x20x18xf32> to vector<2x18x18xf32>
    %c0_5 = arith.constant 0 : index
    %c0_6 = arith.constant 0 : index
    %7 = vector.load %arg1[%c0_5, %c0_6] : memref<36x18xf32, #tpu.memory_space<vmem>>, vector<1x18xf32>
    %8 = vector.shape_cast %7 : vector<1x18xf32> to vector<1x1x18xf32>
    %9 = vector.broadcast %8 : vector<1x1x18xf32> to vector<2x18x18xf32>
    %10 = arith.mulf %6, %9 : vector<2x18x18xf32>
    %11 = arith.addf %1, %10 : vector<2x18x18xf32>
    %c9 = arith.constant 9 : index
    %c0_7 = arith.constant 0 : index
    %12 = vector.load %arg1[%c9, %c0_7] : memref<36x18xf32, #tpu.memory_space<vmem>>, vector<1x18xf32>
    %13 = vector.shape_cast %12 : vector<1x18xf32> to vector<1x1x18xf32>
    %14 = vector.broadcast %13 : vector<1x1x18xf32> to vector<2x18x18xf32>
    %15 = arith.mulf %6, %14 : vector<2x18x18xf32>
    %16 = arith.addf %2, %15 : vector<2x18x18xf32>
    %c18 = arith.constant 18 : index
    %c0_8 = arith.constant 0 : index
    %17 = vector.load %arg1[%c18, %c0_8] : memref<36x18xf32, #tpu.memory_space<vmem>>, vector<1x18xf32>
    %18 = vector.shape_cast %17 : vector<1x18xf32> to vector<1x1x18xf32>
    %19 = vector.broadcast %18 : vector<1x1x18xf32> to vector<2x18x18xf32>
    %20 = arith.mulf %6, %19 : vector<2x18x18xf32>
    %21 = arith.addf %3, %20 : vector<2x18x18xf32>
    %c27 = arith.constant 27 : index
    %c0_9 = arith.constant 0 : index
    %22 = vector.load %arg1[%c27, %c0_9] : memref<36x18xf32, #tpu.memory_space<vmem>>, vector<1x18xf32>
    %23 = vector.shape_cast %22 : vector<1x18xf32> to vector<1x1x18xf32>
    %24 = vector.broadcast %23 : vector<1x1x18xf32> to vector<2x18x18xf32>
    %25 = arith.mulf %6, %24 : vector<2x18x18xf32>
    %26 = arith.addf %4, %25 : vector<2x18x18xf32>
    %27 = vector.extract_strided_slice %5 {offsets = [0, 1, 0], sizes = [2, 18, 18], strides = [1, 1, 1]} : vector<2x20x18xf32> to vector<2x18x18xf32>
    %c3 = arith.constant 3 : index
    %c0_10 = arith.constant 0 : index
    %28 = vector.load %arg1[%c3, %c0_10] : memref<36x18xf32, #tpu.memory_space<vmem>>, vector<1x18xf32>
    %29 = vector.shape_cast %28 : vector<1x18xf32> to vector<1x1x18xf32>
    %30 = vector.broadcast %29 : vector<1x1x18xf32> to vector<2x18x18xf32>
    %31 = arith.mulf %27, %30 : vector<2x18x18xf32>
    %32 = arith.addf %11, %31 : vector<2x18x18xf32>
    %c12 = arith.constant 12 : index
    %c0_11 = arith.constant 0 : index
    %33 = vector.load %arg1[%c12, %c0_11] : memref<36x18xf32, #tpu.memory_space<vmem>>, vector<1x18xf32>
    %34 = vector.shape_cast %33 : vector<1x18xf32> to vector<1x1x18xf32>
    %35 = vector.broadcast %34 : vector<1x1x18xf32> to vector<2x18x18xf32>
    %36 = arith.mulf %27, %35 : vector<2x18x18xf32>
    %37 = arith.addf %16, %36 : vector<2x18x18xf32>
    %c21 = arith.constant 21 : index
    %c0_12 = arith.constant 0 : index
    %38 = vector.load %arg1[%c21, %c0_12] : memref<36x18xf32, #tpu.memory_space<vmem>>, vector<1x18xf32>
    %39 = vector.shape_cast %38 : vector<1x18xf32> to vector<1x1x18xf32>
    %40 = vector.broadcast %39 : vector<1x1x18xf32> to vector<2x18x18xf32>
    %41 = arith.mulf %27, %40 : vector<2x18x18xf32>
    %42 = arith.addf %21, %41 : vector<2x18x18xf32>
    %c30 = arith.constant 30 : index
    %c0_13 = arith.constant 0 : index
    %43 = vector.load %arg1[%c30, %c0_13] : memref<36x18xf32, #tpu.memory_space<vmem>>, vector<1x18xf32>
    %44 = vector.shape_cast %43 : vector<1x18xf32> to vector<1x1x18xf32>
    %45 = vector.broadcast %44 : vector<1x1x18xf32> to vector<2x18x18xf32>
    %46 = arith.mulf %27, %45 : vector<2x18x18xf32>
    %47 = arith.addf %26, %46 : vector<2x18x18xf32>
    %48 = vector.extract_strided_slice %5 {offsets = [0, 2, 0], sizes = [2, 18, 18], strides = [1, 1, 1]} : vector<2x20x18xf32> to vector<2x18x18xf32>
    %c6 = arith.constant 6 : index
    %c0_14 = arith.constant 0 : index
    %49 = vector.load %arg1[%c6, %c0_14] : memref<36x18xf32, #tpu.memory_space<vmem>>, vector<1x18xf32>
    %50 = vector.shape_cast %49 : vector<1x18xf32> to vector<1x1x18xf32>
    %51 = vector.broadcast %50 : vector<1x1x18xf32> to vector<2x18x18xf32>
    %52 = arith.mulf %48, %51 : vector<2x18x18xf32>
    %53 = arith.addf %32, %52 : vector<2x18x18xf32>
    %c15 = arith.constant 15 : index
    %c0_15 = arith.constant 0 : index
    %54 = vector.load %arg1[%c15, %c0_15] : memref<36x18xf32, #tpu.memory_space<vmem>>, vector<1x18xf32>
    %55 = vector.shape_cast %54 : vector<1x18xf32> to vector<1x1x18xf32>
    %56 = vector.broadcast %55 : vector<1x1x18xf32> to vector<2x18x18xf32>
    %57 = arith.mulf %48, %56 : vector<2x18x18xf32>
    %58 = arith.addf %37, %57 : vector<2x18x18xf32>
    %c24 = arith.constant 24 : index
    %c0_16 = arith.constant 0 : index
    %59 = vector.load %arg1[%c24, %c0_16] : memref<36x18xf32, #tpu.memory_space<vmem>>, vector<1x18xf32>
    %60 = vector.shape_cast %59 : vector<1x18xf32> to vector<1x1x18xf32>
    %61 = vector.broadcast %60 : vector<1x1x18xf32> to vector<2x18x18xf32>
    %62 = arith.mulf %48, %61 : vector<2x18x18xf32>
    %63 = arith.addf %42, %62 : vector<2x18x18xf32>
    %c33 = arith.constant 33 : index
    %c0_17 = arith.constant 0 : index
    %64 = vector.load %arg1[%c33, %c0_17] : memref<36x18xf32, #tpu.memory_space<vmem>>, vector<1x18xf32>
    %65 = vector.shape_cast %64 : vector<1x18xf32> to vector<1x1x18xf32>
    %66 = vector.broadcast %65 : vector<1x1x18xf32> to vector<2x18x18xf32>
    %67 = arith.mulf %48, %66 : vector<2x18x18xf32>
    %68 = arith.addf %47, %67 : vector<2x18x18xf32>
    %69 = vector.extract_strided_slice %0 {offsets = [0, 0, 1], sizes = [2, 20, 18], strides = [1, 1, 1]} : vector<2x20x20xf32> to vector<2x20x18xf32>
    %70 = vector.extract_strided_slice %69 {offsets = [0, 0, 0], sizes = [2, 18, 18], strides = [1, 1, 1]} : vector<2x20x18xf32> to vector<2x18x18xf32>
    %c1 = arith.constant 1 : index
    %c0_18 = arith.constant 0 : index
    %71 = vector.load %arg1[%c1, %c0_18] : memref<36x18xf32, #tpu.memory_space<vmem>>, vector<1x18xf32>
    %72 = vector.shape_cast %71 : vector<1x18xf32> to vector<1x1x18xf32>
    %73 = vector.broadcast %72 : vector<1x1x18xf32> to vector<2x18x18xf32>
    %74 = arith.mulf %70, %73 : vector<2x18x18xf32>
    %75 = arith.addf %53, %74 : vector<2x18x18xf32>
    %c10 = arith.constant 10 : index
    %c0_19 = arith.constant 0 : index
    %76 = vector.load %arg1[%c10, %c0_19] : memref<36x18xf32, #tpu.memory_space<vmem>>, vector<1x18xf32>
    %77 = vector.shape_cast %76 : vector<1x18xf32> to vector<1x1x18xf32>
    %78 = vector.broadcast %77 : vector<1x1x18xf32> to vector<2x18x18xf32>
    %79 = arith.mulf %70, %78 : vector<2x18x18xf32>
    %80 = arith.addf %58, %79 : vector<2x18x18xf32>
    %c19 = arith.constant 19 : index
    %c0_20 = arith.constant 0 : index
    %81 = vector.load %arg1[%c19, %c0_20] : memref<36x18xf32, #tpu.memory_space<vmem>>, vector<1x18xf32>
    %82 = vector.shape_cast %81 : vector<1x18xf32> to vector<1x1x18xf32>
    %83 = vector.broadcast %82 : vector<1x1x18xf32> to vector<2x18x18xf32>
    %84 = arith.mulf %70, %83 : vector<2x18x18xf32>
    %85 = arith.addf %63, %84 : vector<2x18x18xf32>
    %c28 = arith.constant 28 : index
    %c0_21 = arith.constant 0 : index
    %86 = vector.load %arg1[%c28, %c0_21] : memref<36x18xf32, #tpu.memory_space<vmem>>, vector<1x18xf32>
    %87 = vector.shape_cast %86 : vector<1x18xf32> to vector<1x1x18xf32>
    %88 = vector.broadcast %87 : vector<1x1x18xf32> to vector<2x18x18xf32>
    %89 = arith.mulf %70, %88 : vector<2x18x18xf32>
    %90 = arith.addf %68, %89 : vector<2x18x18xf32>
    %91 = vector.extract_strided_slice %69 {offsets = [0, 1, 0], sizes = [2, 18, 18], strides = [1, 1, 1]} : vector<2x20x18xf32> to vector<2x18x18xf32>
    %c4 = arith.constant 4 : index
    %c0_22 = arith.constant 0 : index
    %92 = vector.load %arg1[%c4, %c0_22] : memref<36x18xf32, #tpu.memory_space<vmem>>, vector<1x18xf32>
    %93 = vector.shape_cast %92 : vector<1x18xf32> to vector<1x1x18xf32>
    %94 = vector.broadcast %93 : vector<1x1x18xf32> to vector<2x18x18xf32>
    %95 = arith.mulf %91, %94 : vector<2x18x18xf32>
    %96 = arith.addf %75, %95 : vector<2x18x18xf32>
    %c13 = arith.constant 13 : index
    %c0_23 = arith.constant 0 : index
    %97 = vector.load %arg1[%c13, %c0_23] : memref<36x18xf32, #tpu.memory_space<vmem>>, vector<1x18xf32>
    %98 = vector.shape_cast %97 : vector<1x18xf32> to vector<1x1x18xf32>
    %99 = vector.broadcast %98 : vector<1x1x18xf32> to vector<2x18x18xf32>
    %100 = arith.mulf %91, %99 : vector<2x18x18xf32>
    %101 = arith.addf %80, %100 : vector<2x18x18xf32>
    %c22 = arith.constant 22 : index
    %c0_24 = arith.constant 0 : index
    %102 = vector.load %arg1[%c22, %c0_24] : memref<36x18xf32, #tpu.memory_space<vmem>>, vector<1x18xf32>
    %103 = vector.shape_cast %102 : vector<1x18xf32> to vector<1x1x18xf32>
    %104 = vector.broadcast %103 : vector<1x1x18xf32> to vector<2x18x18xf32>
    %105 = arith.mulf %91, %104 : vector<2x18x18xf32>
    %106 = arith.addf %85, %105 : vector<2x18x18xf32>
    %c31 = arith.constant 31 : index
    %c0_25 = arith.constant 0 : index
    %107 = vector.load %arg1[%c31, %c0_25] : memref<36x18xf32, #tpu.memory_space<vmem>>, vector<1x18xf32>
    %108 = vector.shape_cast %107 : vector<1x18xf32> to vector<1x1x18xf32>
    %109 = vector.broadcast %108 : vector<1x1x18xf32> to vector<2x18x18xf32>
    %110 = arith.mulf %91, %109 : vector<2x18x18xf32>
    %111 = arith.addf %90, %110 : vector<2x18x18xf32>
    %112 = vector.extract_strided_slice %69 {offsets = [0, 2, 0], sizes = [2, 18, 18], strides = [1, 1, 1]} : vector<2x20x18xf32> to vector<2x18x18xf32>
    %c7 = arith.constant 7 : index
    %c0_26 = arith.constant 0 : index
    %113 = vector.load %arg1[%c7, %c0_26] : memref<36x18xf32, #tpu.memory_space<vmem>>, vector<1x18xf32>
    %114 = vector.shape_cast %113 : vector<1x18xf32> to vector<1x1x18xf32>
    %115 = vector.broadcast %114 : vector<1x1x18xf32> to vector<2x18x18xf32>
    %116 = arith.mulf %112, %115 : vector<2x18x18xf32>
    %117 = arith.addf %96, %116 : vector<2x18x18xf32>
    %c16 = arith.constant 16 : index
    %c0_27 = arith.constant 0 : index
    %118 = vector.load %arg1[%c16, %c0_27] : memref<36x18xf32, #tpu.memory_space<vmem>>, vector<1x18xf32>
    %119 = vector.shape_cast %118 : vector<1x18xf32> to vector<1x1x18xf32>
    %120 = vector.broadcast %119 : vector<1x1x18xf32> to vector<2x18x18xf32>
    %121 = arith.mulf %112, %120 : vector<2x18x18xf32>
    %122 = arith.addf %101, %121 : vector<2x18x18xf32>
    %c25 = arith.constant 25 : index
    %c0_28 = arith.constant 0 : index
    %123 = vector.load %arg1[%c25, %c0_28] : memref<36x18xf32, #tpu.memory_space<vmem>>, vector<1x18xf32>
    %124 = vector.shape_cast %123 : vector<1x18xf32> to vector<1x1x18xf32>
    %125 = vector.broadcast %124 : vector<1x1x18xf32> to vector<2x18x18xf32>
    %126 = arith.mulf %112, %125 : vector<2x18x18xf32>
    %127 = arith.addf %106, %126 : vector<2x18x18xf32>
    %c34 = arith.constant 34 : index
    %c0_29 = arith.constant 0 : index
    %128 = vector.load %arg1[%c34, %c0_29] : memref<36x18xf32, #tpu.memory_space<vmem>>, vector<1x18xf32>
    %129 = vector.shape_cast %128 : vector<1x18xf32> to vector<1x1x18xf32>
    %130 = vector.broadcast %129 : vector<1x1x18xf32> to vector<2x18x18xf32>
    %131 = arith.mulf %112, %130 : vector<2x18x18xf32>
    %132 = arith.addf %111, %131 : vector<2x18x18xf32>
    %133 = vector.extract_strided_slice %0 {offsets = [0, 0, 2], sizes = [2, 20, 18], strides = [1, 1, 1]} : vector<2x20x20xf32> to vector<2x20x18xf32>
    %134 = vector.extract_strided_slice %133 {offsets = [0, 0, 0], sizes = [2, 18, 18], strides = [1, 1, 1]} : vector<2x20x18xf32> to vector<2x18x18xf32>
    %c2 = arith.constant 2 : index
    %c0_30 = arith.constant 0 : index
    %135 = vector.load %arg1[%c2, %c0_30] : memref<36x18xf32, #tpu.memory_space<vmem>>, vector<1x18xf32>
    %136 = vector.shape_cast %135 : vector<1x18xf32> to vector<1x1x18xf32>
    %137 = vector.broadcast %136 : vector<1x1x18xf32> to vector<2x18x18xf32>
    %138 = arith.mulf %134, %137 : vector<2x18x18xf32>
    %139 = arith.addf %117, %138 : vector<2x18x18xf32>
    %c11 = arith.constant 11 : index
    %c0_31 = arith.constant 0 : index
    %140 = vector.load %arg1[%c11, %c0_31] : memref<36x18xf32, #tpu.memory_space<vmem>>, vector<1x18xf32>
    %141 = vector.shape_cast %140 : vector<1x18xf32> to vector<1x1x18xf32>
    %142 = vector.broadcast %141 : vector<1x1x18xf32> to vector<2x18x18xf32>
    %143 = arith.mulf %134, %142 : vector<2x18x18xf32>
    %144 = arith.addf %122, %143 : vector<2x18x18xf32>
    %c20 = arith.constant 20 : index
    %c0_32 = arith.constant 0 : index
    %145 = vector.load %arg1[%c20, %c0_32] : memref<36x18xf32, #tpu.memory_space<vmem>>, vector<1x18xf32>
    %146 = vector.shape_cast %145 : vector<1x18xf32> to vector<1x1x18xf32>
    %147 = vector.broadcast %146 : vector<1x1x18xf32> to vector<2x18x18xf32>
    %148 = arith.mulf %134, %147 : vector<2x18x18xf32>
    %149 = arith.addf %127, %148 : vector<2x18x18xf32>
    %c29 = arith.constant 29 : index
    %c0_33 = arith.constant 0 : index
    %150 = vector.load %arg1[%c29, %c0_33] : memref<36x18xf32, #tpu.memory_space<vmem>>, vector<1x18xf32>
    %151 = vector.shape_cast %150 : vector<1x18xf32> to vector<1x1x18xf32>
    %152 = vector.broadcast %151 : vector<1x1x18xf32> to vector<2x18x18xf32>
    %153 = arith.mulf %134, %152 : vector<2x18x18xf32>
    %154 = arith.addf %132, %153 : vector<2x18x18xf32>
    %155 = vector.extract_strided_slice %133 {offsets = [0, 1, 0], sizes = [2, 18, 18], strides = [1, 1, 1]} : vector<2x20x18xf32> to vector<2x18x18xf32>
    %c5 = arith.constant 5 : index
    %c0_34 = arith.constant 0 : index
    %156 = vector.load %arg1[%c5, %c0_34] : memref<36x18xf32, #tpu.memory_space<vmem>>, vector<1x18xf32>
    %157 = vector.shape_cast %156 : vector<1x18xf32> to vector<1x1x18xf32>
    %158 = vector.broadcast %157 : vector<1x1x18xf32> to vector<2x18x18xf32>
    %159 = arith.mulf %155, %158 : vector<2x18x18xf32>
    %160 = arith.addf %139, %159 : vector<2x18x18xf32>
    %c14 = arith.constant 14 : index
    %c0_35 = arith.constant 0 : index
    %161 = vector.load %arg1[%c14, %c0_35] : memref<36x18xf32, #tpu.memory_space<vmem>>, vector<1x18xf32>
    %162 = vector.shape_cast %161 : vector<1x18xf32> to vector<1x1x18xf32>
    %163 = vector.broadcast %162 : vector<1x1x18xf32> to vector<2x18x18xf32>
    %164 = arith.mulf %155, %163 : vector<2x18x18xf32>
    %165 = arith.addf %144, %164 : vector<2x18x18xf32>
    %c23 = arith.constant 23 : index
    %c0_36 = arith.constant 0 : index
    %166 = vector.load %arg1[%c23, %c0_36] : memref<36x18xf32, #tpu.memory_space<vmem>>, vector<1x18xf32>
    %167 = vector.shape_cast %166 : vector<1x18xf32> to vector<1x1x18xf32>
    %168 = vector.broadcast %167 : vector<1x1x18xf32> to vector<2x18x18xf32>
    %169 = arith.mulf %155, %168 : vector<2x18x18xf32>
    %170 = arith.addf %149, %169 : vector<2x18x18xf32>
    %c32 = arith.constant 32 : index
    %c0_37 = arith.constant 0 : index
    %171 = vector.load %arg1[%c32, %c0_37] : memref<36x18xf32, #tpu.memory_space<vmem>>, vector<1x18xf32>
    %172 = vector.shape_cast %171 : vector<1x18xf32> to vector<1x1x18xf32>
    %173 = vector.broadcast %172 : vector<1x1x18xf32> to vector<2x18x18xf32>
    %174 = arith.mulf %155, %173 : vector<2x18x18xf32>
    %175 = arith.addf %154, %174 : vector<2x18x18xf32>
    %176 = vector.extract_strided_slice %133 {offsets = [0, 2, 0], sizes = [2, 18, 18], strides = [1, 1, 1]} : vector<2x20x18xf32> to vector<2x18x18xf32>
    %c8 = arith.constant 8 : index
    %c0_38 = arith.constant 0 : index
    %177 = vector.load %arg1[%c8, %c0_38] : memref<36x18xf32, #tpu.memory_space<vmem>>, vector<1x18xf32>
    %178 = vector.shape_cast %177 : vector<1x18xf32> to vector<1x1x18xf32>
    %179 = vector.broadcast %178 : vector<1x1x18xf32> to vector<2x18x18xf32>
    %180 = arith.mulf %176, %179 : vector<2x18x18xf32>
    %181 = arith.addf %160, %180 : vector<2x18x18xf32>
    %c17 = arith.constant 17 : index
    %c0_39 = arith.constant 0 : index
    %182 = vector.load %arg1[%c17, %c0_39] : memref<36x18xf32, #tpu.memory_space<vmem>>, vector<1x18xf32>
    %183 = vector.shape_cast %182 : vector<1x18xf32> to vector<1x1x18xf32>
    %184 = vector.broadcast %183 : vector<1x1x18xf32> to vector<2x18x18xf32>
    %185 = arith.mulf %176, %184 : vector<2x18x18xf32>
    %186 = arith.addf %165, %185 : vector<2x18x18xf32>
    %c26 = arith.constant 26 : index
    %c0_40 = arith.constant 0 : index
    %187 = vector.load %arg1[%c26, %c0_40] : memref<36x18xf32, #tpu.memory_space<vmem>>, vector<1x18xf32>
    %188 = vector.shape_cast %187 : vector<1x18xf32> to vector<1x1x18xf32>
    %189 = vector.broadcast %188 : vector<1x1x18xf32> to vector<2x18x18xf32>
    %190 = arith.mulf %176, %189 : vector<2x18x18xf32>
    %191 = arith.addf %170, %190 : vector<2x18x18xf32>
    %c35 = arith.constant 35 : index
    %c0_41 = arith.constant 0 : index
    %192 = vector.load %arg1[%c35, %c0_41] : memref<36x18xf32, #tpu.memory_space<vmem>>, vector<1x18xf32>
    %193 = vector.shape_cast %192 : vector<1x18xf32> to vector<1x1x18xf32>
    %194 = vector.broadcast %193 : vector<1x1x18xf32> to vector<2x18x18xf32>
    %195 = arith.mulf %176, %194 : vector<2x18x18xf32>
    %196 = arith.addf %175, %195 : vector<2x18x18xf32>
    %c0_42 = arith.constant 0 : index
    %197 = memref.load %arg2[%c0_42] : memref<4xf32, #tpu.memory_space<smem>>
    %198 = vector.broadcast %197 : f32 to vector<2x18x18xf32>
    %199 = arith.addf %181, %198 : vector<2x18x18xf32>
    %200 = vector.shape_cast %199 : vector<2x18x18xf32> to vector<1x2x18x18xf32>
    %cst_43 = arith.constant dense<0.000000e+00> : vector<1xf32>
    %201 = vector.multi_reduction <add>, %200, %cst_43 [1, 2, 3] : vector<1x2x18x18xf32> to vector<1xf32>
    %202 = vector.shape_cast %201 : vector<1xf32> to vector<1x1x1x1xf32>
    %203 = vector.extract %202[0, 0, 0, 0] : f32 from vector<1x1x1x1xf32>
    %204 = arith.mulf %199, %199 : vector<2x18x18xf32>
    %205 = vector.shape_cast %204 : vector<2x18x18xf32> to vector<1x2x18x18xf32>
    %cst_44 = arith.constant dense<0.000000e+00> : vector<1xf32>
    %206 = vector.multi_reduction <add>, %205, %cst_44 [1, 2, 3] : vector<1x2x18x18xf32> to vector<1xf32>
    %207 = vector.shape_cast %206 : vector<1xf32> to vector<1x1x1x1xf32>
    %208 = vector.extract %207[0, 0, 0, 0] : f32 from vector<1x1x1x1xf32>
    %cst_45 = arith.constant 0.00154320989 : f32
    %209 = arith.mulf %203, %cst_45 : f32
    %cst_46 = arith.constant 0.00154320989 : f32
    %210 = arith.mulf %208, %cst_46 : f32
    %211 = arith.mulf %209, %209 : f32
    %212 = arith.subf %210, %211 : f32
    %c0_47 = arith.constant 0 : index
    %213 = memref.load %arg3[%c0_47] : memref<4xf32, #tpu.memory_space<smem>>
    %cst_48 = arith.constant 9.99999974E-6 : f32
    %214 = arith.addf %212, %cst_48 : f32
    %215 = math.rsqrt %214 : f32
    %216 = arith.mulf %213, %215 : f32
    %c0_49 = arith.constant 0 : index
    %217 = memref.load %arg4[%c0_49] : memref<4xf32, #tpu.memory_space<smem>>
    %218 = arith.mulf %209, %216 : f32
    %219 = arith.subf %217, %218 : f32
    %220 = vector.broadcast %216 : f32 to vector<2x18x18xf32>
    %221 = arith.mulf %199, %220 : vector<2x18x18xf32>
    %222 = vector.broadcast %219 : f32 to vector<2x18x18xf32>
    %223 = arith.addf %221, %222 : vector<2x18x18xf32>
    %cst_50 = arith.constant 0.000000e+00 : f32
    %224 = vector.broadcast %cst_50 : f32 to vector<2x18x18xf32>
    %225 = arith.maximumf %223, %224 : vector<2x18x18xf32>
    %226 = vector.extract_strided_slice %225 {offsets = [0, 0, 0], sizes = [2, 18, 17], strides = [1, 1, 1]} : vector<2x18x18xf32> to vector<2x18x17xf32>
    %227 = vector.extract_strided_slice %225 {offsets = [0, 0, 1], sizes = [2, 18, 17], strides = [1, 1, 1]} : vector<2x18x18xf32> to vector<2x18x17xf32>
    %228 = arith.maximumf %226, %227 : vector<2x18x17xf32>
    %229 = vector.extract_strided_slice %228 {offsets = [0, 0, 0], sizes = [2, 17, 17], strides = [1, 1, 1]} : vector<2x18x17xf32> to vector<2x17x17xf32>
    %230 = vector.extract_strided_slice %228 {offsets = [0, 1, 0], sizes = [2, 17, 17], strides = [1, 1, 1]} : vector<2x18x17xf32> to vector<2x17x17xf32>
    %231 = arith.maximumf %229, %230 : vector<2x17x17xf32>
    %c1_51 = arith.constant 1 : index
    %232 = memref.load %arg2[%c1_51] : memref<4xf32, #tpu.memory_space<smem>>
    %233 = vector.broadcast %232 : f32 to vector<2x18x18xf32>
    %234 = arith.addf %186, %233 : vector<2x18x18xf32>
    %235 = vector.shape_cast %234 : vector<2x18x18xf32> to vector<1x2x18x18xf32>
    %cst_52 = arith.constant dense<0.000000e+00> : vector<1xf32>
    %236 = vector.multi_reduction <add>, %235, %cst_52 [1, 2, 3] : vector<1x2x18x18xf32> to vector<1xf32>
    %237 = vector.shape_cast %236 : vector<1xf32> to vector<1x1x1x1xf32>
    %238 = vector.extract %237[0, 0, 0, 0] : f32 from vector<1x1x1x1xf32>
    %239 = arith.mulf %234, %234 : vector<2x18x18xf32>
    %240 = vector.shape_cast %239 : vector<2x18x18xf32> to vector<1x2x18x18xf32>
    %cst_53 = arith.constant dense<0.000000e+00> : vector<1xf32>
    %241 = vector.multi_reduction <add>, %240, %cst_53 [1, 2, 3] : vector<1x2x18x18xf32> to vector<1xf32>
    %242 = vector.shape_cast %241 : vector<1xf32> to vector<1x1x1x1xf32>
    %243 = vector.extract %242[0, 0, 0, 0] : f32 from vector<1x1x1x1xf32>
    %cst_54 = arith.constant 0.00154320989 : f32
    %244 = arith.mulf %238, %cst_54 : f32
    %cst_55 = arith.constant 0.00154320989 : f32
    %245 = arith.mulf %243, %cst_55 : f32
    %246 = arith.mulf %244, %244 : f32
    %247 = arith.subf %245, %246 : f32
    %c1_56 = arith.constant 1 : index
    %248 = memref.load %arg3[%c1_56] : memref<4xf32, #tpu.memory_space<smem>>
    %cst_57 = arith.constant 9.99999974E-6 : f32
    %249 = arith.addf %247, %cst_57 : f32
    %250 = math.rsqrt %249 : f32
    %251 = arith.mulf %248, %250 : f32
    %c1_58 = arith.constant 1 : index
    %252 = memref.load %arg4[%c1_58] : memref<4xf32, #tpu.memory_space<smem>>
    %253 = arith.mulf %244, %251 : f32
    %254 = arith.subf %252, %253 : f32
    %255 = vector.broadcast %251 : f32 to vector<2x18x18xf32>
    %256 = arith.mulf %234, %255 : vector<2x18x18xf32>
    %257 = vector.broadcast %254 : f32 to vector<2x18x18xf32>
    %258 = arith.addf %256, %257 : vector<2x18x18xf32>
    %cst_59 = arith.constant 0.000000e+00 : f32
    %259 = vector.broadcast %cst_59 : f32 to vector<2x18x18xf32>
    %260 = arith.maximumf %258, %259 : vector<2x18x18xf32>
    %261 = vector.extract_strided_slice %260 {offsets = [0, 0, 0], sizes = [2, 18, 17], strides = [1, 1, 1]} : vector<2x18x18xf32> to vector<2x18x17xf32>
    %262 = vector.extract_strided_slice %260 {offsets = [0, 0, 1], sizes = [2, 18, 17], strides = [1, 1, 1]} : vector<2x18x18xf32> to vector<2x18x17xf32>
    %263 = arith.maximumf %261, %262 : vector<2x18x17xf32>
    %264 = vector.extract_strided_slice %263 {offsets = [0, 0, 0], sizes = [2, 17, 17], strides = [1, 1, 1]} : vector<2x18x17xf32> to vector<2x17x17xf32>
    %265 = vector.extract_strided_slice %263 {offsets = [0, 1, 0], sizes = [2, 17, 17], strides = [1, 1, 1]} : vector<2x18x17xf32> to vector<2x17x17xf32>
    %266 = arith.maximumf %264, %265 : vector<2x17x17xf32>
    %c2_60 = arith.constant 2 : index
    %267 = memref.load %arg2[%c2_60] : memref<4xf32, #tpu.memory_space<smem>>
    %268 = vector.broadcast %267 : f32 to vector<2x18x18xf32>
    %269 = arith.addf %191, %268 : vector<2x18x18xf32>
    %270 = vector.shape_cast %269 : vector<2x18x18xf32> to vector<1x2x18x18xf32>
    %cst_61 = arith.constant dense<0.000000e+00> : vector<1xf32>
    %271 = vector.multi_reduction <add>, %270, %cst_61 [1, 2, 3] : vector<1x2x18x18xf32> to vector<1xf32>
    %272 = vector.shape_cast %271 : vector<1xf32> to vector<1x1x1x1xf32>
    %273 = vector.extract %272[0, 0, 0, 0] : f32 from vector<1x1x1x1xf32>
    %274 = arith.mulf %269, %269 : vector<2x18x18xf32>
    %275 = vector.shape_cast %274 : vector<2x18x18xf32> to vector<1x2x18x18xf32>
    %cst_62 = arith.constant dense<0.000000e+00> : vector<1xf32>
    %276 = vector.multi_reduction <add>, %275, %cst_62 [1, 2, 3] : vector<1x2x18x18xf32> to vector<1xf32>
    %277 = vector.shape_cast %276 : vector<1xf32> to vector<1x1x1x1xf32>
    %278 = vector.extract %277[0, 0, 0, 0] : f32 from vector<1x1x1x1xf32>
    %cst_63 = arith.constant 0.00154320989 : f32
    %279 = arith.mulf %273, %cst_63 : f32
    %cst_64 = arith.constant 0.00154320989 : f32
    %280 = arith.mulf %278, %cst_64 : f32
    %281 = arith.mulf %279, %279 : f32
    %282 = arith.subf %280, %281 : f32
    %c2_65 = arith.constant 2 : index
    %283 = memref.load %arg3[%c2_65] : memref<4xf32, #tpu.memory_space<smem>>
    %cst_66 = arith.constant 9.99999974E-6 : f32
    %284 = arith.addf %282, %cst_66 : f32
    %285 = math.rsqrt %284 : f32
    %286 = arith.mulf %283, %285 : f32
    %c2_67 = arith.constant 2 : index
    %287 = memref.load %arg4[%c2_67] : memref<4xf32, #tpu.memory_space<smem>>
    %288 = arith.mulf %279, %286 : f32
    %289 = arith.subf %287, %288 : f32
    %290 = vector.broadcast %286 : f32 to vector<2x18x18xf32>
    %291 = arith.mulf %269, %290 : vector<2x18x18xf32>
    %292 = vector.broadcast %289 : f32 to vector<2x18x18xf32>
    %293 = arith.addf %291, %292 : vector<2x18x18xf32>
    %cst_68 = arith.constant 0.000000e+00 : f32
    %294 = vector.broadcast %cst_68 : f32 to vector<2x18x18xf32>
    %295 = arith.maximumf %293, %294 : vector<2x18x18xf32>
    %296 = vector.extract_strided_slice %295 {offsets = [0, 0, 0], sizes = [2, 18, 17], strides = [1, 1, 1]} : vector<2x18x18xf32> to vector<2x18x17xf32>
    %297 = vector.extract_strided_slice %295 {offsets = [0, 0, 1], sizes = [2, 18, 17], strides = [1, 1, 1]} : vector<2x18x18xf32> to vector<2x18x17xf32>
    %298 = arith.maximumf %296, %297 : vector<2x18x17xf32>
    %299 = vector.extract_strided_slice %298 {offsets = [0, 0, 0], sizes = [2, 17, 17], strides = [1, 1, 1]} : vector<2x18x17xf32> to vector<2x17x17xf32>
    %300 = vector.extract_strided_slice %298 {offsets = [0, 1, 0], sizes = [2, 17, 17], strides = [1, 1, 1]} : vector<2x18x17xf32> to vector<2x17x17xf32>
    %301 = arith.maximumf %299, %300 : vector<2x17x17xf32>
    %c3_69 = arith.constant 3 : index
    %302 = memref.load %arg2[%c3_69] : memref<4xf32, #tpu.memory_space<smem>>
    %303 = vector.broadcast %302 : f32 to vector<2x18x18xf32>
    %304 = arith.addf %196, %303 : vector<2x18x18xf32>
    %305 = vector.shape_cast %304 : vector<2x18x18xf32> to vector<1x2x18x18xf32>
    %cst_70 = arith.constant dense<0.000000e+00> : vector<1xf32>
    %306 = vector.multi_reduction <add>, %305, %cst_70 [1, 2, 3] : vector<1x2x18x18xf32> to vector<1xf32>
    %307 = vector.shape_cast %306 : vector<1xf32> to vector<1x1x1x1xf32>
    %308 = vector.extract %307[0, 0, 0, 0] : f32 from vector<1x1x1x1xf32>
    %309 = arith.mulf %304, %304 : vector<2x18x18xf32>
    %310 = vector.shape_cast %309 : vector<2x18x18xf32> to vector<1x2x18x18xf32>
    %cst_71 = arith.constant dense<0.000000e+00> : vector<1xf32>
    %311 = vector.multi_reduction <add>, %310, %cst_71 [1, 2, 3] : vector<1x2x18x18xf32> to vector<1xf32>
    %312 = vector.shape_cast %311 : vector<1xf32> to vector<1x1x1x1xf32>
    %313 = vector.extract %312[0, 0, 0, 0] : f32 from vector<1x1x1x1xf32>
    %cst_72 = arith.constant 0.00154320989 : f32
    %314 = arith.mulf %308, %cst_72 : f32
    %cst_73 = arith.constant 0.00154320989 : f32
    %315 = arith.mulf %313, %cst_73 : f32
    %316 = arith.mulf %314, %314 : f32
    %317 = arith.subf %315, %316 : f32
    %c3_74 = arith.constant 3 : index
    %318 = memref.load %arg3[%c3_74] : memref<4xf32, #tpu.memory_space<smem>>
    %cst_75 = arith.constant 9.99999974E-6 : f32
    %319 = arith.addf %317, %cst_75 : f32
    %320 = math.rsqrt %319 : f32
    %321 = arith.mulf %318, %320 : f32
    %c3_76 = arith.constant 3 : index
    %322 = memref.load %arg4[%c3_76] : memref<4xf32, #tpu.memory_space<smem>>
    %323 = arith.mulf %314, %321 : f32
    %324 = arith.subf %322, %323 : f32
    %325 = vector.broadcast %321 : f32 to vector<2x18x18xf32>
    %326 = arith.mulf %304, %325 : vector<2x18x18xf32>
    %327 = vector.broadcast %324 : f32 to vector<2x18x18xf32>
    %328 = arith.addf %326, %327 : vector<2x18x18xf32>
    %cst_77 = arith.constant 0.000000e+00 : f32
    %329 = vector.broadcast %cst_77 : f32 to vector<2x18x18xf32>
    %330 = arith.maximumf %328, %329 : vector<2x18x18xf32>
    %331 = vector.extract_strided_slice %330 {offsets = [0, 0, 0], sizes = [2, 18, 17], strides = [1, 1, 1]} : vector<2x18x18xf32> to vector<2x18x17xf32>
    %332 = vector.extract_strided_slice %330 {offsets = [0, 0, 1], sizes = [2, 18, 17], strides = [1, 1, 1]} : vector<2x18x18xf32> to vector<2x18x17xf32>
    %333 = arith.maximumf %331, %332 : vector<2x18x17xf32>
    %334 = vector.extract_strided_slice %333 {offsets = [0, 0, 0], sizes = [2, 17, 17], strides = [1, 1, 1]} : vector<2x18x17xf32> to vector<2x17x17xf32>
    %335 = vector.extract_strided_slice %333 {offsets = [0, 1, 0], sizes = [2, 17, 17], strides = [1, 1, 1]} : vector<2x18x17xf32> to vector<2x17x17xf32>
    %336 = arith.maximumf %334, %335 : vector<2x17x17xf32>
    %337 = tpu.concatenate %231, %266, %301, %336 in 2 : vector<2x17x17xf32>, vector<2x17x17xf32>, vector<2x17x17xf32>, vector<2x17x17xf32> -> vector<2x17x68xf32>
    %cst_78 = arith.constant 0.000000e+00 : f32
    %338 = vector.broadcast %cst_78 : f32 to vector<2x15x66xf32>
    %cst_79 = arith.constant 0.000000e+00 : f32
    %339 = vector.broadcast %cst_79 : f32 to vector<2x15x66xf32>
    %cst_80 = arith.constant 0.000000e+00 : f32
    %340 = vector.broadcast %cst_80 : f32 to vector<2x15x66xf32>
    %cst_81 = arith.constant 0.000000e+00 : f32
    %341 = vector.broadcast %cst_81 : f32 to vector<2x15x66xf32>
    %342 = vector.extract_strided_slice %337 {offsets = [0, 0, 0], sizes = [2, 17, 66], strides = [1, 1, 1]} : vector<2x17x68xf32> to vector<2x17x66xf32>
    %343 = vector.extract_strided_slice %342 {offsets = [0, 0, 0], sizes = [2, 15, 66], strides = [1, 1, 1]} : vector<2x17x66xf32> to vector<2x15x66xf32>
    %c0_82 = arith.constant 0 : index
    %c0_83 = arith.constant 0 : index
    %344 = vector.load %arg5[%c0_82, %c0_83] : memref<36x66xf32, #tpu.memory_space<vmem>>, vector<1x66xf32>
    %345 = vector.shape_cast %344 : vector<1x66xf32> to vector<1x1x66xf32>
    %346 = vector.broadcast %345 : vector<1x1x66xf32> to vector<2x15x66xf32>
    %347 = arith.mulf %343, %346 : vector<2x15x66xf32>
    %348 = arith.addf %338, %347 : vector<2x15x66xf32>
    %c9_84 = arith.constant 9 : index
    %c0_85 = arith.constant 0 : index
    %349 = vector.load %arg5[%c9_84, %c0_85] : memref<36x66xf32, #tpu.memory_space<vmem>>, vector<1x66xf32>
    %350 = vector.shape_cast %349 : vector<1x66xf32> to vector<1x1x66xf32>
    %351 = vector.broadcast %350 : vector<1x1x66xf32> to vector<2x15x66xf32>
    %352 = arith.mulf %343, %351 : vector<2x15x66xf32>
    %353 = arith.addf %339, %352 : vector<2x15x66xf32>
    %c18_86 = arith.constant 18 : index
    %c0_87 = arith.constant 0 : index
    %354 = vector.load %arg5[%c18_86, %c0_87] : memref<36x66xf32, #tpu.memory_space<vmem>>, vector<1x66xf32>
    %355 = vector.shape_cast %354 : vector<1x66xf32> to vector<1x1x66xf32>
    %356 = vector.broadcast %355 : vector<1x1x66xf32> to vector<2x15x66xf32>
    %357 = arith.mulf %343, %356 : vector<2x15x66xf32>
    %358 = arith.addf %340, %357 : vector<2x15x66xf32>
    %c27_88 = arith.constant 27 : index
    %c0_89 = arith.constant 0 : index
    %359 = vector.load %arg5[%c27_88, %c0_89] : memref<36x66xf32, #tpu.memory_space<vmem>>, vector<1x66xf32>
    %360 = vector.shape_cast %359 : vector<1x66xf32> to vector<1x1x66xf32>
    %361 = vector.broadcast %360 : vector<1x1x66xf32> to vector<2x15x66xf32>
    %362 = arith.mulf %343, %361 : vector<2x15x66xf32>
    %363 = arith.addf %341, %362 : vector<2x15x66xf32>
    %364 = vector.extract_strided_slice %342 {offsets = [0, 1, 0], sizes = [2, 15, 66], strides = [1, 1, 1]} : vector<2x17x66xf32> to vector<2x15x66xf32>
    %c3_90 = arith.constant 3 : index
    %c0_91 = arith.constant 0 : index
    %365 = vector.load %arg5[%c3_90, %c0_91] : memref<36x66xf32, #tpu.memory_space<vmem>>, vector<1x66xf32>
    %366 = vector.shape_cast %365 : vector<1x66xf32> to vector<1x1x66xf32>
    %367 = vector.broadcast %366 : vector<1x1x66xf32> to vector<2x15x66xf32>
    %368 = arith.mulf %364, %367 : vector<2x15x66xf32>
    %369 = arith.addf %348, %368 : vector<2x15x66xf32>
    %c12_92 = arith.constant 12 : index
    %c0_93 = arith.constant 0 : index
    %370 = vector.load %arg5[%c12_92, %c0_93] : memref<36x66xf32, #tpu.memory_space<vmem>>, vector<1x66xf32>
    %371 = vector.shape_cast %370 : vector<1x66xf32> to vector<1x1x66xf32>
    %372 = vector.broadcast %371 : vector<1x1x66xf32> to vector<2x15x66xf32>
    %373 = arith.mulf %364, %372 : vector<2x15x66xf32>
    %374 = arith.addf %353, %373 : vector<2x15x66xf32>
    %c21_94 = arith.constant 21 : index
    %c0_95 = arith.constant 0 : index
    %375 = vector.load %arg5[%c21_94, %c0_95] : memref<36x66xf32, #tpu.memory_space<vmem>>, vector<1x66xf32>
    %376 = vector.shape_cast %375 : vector<1x66xf32> to vector<1x1x66xf32>
    %377 = vector.broadcast %376 : vector<1x1x66xf32> to vector<2x15x66xf32>
    %378 = arith.mulf %364, %377 : vector<2x15x66xf32>
    %379 = arith.addf %358, %378 : vector<2x15x66xf32>
    %c30_96 = arith.constant 30 : index
    %c0_97 = arith.constant 0 : index
    %380 = vector.load %arg5[%c30_96, %c0_97] : memref<36x66xf32, #tpu.memory_space<vmem>>, vector<1x66xf32>
    %381 = vector.shape_cast %380 : vector<1x66xf32> to vector<1x1x66xf32>
    %382 = vector.broadcast %381 : vector<1x1x66xf32> to vector<2x15x66xf32>
    %383 = arith.mulf %364, %382 : vector<2x15x66xf32>
    %384 = arith.addf %363, %383 : vector<2x15x66xf32>
    %385 = vector.extract_strided_slice %342 {offsets = [0, 2, 0], sizes = [2, 15, 66], strides = [1, 1, 1]} : vector<2x17x66xf32> to vector<2x15x66xf32>
    %c6_98 = arith.constant 6 : index
    %c0_99 = arith.constant 0 : index
    %386 = vector.load %arg5[%c6_98, %c0_99] : memref<36x66xf32, #tpu.memory_space<vmem>>, vector<1x66xf32>
    %387 = vector.shape_cast %386 : vector<1x66xf32> to vector<1x1x66xf32>
    %388 = vector.broadcast %387 : vector<1x1x66xf32> to vector<2x15x66xf32>
    %389 = arith.mulf %385, %388 : vector<2x15x66xf32>
    %390 = arith.addf %369, %389 : vector<2x15x66xf32>
    %c15_100 = arith.constant 15 : index
    %c0_101 = arith.constant 0 : index
    %391 = vector.load %arg5[%c15_100, %c0_101] : memref<36x66xf32, #tpu.memory_space<vmem>>, vector<1x66xf32>
    %392 = vector.shape_cast %391 : vector<1x66xf32> to vector<1x1x66xf32>
    %393 = vector.broadcast %392 : vector<1x1x66xf32> to vector<2x15x66xf32>
    %394 = arith.mulf %385, %393 : vector<2x15x66xf32>
    %395 = arith.addf %374, %394 : vector<2x15x66xf32>
    %c24_102 = arith.constant 24 : index
    %c0_103 = arith.constant 0 : index
    %396 = vector.load %arg5[%c24_102, %c0_103] : memref<36x66xf32, #tpu.memory_space<vmem>>, vector<1x66xf32>
    %397 = vector.shape_cast %396 : vector<1x66xf32> to vector<1x1x66xf32>
    %398 = vector.broadcast %397 : vector<1x1x66xf32> to vector<2x15x66xf32>
    %399 = arith.mulf %385, %398 : vector<2x15x66xf32>
    %400 = arith.addf %379, %399 : vector<2x15x66xf32>
    %c33_104 = arith.constant 33 : index
    %c0_105 = arith.constant 0 : index
    %401 = vector.load %arg5[%c33_104, %c0_105] : memref<36x66xf32, #tpu.memory_space<vmem>>, vector<1x66xf32>
    %402 = vector.shape_cast %401 : vector<1x66xf32> to vector<1x1x66xf32>
    %403 = vector.broadcast %402 : vector<1x1x66xf32> to vector<2x15x66xf32>
    %404 = arith.mulf %385, %403 : vector<2x15x66xf32>
    %405 = arith.addf %384, %404 : vector<2x15x66xf32>
    %406 = vector.extract_strided_slice %337 {offsets = [0, 0, 1], sizes = [2, 17, 66], strides = [1, 1, 1]} : vector<2x17x68xf32> to vector<2x17x66xf32>
    %407 = vector.extract_strided_slice %406 {offsets = [0, 0, 0], sizes = [2, 15, 66], strides = [1, 1, 1]} : vector<2x17x66xf32> to vector<2x15x66xf32>
    %c1_106 = arith.constant 1 : index
    %c0_107 = arith.constant 0 : index
    %408 = vector.load %arg5[%c1_106, %c0_107] : memref<36x66xf32, #tpu.memory_space<vmem>>, vector<1x66xf32>
    %409 = vector.shape_cast %408 : vector<1x66xf32> to vector<1x1x66xf32>
    %410 = vector.broadcast %409 : vector<1x1x66xf32> to vector<2x15x66xf32>
    %411 = arith.mulf %407, %410 : vector<2x15x66xf32>
    %412 = arith.addf %390, %411 : vector<2x15x66xf32>
    %c10_108 = arith.constant 10 : index
    %c0_109 = arith.constant 0 : index
    %413 = vector.load %arg5[%c10_108, %c0_109] : memref<36x66xf32, #tpu.memory_space<vmem>>, vector<1x66xf32>
    %414 = vector.shape_cast %413 : vector<1x66xf32> to vector<1x1x66xf32>
    %415 = vector.broadcast %414 : vector<1x1x66xf32> to vector<2x15x66xf32>
    %416 = arith.mulf %407, %415 : vector<2x15x66xf32>
    %417 = arith.addf %395, %416 : vector<2x15x66xf32>
    %c19_110 = arith.constant 19 : index
    %c0_111 = arith.constant 0 : index
    %418 = vector.load %arg5[%c19_110, %c0_111] : memref<36x66xf32, #tpu.memory_space<vmem>>, vector<1x66xf32>
    %419 = vector.shape_cast %418 : vector<1x66xf32> to vector<1x1x66xf32>
    %420 = vector.broadcast %419 : vector<1x1x66xf32> to vector<2x15x66xf32>
    %421 = arith.mulf %407, %420 : vector<2x15x66xf32>
    %422 = arith.addf %400, %421 : vector<2x15x66xf32>
    %c28_112 = arith.constant 28 : index
    %c0_113 = arith.constant 0 : index
    %423 = vector.load %arg5[%c28_112, %c0_113] : memref<36x66xf32, #tpu.memory_space<vmem>>, vector<1x66xf32>
    %424 = vector.shape_cast %423 : vector<1x66xf32> to vector<1x1x66xf32>
    %425 = vector.broadcast %424 : vector<1x1x66xf32> to vector<2x15x66xf32>
    %426 = arith.mulf %407, %425 : vector<2x15x66xf32>
    %427 = arith.addf %405, %426 : vector<2x15x66xf32>
    %428 = vector.extract_strided_slice %406 {offsets = [0, 1, 0], sizes = [2, 15, 66], strides = [1, 1, 1]} : vector<2x17x66xf32> to vector<2x15x66xf32>
    %c4_114 = arith.constant 4 : index
    %c0_115 = arith.constant 0 : index
    %429 = vector.load %arg5[%c4_114, %c0_115] : memref<36x66xf32, #tpu.memory_space<vmem>>, vector<1x66xf32>
    %430 = vector.shape_cast %429 : vector<1x66xf32> to vector<1x1x66xf32>
    %431 = vector.broadcast %430 : vector<1x1x66xf32> to vector<2x15x66xf32>
    %432 = arith.mulf %428, %431 : vector<2x15x66xf32>
    %433 = arith.addf %412, %432 : vector<2x15x66xf32>
    %c13_116 = arith.constant 13 : index
    %c0_117 = arith.constant 0 : index
    %434 = vector.load %arg5[%c13_116, %c0_117] : memref<36x66xf32, #tpu.memory_space<vmem>>, vector<1x66xf32>
    %435 = vector.shape_cast %434 : vector<1x66xf32> to vector<1x1x66xf32>
    %436 = vector.broadcast %435 : vector<1x1x66xf32> to vector<2x15x66xf32>
    %437 = arith.mulf %428, %436 : vector<2x15x66xf32>
    %438 = arith.addf %417, %437 : vector<2x15x66xf32>
    %c22_118 = arith.constant 22 : index
    %c0_119 = arith.constant 0 : index
    %439 = vector.load %arg5[%c22_118, %c0_119] : memref<36x66xf32, #tpu.memory_space<vmem>>, vector<1x66xf32>
    %440 = vector.shape_cast %439 : vector<1x66xf32> to vector<1x1x66xf32>
    %441 = vector.broadcast %440 : vector<1x1x66xf32> to vector<2x15x66xf32>
    %442 = arith.mulf %428, %441 : vector<2x15x66xf32>
    %443 = arith.addf %422, %442 : vector<2x15x66xf32>
    %c31_120 = arith.constant 31 : index
    %c0_121 = arith.constant 0 : index
    %444 = vector.load %arg5[%c31_120, %c0_121] : memref<36x66xf32, #tpu.memory_space<vmem>>, vector<1x66xf32>
    %445 = vector.shape_cast %444 : vector<1x66xf32> to vector<1x1x66xf32>
    %446 = vector.broadcast %445 : vector<1x1x66xf32> to vector<2x15x66xf32>
    %447 = arith.mulf %428, %446 : vector<2x15x66xf32>
    %448 = arith.addf %427, %447 : vector<2x15x66xf32>
    %449 = vector.extract_strided_slice %406 {offsets = [0, 2, 0], sizes = [2, 15, 66], strides = [1, 1, 1]} : vector<2x17x66xf32> to vector<2x15x66xf32>
    %c7_122 = arith.constant 7 : index
    %c0_123 = arith.constant 0 : index
    %450 = vector.load %arg5[%c7_122, %c0_123] : memref<36x66xf32, #tpu.memory_space<vmem>>, vector<1x66xf32>
    %451 = vector.shape_cast %450 : vector<1x66xf32> to vector<1x1x66xf32>
    %452 = vector.broadcast %451 : vector<1x1x66xf32> to vector<2x15x66xf32>
    %453 = arith.mulf %449, %452 : vector<2x15x66xf32>
    %454 = arith.addf %433, %453 : vector<2x15x66xf32>
    %c16_124 = arith.constant 16 : index
    %c0_125 = arith.constant 0 : index
    %455 = vector.load %arg5[%c16_124, %c0_125] : memref<36x66xf32, #tpu.memory_space<vmem>>, vector<1x66xf32>
    %456 = vector.shape_cast %455 : vector<1x66xf32> to vector<1x1x66xf32>
    %457 = vector.broadcast %456 : vector<1x1x66xf32> to vector<2x15x66xf32>
    %458 = arith.mulf %449, %457 : vector<2x15x66xf32>
    %459 = arith.addf %438, %458 : vector<2x15x66xf32>
    %c25_126 = arith.constant 25 : index
    %c0_127 = arith.constant 0 : index
    %460 = vector.load %arg5[%c25_126, %c0_127] : memref<36x66xf32, #tpu.memory_space<vmem>>, vector<1x66xf32>
    %461 = vector.shape_cast %460 : vector<1x66xf32> to vector<1x1x66xf32>
    %462 = vector.broadcast %461 : vector<1x1x66xf32> to vector<2x15x66xf32>
    %463 = arith.mulf %449, %462 : vector<2x15x66xf32>
    %464 = arith.addf %443, %463 : vector<2x15x66xf32>
    %c34_128 = arith.constant 34 : index
    %c0_129 = arith.constant 0 : index
    %465 = vector.load %arg5[%c34_128, %c0_129] : memref<36x66xf32, #tpu.memory_space<vmem>>, vector<1x66xf32>
    %466 = vector.shape_cast %465 : vector<1x66xf32> to vector<1x1x66xf32>
    %467 = vector.broadcast %466 : vector<1x1x66xf32> to vector<2x15x66xf32>
    %468 = arith.mulf %449, %467 : vector<2x15x66xf32>
    %469 = arith.addf %448, %468 : vector<2x15x66xf32>
    %470 = vector.extract_strided_slice %337 {offsets = [0, 0, 2], sizes = [2, 17, 66], strides = [1, 1, 1]} : vector<2x17x68xf32> to vector<2x17x66xf32>
    %471 = vector.extract_strided_slice %470 {offsets = [0, 0, 0], sizes = [2, 15, 66], strides = [1, 1, 1]} : vector<2x17x66xf32> to vector<2x15x66xf32>
    %c2_130 = arith.constant 2 : index
    %c0_131 = arith.constant 0 : index
    %472 = vector.load %arg5[%c2_130, %c0_131] : memref<36x66xf32, #tpu.memory_space<vmem>>, vector<1x66xf32>
    %473 = vector.shape_cast %472 : vector<1x66xf32> to vector<1x1x66xf32>
    %474 = vector.broadcast %473 : vector<1x1x66xf32> to vector<2x15x66xf32>
    %475 = arith.mulf %471, %474 : vector<2x15x66xf32>
    %476 = arith.addf %454, %475 : vector<2x15x66xf32>
    %c11_132 = arith.constant 11 : index
    %c0_133 = arith.constant 0 : index
    %477 = vector.load %arg5[%c11_132, %c0_133] : memref<36x66xf32, #tpu.memory_space<vmem>>, vector<1x66xf32>
    %478 = vector.shape_cast %477 : vector<1x66xf32> to vector<1x1x66xf32>
    %479 = vector.broadcast %478 : vector<1x1x66xf32> to vector<2x15x66xf32>
    %480 = arith.mulf %471, %479 : vector<2x15x66xf32>
    %481 = arith.addf %459, %480 : vector<2x15x66xf32>
    %c20_134 = arith.constant 20 : index
    %c0_135 = arith.constant 0 : index
    %482 = vector.load %arg5[%c20_134, %c0_135] : memref<36x66xf32, #tpu.memory_space<vmem>>, vector<1x66xf32>
    %483 = vector.shape_cast %482 : vector<1x66xf32> to vector<1x1x66xf32>
    %484 = vector.broadcast %483 : vector<1x1x66xf32> to vector<2x15x66xf32>
    %485 = arith.mulf %471, %484 : vector<2x15x66xf32>
    %486 = arith.addf %464, %485 : vector<2x15x66xf32>
    %c29_136 = arith.constant 29 : index
    %c0_137 = arith.constant 0 : index
    %487 = vector.load %arg5[%c29_136, %c0_137] : memref<36x66xf32, #tpu.memory_space<vmem>>, vector<1x66xf32>
    %488 = vector.shape_cast %487 : vector<1x66xf32> to vector<1x1x66xf32>
    %489 = vector.broadcast %488 : vector<1x1x66xf32> to vector<2x15x66xf32>
    %490 = arith.mulf %471, %489 : vector<2x15x66xf32>
    %491 = arith.addf %469, %490 : vector<2x15x66xf32>
    %492 = vector.extract_strided_slice %470 {offsets = [0, 1, 0], sizes = [2, 15, 66], strides = [1, 1, 1]} : vector<2x17x66xf32> to vector<2x15x66xf32>
    %c5_138 = arith.constant 5 : index
    %c0_139 = arith.constant 0 : index
    %493 = vector.load %arg5[%c5_138, %c0_139] : memref<36x66xf32, #tpu.memory_space<vmem>>, vector<1x66xf32>
    %494 = vector.shape_cast %493 : vector<1x66xf32> to vector<1x1x66xf32>
    %495 = vector.broadcast %494 : vector<1x1x66xf32> to vector<2x15x66xf32>
    %496 = arith.mulf %492, %495 : vector<2x15x66xf32>
    %497 = arith.addf %476, %496 : vector<2x15x66xf32>
    %c14_140 = arith.constant 14 : index
    %c0_141 = arith.constant 0 : index
    %498 = vector.load %arg5[%c14_140, %c0_141] : memref<36x66xf32, #tpu.memory_space<vmem>>, vector<1x66xf32>
    %499 = vector.shape_cast %498 : vector<1x66xf32> to vector<1x1x66xf32>
    %500 = vector.broadcast %499 : vector<1x1x66xf32> to vector<2x15x66xf32>
    %501 = arith.mulf %492, %500 : vector<2x15x66xf32>
    %502 = arith.addf %481, %501 : vector<2x15x66xf32>
    %c23_142 = arith.constant 23 : index
    %c0_143 = arith.constant 0 : index
    %503 = vector.load %arg5[%c23_142, %c0_143] : memref<36x66xf32, #tpu.memory_space<vmem>>, vector<1x66xf32>
    %504 = vector.shape_cast %503 : vector<1x66xf32> to vector<1x1x66xf32>
    %505 = vector.broadcast %504 : vector<1x1x66xf32> to vector<2x15x66xf32>
    %506 = arith.mulf %492, %505 : vector<2x15x66xf32>
    %507 = arith.addf %486, %506 : vector<2x15x66xf32>
    %c32_144 = arith.constant 32 : index
    %c0_145 = arith.constant 0 : index
    %508 = vector.load %arg5[%c32_144, %c0_145] : memref<36x66xf32, #tpu.memory_space<vmem>>, vector<1x66xf32>
    %509 = vector.shape_cast %508 : vector<1x66xf32> to vector<1x1x66xf32>
    %510 = vector.broadcast %509 : vector<1x1x66xf32> to vector<2x15x66xf32>
    %511 = arith.mulf %492, %510 : vector<2x15x66xf32>
    %512 = arith.addf %491, %511 : vector<2x15x66xf32>
    %513 = vector.extract_strided_slice %470 {offsets = [0, 2, 0], sizes = [2, 15, 66], strides = [1, 1, 1]} : vector<2x17x66xf32> to vector<2x15x66xf32>
    %c8_146 = arith.constant 8 : index
    %c0_147 = arith.constant 0 : index
    %514 = vector.load %arg5[%c8_146, %c0_147] : memref<36x66xf32, #tpu.memory_space<vmem>>, vector<1x66xf32>
    %515 = vector.shape_cast %514 : vector<1x66xf32> to vector<1x1x66xf32>
    %516 = vector.broadcast %515 : vector<1x1x66xf32> to vector<2x15x66xf32>
    %517 = arith.mulf %513, %516 : vector<2x15x66xf32>
    %518 = arith.addf %497, %517 : vector<2x15x66xf32>
    %c17_148 = arith.constant 17 : index
    %c0_149 = arith.constant 0 : index
    %519 = vector.load %arg5[%c17_148, %c0_149] : memref<36x66xf32, #tpu.memory_space<vmem>>, vector<1x66xf32>
    %520 = vector.shape_cast %519 : vector<1x66xf32> to vector<1x1x66xf32>
    %521 = vector.broadcast %520 : vector<1x1x66xf32> to vector<2x15x66xf32>
    %522 = arith.mulf %513, %521 : vector<2x15x66xf32>
    %523 = arith.addf %502, %522 : vector<2x15x66xf32>
    %c26_150 = arith.constant 26 : index
    %c0_151 = arith.constant 0 : index
    %524 = vector.load %arg5[%c26_150, %c0_151] : memref<36x66xf32, #tpu.memory_space<vmem>>, vector<1x66xf32>
    %525 = vector.shape_cast %524 : vector<1x66xf32> to vector<1x1x66xf32>
    %526 = vector.broadcast %525 : vector<1x1x66xf32> to vector<2x15x66xf32>
    %527 = arith.mulf %513, %526 : vector<2x15x66xf32>
    %528 = arith.addf %507, %527 : vector<2x15x66xf32>
    %c35_152 = arith.constant 35 : index
    %c0_153 = arith.constant 0 : index
    %529 = vector.load %arg5[%c35_152, %c0_153] : memref<36x66xf32, #tpu.memory_space<vmem>>, vector<1x66xf32>
    %530 = vector.shape_cast %529 : vector<1x66xf32> to vector<1x1x66xf32>
    %531 = vector.broadcast %530 : vector<1x1x66xf32> to vector<2x15x66xf32>
    %532 = arith.mulf %513, %531 : vector<2x15x66xf32>
    %533 = arith.addf %512, %532 : vector<2x15x66xf32>
    %534 = vector.extract_strided_slice %518 {offsets = [0, 0, 0], sizes = [2, 15, 15], strides = [1, 1, 1]} : vector<2x15x66xf32> to vector<2x15x15xf32>
    %c0_154 = arith.constant 0 : index
    %535 = memref.load %arg6[%c0_154] : memref<4xf32, #tpu.memory_space<smem>>
    %536 = vector.broadcast %535 : f32 to vector<2x15x15xf32>
    %537 = arith.addf %534, %536 : vector<2x15x15xf32>
    %538 = vector.extract_strided_slice %518 {offsets = [0, 0, 17], sizes = [2, 15, 15], strides = [1, 1, 1]} : vector<2x15x66xf32> to vector<2x15x15xf32>
    %539 = arith.addf %537, %538 : vector<2x15x15xf32>
    %540 = vector.extract_strided_slice %518 {offsets = [0, 0, 34], sizes = [2, 15, 15], strides = [1, 1, 1]} : vector<2x15x66xf32> to vector<2x15x15xf32>
    %541 = arith.addf %539, %540 : vector<2x15x15xf32>
    %542 = vector.extract_strided_slice %518 {offsets = [0, 0, 51], sizes = [2, 15, 15], strides = [1, 1, 1]} : vector<2x15x66xf32> to vector<2x15x15xf32>
    %543 = arith.addf %541, %542 : vector<2x15x15xf32>
    %544 = vector.shape_cast %543 : vector<2x15x15xf32> to vector<1x2x15x15xf32>
    %cst_155 = arith.constant dense<0.000000e+00> : vector<1xf32>
    %545 = vector.multi_reduction <add>, %544, %cst_155 [1, 2, 3] : vector<1x2x15x15xf32> to vector<1xf32>
    %546 = vector.shape_cast %545 : vector<1xf32> to vector<1x1x1x1xf32>
    %547 = vector.extract %546[0, 0, 0, 0] : f32 from vector<1x1x1x1xf32>
    %548 = arith.mulf %543, %543 : vector<2x15x15xf32>
    %549 = vector.shape_cast %548 : vector<2x15x15xf32> to vector<1x2x15x15xf32>
    %cst_156 = arith.constant dense<0.000000e+00> : vector<1xf32>
    %550 = vector.multi_reduction <add>, %549, %cst_156 [1, 2, 3] : vector<1x2x15x15xf32> to vector<1xf32>
    %551 = vector.shape_cast %550 : vector<1xf32> to vector<1x1x1x1xf32>
    %552 = vector.extract %551[0, 0, 0, 0] : f32 from vector<1x1x1x1xf32>
    %cst_157 = arith.constant 0.00222222228 : f32
    %553 = arith.mulf %547, %cst_157 : f32
    %cst_158 = arith.constant 0.00222222228 : f32
    %554 = arith.mulf %552, %cst_158 : f32
    %555 = arith.mulf %553, %553 : f32
    %556 = arith.subf %554, %555 : f32
    %c0_159 = arith.constant 0 : index
    %557 = memref.load %arg7[%c0_159] : memref<4xf32, #tpu.memory_space<smem>>
    %cst_160 = arith.constant 9.99999974E-6 : f32
    %558 = arith.addf %556, %cst_160 : f32
    %559 = math.rsqrt %558 : f32
    %560 = arith.mulf %557, %559 : f32
    %c0_161 = arith.constant 0 : index
    %561 = memref.load %arg8[%c0_161] : memref<4xf32, #tpu.memory_space<smem>>
    %562 = arith.mulf %553, %560 : f32
    %563 = arith.subf %561, %562 : f32
    %564 = vector.broadcast %560 : f32 to vector<2x15x15xf32>
    %565 = arith.mulf %543, %564 : vector<2x15x15xf32>
    %566 = vector.broadcast %563 : f32 to vector<2x15x15xf32>
    %567 = arith.addf %565, %566 : vector<2x15x15xf32>
    %cst_162 = arith.constant 0.000000e+00 : f32
    %568 = vector.broadcast %cst_162 : f32 to vector<2x15x15xf32>
    %569 = arith.maximumf %567, %568 : vector<2x15x15xf32>
    %570 = vector.extract_strided_slice %569 {offsets = [0, 0, 0], sizes = [2, 15, 14], strides = [1, 1, 1]} : vector<2x15x15xf32> to vector<2x15x14xf32>
    %571 = vector.extract_strided_slice %569 {offsets = [0, 0, 1], sizes = [2, 15, 14], strides = [1, 1, 1]} : vector<2x15x15xf32> to vector<2x15x14xf32>
    %572 = arith.maximumf %570, %571 : vector<2x15x14xf32>
    %573 = vector.extract_strided_slice %572 {offsets = [0, 0, 0], sizes = [2, 14, 14], strides = [1, 1, 1]} : vector<2x15x14xf32> to vector<2x14x14xf32>
    %574 = vector.extract_strided_slice %572 {offsets = [0, 1, 0], sizes = [2, 14, 14], strides = [1, 1, 1]} : vector<2x15x14xf32> to vector<2x14x14xf32>
    %575 = arith.maximumf %573, %574 : vector<2x14x14xf32>
    %576 = vector.extract_strided_slice %523 {offsets = [0, 0, 0], sizes = [2, 15, 15], strides = [1, 1, 1]} : vector<2x15x66xf32> to vector<2x15x15xf32>
    %c1_163 = arith.constant 1 : index
    %577 = memref.load %arg6[%c1_163] : memref<4xf32, #tpu.memory_space<smem>>
    %578 = vector.broadcast %577 : f32 to vector<2x15x15xf32>
    %579 = arith.addf %576, %578 : vector<2x15x15xf32>
    %580 = vector.extract_strided_slice %523 {offsets = [0, 0, 17], sizes = [2, 15, 15], strides = [1, 1, 1]} : vector<2x15x66xf32> to vector<2x15x15xf32>
    %581 = arith.addf %579, %580 : vector<2x15x15xf32>
    %582 = vector.extract_strided_slice %523 {offsets = [0, 0, 34], sizes = [2, 15, 15], strides = [1, 1, 1]} : vector<2x15x66xf32> to vector<2x15x15xf32>
    %583 = arith.addf %581, %582 : vector<2x15x15xf32>
    %584 = vector.extract_strided_slice %523 {offsets = [0, 0, 51], sizes = [2, 15, 15], strides = [1, 1, 1]} : vector<2x15x66xf32> to vector<2x15x15xf32>
    %585 = arith.addf %583, %584 : vector<2x15x15xf32>
    %586 = vector.shape_cast %585 : vector<2x15x15xf32> to vector<1x2x15x15xf32>
    %cst_164 = arith.constant dense<0.000000e+00> : vector<1xf32>
    %587 = vector.multi_reduction <add>, %586, %cst_164 [1, 2, 3] : vector<1x2x15x15xf32> to vector<1xf32>
    %588 = vector.shape_cast %587 : vector<1xf32> to vector<1x1x1x1xf32>
    %589 = vector.extract %588[0, 0, 0, 0] : f32 from vector<1x1x1x1xf32>
    %590 = arith.mulf %585, %585 : vector<2x15x15xf32>
    %591 = vector.shape_cast %590 : vector<2x15x15xf32> to vector<1x2x15x15xf32>
    %cst_165 = arith.constant dense<0.000000e+00> : vector<1xf32>
    %592 = vector.multi_reduction <add>, %591, %cst_165 [1, 2, 3] : vector<1x2x15x15xf32> to vector<1xf32>
    %593 = vector.shape_cast %592 : vector<1xf32> to vector<1x1x1x1xf32>
    %594 = vector.extract %593[0, 0, 0, 0] : f32 from vector<1x1x1x1xf32>
    %cst_166 = arith.constant 0.00222222228 : f32
    %595 = arith.mulf %589, %cst_166 : f32
    %cst_167 = arith.constant 0.00222222228 : f32
    %596 = arith.mulf %594, %cst_167 : f32
    %597 = arith.mulf %595, %595 : f32
    %598 = arith.subf %596, %597 : f32
    %c1_168 = arith.constant 1 : index
    %599 = memref.load %arg7[%c1_168] : memref<4xf32, #tpu.memory_space<smem>>
    %cst_169 = arith.constant 9.99999974E-6 : f32
    %600 = arith.addf %598, %cst_169 : f32
    %601 = math.rsqrt %600 : f32
    %602 = arith.mulf %599, %601 : f32
    %c1_170 = arith.constant 1 : index
    %603 = memref.load %arg8[%c1_170] : memref<4xf32, #tpu.memory_space<smem>>
    %604 = arith.mulf %595, %602 : f32
    %605 = arith.subf %603, %604 : f32
    %606 = vector.broadcast %602 : f32 to vector<2x15x15xf32>
    %607 = arith.mulf %585, %606 : vector<2x15x15xf32>
    %608 = vector.broadcast %605 : f32 to vector<2x15x15xf32>
    %609 = arith.addf %607, %608 : vector<2x15x15xf32>
    %cst_171 = arith.constant 0.000000e+00 : f32
    %610 = vector.broadcast %cst_171 : f32 to vector<2x15x15xf32>
    %611 = arith.maximumf %609, %610 : vector<2x15x15xf32>
    %612 = vector.extract_strided_slice %611 {offsets = [0, 0, 0], sizes = [2, 15, 14], strides = [1, 1, 1]} : vector<2x15x15xf32> to vector<2x15x14xf32>
    %613 = vector.extract_strided_slice %611 {offsets = [0, 0, 1], sizes = [2, 15, 14], strides = [1, 1, 1]} : vector<2x15x15xf32> to vector<2x15x14xf32>
    %614 = arith.maximumf %612, %613 : vector<2x15x14xf32>
    %615 = vector.extract_strided_slice %614 {offsets = [0, 0, 0], sizes = [2, 14, 14], strides = [1, 1, 1]} : vector<2x15x14xf32> to vector<2x14x14xf32>
    %616 = vector.extract_strided_slice %614 {offsets = [0, 1, 0], sizes = [2, 14, 14], strides = [1, 1, 1]} : vector<2x15x14xf32> to vector<2x14x14xf32>
    %617 = arith.maximumf %615, %616 : vector<2x14x14xf32>
    %618 = vector.extract_strided_slice %528 {offsets = [0, 0, 0], sizes = [2, 15, 15], strides = [1, 1, 1]} : vector<2x15x66xf32> to vector<2x15x15xf32>
    %c2_172 = arith.constant 2 : index
    %619 = memref.load %arg6[%c2_172] : memref<4xf32, #tpu.memory_space<smem>>
    %620 = vector.broadcast %619 : f32 to vector<2x15x15xf32>
    %621 = arith.addf %618, %620 : vector<2x15x15xf32>
    %622 = vector.extract_strided_slice %528 {offsets = [0, 0, 17], sizes = [2, 15, 15], strides = [1, 1, 1]} : vector<2x15x66xf32> to vector<2x15x15xf32>
    %623 = arith.addf %621, %622 : vector<2x15x15xf32>
    %624 = vector.extract_strided_slice %528 {offsets = [0, 0, 34], sizes = [2, 15, 15], strides = [1, 1, 1]} : vector<2x15x66xf32> to vector<2x15x15xf32>
    %625 = arith.addf %623, %624 : vector<2x15x15xf32>
    %626 = vector.extract_strided_slice %528 {offsets = [0, 0, 51], sizes = [2, 15, 15], strides = [1, 1, 1]} : vector<2x15x66xf32> to vector<2x15x15xf32>
    %627 = arith.addf %625, %626 : vector<2x15x15xf32>
    %628 = vector.shape_cast %627 : vector<2x15x15xf32> to vector<1x2x15x15xf32>
    %cst_173 = arith.constant dense<0.000000e+00> : vector<1xf32>
    %629 = vector.multi_reduction <add>, %628, %cst_173 [1, 2, 3] : vector<1x2x15x15xf32> to vector<1xf32>
    %630 = vector.shape_cast %629 : vector<1xf32> to vector<1x1x1x1xf32>
    %631 = vector.extract %630[0, 0, 0, 0] : f32 from vector<1x1x1x1xf32>
    %632 = arith.mulf %627, %627 : vector<2x15x15xf32>
    %633 = vector.shape_cast %632 : vector<2x15x15xf32> to vector<1x2x15x15xf32>
    %cst_174 = arith.constant dense<0.000000e+00> : vector<1xf32>
    %634 = vector.multi_reduction <add>, %633, %cst_174 [1, 2, 3] : vector<1x2x15x15xf32> to vector<1xf32>
    %635 = vector.shape_cast %634 : vector<1xf32> to vector<1x1x1x1xf32>
    %636 = vector.extract %635[0, 0, 0, 0] : f32 from vector<1x1x1x1xf32>
    %cst_175 = arith.constant 0.00222222228 : f32
    %637 = arith.mulf %631, %cst_175 : f32
    %cst_176 = arith.constant 0.00222222228 : f32
    %638 = arith.mulf %636, %cst_176 : f32
    %639 = arith.mulf %637, %637 : f32
    %640 = arith.subf %638, %639 : f32
    %c2_177 = arith.constant 2 : index
    %641 = memref.load %arg7[%c2_177] : memref<4xf32, #tpu.memory_space<smem>>
    %cst_178 = arith.constant 9.99999974E-6 : f32
    %642 = arith.addf %640, %cst_178 : f32
    %643 = math.rsqrt %642 : f32
    %644 = arith.mulf %641, %643 : f32
    %c2_179 = arith.constant 2 : index
    %645 = memref.load %arg8[%c2_179] : memref<4xf32, #tpu.memory_space<smem>>
    %646 = arith.mulf %637, %644 : f32
    %647 = arith.subf %645, %646 : f32
    %648 = vector.broadcast %644 : f32 to vector<2x15x15xf32>
    %649 = arith.mulf %627, %648 : vector<2x15x15xf32>
    %650 = vector.broadcast %647 : f32 to vector<2x15x15xf32>
    %651 = arith.addf %649, %650 : vector<2x15x15xf32>
    %cst_180 = arith.constant 0.000000e+00 : f32
    %652 = vector.broadcast %cst_180 : f32 to vector<2x15x15xf32>
    %653 = arith.maximumf %651, %652 : vector<2x15x15xf32>
    %654 = vector.extract_strided_slice %653 {offsets = [0, 0, 0], sizes = [2, 15, 14], strides = [1, 1, 1]} : vector<2x15x15xf32> to vector<2x15x14xf32>
    %655 = vector.extract_strided_slice %653 {offsets = [0, 0, 1], sizes = [2, 15, 14], strides = [1, 1, 1]} : vector<2x15x15xf32> to vector<2x15x14xf32>
    %656 = arith.maximumf %654, %655 : vector<2x15x14xf32>
    %657 = vector.extract_strided_slice %656 {offsets = [0, 0, 0], sizes = [2, 14, 14], strides = [1, 1, 1]} : vector<2x15x14xf32> to vector<2x14x14xf32>
    %658 = vector.extract_strided_slice %656 {offsets = [0, 1, 0], sizes = [2, 14, 14], strides = [1, 1, 1]} : vector<2x15x14xf32> to vector<2x14x14xf32>
    %659 = arith.maximumf %657, %658 : vector<2x14x14xf32>
    %660 = vector.extract_strided_slice %533 {offsets = [0, 0, 0], sizes = [2, 15, 15], strides = [1, 1, 1]} : vector<2x15x66xf32> to vector<2x15x15xf32>
    %c3_181 = arith.constant 3 : index
    %661 = memref.load %arg6[%c3_181] : memref<4xf32, #tpu.memory_space<smem>>
    %662 = vector.broadcast %661 : f32 to vector<2x15x15xf32>
    %663 = arith.addf %660, %662 : vector<2x15x15xf32>
    %664 = vector.extract_strided_slice %533 {offsets = [0, 0, 17], sizes = [2, 15, 15], strides = [1, 1, 1]} : vector<2x15x66xf32> to vector<2x15x15xf32>
    %665 = arith.addf %663, %664 : vector<2x15x15xf32>
    %666 = vector.extract_strided_slice %533 {offsets = [0, 0, 34], sizes = [2, 15, 15], strides = [1, 1, 1]} : vector<2x15x66xf32> to vector<2x15x15xf32>
    %667 = arith.addf %665, %666 : vector<2x15x15xf32>
    %668 = vector.extract_strided_slice %533 {offsets = [0, 0, 51], sizes = [2, 15, 15], strides = [1, 1, 1]} : vector<2x15x66xf32> to vector<2x15x15xf32>
    %669 = arith.addf %667, %668 : vector<2x15x15xf32>
    %670 = vector.shape_cast %669 : vector<2x15x15xf32> to vector<1x2x15x15xf32>
    %cst_182 = arith.constant dense<0.000000e+00> : vector<1xf32>
    %671 = vector.multi_reduction <add>, %670, %cst_182 [1, 2, 3] : vector<1x2x15x15xf32> to vector<1xf32>
    %672 = vector.shape_cast %671 : vector<1xf32> to vector<1x1x1x1xf32>
    %673 = vector.extract %672[0, 0, 0, 0] : f32 from vector<1x1x1x1xf32>
    %674 = arith.mulf %669, %669 : vector<2x15x15xf32>
    %675 = vector.shape_cast %674 : vector<2x15x15xf32> to vector<1x2x15x15xf32>
    %cst_183 = arith.constant dense<0.000000e+00> : vector<1xf32>
    %676 = vector.multi_reduction <add>, %675, %cst_183 [1, 2, 3] : vector<1x2x15x15xf32> to vector<1xf32>
    %677 = vector.shape_cast %676 : vector<1xf32> to vector<1x1x1x1xf32>
    %678 = vector.extract %677[0, 0, 0, 0] : f32 from vector<1x1x1x1xf32>
    %cst_184 = arith.constant 0.00222222228 : f32
    %679 = arith.mulf %673, %cst_184 : f32
    %cst_185 = arith.constant 0.00222222228 : f32
    %680 = arith.mulf %678, %cst_185 : f32
    %681 = arith.mulf %679, %679 : f32
    %682 = arith.subf %680, %681 : f32
    %c3_186 = arith.constant 3 : index
    %683 = memref.load %arg7[%c3_186] : memref<4xf32, #tpu.memory_space<smem>>
    %cst_187 = arith.constant 9.99999974E-6 : f32
    %684 = arith.addf %682, %cst_187 : f32
    %685 = math.rsqrt %684 : f32
    %686 = arith.mulf %683, %685 : f32
    %c3_188 = arith.constant 3 : index
    %687 = memref.load %arg8[%c3_188] : memref<4xf32, #tpu.memory_space<smem>>
    %688 = arith.mulf %679, %686 : f32
    %689 = arith.subf %687, %688 : f32
    %690 = vector.broadcast %686 : f32 to vector<2x15x15xf32>
    %691 = arith.mulf %669, %690 : vector<2x15x15xf32>
    %692 = vector.broadcast %689 : f32 to vector<2x15x15xf32>
    %693 = arith.addf %691, %692 : vector<2x15x15xf32>
    %cst_189 = arith.constant 0.000000e+00 : f32
    %694 = vector.broadcast %cst_189 : f32 to vector<2x15x15xf32>
    %695 = arith.maximumf %693, %694 : vector<2x15x15xf32>
    %696 = vector.extract_strided_slice %695 {offsets = [0, 0, 0], sizes = [2, 15, 14], strides = [1, 1, 1]} : vector<2x15x15xf32> to vector<2x15x14xf32>
    %697 = vector.extract_strided_slice %695 {offsets = [0, 0, 1], sizes = [2, 15, 14], strides = [1, 1, 1]} : vector<2x15x15xf32> to vector<2x15x14xf32>
    %698 = arith.maximumf %696, %697 : vector<2x15x14xf32>
    %699 = vector.extract_strided_slice %698 {offsets = [0, 0, 0], sizes = [2, 14, 14], strides = [1, 1, 1]} : vector<2x15x14xf32> to vector<2x14x14xf32>
    %700 = vector.extract_strided_slice %698 {offsets = [0, 1, 0], sizes = [2, 14, 14], strides = [1, 1, 1]} : vector<2x15x14xf32> to vector<2x14x14xf32>
    %701 = arith.maximumf %699, %700 : vector<2x14x14xf32>
    %702 = tpu.concatenate %575, %617, %659, %701 in 2 : vector<2x14x14xf32>, vector<2x14x14xf32>, vector<2x14x14xf32>, vector<2x14x14xf32> -> vector<2x14x56xf32>
    %cst_190 = arith.constant 0.000000e+00 : f32
    %703 = vector.broadcast %cst_190 : f32 to vector<2x12x54xf32>
    %cst_191 = arith.constant 0.000000e+00 : f32
    %704 = vector.broadcast %cst_191 : f32 to vector<2x12x54xf32>
    %cst_192 = arith.constant 0.000000e+00 : f32
    %705 = vector.broadcast %cst_192 : f32 to vector<2x12x54xf32>
    %cst_193 = arith.constant 0.000000e+00 : f32
    %706 = vector.broadcast %cst_193 : f32 to vector<2x12x54xf32>
    %707 = vector.extract_strided_slice %702 {offsets = [0, 0, 0], sizes = [2, 14, 54], strides = [1, 1, 1]} : vector<2x14x56xf32> to vector<2x14x54xf32>
    %708 = vector.extract_strided_slice %707 {offsets = [0, 0, 0], sizes = [2, 12, 54], strides = [1, 1, 1]} : vector<2x14x54xf32> to vector<2x12x54xf32>
    %c0_194 = arith.constant 0 : index
    %c0_195 = arith.constant 0 : index
    %709 = vector.load %arg9[%c0_194, %c0_195] : memref<36x54xf32, #tpu.memory_space<vmem>>, vector<1x54xf32>
    %710 = vector.shape_cast %709 : vector<1x54xf32> to vector<1x1x54xf32>
    %711 = vector.broadcast %710 : vector<1x1x54xf32> to vector<2x12x54xf32>
    %712 = arith.mulf %708, %711 : vector<2x12x54xf32>
    %713 = arith.addf %703, %712 : vector<2x12x54xf32>
    %c9_196 = arith.constant 9 : index
    %c0_197 = arith.constant 0 : index
    %714 = vector.load %arg9[%c9_196, %c0_197] : memref<36x54xf32, #tpu.memory_space<vmem>>, vector<1x54xf32>
    %715 = vector.shape_cast %714 : vector<1x54xf32> to vector<1x1x54xf32>
    %716 = vector.broadcast %715 : vector<1x1x54xf32> to vector<2x12x54xf32>
    %717 = arith.mulf %708, %716 : vector<2x12x54xf32>
    %718 = arith.addf %704, %717 : vector<2x12x54xf32>
    %c18_198 = arith.constant 18 : index
    %c0_199 = arith.constant 0 : index
    %719 = vector.load %arg9[%c18_198, %c0_199] : memref<36x54xf32, #tpu.memory_space<vmem>>, vector<1x54xf32>
    %720 = vector.shape_cast %719 : vector<1x54xf32> to vector<1x1x54xf32>
    %721 = vector.broadcast %720 : vector<1x1x54xf32> to vector<2x12x54xf32>
    %722 = arith.mulf %708, %721 : vector<2x12x54xf32>
    %723 = arith.addf %705, %722 : vector<2x12x54xf32>
    %c27_200 = arith.constant 27 : index
    %c0_201 = arith.constant 0 : index
    %724 = vector.load %arg9[%c27_200, %c0_201] : memref<36x54xf32, #tpu.memory_space<vmem>>, vector<1x54xf32>
    %725 = vector.shape_cast %724 : vector<1x54xf32> to vector<1x1x54xf32>
    %726 = vector.broadcast %725 : vector<1x1x54xf32> to vector<2x12x54xf32>
    %727 = arith.mulf %708, %726 : vector<2x12x54xf32>
    %728 = arith.addf %706, %727 : vector<2x12x54xf32>
    %729 = vector.extract_strided_slice %707 {offsets = [0, 1, 0], sizes = [2, 12, 54], strides = [1, 1, 1]} : vector<2x14x54xf32> to vector<2x12x54xf32>
    %c3_202 = arith.constant 3 : index
    %c0_203 = arith.constant 0 : index
    %730 = vector.load %arg9[%c3_202, %c0_203] : memref<36x54xf32, #tpu.memory_space<vmem>>, vector<1x54xf32>
    %731 = vector.shape_cast %730 : vector<1x54xf32> to vector<1x1x54xf32>
    %732 = vector.broadcast %731 : vector<1x1x54xf32> to vector<2x12x54xf32>
    %733 = arith.mulf %729, %732 : vector<2x12x54xf32>
    %734 = arith.addf %713, %733 : vector<2x12x54xf32>
    %c12_204 = arith.constant 12 : index
    %c0_205 = arith.constant 0 : index
    %735 = vector.load %arg9[%c12_204, %c0_205] : memref<36x54xf32, #tpu.memory_space<vmem>>, vector<1x54xf32>
    %736 = vector.shape_cast %735 : vector<1x54xf32> to vector<1x1x54xf32>
    %737 = vector.broadcast %736 : vector<1x1x54xf32> to vector<2x12x54xf32>
    %738 = arith.mulf %729, %737 : vector<2x12x54xf32>
    %739 = arith.addf %718, %738 : vector<2x12x54xf32>
    %c21_206 = arith.constant 21 : index
    %c0_207 = arith.constant 0 : index
    %740 = vector.load %arg9[%c21_206, %c0_207] : memref<36x54xf32, #tpu.memory_space<vmem>>, vector<1x54xf32>
    %741 = vector.shape_cast %740 : vector<1x54xf32> to vector<1x1x54xf32>
    %742 = vector.broadcast %741 : vector<1x1x54xf32> to vector<2x12x54xf32>
    %743 = arith.mulf %729, %742 : vector<2x12x54xf32>
    %744 = arith.addf %723, %743 : vector<2x12x54xf32>
    %c30_208 = arith.constant 30 : index
    %c0_209 = arith.constant 0 : index
    %745 = vector.load %arg9[%c30_208, %c0_209] : memref<36x54xf32, #tpu.memory_space<vmem>>, vector<1x54xf32>
    %746 = vector.shape_cast %745 : vector<1x54xf32> to vector<1x1x54xf32>
    %747 = vector.broadcast %746 : vector<1x1x54xf32> to vector<2x12x54xf32>
    %748 = arith.mulf %729, %747 : vector<2x12x54xf32>
    %749 = arith.addf %728, %748 : vector<2x12x54xf32>
    %750 = vector.extract_strided_slice %707 {offsets = [0, 2, 0], sizes = [2, 12, 54], strides = [1, 1, 1]} : vector<2x14x54xf32> to vector<2x12x54xf32>
    %c6_210 = arith.constant 6 : index
    %c0_211 = arith.constant 0 : index
    %751 = vector.load %arg9[%c6_210, %c0_211] : memref<36x54xf32, #tpu.memory_space<vmem>>, vector<1x54xf32>
    %752 = vector.shape_cast %751 : vector<1x54xf32> to vector<1x1x54xf32>
    %753 = vector.broadcast %752 : vector<1x1x54xf32> to vector<2x12x54xf32>
    %754 = arith.mulf %750, %753 : vector<2x12x54xf32>
    %755 = arith.addf %734, %754 : vector<2x12x54xf32>
    %c15_212 = arith.constant 15 : index
    %c0_213 = arith.constant 0 : index
    %756 = vector.load %arg9[%c15_212, %c0_213] : memref<36x54xf32, #tpu.memory_space<vmem>>, vector<1x54xf32>
    %757 = vector.shape_cast %756 : vector<1x54xf32> to vector<1x1x54xf32>
    %758 = vector.broadcast %757 : vector<1x1x54xf32> to vector<2x12x54xf32>
    %759 = arith.mulf %750, %758 : vector<2x12x54xf32>
    %760 = arith.addf %739, %759 : vector<2x12x54xf32>
    %c24_214 = arith.constant 24 : index
    %c0_215 = arith.constant 0 : index
    %761 = vector.load %arg9[%c24_214, %c0_215] : memref<36x54xf32, #tpu.memory_space<vmem>>, vector<1x54xf32>
    %762 = vector.shape_cast %761 : vector<1x54xf32> to vector<1x1x54xf32>
    %763 = vector.broadcast %762 : vector<1x1x54xf32> to vector<2x12x54xf32>
    %764 = arith.mulf %750, %763 : vector<2x12x54xf32>
    %765 = arith.addf %744, %764 : vector<2x12x54xf32>
    %c33_216 = arith.constant 33 : index
    %c0_217 = arith.constant 0 : index
    %766 = vector.load %arg9[%c33_216, %c0_217] : memref<36x54xf32, #tpu.memory_space<vmem>>, vector<1x54xf32>
    %767 = vector.shape_cast %766 : vector<1x54xf32> to vector<1x1x54xf32>
    %768 = vector.broadcast %767 : vector<1x1x54xf32> to vector<2x12x54xf32>
    %769 = arith.mulf %750, %768 : vector<2x12x54xf32>
    %770 = arith.addf %749, %769 : vector<2x12x54xf32>
    %771 = vector.extract_strided_slice %702 {offsets = [0, 0, 1], sizes = [2, 14, 54], strides = [1, 1, 1]} : vector<2x14x56xf32> to vector<2x14x54xf32>
    %772 = vector.extract_strided_slice %771 {offsets = [0, 0, 0], sizes = [2, 12, 54], strides = [1, 1, 1]} : vector<2x14x54xf32> to vector<2x12x54xf32>
    %c1_218 = arith.constant 1 : index
    %c0_219 = arith.constant 0 : index
    %773 = vector.load %arg9[%c1_218, %c0_219] : memref<36x54xf32, #tpu.memory_space<vmem>>, vector<1x54xf32>
    %774 = vector.shape_cast %773 : vector<1x54xf32> to vector<1x1x54xf32>
    %775 = vector.broadcast %774 : vector<1x1x54xf32> to vector<2x12x54xf32>
    %776 = arith.mulf %772, %775 : vector<2x12x54xf32>
    %777 = arith.addf %755, %776 : vector<2x12x54xf32>
    %c10_220 = arith.constant 10 : index
    %c0_221 = arith.constant 0 : index
    %778 = vector.load %arg9[%c10_220, %c0_221] : memref<36x54xf32, #tpu.memory_space<vmem>>, vector<1x54xf32>
    %779 = vector.shape_cast %778 : vector<1x54xf32> to vector<1x1x54xf32>
    %780 = vector.broadcast %779 : vector<1x1x54xf32> to vector<2x12x54xf32>
    %781 = arith.mulf %772, %780 : vector<2x12x54xf32>
    %782 = arith.addf %760, %781 : vector<2x12x54xf32>
    %c19_222 = arith.constant 19 : index
    %c0_223 = arith.constant 0 : index
    %783 = vector.load %arg9[%c19_222, %c0_223] : memref<36x54xf32, #tpu.memory_space<vmem>>, vector<1x54xf32>
    %784 = vector.shape_cast %783 : vector<1x54xf32> to vector<1x1x54xf32>
    %785 = vector.broadcast %784 : vector<1x1x54xf32> to vector<2x12x54xf32>
    %786 = arith.mulf %772, %785 : vector<2x12x54xf32>
    %787 = arith.addf %765, %786 : vector<2x12x54xf32>
    %c28_224 = arith.constant 28 : index
    %c0_225 = arith.constant 0 : index
    %788 = vector.load %arg9[%c28_224, %c0_225] : memref<36x54xf32, #tpu.memory_space<vmem>>, vector<1x54xf32>
    %789 = vector.shape_cast %788 : vector<1x54xf32> to vector<1x1x54xf32>
    %790 = vector.broadcast %789 : vector<1x1x54xf32> to vector<2x12x54xf32>
    %791 = arith.mulf %772, %790 : vector<2x12x54xf32>
    %792 = arith.addf %770, %791 : vector<2x12x54xf32>
    %793 = vector.extract_strided_slice %771 {offsets = [0, 1, 0], sizes = [2, 12, 54], strides = [1, 1, 1]} : vector<2x14x54xf32> to vector<2x12x54xf32>
    %c4_226 = arith.constant 4 : index
    %c0_227 = arith.constant 0 : index
    %794 = vector.load %arg9[%c4_226, %c0_227] : memref<36x54xf32, #tpu.memory_space<vmem>>, vector<1x54xf32>
    %795 = vector.shape_cast %794 : vector<1x54xf32> to vector<1x1x54xf32>
    %796 = vector.broadcast %795 : vector<1x1x54xf32> to vector<2x12x54xf32>
    %797 = arith.mulf %793, %796 : vector<2x12x54xf32>
    %798 = arith.addf %777, %797 : vector<2x12x54xf32>
    %c13_228 = arith.constant 13 : index
    %c0_229 = arith.constant 0 : index
    %799 = vector.load %arg9[%c13_228, %c0_229] : memref<36x54xf32, #tpu.memory_space<vmem>>, vector<1x54xf32>
    %800 = vector.shape_cast %799 : vector<1x54xf32> to vector<1x1x54xf32>
    %801 = vector.broadcast %800 : vector<1x1x54xf32> to vector<2x12x54xf32>
    %802 = arith.mulf %793, %801 : vector<2x12x54xf32>
    %803 = arith.addf %782, %802 : vector<2x12x54xf32>
    %c22_230 = arith.constant 22 : index
    %c0_231 = arith.constant 0 : index
    %804 = vector.load %arg9[%c22_230, %c0_231] : memref<36x54xf32, #tpu.memory_space<vmem>>, vector<1x54xf32>
    %805 = vector.shape_cast %804 : vector<1x54xf32> to vector<1x1x54xf32>
    %806 = vector.broadcast %805 : vector<1x1x54xf32> to vector<2x12x54xf32>
    %807 = arith.mulf %793, %806 : vector<2x12x54xf32>
    %808 = arith.addf %787, %807 : vector<2x12x54xf32>
    %c31_232 = arith.constant 31 : index
    %c0_233 = arith.constant 0 : index
    %809 = vector.load %arg9[%c31_232, %c0_233] : memref<36x54xf32, #tpu.memory_space<vmem>>, vector<1x54xf32>
    %810 = vector.shape_cast %809 : vector<1x54xf32> to vector<1x1x54xf32>
    %811 = vector.broadcast %810 : vector<1x1x54xf32> to vector<2x12x54xf32>
    %812 = arith.mulf %793, %811 : vector<2x12x54xf32>
    %813 = arith.addf %792, %812 : vector<2x12x54xf32>
    %814 = vector.extract_strided_slice %771 {offsets = [0, 2, 0], sizes = [2, 12, 54], strides = [1, 1, 1]} : vector<2x14x54xf32> to vector<2x12x54xf32>
    %c7_234 = arith.constant 7 : index
    %c0_235 = arith.constant 0 : index
    %815 = vector.load %arg9[%c7_234, %c0_235] : memref<36x54xf32, #tpu.memory_space<vmem>>, vector<1x54xf32>
    %816 = vector.shape_cast %815 : vector<1x54xf32> to vector<1x1x54xf32>
    %817 = vector.broadcast %816 : vector<1x1x54xf32> to vector<2x12x54xf32>
    %818 = arith.mulf %814, %817 : vector<2x12x54xf32>
    %819 = arith.addf %798, %818 : vector<2x12x54xf32>
    %c16_236 = arith.constant 16 : index
    %c0_237 = arith.constant 0 : index
    %820 = vector.load %arg9[%c16_236, %c0_237] : memref<36x54xf32, #tpu.memory_space<vmem>>, vector<1x54xf32>
    %821 = vector.shape_cast %820 : vector<1x54xf32> to vector<1x1x54xf32>
    %822 = vector.broadcast %821 : vector<1x1x54xf32> to vector<2x12x54xf32>
    %823 = arith.mulf %814, %822 : vector<2x12x54xf32>
    %824 = arith.addf %803, %823 : vector<2x12x54xf32>
    %c25_238 = arith.constant 25 : index
    %c0_239 = arith.constant 0 : index
    %825 = vector.load %arg9[%c25_238, %c0_239] : memref<36x54xf32, #tpu.memory_space<vmem>>, vector<1x54xf32>
    %826 = vector.shape_cast %825 : vector<1x54xf32> to vector<1x1x54xf32>
    %827 = vector.broadcast %826 : vector<1x1x54xf32> to vector<2x12x54xf32>
    %828 = arith.mulf %814, %827 : vector<2x12x54xf32>
    %829 = arith.addf %808, %828 : vector<2x12x54xf32>
    %c34_240 = arith.constant 34 : index
    %c0_241 = arith.constant 0 : index
    %830 = vector.load %arg9[%c34_240, %c0_241] : memref<36x54xf32, #tpu.memory_space<vmem>>, vector<1x54xf32>
    %831 = vector.shape_cast %830 : vector<1x54xf32> to vector<1x1x54xf32>
    %832 = vector.broadcast %831 : vector<1x1x54xf32> to vector<2x12x54xf32>
    %833 = arith.mulf %814, %832 : vector<2x12x54xf32>
    %834 = arith.addf %813, %833 : vector<2x12x54xf32>
    %835 = vector.extract_strided_slice %702 {offsets = [0, 0, 2], sizes = [2, 14, 54], strides = [1, 1, 1]} : vector<2x14x56xf32> to vector<2x14x54xf32>
    %836 = vector.extract_strided_slice %835 {offsets = [0, 0, 0], sizes = [2, 12, 54], strides = [1, 1, 1]} : vector<2x14x54xf32> to vector<2x12x54xf32>
    %c2_242 = arith.constant 2 : index
    %c0_243 = arith.constant 0 : index
    %837 = vector.load %arg9[%c2_242, %c0_243] : memref<36x54xf32, #tpu.memory_space<vmem>>, vector<1x54xf32>
    %838 = vector.shape_cast %837 : vector<1x54xf32> to vector<1x1x54xf32>
    %839 = vector.broadcast %838 : vector<1x1x54xf32> to vector<2x12x54xf32>
    %840 = arith.mulf %836, %839 : vector<2x12x54xf32>
    %841 = arith.addf %819, %840 : vector<2x12x54xf32>
    %c11_244 = arith.constant 11 : index
    %c0_245 = arith.constant 0 : index
    %842 = vector.load %arg9[%c11_244, %c0_245] : memref<36x54xf32, #tpu.memory_space<vmem>>, vector<1x54xf32>
    %843 = vector.shape_cast %842 : vector<1x54xf32> to vector<1x1x54xf32>
    %844 = vector.broadcast %843 : vector<1x1x54xf32> to vector<2x12x54xf32>
    %845 = arith.mulf %836, %844 : vector<2x12x54xf32>
    %846 = arith.addf %824, %845 : vector<2x12x54xf32>
    %c20_246 = arith.constant 20 : index
    %c0_247 = arith.constant 0 : index
    %847 = vector.load %arg9[%c20_246, %c0_247] : memref<36x54xf32, #tpu.memory_space<vmem>>, vector<1x54xf32>
    %848 = vector.shape_cast %847 : vector<1x54xf32> to vector<1x1x54xf32>
    %849 = vector.broadcast %848 : vector<1x1x54xf32> to vector<2x12x54xf32>
    %850 = arith.mulf %836, %849 : vector<2x12x54xf32>
    %851 = arith.addf %829, %850 : vector<2x12x54xf32>
    %c29_248 = arith.constant 29 : index
    %c0_249 = arith.constant 0 : index
    %852 = vector.load %arg9[%c29_248, %c0_249] : memref<36x54xf32, #tpu.memory_space<vmem>>, vector<1x54xf32>
    %853 = vector.shape_cast %852 : vector<1x54xf32> to vector<1x1x54xf32>
    %854 = vector.broadcast %853 : vector<1x1x54xf32> to vector<2x12x54xf32>
    %855 = arith.mulf %836, %854 : vector<2x12x54xf32>
    %856 = arith.addf %834, %855 : vector<2x12x54xf32>
    %857 = vector.extract_strided_slice %835 {offsets = [0, 1, 0], sizes = [2, 12, 54], strides = [1, 1, 1]} : vector<2x14x54xf32> to vector<2x12x54xf32>
    %c5_250 = arith.constant 5 : index
    %c0_251 = arith.constant 0 : index
    %858 = vector.load %arg9[%c5_250, %c0_251] : memref<36x54xf32, #tpu.memory_space<vmem>>, vector<1x54xf32>
    %859 = vector.shape_cast %858 : vector<1x54xf32> to vector<1x1x54xf32>
    %860 = vector.broadcast %859 : vector<1x1x54xf32> to vector<2x12x54xf32>
    %861 = arith.mulf %857, %860 : vector<2x12x54xf32>
    %862 = arith.addf %841, %861 : vector<2x12x54xf32>
    %c14_252 = arith.constant 14 : index
    %c0_253 = arith.constant 0 : index
    %863 = vector.load %arg9[%c14_252, %c0_253] : memref<36x54xf32, #tpu.memory_space<vmem>>, vector<1x54xf32>
    %864 = vector.shape_cast %863 : vector<1x54xf32> to vector<1x1x54xf32>
    %865 = vector.broadcast %864 : vector<1x1x54xf32> to vector<2x12x54xf32>
    %866 = arith.mulf %857, %865 : vector<2x12x54xf32>
    %867 = arith.addf %846, %866 : vector<2x12x54xf32>
    %c23_254 = arith.constant 23 : index
    %c0_255 = arith.constant 0 : index
    %868 = vector.load %arg9[%c23_254, %c0_255] : memref<36x54xf32, #tpu.memory_space<vmem>>, vector<1x54xf32>
    %869 = vector.shape_cast %868 : vector<1x54xf32> to vector<1x1x54xf32>
    %870 = vector.broadcast %869 : vector<1x1x54xf32> to vector<2x12x54xf32>
    %871 = arith.mulf %857, %870 : vector<2x12x54xf32>
    %872 = arith.addf %851, %871 : vector<2x12x54xf32>
    %c32_256 = arith.constant 32 : index
    %c0_257 = arith.constant 0 : index
    %873 = vector.load %arg9[%c32_256, %c0_257] : memref<36x54xf32, #tpu.memory_space<vmem>>, vector<1x54xf32>
    %874 = vector.shape_cast %873 : vector<1x54xf32> to vector<1x1x54xf32>
    %875 = vector.broadcast %874 : vector<1x1x54xf32> to vector<2x12x54xf32>
    %876 = arith.mulf %857, %875 : vector<2x12x54xf32>
    %877 = arith.addf %856, %876 : vector<2x12x54xf32>
    %878 = vector.extract_strided_slice %835 {offsets = [0, 2, 0], sizes = [2, 12, 54], strides = [1, 1, 1]} : vector<2x14x54xf32> to vector<2x12x54xf32>
    %c8_258 = arith.constant 8 : index
    %c0_259 = arith.constant 0 : index
    %879 = vector.load %arg9[%c8_258, %c0_259] : memref<36x54xf32, #tpu.memory_space<vmem>>, vector<1x54xf32>
    %880 = vector.shape_cast %879 : vector<1x54xf32> to vector<1x1x54xf32>
    %881 = vector.broadcast %880 : vector<1x1x54xf32> to vector<2x12x54xf32>
    %882 = arith.mulf %878, %881 : vector<2x12x54xf32>
    %883 = arith.addf %862, %882 : vector<2x12x54xf32>
    %c17_260 = arith.constant 17 : index
    %c0_261 = arith.constant 0 : index
    %884 = vector.load %arg9[%c17_260, %c0_261] : memref<36x54xf32, #tpu.memory_space<vmem>>, vector<1x54xf32>
    %885 = vector.shape_cast %884 : vector<1x54xf32> to vector<1x1x54xf32>
    %886 = vector.broadcast %885 : vector<1x1x54xf32> to vector<2x12x54xf32>
    %887 = arith.mulf %878, %886 : vector<2x12x54xf32>
    %888 = arith.addf %867, %887 : vector<2x12x54xf32>
    %c26_262 = arith.constant 26 : index
    %c0_263 = arith.constant 0 : index
    %889 = vector.load %arg9[%c26_262, %c0_263] : memref<36x54xf32, #tpu.memory_space<vmem>>, vector<1x54xf32>
    %890 = vector.shape_cast %889 : vector<1x54xf32> to vector<1x1x54xf32>
    %891 = vector.broadcast %890 : vector<1x1x54xf32> to vector<2x12x54xf32>
    %892 = arith.mulf %878, %891 : vector<2x12x54xf32>
    %893 = arith.addf %872, %892 : vector<2x12x54xf32>
    %c35_264 = arith.constant 35 : index
    %c0_265 = arith.constant 0 : index
    %894 = vector.load %arg9[%c35_264, %c0_265] : memref<36x54xf32, #tpu.memory_space<vmem>>, vector<1x54xf32>
    %895 = vector.shape_cast %894 : vector<1x54xf32> to vector<1x1x54xf32>
    %896 = vector.broadcast %895 : vector<1x1x54xf32> to vector<2x12x54xf32>
    %897 = arith.mulf %878, %896 : vector<2x12x54xf32>
    %898 = arith.addf %877, %897 : vector<2x12x54xf32>
    %899 = vector.extract_strided_slice %883 {offsets = [0, 0, 0], sizes = [2, 12, 12], strides = [1, 1, 1]} : vector<2x12x54xf32> to vector<2x12x12xf32>
    %c0_266 = arith.constant 0 : index
    %900 = memref.load %arg10[%c0_266] : memref<4xf32, #tpu.memory_space<smem>>
    %901 = vector.broadcast %900 : f32 to vector<2x12x12xf32>
    %902 = arith.addf %899, %901 : vector<2x12x12xf32>
    %903 = vector.extract_strided_slice %883 {offsets = [0, 0, 14], sizes = [2, 12, 12], strides = [1, 1, 1]} : vector<2x12x54xf32> to vector<2x12x12xf32>
    %904 = arith.addf %902, %903 : vector<2x12x12xf32>
    %905 = vector.extract_strided_slice %883 {offsets = [0, 0, 28], sizes = [2, 12, 12], strides = [1, 1, 1]} : vector<2x12x54xf32> to vector<2x12x12xf32>
    %906 = arith.addf %904, %905 : vector<2x12x12xf32>
    %907 = vector.extract_strided_slice %883 {offsets = [0, 0, 42], sizes = [2, 12, 12], strides = [1, 1, 1]} : vector<2x12x54xf32> to vector<2x12x12xf32>
    %908 = arith.addf %906, %907 : vector<2x12x12xf32>
    %909 = vector.shape_cast %908 : vector<2x12x12xf32> to vector<1x2x12x12xf32>
    %cst_267 = arith.constant dense<0.000000e+00> : vector<1xf32>
    %910 = vector.multi_reduction <add>, %909, %cst_267 [1, 2, 3] : vector<1x2x12x12xf32> to vector<1xf32>
    %911 = vector.shape_cast %910 : vector<1xf32> to vector<1x1x1x1xf32>
    %912 = vector.extract %911[0, 0, 0, 0] : f32 from vector<1x1x1x1xf32>
    %913 = arith.mulf %908, %908 : vector<2x12x12xf32>
    %914 = vector.shape_cast %913 : vector<2x12x12xf32> to vector<1x2x12x12xf32>
    %cst_268 = arith.constant dense<0.000000e+00> : vector<1xf32>
    %915 = vector.multi_reduction <add>, %914, %cst_268 [1, 2, 3] : vector<1x2x12x12xf32> to vector<1xf32>
    %916 = vector.shape_cast %915 : vector<1xf32> to vector<1x1x1x1xf32>
    %917 = vector.extract %916[0, 0, 0, 0] : f32 from vector<1x1x1x1xf32>
    %cst_269 = arith.constant 0.00347222225 : f32
    %918 = arith.mulf %912, %cst_269 : f32
    %cst_270 = arith.constant 0.00347222225 : f32
    %919 = arith.mulf %917, %cst_270 : f32
    %920 = arith.mulf %918, %918 : f32
    %921 = arith.subf %919, %920 : f32
    %c0_271 = arith.constant 0 : index
    %922 = memref.load %arg11[%c0_271] : memref<4xf32, #tpu.memory_space<smem>>
    %cst_272 = arith.constant 9.99999974E-6 : f32
    %923 = arith.addf %921, %cst_272 : f32
    %924 = math.rsqrt %923 : f32
    %925 = arith.mulf %922, %924 : f32
    %c0_273 = arith.constant 0 : index
    %926 = memref.load %arg12[%c0_273] : memref<4xf32, #tpu.memory_space<smem>>
    %927 = arith.mulf %918, %925 : f32
    %928 = arith.subf %926, %927 : f32
    %929 = vector.broadcast %925 : f32 to vector<2x12x12xf32>
    %930 = arith.mulf %908, %929 : vector<2x12x12xf32>
    %931 = vector.broadcast %928 : f32 to vector<2x12x12xf32>
    %932 = arith.addf %930, %931 : vector<2x12x12xf32>
    %cst_274 = arith.constant 0.000000e+00 : f32
    %933 = vector.broadcast %cst_274 : f32 to vector<2x12x12xf32>
    %934 = arith.maximumf %932, %933 : vector<2x12x12xf32>
    %935 = vector.extract_strided_slice %934 {offsets = [0, 0, 0], sizes = [2, 12, 11], strides = [1, 1, 1]} : vector<2x12x12xf32> to vector<2x12x11xf32>
    %936 = vector.extract_strided_slice %934 {offsets = [0, 0, 1], sizes = [2, 12, 11], strides = [1, 1, 1]} : vector<2x12x12xf32> to vector<2x12x11xf32>
    %937 = arith.maximumf %935, %936 : vector<2x12x11xf32>
    %938 = vector.extract_strided_slice %937 {offsets = [0, 0, 0], sizes = [2, 11, 11], strides = [1, 1, 1]} : vector<2x12x11xf32> to vector<2x11x11xf32>
    %939 = vector.extract_strided_slice %937 {offsets = [0, 1, 0], sizes = [2, 11, 11], strides = [1, 1, 1]} : vector<2x12x11xf32> to vector<2x11x11xf32>
    %940 = arith.maximumf %938, %939 : vector<2x11x11xf32>
    %941 = vector.extract_strided_slice %888 {offsets = [0, 0, 0], sizes = [2, 12, 12], strides = [1, 1, 1]} : vector<2x12x54xf32> to vector<2x12x12xf32>
    %c1_275 = arith.constant 1 : index
    %942 = memref.load %arg10[%c1_275] : memref<4xf32, #tpu.memory_space<smem>>
    %943 = vector.broadcast %942 : f32 to vector<2x12x12xf32>
    %944 = arith.addf %941, %943 : vector<2x12x12xf32>
    %945 = vector.extract_strided_slice %888 {offsets = [0, 0, 14], sizes = [2, 12, 12], strides = [1, 1, 1]} : vector<2x12x54xf32> to vector<2x12x12xf32>
    %946 = arith.addf %944, %945 : vector<2x12x12xf32>
    %947 = vector.extract_strided_slice %888 {offsets = [0, 0, 28], sizes = [2, 12, 12], strides = [1, 1, 1]} : vector<2x12x54xf32> to vector<2x12x12xf32>
    %948 = arith.addf %946, %947 : vector<2x12x12xf32>
    %949 = vector.extract_strided_slice %888 {offsets = [0, 0, 42], sizes = [2, 12, 12], strides = [1, 1, 1]} : vector<2x12x54xf32> to vector<2x12x12xf32>
    %950 = arith.addf %948, %949 : vector<2x12x12xf32>
    %951 = vector.shape_cast %950 : vector<2x12x12xf32> to vector<1x2x12x12xf32>
    %cst_276 = arith.constant dense<0.000000e+00> : vector<1xf32>
    %952 = vector.multi_reduction <add>, %951, %cst_276 [1, 2, 3] : vector<1x2x12x12xf32> to vector<1xf32>
    %953 = vector.shape_cast %952 : vector<1xf32> to vector<1x1x1x1xf32>
    %954 = vector.extract %953[0, 0, 0, 0] : f32 from vector<1x1x1x1xf32>
    %955 = arith.mulf %950, %950 : vector<2x12x12xf32>
    %956 = vector.shape_cast %955 : vector<2x12x12xf32> to vector<1x2x12x12xf32>
    %cst_277 = arith.constant dense<0.000000e+00> : vector<1xf32>
    %957 = vector.multi_reduction <add>, %956, %cst_277 [1, 2, 3] : vector<1x2x12x12xf32> to vector<1xf32>
    %958 = vector.shape_cast %957 : vector<1xf32> to vector<1x1x1x1xf32>
    %959 = vector.extract %958[0, 0, 0, 0] : f32 from vector<1x1x1x1xf32>
    %cst_278 = arith.constant 0.00347222225 : f32
    %960 = arith.mulf %954, %cst_278 : f32
    %cst_279 = arith.constant 0.00347222225 : f32
    %961 = arith.mulf %959, %cst_279 : f32
    %962 = arith.mulf %960, %960 : f32
    %963 = arith.subf %961, %962 : f32
    %c1_280 = arith.constant 1 : index
    %964 = memref.load %arg11[%c1_280] : memref<4xf32, #tpu.memory_space<smem>>
    %cst_281 = arith.constant 9.99999974E-6 : f32
    %965 = arith.addf %963, %cst_281 : f32
    %966 = math.rsqrt %965 : f32
    %967 = arith.mulf %964, %966 : f32
    %c1_282 = arith.constant 1 : index
    %968 = memref.load %arg12[%c1_282] : memref<4xf32, #tpu.memory_space<smem>>
    %969 = arith.mulf %960, %967 : f32
    %970 = arith.subf %968, %969 : f32
    %971 = vector.broadcast %967 : f32 to vector<2x12x12xf32>
    %972 = arith.mulf %950, %971 : vector<2x12x12xf32>
    %973 = vector.broadcast %970 : f32 to vector<2x12x12xf32>
    %974 = arith.addf %972, %973 : vector<2x12x12xf32>
    %cst_283 = arith.constant 0.000000e+00 : f32
    %975 = vector.broadcast %cst_283 : f32 to vector<2x12x12xf32>
    %976 = arith.maximumf %974, %975 : vector<2x12x12xf32>
    %977 = vector.extract_strided_slice %976 {offsets = [0, 0, 0], sizes = [2, 12, 11], strides = [1, 1, 1]} : vector<2x12x12xf32> to vector<2x12x11xf32>
    %978 = vector.extract_strided_slice %976 {offsets = [0, 0, 1], sizes = [2, 12, 11], strides = [1, 1, 1]} : vector<2x12x12xf32> to vector<2x12x11xf32>
    %979 = arith.maximumf %977, %978 : vector<2x12x11xf32>
    %980 = vector.extract_strided_slice %979 {offsets = [0, 0, 0], sizes = [2, 11, 11], strides = [1, 1, 1]} : vector<2x12x11xf32> to vector<2x11x11xf32>
    %981 = vector.extract_strided_slice %979 {offsets = [0, 1, 0], sizes = [2, 11, 11], strides = [1, 1, 1]} : vector<2x12x11xf32> to vector<2x11x11xf32>
    %982 = arith.maximumf %980, %981 : vector<2x11x11xf32>
    %983 = vector.extract_strided_slice %893 {offsets = [0, 0, 0], sizes = [2, 12, 12], strides = [1, 1, 1]} : vector<2x12x54xf32> to vector<2x12x12xf32>
    %c2_284 = arith.constant 2 : index
    %984 = memref.load %arg10[%c2_284] : memref<4xf32, #tpu.memory_space<smem>>
    %985 = vector.broadcast %984 : f32 to vector<2x12x12xf32>
    %986 = arith.addf %983, %985 : vector<2x12x12xf32>
    %987 = vector.extract_strided_slice %893 {offsets = [0, 0, 14], sizes = [2, 12, 12], strides = [1, 1, 1]} : vector<2x12x54xf32> to vector<2x12x12xf32>
    %988 = arith.addf %986, %987 : vector<2x12x12xf32>
    %989 = vector.extract_strided_slice %893 {offsets = [0, 0, 28], sizes = [2, 12, 12], strides = [1, 1, 1]} : vector<2x12x54xf32> to vector<2x12x12xf32>
    %990 = arith.addf %988, %989 : vector<2x12x12xf32>
    %991 = vector.extract_strided_slice %893 {offsets = [0, 0, 42], sizes = [2, 12, 12], strides = [1, 1, 1]} : vector<2x12x54xf32> to vector<2x12x12xf32>
    %992 = arith.addf %990, %991 : vector<2x12x12xf32>
    %993 = vector.shape_cast %992 : vector<2x12x12xf32> to vector<1x2x12x12xf32>
    %cst_285 = arith.constant dense<0.000000e+00> : vector<1xf32>
    %994 = vector.multi_reduction <add>, %993, %cst_285 [1, 2, 3] : vector<1x2x12x12xf32> to vector<1xf32>
    %995 = vector.shape_cast %994 : vector<1xf32> to vector<1x1x1x1xf32>
    %996 = vector.extract %995[0, 0, 0, 0] : f32 from vector<1x1x1x1xf32>
    %997 = arith.mulf %992, %992 : vector<2x12x12xf32>
    %998 = vector.shape_cast %997 : vector<2x12x12xf32> to vector<1x2x12x12xf32>
    %cst_286 = arith.constant dense<0.000000e+00> : vector<1xf32>
    %999 = vector.multi_reduction <add>, %998, %cst_286 [1, 2, 3] : vector<1x2x12x12xf32> to vector<1xf32>
    %1000 = vector.shape_cast %999 : vector<1xf32> to vector<1x1x1x1xf32>
    %1001 = vector.extract %1000[0, 0, 0, 0] : f32 from vector<1x1x1x1xf32>
    %cst_287 = arith.constant 0.00347222225 : f32
    %1002 = arith.mulf %996, %cst_287 : f32
    %cst_288 = arith.constant 0.00347222225 : f32
    %1003 = arith.mulf %1001, %cst_288 : f32
    %1004 = arith.mulf %1002, %1002 : f32
    %1005 = arith.subf %1003, %1004 : f32
    %c2_289 = arith.constant 2 : index
    %1006 = memref.load %arg11[%c2_289] : memref<4xf32, #tpu.memory_space<smem>>
    %cst_290 = arith.constant 9.99999974E-6 : f32
    %1007 = arith.addf %1005, %cst_290 : f32
    %1008 = math.rsqrt %1007 : f32
    %1009 = arith.mulf %1006, %1008 : f32
    %c2_291 = arith.constant 2 : index
    %1010 = memref.load %arg12[%c2_291] : memref<4xf32, #tpu.memory_space<smem>>
    %1011 = arith.mulf %1002, %1009 : f32
    %1012 = arith.subf %1010, %1011 : f32
    %1013 = vector.broadcast %1009 : f32 to vector<2x12x12xf32>
    %1014 = arith.mulf %992, %1013 : vector<2x12x12xf32>
    %1015 = vector.broadcast %1012 : f32 to vector<2x12x12xf32>
    %1016 = arith.addf %1014, %1015 : vector<2x12x12xf32>
    %cst_292 = arith.constant 0.000000e+00 : f32
    %1017 = vector.broadcast %cst_292 : f32 to vector<2x12x12xf32>
    %1018 = arith.maximumf %1016, %1017 : vector<2x12x12xf32>
    %1019 = vector.extract_strided_slice %1018 {offsets = [0, 0, 0], sizes = [2, 12, 11], strides = [1, 1, 1]} : vector<2x12x12xf32> to vector<2x12x11xf32>
    %1020 = vector.extract_strided_slice %1018 {offsets = [0, 0, 1], sizes = [2, 12, 11], strides = [1, 1, 1]} : vector<2x12x12xf32> to vector<2x12x11xf32>
    %1021 = arith.maximumf %1019, %1020 : vector<2x12x11xf32>
    %1022 = vector.extract_strided_slice %1021 {offsets = [0, 0, 0], sizes = [2, 11, 11], strides = [1, 1, 1]} : vector<2x12x11xf32> to vector<2x11x11xf32>
    %1023 = vector.extract_strided_slice %1021 {offsets = [0, 1, 0], sizes = [2, 11, 11], strides = [1, 1, 1]} : vector<2x12x11xf32> to vector<2x11x11xf32>
    %1024 = arith.maximumf %1022, %1023 : vector<2x11x11xf32>
    %1025 = vector.extract_strided_slice %898 {offsets = [0, 0, 0], sizes = [2, 12, 12], strides = [1, 1, 1]} : vector<2x12x54xf32> to vector<2x12x12xf32>
    %c3_293 = arith.constant 3 : index
    %1026 = memref.load %arg10[%c3_293] : memref<4xf32, #tpu.memory_space<smem>>
    %1027 = vector.broadcast %1026 : f32 to vector<2x12x12xf32>
    %1028 = arith.addf %1025, %1027 : vector<2x12x12xf32>
    %1029 = vector.extract_strided_slice %898 {offsets = [0, 0, 14], sizes = [2, 12, 12], strides = [1, 1, 1]} : vector<2x12x54xf32> to vector<2x12x12xf32>
    %1030 = arith.addf %1028, %1029 : vector<2x12x12xf32>
    %1031 = vector.extract_strided_slice %898 {offsets = [0, 0, 28], sizes = [2, 12, 12], strides = [1, 1, 1]} : vector<2x12x54xf32> to vector<2x12x12xf32>
    %1032 = arith.addf %1030, %1031 : vector<2x12x12xf32>
    %1033 = vector.extract_strided_slice %898 {offsets = [0, 0, 42], sizes = [2, 12, 12], strides = [1, 1, 1]} : vector<2x12x54xf32> to vector<2x12x12xf32>
    %1034 = arith.addf %1032, %1033 : vector<2x12x12xf32>
    %1035 = vector.shape_cast %1034 : vector<2x12x12xf32> to vector<1x2x12x12xf32>
    %cst_294 = arith.constant dense<0.000000e+00> : vector<1xf32>
    %1036 = vector.multi_reduction <add>, %1035, %cst_294 [1, 2, 3] : vector<1x2x12x12xf32> to vector<1xf32>
    %1037 = vector.shape_cast %1036 : vector<1xf32> to vector<1x1x1x1xf32>
    %1038 = vector.extract %1037[0, 0, 0, 0] : f32 from vector<1x1x1x1xf32>
    %1039 = arith.mulf %1034, %1034 : vector<2x12x12xf32>
    %1040 = vector.shape_cast %1039 : vector<2x12x12xf32> to vector<1x2x12x12xf32>
    %cst_295 = arith.constant dense<0.000000e+00> : vector<1xf32>
    %1041 = vector.multi_reduction <add>, %1040, %cst_295 [1, 2, 3] : vector<1x2x12x12xf32> to vector<1xf32>
    %1042 = vector.shape_cast %1041 : vector<1xf32> to vector<1x1x1x1xf32>
    %1043 = vector.extract %1042[0, 0, 0, 0] : f32 from vector<1x1x1x1xf32>
    %cst_296 = arith.constant 0.00347222225 : f32
    %1044 = arith.mulf %1038, %cst_296 : f32
    %cst_297 = arith.constant 0.00347222225 : f32
    %1045 = arith.mulf %1043, %cst_297 : f32
    %1046 = arith.mulf %1044, %1044 : f32
    %1047 = arith.subf %1045, %1046 : f32
    %c3_298 = arith.constant 3 : index
    %1048 = memref.load %arg11[%c3_298] : memref<4xf32, #tpu.memory_space<smem>>
    %cst_299 = arith.constant 9.99999974E-6 : f32
    %1049 = arith.addf %1047, %cst_299 : f32
    %1050 = math.rsqrt %1049 : f32
    %1051 = arith.mulf %1048, %1050 : f32
    %c3_300 = arith.constant 3 : index
    %1052 = memref.load %arg12[%c3_300] : memref<4xf32, #tpu.memory_space<smem>>
    %1053 = arith.mulf %1044, %1051 : f32
    %1054 = arith.subf %1052, %1053 : f32
    %1055 = vector.broadcast %1051 : f32 to vector<2x12x12xf32>
    %1056 = arith.mulf %1034, %1055 : vector<2x12x12xf32>
    %1057 = vector.broadcast %1054 : f32 to vector<2x12x12xf32>
    %1058 = arith.addf %1056, %1057 : vector<2x12x12xf32>
    %cst_301 = arith.constant 0.000000e+00 : f32
    %1059 = vector.broadcast %cst_301 : f32 to vector<2x12x12xf32>
    %1060 = arith.maximumf %1058, %1059 : vector<2x12x12xf32>
    %1061 = vector.extract_strided_slice %1060 {offsets = [0, 0, 0], sizes = [2, 12, 11], strides = [1, 1, 1]} : vector<2x12x12xf32> to vector<2x12x11xf32>
    %1062 = vector.extract_strided_slice %1060 {offsets = [0, 0, 1], sizes = [2, 12, 11], strides = [1, 1, 1]} : vector<2x12x12xf32> to vector<2x12x11xf32>
    %1063 = arith.maximumf %1061, %1062 : vector<2x12x11xf32>
    %1064 = vector.extract_strided_slice %1063 {offsets = [0, 0, 0], sizes = [2, 11, 11], strides = [1, 1, 1]} : vector<2x12x11xf32> to vector<2x11x11xf32>
    %1065 = vector.extract_strided_slice %1063 {offsets = [0, 1, 0], sizes = [2, 11, 11], strides = [1, 1, 1]} : vector<2x12x11xf32> to vector<2x11x11xf32>
    %1066 = arith.maximumf %1064, %1065 : vector<2x11x11xf32>
    %1067 = tpu.concatenate %940, %982, %1024, %1066 in 2 : vector<2x11x11xf32>, vector<2x11x11xf32>, vector<2x11x11xf32>, vector<2x11x11xf32> -> vector<2x11x44xf32>
    %cst_302 = arith.constant 0.000000e+00 : f32
    %1068 = vector.broadcast %cst_302 : f32 to vector<2x9x42xf32>
    %cst_303 = arith.constant 0.000000e+00 : f32
    %1069 = vector.broadcast %cst_303 : f32 to vector<2x9x42xf32>
    %cst_304 = arith.constant 0.000000e+00 : f32
    %1070 = vector.broadcast %cst_304 : f32 to vector<2x9x42xf32>
    %cst_305 = arith.constant 0.000000e+00 : f32
    %1071 = vector.broadcast %cst_305 : f32 to vector<2x9x42xf32>
    %1072 = vector.extract_strided_slice %1067 {offsets = [0, 0, 0], sizes = [2, 11, 42], strides = [1, 1, 1]} : vector<2x11x44xf32> to vector<2x11x42xf32>
    %1073 = vector.extract_strided_slice %1072 {offsets = [0, 0, 0], sizes = [2, 9, 42], strides = [1, 1, 1]} : vector<2x11x42xf32> to vector<2x9x42xf32>
    %c0_306 = arith.constant 0 : index
    %c0_307 = arith.constant 0 : index
    %1074 = vector.load %arg13[%c0_306, %c0_307] : memref<36x42xf32, #tpu.memory_space<vmem>>, vector<1x42xf32>
    %1075 = vector.shape_cast %1074 : vector<1x42xf32> to vector<1x1x42xf32>
    %1076 = vector.broadcast %1075 : vector<1x1x42xf32> to vector<2x9x42xf32>
    %1077 = arith.mulf %1073, %1076 : vector<2x9x42xf32>
    %1078 = arith.addf %1068, %1077 : vector<2x9x42xf32>
    %c9_308 = arith.constant 9 : index
    %c0_309 = arith.constant 0 : index
    %1079 = vector.load %arg13[%c9_308, %c0_309] : memref<36x42xf32, #tpu.memory_space<vmem>>, vector<1x42xf32>
    %1080 = vector.shape_cast %1079 : vector<1x42xf32> to vector<1x1x42xf32>
    %1081 = vector.broadcast %1080 : vector<1x1x42xf32> to vector<2x9x42xf32>
    %1082 = arith.mulf %1073, %1081 : vector<2x9x42xf32>
    %1083 = arith.addf %1069, %1082 : vector<2x9x42xf32>
    %c18_310 = arith.constant 18 : index
    %c0_311 = arith.constant 0 : index
    %1084 = vector.load %arg13[%c18_310, %c0_311] : memref<36x42xf32, #tpu.memory_space<vmem>>, vector<1x42xf32>
    %1085 = vector.shape_cast %1084 : vector<1x42xf32> to vector<1x1x42xf32>
    %1086 = vector.broadcast %1085 : vector<1x1x42xf32> to vector<2x9x42xf32>
    %1087 = arith.mulf %1073, %1086 : vector<2x9x42xf32>
    %1088 = arith.addf %1070, %1087 : vector<2x9x42xf32>
    %c27_312 = arith.constant 27 : index
    %c0_313 = arith.constant 0 : index
    %1089 = vector.load %arg13[%c27_312, %c0_313] : memref<36x42xf32, #tpu.memory_space<vmem>>, vector<1x42xf32>
    %1090 = vector.shape_cast %1089 : vector<1x42xf32> to vector<1x1x42xf32>
    %1091 = vector.broadcast %1090 : vector<1x1x42xf32> to vector<2x9x42xf32>
    %1092 = arith.mulf %1073, %1091 : vector<2x9x42xf32>
    %1093 = arith.addf %1071, %1092 : vector<2x9x42xf32>
    %1094 = vector.extract_strided_slice %1072 {offsets = [0, 1, 0], sizes = [2, 9, 42], strides = [1, 1, 1]} : vector<2x11x42xf32> to vector<2x9x42xf32>
    %c3_314 = arith.constant 3 : index
    %c0_315 = arith.constant 0 : index
    %1095 = vector.load %arg13[%c3_314, %c0_315] : memref<36x42xf32, #tpu.memory_space<vmem>>, vector<1x42xf32>
    %1096 = vector.shape_cast %1095 : vector<1x42xf32> to vector<1x1x42xf32>
    %1097 = vector.broadcast %1096 : vector<1x1x42xf32> to vector<2x9x42xf32>
    %1098 = arith.mulf %1094, %1097 : vector<2x9x42xf32>
    %1099 = arith.addf %1078, %1098 : vector<2x9x42xf32>
    %c12_316 = arith.constant 12 : index
    %c0_317 = arith.constant 0 : index
    %1100 = vector.load %arg13[%c12_316, %c0_317] : memref<36x42xf32, #tpu.memory_space<vmem>>, vector<1x42xf32>
    %1101 = vector.shape_cast %1100 : vector<1x42xf32> to vector<1x1x42xf32>
    %1102 = vector.broadcast %1101 : vector<1x1x42xf32> to vector<2x9x42xf32>
    %1103 = arith.mulf %1094, %1102 : vector<2x9x42xf32>
    %1104 = arith.addf %1083, %1103 : vector<2x9x42xf32>
    %c21_318 = arith.constant 21 : index
    %c0_319 = arith.constant 0 : index
    %1105 = vector.load %arg13[%c21_318, %c0_319] : memref<36x42xf32, #tpu.memory_space<vmem>>, vector<1x42xf32>
    %1106 = vector.shape_cast %1105 : vector<1x42xf32> to vector<1x1x42xf32>
    %1107 = vector.broadcast %1106 : vector<1x1x42xf32> to vector<2x9x42xf32>
    %1108 = arith.mulf %1094, %1107 : vector<2x9x42xf32>
    %1109 = arith.addf %1088, %1108 : vector<2x9x42xf32>
    %c30_320 = arith.constant 30 : index
    %c0_321 = arith.constant 0 : index
    %1110 = vector.load %arg13[%c30_320, %c0_321] : memref<36x42xf32, #tpu.memory_space<vmem>>, vector<1x42xf32>
    %1111 = vector.shape_cast %1110 : vector<1x42xf32> to vector<1x1x42xf32>
    %1112 = vector.broadcast %1111 : vector<1x1x42xf32> to vector<2x9x42xf32>
    %1113 = arith.mulf %1094, %1112 : vector<2x9x42xf32>
    %1114 = arith.addf %1093, %1113 : vector<2x9x42xf32>
    %1115 = vector.extract_strided_slice %1072 {offsets = [0, 2, 0], sizes = [2, 9, 42], strides = [1, 1, 1]} : vector<2x11x42xf32> to vector<2x9x42xf32>
    %c6_322 = arith.constant 6 : index
    %c0_323 = arith.constant 0 : index
    %1116 = vector.load %arg13[%c6_322, %c0_323] : memref<36x42xf32, #tpu.memory_space<vmem>>, vector<1x42xf32>
    %1117 = vector.shape_cast %1116 : vector<1x42xf32> to vector<1x1x42xf32>
    %1118 = vector.broadcast %1117 : vector<1x1x42xf32> to vector<2x9x42xf32>
    %1119 = arith.mulf %1115, %1118 : vector<2x9x42xf32>
    %1120 = arith.addf %1099, %1119 : vector<2x9x42xf32>
    %c15_324 = arith.constant 15 : index
    %c0_325 = arith.constant 0 : index
    %1121 = vector.load %arg13[%c15_324, %c0_325] : memref<36x42xf32, #tpu.memory_space<vmem>>, vector<1x42xf32>
    %1122 = vector.shape_cast %1121 : vector<1x42xf32> to vector<1x1x42xf32>
    %1123 = vector.broadcast %1122 : vector<1x1x42xf32> to vector<2x9x42xf32>
    %1124 = arith.mulf %1115, %1123 : vector<2x9x42xf32>
    %1125 = arith.addf %1104, %1124 : vector<2x9x42xf32>
    %c24_326 = arith.constant 24 : index
    %c0_327 = arith.constant 0 : index
    %1126 = vector.load %arg13[%c24_326, %c0_327] : memref<36x42xf32, #tpu.memory_space<vmem>>, vector<1x42xf32>
    %1127 = vector.shape_cast %1126 : vector<1x42xf32> to vector<1x1x42xf32>
    %1128 = vector.broadcast %1127 : vector<1x1x42xf32> to vector<2x9x42xf32>
    %1129 = arith.mulf %1115, %1128 : vector<2x9x42xf32>
    %1130 = arith.addf %1109, %1129 : vector<2x9x42xf32>
    %c33_328 = arith.constant 33 : index
    %c0_329 = arith.constant 0 : index
    %1131 = vector.load %arg13[%c33_328, %c0_329] : memref<36x42xf32, #tpu.memory_space<vmem>>, vector<1x42xf32>
    %1132 = vector.shape_cast %1131 : vector<1x42xf32> to vector<1x1x42xf32>
    %1133 = vector.broadcast %1132 : vector<1x1x42xf32> to vector<2x9x42xf32>
    %1134 = arith.mulf %1115, %1133 : vector<2x9x42xf32>
    %1135 = arith.addf %1114, %1134 : vector<2x9x42xf32>
    %1136 = vector.extract_strided_slice %1067 {offsets = [0, 0, 1], sizes = [2, 11, 42], strides = [1, 1, 1]} : vector<2x11x44xf32> to vector<2x11x42xf32>
    %1137 = vector.extract_strided_slice %1136 {offsets = [0, 0, 0], sizes = [2, 9, 42], strides = [1, 1, 1]} : vector<2x11x42xf32> to vector<2x9x42xf32>
    %c1_330 = arith.constant 1 : index
    %c0_331 = arith.constant 0 : index
    %1138 = vector.load %arg13[%c1_330, %c0_331] : memref<36x42xf32, #tpu.memory_space<vmem>>, vector<1x42xf32>
    %1139 = vector.shape_cast %1138 : vector<1x42xf32> to vector<1x1x42xf32>
    %1140 = vector.broadcast %1139 : vector<1x1x42xf32> to vector<2x9x42xf32>
    %1141 = arith.mulf %1137, %1140 : vector<2x9x42xf32>
    %1142 = arith.addf %1120, %1141 : vector<2x9x42xf32>
    %c10_332 = arith.constant 10 : index
    %c0_333 = arith.constant 0 : index
    %1143 = vector.load %arg13[%c10_332, %c0_333] : memref<36x42xf32, #tpu.memory_space<vmem>>, vector<1x42xf32>
    %1144 = vector.shape_cast %1143 : vector<1x42xf32> to vector<1x1x42xf32>
    %1145 = vector.broadcast %1144 : vector<1x1x42xf32> to vector<2x9x42xf32>
    %1146 = arith.mulf %1137, %1145 : vector<2x9x42xf32>
    %1147 = arith.addf %1125, %1146 : vector<2x9x42xf32>
    %c19_334 = arith.constant 19 : index
    %c0_335 = arith.constant 0 : index
    %1148 = vector.load %arg13[%c19_334, %c0_335] : memref<36x42xf32, #tpu.memory_space<vmem>>, vector<1x42xf32>
    %1149 = vector.shape_cast %1148 : vector<1x42xf32> to vector<1x1x42xf32>
    %1150 = vector.broadcast %1149 : vector<1x1x42xf32> to vector<2x9x42xf32>
    %1151 = arith.mulf %1137, %1150 : vector<2x9x42xf32>
    %1152 = arith.addf %1130, %1151 : vector<2x9x42xf32>
    %c28_336 = arith.constant 28 : index
    %c0_337 = arith.constant 0 : index
    %1153 = vector.load %arg13[%c28_336, %c0_337] : memref<36x42xf32, #tpu.memory_space<vmem>>, vector<1x42xf32>
    %1154 = vector.shape_cast %1153 : vector<1x42xf32> to vector<1x1x42xf32>
    %1155 = vector.broadcast %1154 : vector<1x1x42xf32> to vector<2x9x42xf32>
    %1156 = arith.mulf %1137, %1155 : vector<2x9x42xf32>
    %1157 = arith.addf %1135, %1156 : vector<2x9x42xf32>
    %1158 = vector.extract_strided_slice %1136 {offsets = [0, 1, 0], sizes = [2, 9, 42], strides = [1, 1, 1]} : vector<2x11x42xf32> to vector<2x9x42xf32>
    %c4_338 = arith.constant 4 : index
    %c0_339 = arith.constant 0 : index
    %1159 = vector.load %arg13[%c4_338, %c0_339] : memref<36x42xf32, #tpu.memory_space<vmem>>, vector<1x42xf32>
    %1160 = vector.shape_cast %1159 : vector<1x42xf32> to vector<1x1x42xf32>
    %1161 = vector.broadcast %1160 : vector<1x1x42xf32> to vector<2x9x42xf32>
    %1162 = arith.mulf %1158, %1161 : vector<2x9x42xf32>
    %1163 = arith.addf %1142, %1162 : vector<2x9x42xf32>
    %c13_340 = arith.constant 13 : index
    %c0_341 = arith.constant 0 : index
    %1164 = vector.load %arg13[%c13_340, %c0_341] : memref<36x42xf32, #tpu.memory_space<vmem>>, vector<1x42xf32>
    %1165 = vector.shape_cast %1164 : vector<1x42xf32> to vector<1x1x42xf32>
    %1166 = vector.broadcast %1165 : vector<1x1x42xf32> to vector<2x9x42xf32>
    %1167 = arith.mulf %1158, %1166 : vector<2x9x42xf32>
    %1168 = arith.addf %1147, %1167 : vector<2x9x42xf32>
    %c22_342 = arith.constant 22 : index
    %c0_343 = arith.constant 0 : index
    %1169 = vector.load %arg13[%c22_342, %c0_343] : memref<36x42xf32, #tpu.memory_space<vmem>>, vector<1x42xf32>
    %1170 = vector.shape_cast %1169 : vector<1x42xf32> to vector<1x1x42xf32>
    %1171 = vector.broadcast %1170 : vector<1x1x42xf32> to vector<2x9x42xf32>
    %1172 = arith.mulf %1158, %1171 : vector<2x9x42xf32>
    %1173 = arith.addf %1152, %1172 : vector<2x9x42xf32>
    %c31_344 = arith.constant 31 : index
    %c0_345 = arith.constant 0 : index
    %1174 = vector.load %arg13[%c31_344, %c0_345] : memref<36x42xf32, #tpu.memory_space<vmem>>, vector<1x42xf32>
    %1175 = vector.shape_cast %1174 : vector<1x42xf32> to vector<1x1x42xf32>
    %1176 = vector.broadcast %1175 : vector<1x1x42xf32> to vector<2x9x42xf32>
    %1177 = arith.mulf %1158, %1176 : vector<2x9x42xf32>
    %1178 = arith.addf %1157, %1177 : vector<2x9x42xf32>
    %1179 = vector.extract_strided_slice %1136 {offsets = [0, 2, 0], sizes = [2, 9, 42], strides = [1, 1, 1]} : vector<2x11x42xf32> to vector<2x9x42xf32>
    %c7_346 = arith.constant 7 : index
    %c0_347 = arith.constant 0 : index
    %1180 = vector.load %arg13[%c7_346, %c0_347] : memref<36x42xf32, #tpu.memory_space<vmem>>, vector<1x42xf32>
    %1181 = vector.shape_cast %1180 : vector<1x42xf32> to vector<1x1x42xf32>
    %1182 = vector.broadcast %1181 : vector<1x1x42xf32> to vector<2x9x42xf32>
    %1183 = arith.mulf %1179, %1182 : vector<2x9x42xf32>
    %1184 = arith.addf %1163, %1183 : vector<2x9x42xf32>
    %c16_348 = arith.constant 16 : index
    %c0_349 = arith.constant 0 : index
    %1185 = vector.load %arg13[%c16_348, %c0_349] : memref<36x42xf32, #tpu.memory_space<vmem>>, vector<1x42xf32>
    %1186 = vector.shape_cast %1185 : vector<1x42xf32> to vector<1x1x42xf32>
    %1187 = vector.broadcast %1186 : vector<1x1x42xf32> to vector<2x9x42xf32>
    %1188 = arith.mulf %1179, %1187 : vector<2x9x42xf32>
    %1189 = arith.addf %1168, %1188 : vector<2x9x42xf32>
    %c25_350 = arith.constant 25 : index
    %c0_351 = arith.constant 0 : index
    %1190 = vector.load %arg13[%c25_350, %c0_351] : memref<36x42xf32, #tpu.memory_space<vmem>>, vector<1x42xf32>
    %1191 = vector.shape_cast %1190 : vector<1x42xf32> to vector<1x1x42xf32>
    %1192 = vector.broadcast %1191 : vector<1x1x42xf32> to vector<2x9x42xf32>
    %1193 = arith.mulf %1179, %1192 : vector<2x9x42xf32>
    %1194 = arith.addf %1173, %1193 : vector<2x9x42xf32>
    %c34_352 = arith.constant 34 : index
    %c0_353 = arith.constant 0 : index
    %1195 = vector.load %arg13[%c34_352, %c0_353] : memref<36x42xf32, #tpu.memory_space<vmem>>, vector<1x42xf32>
    %1196 = vector.shape_cast %1195 : vector<1x42xf32> to vector<1x1x42xf32>
    %1197 = vector.broadcast %1196 : vector<1x1x42xf32> to vector<2x9x42xf32>
    %1198 = arith.mulf %1179, %1197 : vector<2x9x42xf32>
    %1199 = arith.addf %1178, %1198 : vector<2x9x42xf32>
    %1200 = vector.extract_strided_slice %1067 {offsets = [0, 0, 2], sizes = [2, 11, 42], strides = [1, 1, 1]} : vector<2x11x44xf32> to vector<2x11x42xf32>
    %1201 = vector.extract_strided_slice %1200 {offsets = [0, 0, 0], sizes = [2, 9, 42], strides = [1, 1, 1]} : vector<2x11x42xf32> to vector<2x9x42xf32>
    %c2_354 = arith.constant 2 : index
    %c0_355 = arith.constant 0 : index
    %1202 = vector.load %arg13[%c2_354, %c0_355] : memref<36x42xf32, #tpu.memory_space<vmem>>, vector<1x42xf32>
    %1203 = vector.shape_cast %1202 : vector<1x42xf32> to vector<1x1x42xf32>
    %1204 = vector.broadcast %1203 : vector<1x1x42xf32> to vector<2x9x42xf32>
    %1205 = arith.mulf %1201, %1204 : vector<2x9x42xf32>
    %1206 = arith.addf %1184, %1205 : vector<2x9x42xf32>
    %c11_356 = arith.constant 11 : index
    %c0_357 = arith.constant 0 : index
    %1207 = vector.load %arg13[%c11_356, %c0_357] : memref<36x42xf32, #tpu.memory_space<vmem>>, vector<1x42xf32>
    %1208 = vector.shape_cast %1207 : vector<1x42xf32> to vector<1x1x42xf32>
    %1209 = vector.broadcast %1208 : vector<1x1x42xf32> to vector<2x9x42xf32>
    %1210 = arith.mulf %1201, %1209 : vector<2x9x42xf32>
    %1211 = arith.addf %1189, %1210 : vector<2x9x42xf32>
    %c20_358 = arith.constant 20 : index
    %c0_359 = arith.constant 0 : index
    %1212 = vector.load %arg13[%c20_358, %c0_359] : memref<36x42xf32, #tpu.memory_space<vmem>>, vector<1x42xf32>
    %1213 = vector.shape_cast %1212 : vector<1x42xf32> to vector<1x1x42xf32>
    %1214 = vector.broadcast %1213 : vector<1x1x42xf32> to vector<2x9x42xf32>
    %1215 = arith.mulf %1201, %1214 : vector<2x9x42xf32>
    %1216 = arith.addf %1194, %1215 : vector<2x9x42xf32>
    %c29_360 = arith.constant 29 : index
    %c0_361 = arith.constant 0 : index
    %1217 = vector.load %arg13[%c29_360, %c0_361] : memref<36x42xf32, #tpu.memory_space<vmem>>, vector<1x42xf32>
    %1218 = vector.shape_cast %1217 : vector<1x42xf32> to vector<1x1x42xf32>
    %1219 = vector.broadcast %1218 : vector<1x1x42xf32> to vector<2x9x42xf32>
    %1220 = arith.mulf %1201, %1219 : vector<2x9x42xf32>
    %1221 = arith.addf %1199, %1220 : vector<2x9x42xf32>
    %1222 = vector.extract_strided_slice %1200 {offsets = [0, 1, 0], sizes = [2, 9, 42], strides = [1, 1, 1]} : vector<2x11x42xf32> to vector<2x9x42xf32>
    %c5_362 = arith.constant 5 : index
    %c0_363 = arith.constant 0 : index
    %1223 = vector.load %arg13[%c5_362, %c0_363] : memref<36x42xf32, #tpu.memory_space<vmem>>, vector<1x42xf32>
    %1224 = vector.shape_cast %1223 : vector<1x42xf32> to vector<1x1x42xf32>
    %1225 = vector.broadcast %1224 : vector<1x1x42xf32> to vector<2x9x42xf32>
    %1226 = arith.mulf %1222, %1225 : vector<2x9x42xf32>
    %1227 = arith.addf %1206, %1226 : vector<2x9x42xf32>
    %c14_364 = arith.constant 14 : index
    %c0_365 = arith.constant 0 : index
    %1228 = vector.load %arg13[%c14_364, %c0_365] : memref<36x42xf32, #tpu.memory_space<vmem>>, vector<1x42xf32>
    %1229 = vector.shape_cast %1228 : vector<1x42xf32> to vector<1x1x42xf32>
    %1230 = vector.broadcast %1229 : vector<1x1x42xf32> to vector<2x9x42xf32>
    %1231 = arith.mulf %1222, %1230 : vector<2x9x42xf32>
    %1232 = arith.addf %1211, %1231 : vector<2x9x42xf32>
    %c23_366 = arith.constant 23 : index
    %c0_367 = arith.constant 0 : index
    %1233 = vector.load %arg13[%c23_366, %c0_367] : memref<36x42xf32, #tpu.memory_space<vmem>>, vector<1x42xf32>
    %1234 = vector.shape_cast %1233 : vector<1x42xf32> to vector<1x1x42xf32>
    %1235 = vector.broadcast %1234 : vector<1x1x42xf32> to vector<2x9x42xf32>
    %1236 = arith.mulf %1222, %1235 : vector<2x9x42xf32>
    %1237 = arith.addf %1216, %1236 : vector<2x9x42xf32>
    %c32_368 = arith.constant 32 : index
    %c0_369 = arith.constant 0 : index
    %1238 = vector.load %arg13[%c32_368, %c0_369] : memref<36x42xf32, #tpu.memory_space<vmem>>, vector<1x42xf32>
    %1239 = vector.shape_cast %1238 : vector<1x42xf32> to vector<1x1x42xf32>
    %1240 = vector.broadcast %1239 : vector<1x1x42xf32> to vector<2x9x42xf32>
    %1241 = arith.mulf %1222, %1240 : vector<2x9x42xf32>
    %1242 = arith.addf %1221, %1241 : vector<2x9x42xf32>
    %1243 = vector.extract_strided_slice %1200 {offsets = [0, 2, 0], sizes = [2, 9, 42], strides = [1, 1, 1]} : vector<2x11x42xf32> to vector<2x9x42xf32>
    %c8_370 = arith.constant 8 : index
    %c0_371 = arith.constant 0 : index
    %1244 = vector.load %arg13[%c8_370, %c0_371] : memref<36x42xf32, #tpu.memory_space<vmem>>, vector<1x42xf32>
    %1245 = vector.shape_cast %1244 : vector<1x42xf32> to vector<1x1x42xf32>
    %1246 = vector.broadcast %1245 : vector<1x1x42xf32> to vector<2x9x42xf32>
    %1247 = arith.mulf %1243, %1246 : vector<2x9x42xf32>
    %1248 = arith.addf %1227, %1247 : vector<2x9x42xf32>
    %c17_372 = arith.constant 17 : index
    %c0_373 = arith.constant 0 : index
    %1249 = vector.load %arg13[%c17_372, %c0_373] : memref<36x42xf32, #tpu.memory_space<vmem>>, vector<1x42xf32>
    %1250 = vector.shape_cast %1249 : vector<1x42xf32> to vector<1x1x42xf32>
    %1251 = vector.broadcast %1250 : vector<1x1x42xf32> to vector<2x9x42xf32>
    %1252 = arith.mulf %1243, %1251 : vector<2x9x42xf32>
    %1253 = arith.addf %1232, %1252 : vector<2x9x42xf32>
    %c26_374 = arith.constant 26 : index
    %c0_375 = arith.constant 0 : index
    %1254 = vector.load %arg13[%c26_374, %c0_375] : memref<36x42xf32, #tpu.memory_space<vmem>>, vector<1x42xf32>
    %1255 = vector.shape_cast %1254 : vector<1x42xf32> to vector<1x1x42xf32>
    %1256 = vector.broadcast %1255 : vector<1x1x42xf32> to vector<2x9x42xf32>
    %1257 = arith.mulf %1243, %1256 : vector<2x9x42xf32>
    %1258 = arith.addf %1237, %1257 : vector<2x9x42xf32>
    %c35_376 = arith.constant 35 : index
    %c0_377 = arith.constant 0 : index
    %1259 = vector.load %arg13[%c35_376, %c0_377] : memref<36x42xf32, #tpu.memory_space<vmem>>, vector<1x42xf32>
    %1260 = vector.shape_cast %1259 : vector<1x42xf32> to vector<1x1x42xf32>
    %1261 = vector.broadcast %1260 : vector<1x1x42xf32> to vector<2x9x42xf32>
    %1262 = arith.mulf %1243, %1261 : vector<2x9x42xf32>
    %1263 = arith.addf %1242, %1262 : vector<2x9x42xf32>
    %1264 = vector.extract_strided_slice %1248 {offsets = [0, 0, 0], sizes = [2, 9, 9], strides = [1, 1, 1]} : vector<2x9x42xf32> to vector<2x9x9xf32>
    %c0_378 = arith.constant 0 : index
    %1265 = memref.load %arg14[%c0_378] : memref<4xf32, #tpu.memory_space<smem>>
    %1266 = vector.broadcast %1265 : f32 to vector<2x9x9xf32>
    %1267 = arith.addf %1264, %1266 : vector<2x9x9xf32>
    %1268 = vector.extract_strided_slice %1248 {offsets = [0, 0, 11], sizes = [2, 9, 9], strides = [1, 1, 1]} : vector<2x9x42xf32> to vector<2x9x9xf32>
    %1269 = arith.addf %1267, %1268 : vector<2x9x9xf32>
    %1270 = vector.extract_strided_slice %1248 {offsets = [0, 0, 22], sizes = [2, 9, 9], strides = [1, 1, 1]} : vector<2x9x42xf32> to vector<2x9x9xf32>
    %1271 = arith.addf %1269, %1270 : vector<2x9x9xf32>
    %1272 = vector.extract_strided_slice %1248 {offsets = [0, 0, 33], sizes = [2, 9, 9], strides = [1, 1, 1]} : vector<2x9x42xf32> to vector<2x9x9xf32>
    %1273 = arith.addf %1271, %1272 : vector<2x9x9xf32>
    %1274 = vector.shape_cast %1273 : vector<2x9x9xf32> to vector<1x2x9x9xf32>
    %cst_379 = arith.constant dense<0.000000e+00> : vector<1xf32>
    %1275 = vector.multi_reduction <add>, %1274, %cst_379 [1, 2, 3] : vector<1x2x9x9xf32> to vector<1xf32>
    %1276 = vector.shape_cast %1275 : vector<1xf32> to vector<1x1x1x1xf32>
    %1277 = vector.extract %1276[0, 0, 0, 0] : f32 from vector<1x1x1x1xf32>
    %1278 = arith.mulf %1273, %1273 : vector<2x9x9xf32>
    %1279 = vector.shape_cast %1278 : vector<2x9x9xf32> to vector<1x2x9x9xf32>
    %cst_380 = arith.constant dense<0.000000e+00> : vector<1xf32>
    %1280 = vector.multi_reduction <add>, %1279, %cst_380 [1, 2, 3] : vector<1x2x9x9xf32> to vector<1xf32>
    %1281 = vector.shape_cast %1280 : vector<1xf32> to vector<1x1x1x1xf32>
    %1282 = vector.extract %1281[0, 0, 0, 0] : f32 from vector<1x1x1x1xf32>
    %cst_381 = arith.constant 0.00617283955 : f32
    %1283 = arith.mulf %1277, %cst_381 : f32
    %cst_382 = arith.constant 0.00617283955 : f32
    %1284 = arith.mulf %1282, %cst_382 : f32
    %1285 = arith.mulf %1283, %1283 : f32
    %1286 = arith.subf %1284, %1285 : f32
    %c0_383 = arith.constant 0 : index
    %1287 = memref.load %arg15[%c0_383] : memref<4xf32, #tpu.memory_space<smem>>
    %cst_384 = arith.constant 9.99999974E-6 : f32
    %1288 = arith.addf %1286, %cst_384 : f32
    %1289 = math.rsqrt %1288 : f32
    %1290 = arith.mulf %1287, %1289 : f32
    %c0_385 = arith.constant 0 : index
    %1291 = memref.load %arg16[%c0_385] : memref<4xf32, #tpu.memory_space<smem>>
    %1292 = arith.mulf %1283, %1290 : f32
    %1293 = arith.subf %1291, %1292 : f32
    %1294 = vector.broadcast %1290 : f32 to vector<2x9x9xf32>
    %1295 = arith.mulf %1273, %1294 : vector<2x9x9xf32>
    %1296 = vector.broadcast %1293 : f32 to vector<2x9x9xf32>
    %1297 = arith.addf %1295, %1296 : vector<2x9x9xf32>
    %cst_386 = arith.constant 0.000000e+00 : f32
    %1298 = vector.broadcast %cst_386 : f32 to vector<2x9x9xf32>
    %1299 = arith.maximumf %1297, %1298 : vector<2x9x9xf32>
    %1300 = vector.extract_strided_slice %1299 {offsets = [0, 0, 0], sizes = [2, 9, 8], strides = [1, 1, 1]} : vector<2x9x9xf32> to vector<2x9x8xf32>
    %1301 = vector.extract_strided_slice %1299 {offsets = [0, 0, 1], sizes = [2, 9, 8], strides = [1, 1, 1]} : vector<2x9x9xf32> to vector<2x9x8xf32>
    %1302 = arith.maximumf %1300, %1301 : vector<2x9x8xf32>
    %1303 = vector.extract_strided_slice %1302 {offsets = [0, 0, 0], sizes = [2, 8, 8], strides = [1, 1, 1]} : vector<2x9x8xf32> to vector<2x8x8xf32>
    %1304 = vector.extract_strided_slice %1302 {offsets = [0, 1, 0], sizes = [2, 8, 8], strides = [1, 1, 1]} : vector<2x9x8xf32> to vector<2x8x8xf32>
    %1305 = arith.maximumf %1303, %1304 : vector<2x8x8xf32>
    %1306 = vector.extract_strided_slice %1253 {offsets = [0, 0, 0], sizes = [2, 9, 9], strides = [1, 1, 1]} : vector<2x9x42xf32> to vector<2x9x9xf32>
    %c1_387 = arith.constant 1 : index
    %1307 = memref.load %arg14[%c1_387] : memref<4xf32, #tpu.memory_space<smem>>
    %1308 = vector.broadcast %1307 : f32 to vector<2x9x9xf32>
    %1309 = arith.addf %1306, %1308 : vector<2x9x9xf32>
    %1310 = vector.extract_strided_slice %1253 {offsets = [0, 0, 11], sizes = [2, 9, 9], strides = [1, 1, 1]} : vector<2x9x42xf32> to vector<2x9x9xf32>
    %1311 = arith.addf %1309, %1310 : vector<2x9x9xf32>
    %1312 = vector.extract_strided_slice %1253 {offsets = [0, 0, 22], sizes = [2, 9, 9], strides = [1, 1, 1]} : vector<2x9x42xf32> to vector<2x9x9xf32>
    %1313 = arith.addf %1311, %1312 : vector<2x9x9xf32>
    %1314 = vector.extract_strided_slice %1253 {offsets = [0, 0, 33], sizes = [2, 9, 9], strides = [1, 1, 1]} : vector<2x9x42xf32> to vector<2x9x9xf32>
    %1315 = arith.addf %1313, %1314 : vector<2x9x9xf32>
    %1316 = vector.shape_cast %1315 : vector<2x9x9xf32> to vector<1x2x9x9xf32>
    %cst_388 = arith.constant dense<0.000000e+00> : vector<1xf32>
    %1317 = vector.multi_reduction <add>, %1316, %cst_388 [1, 2, 3] : vector<1x2x9x9xf32> to vector<1xf32>
    %1318 = vector.shape_cast %1317 : vector<1xf32> to vector<1x1x1x1xf32>
    %1319 = vector.extract %1318[0, 0, 0, 0] : f32 from vector<1x1x1x1xf32>
    %1320 = arith.mulf %1315, %1315 : vector<2x9x9xf32>
    %1321 = vector.shape_cast %1320 : vector<2x9x9xf32> to vector<1x2x9x9xf32>
    %cst_389 = arith.constant dense<0.000000e+00> : vector<1xf32>
    %1322 = vector.multi_reduction <add>, %1321, %cst_389 [1, 2, 3] : vector<1x2x9x9xf32> to vector<1xf32>
    %1323 = vector.shape_cast %1322 : vector<1xf32> to vector<1x1x1x1xf32>
    %1324 = vector.extract %1323[0, 0, 0, 0] : f32 from vector<1x1x1x1xf32>
    %cst_390 = arith.constant 0.00617283955 : f32
    %1325 = arith.mulf %1319, %cst_390 : f32
    %cst_391 = arith.constant 0.00617283955 : f32
    %1326 = arith.mulf %1324, %cst_391 : f32
    %1327 = arith.mulf %1325, %1325 : f32
    %1328 = arith.subf %1326, %1327 : f32
    %c1_392 = arith.constant 1 : index
    %1329 = memref.load %arg15[%c1_392] : memref<4xf32, #tpu.memory_space<smem>>
    %cst_393 = arith.constant 9.99999974E-6 : f32
    %1330 = arith.addf %1328, %cst_393 : f32
    %1331 = math.rsqrt %1330 : f32
    %1332 = arith.mulf %1329, %1331 : f32
    %c1_394 = arith.constant 1 : index
    %1333 = memref.load %arg16[%c1_394] : memref<4xf32, #tpu.memory_space<smem>>
    %1334 = arith.mulf %1325, %1332 : f32
    %1335 = arith.subf %1333, %1334 : f32
    %1336 = vector.broadcast %1332 : f32 to vector<2x9x9xf32>
    %1337 = arith.mulf %1315, %1336 : vector<2x9x9xf32>
    %1338 = vector.broadcast %1335 : f32 to vector<2x9x9xf32>
    %1339 = arith.addf %1337, %1338 : vector<2x9x9xf32>
    %cst_395 = arith.constant 0.000000e+00 : f32
    %1340 = vector.broadcast %cst_395 : f32 to vector<2x9x9xf32>
    %1341 = arith.maximumf %1339, %1340 : vector<2x9x9xf32>
    %1342 = vector.extract_strided_slice %1341 {offsets = [0, 0, 0], sizes = [2, 9, 8], strides = [1, 1, 1]} : vector<2x9x9xf32> to vector<2x9x8xf32>
    %1343 = vector.extract_strided_slice %1341 {offsets = [0, 0, 1], sizes = [2, 9, 8], strides = [1, 1, 1]} : vector<2x9x9xf32> to vector<2x9x8xf32>
    %1344 = arith.maximumf %1342, %1343 : vector<2x9x8xf32>
    %1345 = vector.extract_strided_slice %1344 {offsets = [0, 0, 0], sizes = [2, 8, 8], strides = [1, 1, 1]} : vector<2x9x8xf32> to vector<2x8x8xf32>
    %1346 = vector.extract_strided_slice %1344 {offsets = [0, 1, 0], sizes = [2, 8, 8], strides = [1, 1, 1]} : vector<2x9x8xf32> to vector<2x8x8xf32>
    %1347 = arith.maximumf %1345, %1346 : vector<2x8x8xf32>
    %1348 = vector.extract_strided_slice %1258 {offsets = [0, 0, 0], sizes = [2, 9, 9], strides = [1, 1, 1]} : vector<2x9x42xf32> to vector<2x9x9xf32>
    %c2_396 = arith.constant 2 : index
    %1349 = memref.load %arg14[%c2_396] : memref<4xf32, #tpu.memory_space<smem>>
    %1350 = vector.broadcast %1349 : f32 to vector<2x9x9xf32>
    %1351 = arith.addf %1348, %1350 : vector<2x9x9xf32>
    %1352 = vector.extract_strided_slice %1258 {offsets = [0, 0, 11], sizes = [2, 9, 9], strides = [1, 1, 1]} : vector<2x9x42xf32> to vector<2x9x9xf32>
    %1353 = arith.addf %1351, %1352 : vector<2x9x9xf32>
    %1354 = vector.extract_strided_slice %1258 {offsets = [0, 0, 22], sizes = [2, 9, 9], strides = [1, 1, 1]} : vector<2x9x42xf32> to vector<2x9x9xf32>
    %1355 = arith.addf %1353, %1354 : vector<2x9x9xf32>
    %1356 = vector.extract_strided_slice %1258 {offsets = [0, 0, 33], sizes = [2, 9, 9], strides = [1, 1, 1]} : vector<2x9x42xf32> to vector<2x9x9xf32>
    %1357 = arith.addf %1355, %1356 : vector<2x9x9xf32>
    %1358 = vector.shape_cast %1357 : vector<2x9x9xf32> to vector<1x2x9x9xf32>
    %cst_397 = arith.constant dense<0.000000e+00> : vector<1xf32>
    %1359 = vector.multi_reduction <add>, %1358, %cst_397 [1, 2, 3] : vector<1x2x9x9xf32> to vector<1xf32>
    %1360 = vector.shape_cast %1359 : vector<1xf32> to vector<1x1x1x1xf32>
    %1361 = vector.extract %1360[0, 0, 0, 0] : f32 from vector<1x1x1x1xf32>
    %1362 = arith.mulf %1357, %1357 : vector<2x9x9xf32>
    %1363 = vector.shape_cast %1362 : vector<2x9x9xf32> to vector<1x2x9x9xf32>
    %cst_398 = arith.constant dense<0.000000e+00> : vector<1xf32>
    %1364 = vector.multi_reduction <add>, %1363, %cst_398 [1, 2, 3] : vector<1x2x9x9xf32> to vector<1xf32>
    %1365 = vector.shape_cast %1364 : vector<1xf32> to vector<1x1x1x1xf32>
    %1366 = vector.extract %1365[0, 0, 0, 0] : f32 from vector<1x1x1x1xf32>
    %cst_399 = arith.constant 0.00617283955 : f32
    %1367 = arith.mulf %1361, %cst_399 : f32
    %cst_400 = arith.constant 0.00617283955 : f32
    %1368 = arith.mulf %1366, %cst_400 : f32
    %1369 = arith.mulf %1367, %1367 : f32
    %1370 = arith.subf %1368, %1369 : f32
    %c2_401 = arith.constant 2 : index
    %1371 = memref.load %arg15[%c2_401] : memref<4xf32, #tpu.memory_space<smem>>
    %cst_402 = arith.constant 9.99999974E-6 : f32
    %1372 = arith.addf %1370, %cst_402 : f32
    %1373 = math.rsqrt %1372 : f32
    %1374 = arith.mulf %1371, %1373 : f32
    %c2_403 = arith.constant 2 : index
    %1375 = memref.load %arg16[%c2_403] : memref<4xf32, #tpu.memory_space<smem>>
    %1376 = arith.mulf %1367, %1374 : f32
    %1377 = arith.subf %1375, %1376 : f32
    %1378 = vector.broadcast %1374 : f32 to vector<2x9x9xf32>
    %1379 = arith.mulf %1357, %1378 : vector<2x9x9xf32>
    %1380 = vector.broadcast %1377 : f32 to vector<2x9x9xf32>
    %1381 = arith.addf %1379, %1380 : vector<2x9x9xf32>
    %cst_404 = arith.constant 0.000000e+00 : f32
    %1382 = vector.broadcast %cst_404 : f32 to vector<2x9x9xf32>
    %1383 = arith.maximumf %1381, %1382 : vector<2x9x9xf32>
    %1384 = vector.extract_strided_slice %1383 {offsets = [0, 0, 0], sizes = [2, 9, 8], strides = [1, 1, 1]} : vector<2x9x9xf32> to vector<2x9x8xf32>
    %1385 = vector.extract_strided_slice %1383 {offsets = [0, 0, 1], sizes = [2, 9, 8], strides = [1, 1, 1]} : vector<2x9x9xf32> to vector<2x9x8xf32>
    %1386 = arith.maximumf %1384, %1385 : vector<2x9x8xf32>
    %1387 = vector.extract_strided_slice %1386 {offsets = [0, 0, 0], sizes = [2, 8, 8], strides = [1, 1, 1]} : vector<2x9x8xf32> to vector<2x8x8xf32>
    %1388 = vector.extract_strided_slice %1386 {offsets = [0, 1, 0], sizes = [2, 8, 8], strides = [1, 1, 1]} : vector<2x9x8xf32> to vector<2x8x8xf32>
    %1389 = arith.maximumf %1387, %1388 : vector<2x8x8xf32>
    %1390 = vector.extract_strided_slice %1263 {offsets = [0, 0, 0], sizes = [2, 9, 9], strides = [1, 1, 1]} : vector<2x9x42xf32> to vector<2x9x9xf32>
    %c3_405 = arith.constant 3 : index
    %1391 = memref.load %arg14[%c3_405] : memref<4xf32, #tpu.memory_space<smem>>
    %1392 = vector.broadcast %1391 : f32 to vector<2x9x9xf32>
    %1393 = arith.addf %1390, %1392 : vector<2x9x9xf32>
    %1394 = vector.extract_strided_slice %1263 {offsets = [0, 0, 11], sizes = [2, 9, 9], strides = [1, 1, 1]} : vector<2x9x42xf32> to vector<2x9x9xf32>
    %1395 = arith.addf %1393, %1394 : vector<2x9x9xf32>
    %1396 = vector.extract_strided_slice %1263 {offsets = [0, 0, 22], sizes = [2, 9, 9], strides = [1, 1, 1]} : vector<2x9x42xf32> to vector<2x9x9xf32>
    %1397 = arith.addf %1395, %1396 : vector<2x9x9xf32>
    %1398 = vector.extract_strided_slice %1263 {offsets = [0, 0, 33], sizes = [2, 9, 9], strides = [1, 1, 1]} : vector<2x9x42xf32> to vector<2x9x9xf32>
    %1399 = arith.addf %1397, %1398 : vector<2x9x9xf32>
    %1400 = vector.shape_cast %1399 : vector<2x9x9xf32> to vector<1x2x9x9xf32>
    %cst_406 = arith.constant dense<0.000000e+00> : vector<1xf32>
    %1401 = vector.multi_reduction <add>, %1400, %cst_406 [1, 2, 3] : vector<1x2x9x9xf32> to vector<1xf32>
    %1402 = vector.shape_cast %1401 : vector<1xf32> to vector<1x1x1x1xf32>
    %1403 = vector.extract %1402[0, 0, 0, 0] : f32 from vector<1x1x1x1xf32>
    %1404 = arith.mulf %1399, %1399 : vector<2x9x9xf32>
    %1405 = vector.shape_cast %1404 : vector<2x9x9xf32> to vector<1x2x9x9xf32>
    %cst_407 = arith.constant dense<0.000000e+00> : vector<1xf32>
    %1406 = vector.multi_reduction <add>, %1405, %cst_407 [1, 2, 3] : vector<1x2x9x9xf32> to vector<1xf32>
    %1407 = vector.shape_cast %1406 : vector<1xf32> to vector<1x1x1x1xf32>
    %1408 = vector.extract %1407[0, 0, 0, 0] : f32 from vector<1x1x1x1xf32>
    %cst_408 = arith.constant 0.00617283955 : f32
    %1409 = arith.mulf %1403, %cst_408 : f32
    %cst_409 = arith.constant 0.00617283955 : f32
    %1410 = arith.mulf %1408, %cst_409 : f32
    %1411 = arith.mulf %1409, %1409 : f32
    %1412 = arith.subf %1410, %1411 : f32
    %c3_410 = arith.constant 3 : index
    %1413 = memref.load %arg15[%c3_410] : memref<4xf32, #tpu.memory_space<smem>>
    %cst_411 = arith.constant 9.99999974E-6 : f32
    %1414 = arith.addf %1412, %cst_411 : f32
    %1415 = math.rsqrt %1414 : f32
    %1416 = arith.mulf %1413, %1415 : f32
    %c3_412 = arith.constant 3 : index
    %1417 = memref.load %arg16[%c3_412] : memref<4xf32, #tpu.memory_space<smem>>
    %1418 = arith.mulf %1409, %1416 : f32
    %1419 = arith.subf %1417, %1418 : f32
    %1420 = vector.broadcast %1416 : f32 to vector<2x9x9xf32>
    %1421 = arith.mulf %1399, %1420 : vector<2x9x9xf32>
    %1422 = vector.broadcast %1419 : f32 to vector<2x9x9xf32>
    %1423 = arith.addf %1421, %1422 : vector<2x9x9xf32>
    %cst_413 = arith.constant 0.000000e+00 : f32
    %1424 = vector.broadcast %cst_413 : f32 to vector<2x9x9xf32>
    %1425 = arith.maximumf %1423, %1424 : vector<2x9x9xf32>
    %1426 = vector.extract_strided_slice %1425 {offsets = [0, 0, 0], sizes = [2, 9, 8], strides = [1, 1, 1]} : vector<2x9x9xf32> to vector<2x9x8xf32>
    %1427 = vector.extract_strided_slice %1425 {offsets = [0, 0, 1], sizes = [2, 9, 8], strides = [1, 1, 1]} : vector<2x9x9xf32> to vector<2x9x8xf32>
    %1428 = arith.maximumf %1426, %1427 : vector<2x9x8xf32>
    %1429 = vector.extract_strided_slice %1428 {offsets = [0, 0, 0], sizes = [2, 8, 8], strides = [1, 1, 1]} : vector<2x9x8xf32> to vector<2x8x8xf32>
    %1430 = vector.extract_strided_slice %1428 {offsets = [0, 1, 0], sizes = [2, 8, 8], strides = [1, 1, 1]} : vector<2x9x8xf32> to vector<2x8x8xf32>
    %1431 = arith.maximumf %1429, %1430 : vector<2x8x8xf32>
    %1432 = tpu.concatenate %1305, %1347, %1389, %1431 in 2 : vector<2x8x8xf32>, vector<2x8x8xf32>, vector<2x8x8xf32>, vector<2x8x8xf32> -> vector<2x8x32xf32>
    %cst_414 = arith.constant 0.000000e+00 : f32
    %1433 = vector.broadcast %cst_414 : f32 to vector<2x6xf32>
    %1434 = vector.extract_strided_slice %1432 {offsets = [0, 0, 0], sizes = [2, 1, 32], strides = [1, 1, 1]} : vector<2x8x32xf32> to vector<2x1x32xf32>
    %1435 = vector.shape_cast %1434 : vector<2x1x32xf32> to vector<2x32xf32>
    %c0_415 = arith.constant 0 : index
    %c0_416 = arith.constant 0 : index
    %1436 = vector.load %arg17[%c0_415, %c0_416] : memref<48x32xf32, #tpu.memory_space<vmem>>, vector<6x32xf32>
    %cst_417 = arith.constant dense<0.000000e+00> : vector<2x6xf32>
    %1437 = tpu.matmul %1435, %1436, %cst_417 {dimension_numbers = #tpu.dot_dimension_numbers<[1], [1], [0], [0], [0, 0, 1, 0], [], []>} : vector<2x32xf32>, vector<6x32xf32>, vector<2x6xf32> -> vector<2x6xf32>
    %1438 = arith.addf %1433, %1437 : vector<2x6xf32>
    %1439 = vector.extract_strided_slice %1432 {offsets = [0, 1, 0], sizes = [2, 1, 32], strides = [1, 1, 1]} : vector<2x8x32xf32> to vector<2x1x32xf32>
    %1440 = vector.shape_cast %1439 : vector<2x1x32xf32> to vector<2x32xf32>
    %c6_418 = arith.constant 6 : index
    %c0_419 = arith.constant 0 : index
    %1441 = vector.load %arg17[%c6_418, %c0_419] : memref<48x32xf32, #tpu.memory_space<vmem>>, vector<6x32xf32>
    %cst_420 = arith.constant dense<0.000000e+00> : vector<2x6xf32>
    %1442 = tpu.matmul %1440, %1441, %cst_420 {dimension_numbers = #tpu.dot_dimension_numbers<[1], [1], [0], [0], [0, 0, 1, 0], [], []>} : vector<2x32xf32>, vector<6x32xf32>, vector<2x6xf32> -> vector<2x6xf32>
    %1443 = arith.addf %1438, %1442 : vector<2x6xf32>
    %1444 = vector.extract_strided_slice %1432 {offsets = [0, 2, 0], sizes = [2, 1, 32], strides = [1, 1, 1]} : vector<2x8x32xf32> to vector<2x1x32xf32>
    %1445 = vector.shape_cast %1444 : vector<2x1x32xf32> to vector<2x32xf32>
    %c12_421 = arith.constant 12 : index
    %c0_422 = arith.constant 0 : index
    %1446 = vector.load %arg17[%c12_421, %c0_422] : memref<48x32xf32, #tpu.memory_space<vmem>>, vector<6x32xf32>
    %cst_423 = arith.constant dense<0.000000e+00> : vector<2x6xf32>
    %1447 = tpu.matmul %1445, %1446, %cst_423 {dimension_numbers = #tpu.dot_dimension_numbers<[1], [1], [0], [0], [0, 0, 1, 0], [], []>} : vector<2x32xf32>, vector<6x32xf32>, vector<2x6xf32> -> vector<2x6xf32>
    %1448 = arith.addf %1443, %1447 : vector<2x6xf32>
    %1449 = vector.extract_strided_slice %1432 {offsets = [0, 3, 0], sizes = [2, 1, 32], strides = [1, 1, 1]} : vector<2x8x32xf32> to vector<2x1x32xf32>
    %1450 = vector.shape_cast %1449 : vector<2x1x32xf32> to vector<2x32xf32>
    %c18_424 = arith.constant 18 : index
    %c0_425 = arith.constant 0 : index
    %1451 = vector.load %arg17[%c18_424, %c0_425] : memref<48x32xf32, #tpu.memory_space<vmem>>, vector<6x32xf32>
    %cst_426 = arith.constant dense<0.000000e+00> : vector<2x6xf32>
    %1452 = tpu.matmul %1450, %1451, %cst_426 {dimension_numbers = #tpu.dot_dimension_numbers<[1], [1], [0], [0], [0, 0, 1, 0], [], []>} : vector<2x32xf32>, vector<6x32xf32>, vector<2x6xf32> -> vector<2x6xf32>
    %1453 = arith.addf %1448, %1452 : vector<2x6xf32>
    %1454 = vector.extract_strided_slice %1432 {offsets = [0, 4, 0], sizes = [2, 1, 32], strides = [1, 1, 1]} : vector<2x8x32xf32> to vector<2x1x32xf32>
    %1455 = vector.shape_cast %1454 : vector<2x1x32xf32> to vector<2x32xf32>
    %c24_427 = arith.constant 24 : index
    %c0_428 = arith.constant 0 : index
    %1456 = vector.load %arg17[%c24_427, %c0_428] : memref<48x32xf32, #tpu.memory_space<vmem>>, vector<6x32xf32>
    %cst_429 = arith.constant dense<0.000000e+00> : vector<2x6xf32>
    %1457 = tpu.matmul %1455, %1456, %cst_429 {dimension_numbers = #tpu.dot_dimension_numbers<[1], [1], [0], [0], [0, 0, 1, 0], [], []>} : vector<2x32xf32>, vector<6x32xf32>, vector<2x6xf32> -> vector<2x6xf32>
    %1458 = arith.addf %1453, %1457 : vector<2x6xf32>
    %1459 = vector.extract_strided_slice %1432 {offsets = [0, 5, 0], sizes = [2, 1, 32], strides = [1, 1, 1]} : vector<2x8x32xf32> to vector<2x1x32xf32>
    %1460 = vector.shape_cast %1459 : vector<2x1x32xf32> to vector<2x32xf32>
    %c30_430 = arith.constant 30 : index
    %c0_431 = arith.constant 0 : index
    %1461 = vector.load %arg17[%c30_430, %c0_431] : memref<48x32xf32, #tpu.memory_space<vmem>>, vector<6x32xf32>
    %cst_432 = arith.constant dense<0.000000e+00> : vector<2x6xf32>
    %1462 = tpu.matmul %1460, %1461, %cst_432 {dimension_numbers = #tpu.dot_dimension_numbers<[1], [1], [0], [0], [0, 0, 1, 0], [], []>} : vector<2x32xf32>, vector<6x32xf32>, vector<2x6xf32> -> vector<2x6xf32>
    %1463 = arith.addf %1458, %1462 : vector<2x6xf32>
    %1464 = vector.extract_strided_slice %1432 {offsets = [0, 6, 0], sizes = [2, 1, 32], strides = [1, 1, 1]} : vector<2x8x32xf32> to vector<2x1x32xf32>
    %1465 = vector.shape_cast %1464 : vector<2x1x32xf32> to vector<2x32xf32>
    %c36 = arith.constant 36 : index
    %c0_433 = arith.constant 0 : index
    %1466 = vector.load %arg17[%c36, %c0_433] : memref<48x32xf32, #tpu.memory_space<vmem>>, vector<6x32xf32>
    %cst_434 = arith.constant dense<0.000000e+00> : vector<2x6xf32>
    %1467 = tpu.matmul %1465, %1466, %cst_434 {dimension_numbers = #tpu.dot_dimension_numbers<[1], [1], [0], [0], [0, 0, 1, 0], [], []>} : vector<2x32xf32>, vector<6x32xf32>, vector<2x6xf32> -> vector<2x6xf32>
    %1468 = arith.addf %1463, %1467 : vector<2x6xf32>
    %1469 = vector.extract_strided_slice %1432 {offsets = [0, 7, 0], sizes = [2, 1, 32], strides = [1, 1, 1]} : vector<2x8x32xf32> to vector<2x1x32xf32>
    %1470 = vector.shape_cast %1469 : vector<2x1x32xf32> to vector<2x32xf32>
    %c42 = arith.constant 42 : index
    %c0_435 = arith.constant 0 : index
    %1471 = vector.load %arg17[%c42, %c0_435] : memref<48x32xf32, #tpu.memory_space<vmem>>, vector<6x32xf32>
    %cst_436 = arith.constant dense<0.000000e+00> : vector<2x6xf32>
    %1472 = tpu.matmul %1470, %1471, %cst_436 {dimension_numbers = #tpu.dot_dimension_numbers<[1], [1], [0], [0], [0, 0, 1, 0], [], []>} : vector<2x32xf32>, vector<6x32xf32>, vector<2x6xf32> -> vector<2x6xf32>
    %1473 = arith.addf %1468, %1472 : vector<2x6xf32>
    %c0_437 = arith.constant 0 : index
    %c0_438 = arith.constant 0 : index
    %1474 = vector.load %arg18[%c0_437, %c0_438] : memref<1x6xf32, #tpu.memory_space<vmem>>, vector<1x6xf32>
    %1475 = vector.broadcast %1474 : vector<1x6xf32> to vector<2x6xf32>
    %1476 = arith.addf %1473, %1475 : vector<2x6xf32>
    %c0_439 = arith.constant 0 : index
    %c0_440 = arith.constant 0 : index
    %1477 = vector.load %arg19[%c0_439, %c0_440] : memref<2x6xf32, #tpu.memory_space<vmem>>, vector<2x6xf32>
    tpu.vector_store %arg19[%c0_439, %c0_440], %1476 {strides = array<i32>} : memref<2x6xf32, #tpu.memory_space<vmem>>, vector<2x6xf32>,
    return
  }
}

</mosaic_0001>

<llo_original>
// kernel: convnet_forward.1
$region0: #{convnet_forward.1}
  #allocation0 [shape = 'u32[]', space=smem, size = 0x4, offset = 0x4, fixed_abs, tag = 'smem constant byte address 0x4 - core index']
  #allocation1 [shape = 'u32[72,128]{1,0:T(1,128)}', space=vmem, size = 0x9000, scoped, tag = 'internal scratch']
  %s0 = inlined_call_operand.vmem [shape: f32[2,20,20], index: 0, kind: input, shape index: {}]
  %s1 = inlined_call_operand.vmem [shape: f32[36,18], index: 1, kind: input, shape index: {}]
  %s2 = inlined_call_operand.vmem [shape: f32[4], index: 2, kind: input, shape index: {}]
  %s3 = inlined_call_operand.vmem [shape: f32[4], index: 3, kind: input, shape index: {}]
  %s4 = inlined_call_operand.vmem [shape: f32[4], index: 4, kind: input, shape index: {}]
  %s5 = inlined_call_operand.vmem [shape: f32[36,66], index: 5, kind: input, shape index: {}]
  %s6 = inlined_call_operand.vmem [shape: f32[4], index: 6, kind: input, shape index: {}]
  %s7 = inlined_call_operand.vmem [shape: f32[4], index: 7, kind: input, shape index: {}]
  %s8 = inlined_call_operand.vmem [shape: f32[4], index: 8, kind: input, shape index: {}]
  %s9 = inlined_call_operand.vmem [shape: f32[36,54], index: 9, kind: input, shape index: {}]
  %s10 = inlined_call_operand.vmem [shape: f32[4], index: 10, kind: input, shape index: {}]
  %s11 = inlined_call_operand.vmem [shape: f32[4], index: 11, kind: input, shape index: {}]
  %s12 = inlined_call_operand.vmem [shape: f32[4], index: 12, kind: input, shape index: {}]
  %s13 = inlined_call_operand.vmem [shape: f32[36,42], index: 13, kind: input, shape index: {}]
  %s14 = inlined_call_operand.vmem [shape: f32[4], index: 14, kind: input, shape index: {}]
  %s15 = inlined_call_operand.vmem [shape: f32[4], index: 15, kind: input, shape index: {}]
  %s16 = inlined_call_operand.vmem [shape: f32[4], index: 16, kind: input, shape index: {}]
  %s17 = inlined_call_operand.vmem [shape: f32[48,32], index: 17, kind: input, shape index: {}]
  %s18 = inlined_call_operand.vmem [shape: f32[1,6], index: 18, kind: input, shape index: {}]
  %s19 = inlined_call_operand.hbm [shape: f32[2,6], index: 19, kind: output, shape index: {}]
  %s20 = sld [smem:[#allocation0]]
  $region134: #{convnet_forward.1} parent=0
    _
  %s22 = ssub.s32 1, %s20
  %s23 = scalar_select 0, %s22, %s20
  $region1: #{convnet_forward.1} parent=0
    #allocation2 [shape = 'u8[512]{0}', space=smem, size = 0x200, scoped, tag = 'input window, operand 2, single buffered']
    #allocation3 [shape = 's32[1]{0}', space=sflag, size = 0x4, scoped, tag = 'scoped memory for convnet_forward.1']
    #allocation4 [shape = 's32[1]{0}', space=sflag, size = 0x4, scoped, tag = 'scoped memory for convnet_forward.1']
    #allocation5 [shape = 'u8[512]{0}', space=smem, size = 0x200, scoped, tag = 'input window, operand 3, single buffered']
    #allocation6 [shape = 's32[1]{0}', space=sflag, size = 0x4, scoped, tag = 'scoped memory for convnet_forward.1']
    #allocation7 [shape = 'u8[512]{0}', space=smem, size = 0x200, scoped, tag = 'input window, operand 4, single buffered']
    #allocation8 [shape = 'u8[512]{0}', space=smem, size = 0x200, scoped, tag = 'input window, operand 6, single buffered']
    #allocation9 [shape = 's32[1]{0}', space=sflag, size = 0x4, scoped, tag = 'scoped memory for convnet_forward.1']
    #allocation10 [shape = 'u8[512]{0}', space=smem, size = 0x200, scoped, tag = 'input window, operand 7, single buffered']
    #allocation11 [shape = 'u8[512]{0}', space=smem, size = 0x200, scoped, tag = 'input window, operand 8, single buffered']
    #allocation12 [shape = 's32[1]{0}', space=sflag, size = 0x4, scoped, tag = 'scoped memory for convnet_forward.1']
    #allocation13 [shape = 'u8[512]{0}', space=smem, size = 0x200, scoped, tag = 'input window, operand 10, single buffered']
    #allocation14 [shape = 'u8[512]{0}', space=smem, size = 0x200, scoped, tag = 'input window, operand 11, single buffered']
    #allocation15 [shape = 's32[1]{0}', space=sflag, size = 0x4, scoped, tag = 'scoped memory for convnet_forward.1']
    #allocation16 [shape = 'u8[512]{0}', space=smem, size = 0x200, scoped, tag = 'input window, operand 12, single buffered']
    #allocation17 [shape = 'u8[512]{0}', space=smem, size = 0x200, scoped, tag = 'input window, operand 14, single buffered']
    #allocation18 [shape = 's32[1]{0}', space=sflag, size = 0x4, scoped, tag = 'scoped memory for convnet_forward.1']
    #allocation19 [shape = 'u8[512]{0}', space=smem, size = 0x200, scoped, tag = 'input window, operand 15, single buffered']
    #allocation20 [shape = 'u8[512]{0}', space=smem, size = 0x200, scoped, tag = 'input window, operand 16, single buffered']
    #allocation21 [shape = 's32[1]{0}', space=sflag, size = 0x4, scoped, tag = 'scoped memory for convnet_forward.1']
    #allocation22 [shape = 'u8[1024]{0}', space=vmem, size = 0x400, scoped, tag = 'output window, operand 0, single buffered']
    %24 = vsyncpa [#allocation4], 0
    %25 = vsyncpa [#allocation6], 0
    %26 = vsyncpa [#allocation9], 0
    %27 = vsyncpa [#allocation12], 0
    %28 = vsyncpa [#allocation15], 0
    %29 = vsyncpa [#allocation18], 0
    %30 = vsyncpa [#allocation21], 0
    %31 = vsyncpa [#allocation3], 0
    // Predicated region
    $region2: #{convnet_forward.1} parent=1 // pred_check
      _
    $region3: #{convnet_forward.1} parent=1 // pred_check_branch
      %33 = sbr.rel (0) target = $region5
    $region4: #{convnet_forward.1} parent=1 // pred_region
      _
    $region5: #{convnet_forward.1} parent=1 // pred_fallthru
      _
    // Predicated region
    $region6: #{convnet_forward.1} parent=1 // pred_check
      _
    $region7: #{convnet_forward.1} parent=1 // pred_check_branch
      %35 = sbr.rel (0) target = $region9
    $region8: #{convnet_forward.1} parent=1 // pred_region
      _
    $region9: #{convnet_forward.1} parent=1 // pred_fallthru
      _
    // Predicated region
    $region10: #{convnet_forward.1} parent=1 // pred_check
      _
    $region11: #{convnet_forward.1} parent=1 // pred_check_branch
      %37 = sbr.rel (0) target = $region13
    $region12: #{convnet_forward.1} parent=1 // pred_region
      %39 = vsyncadd [#allocation4], 0
      %s41 = sshll.u32 %s2, 4
      %s42 = int_to_ptr.vmem [resolvable:$true] %s41
      %44 = dma.vmem_to_smem %s42, 16, [#allocation2], [#allocation4]
    $region13: #{convnet_forward.1} parent=1 // pred_fallthru
      _
    // Predicated region
    $region14: #{convnet_forward.1} parent=1 // pred_check
      _
    $region15: #{convnet_forward.1} parent=1 // pred_check_branch
      %46 = sbr.rel (0) target = $region17
    $region16: #{convnet_forward.1} parent=1 // pred_region
      %48 = vsyncadd [#allocation6], 0
      %s50 = sshll.u32 %s3, 4
      %s51 = int_to_ptr.vmem [resolvable:$true] %s50
      %53 = dma.vmem_to_smem %s51, 16, [#allocation5], [#allocation6]
    $region17: #{convnet_forward.1} parent=1 // pred_fallthru
      _
    // Predicated region
    $region18: #{convnet_forward.1} parent=1 // pred_check
      _
    $region19: #{convnet_forward.1} parent=1 // pred_check_branch
      %55 = sbr.rel (0) target = $region21
    $region20: #{convnet_forward.1} parent=1 // pred_region
      %57 = vsyncadd [#allocation6], 0
      %s59 = sshll.u32 %s4, 4
      %s60 = int_to_ptr.vmem [resolvable:$true] %s59
      %62 = dma.vmem_to_smem %s60, 16, [#allocation7], [#allocation6]
    $region21: #{convnet_forward.1} parent=1 // pred_fallthru
      _
    // Predicated region
    $region22: #{convnet_forward.1} parent=1 // pred_check
      _
    $region23: #{convnet_forward.1} parent=1 // pred_check_branch
      %64 = sbr.rel (0) target = $region25
    $region24: #{convnet_forward.1} parent=1 // pred_region
      _
    $region25: #{convnet_forward.1} parent=1 // pred_fallthru
      _
    // Predicated region
    $region26: #{convnet_forward.1} parent=1 // pred_check
      _
    $region27: #{convnet_forward.1} parent=1 // pred_check_branch
      %66 = sbr.rel (0) target = $region29
    $region28: #{convnet_forward.1} parent=1 // pred_region
      %68 = vsyncadd [#allocation9], 0
      %s70 = sshll.u32 %s6, 4
      %s71 = int_to_ptr.vmem [resolvable:$true] %s70
      %73 = dma.vmem_to_smem %s71, 16, [#allocation8], [#allocation9]
    $region29: #{convnet_forward.1} parent=1 // pred_fallthru
      _
    // Predicated region
    $region30: #{convnet_forward.1} parent=1 // pred_check
      _
    $region31: #{convnet_forward.1} parent=1 // pred_check_branch
      %75 = sbr.rel (0) target = $region33
    $region32: #{convnet_forward.1} parent=1 // pred_region
      %77 = vsyncadd [#allocation9], 0
      %s79 = sshll.u32 %s7, 4
      %s80 = int_to_ptr.vmem [resolvable:$true] %s79
      %82 = dma.vmem_to_smem %s80, 16, [#allocation10], [#allocation9]
    $region33: #{convnet_forward.1} parent=1 // pred_fallthru
      _
    // Predicated region
    $region34: #{convnet_forward.1} parent=1 // pred_check
      _
    $region35: #{convnet_forward.1} parent=1 // pred_check_branch
      %84 = sbr.rel (0) target = $region37
    $region36: #{convnet_forward.1} parent=1 // pred_region
      %86 = vsyncadd [#allocation12], 0
      %s88 = sshll.u32 %s8, 4
      %s89 = int_to_ptr.vmem [resolvable:$true] %s88
      %91 = dma.vmem_to_smem %s89, 16, [#allocation11], [#allocation12]
    $region37: #{convnet_forward.1} parent=1 // pred_fallthru
      _
    // Predicated region
    $region38: #{convnet_forward.1} parent=1 // pred_check
      _
    $region39: #{convnet_forward.1} parent=1 // pred_check_branch
      %93 = sbr.rel (0) target = $region41
    $region40: #{convnet_forward.1} parent=1 // pred_region
      _
    $region41: #{convnet_forward.1} parent=1 // pred_fallthru
      _
    // Predicated region
    $region42: #{convnet_forward.1} parent=1 // pred_check
      _
    $region43: #{convnet_forward.1} parent=1 // pred_check_branch
      %95 = sbr.rel (0) target = $region45
    $region44: #{convnet_forward.1} parent=1 // pred_region
      %97 = vsyncadd [#allocation12], 0
      %s99 = sshll.u32 %s10, 4
      %s100 = int_to_ptr.vmem [resolvable:$true] %s99
      %102 = dma.vmem_to_smem %s100, 16, [#allocation13], [#allocation12]
    $region45: #{convnet_forward.1} parent=1 // pred_fallthru
      _
    // Predicated region
    $region46: #{convnet_forward.1} parent=1 // pred_check
      _
    $region47: #{convnet_forward.1} parent=1 // pred_check_branch
      %104 = sbr.rel (0) target = $region49
    $region48: #{convnet_forward.1} parent=1 // pred_region
      %106 = vsyncadd [#allocation15], 0
      %s108 = sshll.u32 %s11, 4
      %s109 = int_to_ptr.vmem [resolvable:$true] %s108
      %111 = dma.vmem_to_smem %s109, 16, [#allocation14], [#allocation15]
    $region49: #{convnet_forward.1} parent=1 // pred_fallthru
      _
    // Predicated region
    $region50: #{convnet_forward.1} parent=1 // pred_check
      _
    $region51: #{convnet_forward.1} parent=1 // pred_check_branch
      %113 = sbr.rel (0) target = $region53
    $region52: #{convnet_forward.1} parent=1 // pred_region
      %115 = vsyncadd [#allocation15], 0
      %s117 = sshll.u32 %s12, 4
      %s118 = int_to_ptr.vmem [resolvable:$true] %s117
      %120 = dma.vmem_to_smem %s118, 16, [#allocation16], [#allocation15]
    $region53: #{convnet_forward.1} parent=1 // pred_fallthru
      _
    // Predicated region
    $region54: #{convnet_forward.1} parent=1 // pred_check
      _
    $region55: #{convnet_forward.1} parent=1 // pred_check_branch
      %122 = sbr.rel (0) target = $region57
    $region56: #{convnet_forward.1} parent=1 // pred_region
      _
    $region57: #{convnet_forward.1} parent=1 // pred_fallthru
      _
    // Predicated region
    $region58: #{convnet_forward.1} parent=1 // pred_check
      _
    $region59: #{convnet_forward.1} parent=1 // pred_check_branch
      %124 = sbr.rel (0) target = $region61
    $region60: #{convnet_forward.1} parent=1 // pred_region
      %126 = vsyncadd [#allocation18], 0
      %s128 = sshll.u32 %s14, 4
      %s129 = int_to_ptr.vmem [resolvable:$true] %s128
      %131 = dma.vmem_to_smem %s129, 16, [#allocation17], [#allocation18]
    $region61: #{convnet_forward.1} parent=1 // pred_fallthru
      _
    // Predicated region
    $region62: #{convnet_forward.1} parent=1 // pred_check
      _
    $region63: #{convnet_forward.1} parent=1 // pred_check_branch
      %133 = sbr.rel (0) target = $region65
    $region64: #{convnet_forward.1} parent=1 // pred_region
      %135 = vsyncadd [#allocation18], 0
      %s137 = sshll.u32 %s15, 4
      %s138 = int_to_ptr.vmem [resolvable:$true] %s137
      %140 = dma.vmem_to_smem %s138, 16, [#allocation19], [#allocation18]
    $region65: #{convnet_forward.1} parent=1 // pred_fallthru
      _
    // Predicated region
    $region66: #{convnet_forward.1} parent=1 // pred_check
      _
    $region67: #{convnet_forward.1} parent=1 // pred_check_branch
      %142 = sbr.rel (0) target = $region69
    $region68: #{convnet_forward.1} parent=1 // pred_region
      %144 = vsyncadd [#allocation21], 0
      %s146 = sshll.u32 %s16, 4
      %s147 = int_to_ptr.vmem [resolvable:$true] %s146
      %149 = dma.vmem_to_smem %s147, 16, [#allocation20], [#allocation21]
    $region69: #{convnet_forward.1} parent=1 // pred_fallthru
      _
    // Predicated region
    $region70: #{convnet_forward.1} parent=1 // pred_check
      _
    $region71: #{convnet_forward.1} parent=1 // pred_check_branch
      %151 = sbr.rel (0) target = $region73
    $region72: #{convnet_forward.1} parent=1 // pred_region
      _
    $region73: #{convnet_forward.1} parent=1 // pred_fallthru
      _
    // Predicated region
    $region74: #{convnet_forward.1} parent=1 // pred_check
      _
    $region75: #{convnet_forward.1} parent=1 // pred_check_branch
      %153 = sbr.rel (0) target = $region77
    $region76: #{convnet_forward.1} parent=1 // pred_region
      _
    $region77: #{convnet_forward.1} parent=1 // pred_fallthru
      _
    // Predicated region
    $region78: #{convnet_forward.1} parent=1 // pred_check
      _
    $region79: #{convnet_forward.1} parent=1 // pred_check_branch
      %155 = sbr.rel (0) target = $region81
    $region80: #{convnet_forward.1} parent=1 // pred_region
      %157 = dma.done [#allocation4], 16
    $region81: #{convnet_forward.1} parent=1 // pred_fallthru
      _
    // Predicated region
    $region82: #{convnet_forward.1} parent=1 // pred_check
      _
    $region83: #{convnet_forward.1} parent=1 // pred_check_branch
      %159 = sbr.rel (0) target = $region85
    $region84: #{convnet_forward.1} parent=1 // pred_region
      %161 = dma.done [#allocation6], 16
    $region85: #{convnet_forward.1} parent=1 // pred_fallthru
      _
    // Predicated region
    $region86: #{convnet_forward.1} parent=1 // pred_check
      _
    $region87: #{convnet_forward.1} parent=1 // pred_check_branch
      %163 = sbr.rel (0) target = $region89
    $region88: #{convnet_forward.1} parent=1 // pred_region
      %165 = dma.done [#allocation6], 16
    $region89: #{convnet_forward.1} parent=1 // pred_fallthru
      _
    // Predicated region
    $region90: #{convnet_forward.1} parent=1 // pred_check
      _
    $region91: #{convnet_forward.1} parent=1 // pred_check_branch
      %167 = sbr.rel (0) target = $region93
    $region92: #{convnet_forward.1} parent=1 // pred_region
      %169 = dma.done [#allocation9], 16
    $region93: #{convnet_forward.1} parent=1 // pred_fallthru
      _
    // Predicated region
    $region94: #{convnet_forward.1} parent=1 // pred_check
      _
    $region95: #{convnet_forward.1} parent=1 // pred_check_branch
      %171 = sbr.rel (0) target = $region97
    $region96: #{convnet_forward.1} parent=1 // pred_region
      %173 = dma.done [#allocation9], 16
    $region97: #{convnet_forward.1} parent=1 // pred_fallthru
      _
    // Predicated region
    $region98: #{convnet_forward.1} parent=1 // pred_check
      _
    $region99: #{convnet_forward.1} parent=1 // pred_check_branch
      %175 = sbr.rel (0) target = $region101
    $region100: #{convnet_forward.1} parent=1 // pred_region
      %177 = dma.done [#allocation12], 16
    $region101: #{convnet_forward.1} parent=1 // pred_fallthru
      _
    // Predicated region
    $region102: #{convnet_forward.1} parent=1 // pred_check
      _
    $region103: #{convnet_forward.1} parent=1 // pred_check_branch
      %179 = sbr.rel (0) target = $region105
    $region104: #{convnet_forward.1} parent=1 // pred_region
      %181 = dma.done [#allocation12], 16
    $region105: #{convnet_forward.1} parent=1 // pred_fallthru
      _
    // Predicated region
    $region106: #{convnet_forward.1} parent=1 // pred_check
      _
    $region107: #{convnet_forward.1} parent=1 // pred_check_branch
      %183 = sbr.rel (0) target = $region109
    $region108: #{convnet_forward.1} parent=1 // pred_region
      %185 = dma.done [#allocation15], 16
    $region109: #{convnet_forward.1} parent=1 // pred_fallthru
      _
    // Predicated region
    $region110: #{convnet_forward.1} parent=1 // pred_check
      _
    $region111: #{convnet_forward.1} parent=1 // pred_check_branch
      %187 = sbr.rel (0) target = $region113
    $region112: #{convnet_forward.1} parent=1 // pred_region
      %189 = dma.done [#allocation15], 16
    $region113: #{convnet_forward.1} parent=1 // pred_fallthru
      _
    // Predicated region
    $region114: #{convnet_forward.1} parent=1 // pred_check
      _
    $region115: #{convnet_forward.1} parent=1 // pred_check_branch
      %191 = sbr.rel (0) target = $region117
    $region116: #{convnet_forward.1} parent=1 // pred_region
      %193 = dma.done [#allocation18], 16
    $region117: #{convnet_forward.1} parent=1 // pred_fallthru
      _
    // Predicated region
    $region118: #{convnet_forward.1} parent=1 // pred_check
      _
    $region119: #{convnet_forward.1} parent=1 // pred_check_branch
      %195 = sbr.rel (0) target = $region121
    $region120: #{convnet_forward.1} parent=1 // pred_region
      %197 = dma.done [#allocation18], 16
    $region121: #{convnet_forward.1} parent=1 // pred_fallthru
      _
    // Predicated region
    $region122: #{convnet_forward.1} parent=1 // pred_check
      _
    $region123: #{convnet_forward.1} parent=1 // pred_check_branch
      %199 = sbr.rel (0) target = $region125
    $region124: #{convnet_forward.1} parent=1 // pred_region
      %201 = dma.done [#allocation21], 16
    $region125: #{convnet_forward.1} parent=1 // pred_fallthru
      _
    %202 = sfence
    %v203 = vld [vmem:[%s0] sm:$0xff]
    %v204 = vld [vmem:[%s0 + $0x8] sm:$0xff]
    %v205 = vld [vmem:[%s0 + $0x10] sm:$0xf]
    %v206 = vld [vmem:[%s0 + $0x18] sm:$0xff]
    %v207 = vld [vmem:[%s0 + $0x20] sm:$0xff]
    %v208 = vld [vmem:[%s0 + $0x28] sm:$0xf]
    %v209 = vld [vmem:[%s1] sm:$0x1]
    %v210 = vperm.slane %v209, 0
    %v211 = vmul.f32 %v203, %v210
    %v212 = vmul.f32 %v204, %v210
    %v213 = vmul.f32 %v205, %v210
    %v214 = vmul.f32 %v206, %v210
    %v215 = vmul.f32 %v207, %v210
    %v216 = vmul.f32 %v208, %v210
    %v217 = vadd.f32 %v211, 0.0
    %v218 = vadd.f32 %v212, 0.0
    %v219 = vadd.f32 %v213, 0.0
    %v220 = vadd.f32 %v214, 0.0
    %v221 = vadd.f32 %v215, 0.0
    %v222 = vadd.f32 %v216, 0.0
    %v223 = vld [vmem:[%s1 + $0x9] sm:$0x1]
    %v224 = vperm.slane %v223, 0
    %v225 = vmul.f32 %v203, %v224
    %v226 = vmul.f32 %v204, %v224
    %v227 = vmul.f32 %v205, %v224
    %v228 = vmul.f32 %v206, %v224
    %v229 = vmul.f32 %v207, %v224
    %v230 = vmul.f32 %v208, %v224
    %v231 = vadd.f32 %v225, 0.0
    %v232 = vadd.f32 %v226, 0.0
    %v233 = vadd.f32 %v227, 0.0
    %v234 = vadd.f32 %v228, 0.0
    %v235 = vadd.f32 %v229, 0.0
    %v236 = vadd.f32 %v230, 0.0
    %v237 = vld [vmem:[%s1 + $0x12] sm:$0x1]
    %v238 = vperm.slane %v237, 0
    %v239 = vmul.f32 %v203, %v238
    %v240 = vmul.f32 %v204, %v238
    %v241 = vmul.f32 %v205, %v238
    %v242 = vmul.f32 %v206, %v238
    %v243 = vmul.f32 %v207, %v238
    %v244 = vmul.f32 %v208, %v238
    %v245 = vadd.f32 %v239, 0.0
    %v246 = vadd.f32 %v240, 0.0
    %v247 = vadd.f32 %v241, 0.0
    %v248 = vadd.f32 %v242, 0.0
    %v249 = vadd.f32 %v243, 0.0
    %v250 = vadd.f32 %v244, 0.0
    %v251 = vld [vmem:[%s1 + $0x1b] sm:$0x1]
    %v252 = vperm.slane %v251, 0
    %v253 = vmul.f32 %v203, %v252
    %v254 = vmul.f32 %v204, %v252
    %v255 = vmul.f32 %v205, %v252
    %v256 = vmul.f32 %v206, %v252
    %v257 = vmul.f32 %v207, %v252
    %v258 = vmul.f32 %v208, %v252
    %v259 = vadd.f32 %v253, 0.0
    %v260 = vadd.f32 %v254, 0.0
    %v261 = vadd.f32 %v255, 0.0
    %v262 = vadd.f32 %v256, 0.0
    %v263 = vadd.f32 %v257, 0.0
    %v264 = vadd.f32 %v258, 0.0
    %v265 = vld [vmem:[%s1 + $0x3] sm:$0x1]
    %v266 = vperm.slane %v265, 0
    %v267 = vmul.f32 %v203, %v266
    %v268 = vmul.f32 %v204, %v266
    %v269 = vmul.f32 %v205, %v266
    %v270 = vmul.f32 %v206, %v266
    %v271 = vmul.f32 %v207, %v266
    %v272 = vmul.f32 %v208, %v266
    %vm279 = vcmask 1046528
    %v280 = vrot.slane %v267, 1
    %v281 = vrot.slane %v268, 1
    %v282 = vsel %vm279, %v280, %v281
    %v283 = vrot.slane %v269, 1
    %v284 = vsel %vm279, %v281, %v283
    %v285 = vrot.slane %v270, 1
    %v286 = vrot.slane %v271, 1
    %v287 = vsel %vm279, %v285, %v286
    %v288 = vrot.slane %v272, 1
    %v289 = vsel %vm279, %v286, %v288
    %v296 = vadd.f32 %v217, %v282
    %v297 = vadd.f32 %v218, %v284
    %v298 = vadd.f32 %v219, %v283
    %v299 = vadd.f32 %v220, %v287
    %v300 = vadd.f32 %v221, %v289
    %v301 = vadd.f32 %v222, %v288
    %v302 = vld [vmem:[%s1 + $0xc] sm:$0x1]
    %v303 = vperm.slane %v302, 0
    %v304 = vmul.f32 %v203, %v303
    %v305 = vmul.f32 %v204, %v303
    %v306 = vmul.f32 %v205, %v303
    %v307 = vmul.f32 %v206, %v303
    %v308 = vmul.f32 %v207, %v303
    %v309 = vmul.f32 %v208, %v303
    %v316 = vrot.slane %v304, 1
    %v317 = vrot.slane %v305, 1
    %v318 = vsel %vm279, %v316, %v317
    %v319 = vrot.slane %v306, 1
    %v320 = vsel %vm279, %v317, %v319
    %v321 = vrot.slane %v307, 1
    %v322 = vrot.slane %v308, 1
    %v323 = vsel %vm279, %v321, %v322
    %v324 = vrot.slane %v309, 1
    %v325 = vsel %vm279, %v322, %v324
    %v332 = vadd.f32 %v231, %v318
    %v333 = vadd.f32 %v232, %v320
    %v334 = vadd.f32 %v233, %v319
    %v335 = vadd.f32 %v234, %v323
    %v336 = vadd.f32 %v235, %v325
    %v337 = vadd.f32 %v236, %v324
    %v338 = vld [vmem:[%s1 + $0x15] sm:$0x1]
    %v339 = vperm.slane %v338, 0
    %v340 = vmul.f32 %v203, %v339
    %v341 = vmul.f32 %v204, %v339
    %v342 = vmul.f32 %v205, %v339
    %v343 = vmul.f32 %v206, %v339
    %v344 = vmul.f32 %v207, %v339
    %v345 = vmul.f32 %v208, %v339
    %v352 = vrot.slane %v340, 1
    %v353 = vrot.slane %v341, 1
    %v354 = vsel %vm279, %v352, %v353
    %v355 = vrot.slane %v342, 1
    %v356 = vsel %vm279, %v353, %v355
    %v357 = vrot.slane %v343, 1
    %v358 = vrot.slane %v344, 1
    %v359 = vsel %vm279, %v357, %v358
    %v360 = vrot.slane %v345, 1
    %v361 = vsel %vm279, %v358, %v360
    %v368 = vadd.f32 %v245, %v354
    %v369 = vadd.f32 %v246, %v356
    %v370 = vadd.f32 %v247, %v355
    %v371 = vadd.f32 %v248, %v359
    %v372 = vadd.f32 %v249, %v361
    %v373 = vadd.f32 %v250, %v360
    %v374 = vld [vmem:[%s1 + $0x1e] sm:$0x1]
    %v375 = vperm.slane %v374, 0
    %v376 = vmul.f32 %v203, %v375
    %v377 = vmul.f32 %v204, %v375
    %v378 = vmul.f32 %v205, %v375
    %v379 = vmul.f32 %v206, %v375
    %v380 = vmul.f32 %v207, %v375
    %v381 = vmul.f32 %v208, %v375
    %v388 = vrot.slane %v376, 1
    %v389 = vrot.slane %v377, 1
    %v390 = vsel %vm279, %v388, %v389
    %v391 = vrot.slane %v378, 1
    %v392 = vsel %vm279, %v389, %v391
    %v393 = vrot.slane %v379, 1
    %v394 = vrot.slane %v380, 1
    %v395 = vsel %vm279, %v393, %v394
    %v396 = vrot.slane %v381, 1
    %v397 = vsel %vm279, %v394, %v396
    %v404 = vadd.f32 %v259, %v390
    %v405 = vadd.f32 %v260, %v392
    %v406 = vadd.f32 %v261, %v391
    %v407 = vadd.f32 %v262, %v395
    %v408 = vadd.f32 %v263, %v397
    %v409 = vadd.f32 %v264, %v396
    %v410 = vld [vmem:[%s1 + $0x6] sm:$0x1]
    %v411 = vperm.slane %v410, 0
    %v412 = vmul.f32 %v203, %v411
    %v413 = vmul.f32 %v204, %v411
    %v414 = vmul.f32 %v205, %v411
    %v415 = vmul.f32 %v206, %v411
    %v416 = vmul.f32 %v207, %v411
    %v417 = vmul.f32 %v208, %v411
    %vm424 = vcmask 1045504
    %v425 = vrot.slane %v412, 2
    %v426 = vrot.slane %v413, 2
    %v427 = vsel %vm424, %v425, %v426
    %v428 = vrot.slane %v414, 2
    %v429 = vsel %vm424, %v426, %v428
    %v430 = vrot.slane %v415, 2
    %v431 = vrot.slane %v416, 2
    %v432 = vsel %vm424, %v430, %v431
    %v433 = vrot.slane %v417, 2
    %v434 = vsel %vm424, %v431, %v433
    %v441 = vadd.f32 %v296, %v427
    %v442 = vadd.f32 %v297, %v429
    %v443 = vadd.f32 %v298, %v428
    %v444 = vadd.f32 %v299, %v432
    %v445 = vadd.f32 %v300, %v434
    %v446 = vadd.f32 %v301, %v433
    %v447 = vld [vmem:[%s1 + $0xf] sm:$0x1]
    %v448 = vperm.slane %v447, 0
    %v449 = vmul.f32 %v203, %v448
    %v450 = vmul.f32 %v204, %v448
    %v451 = vmul.f32 %v205, %v448
    %v452 = vmul.f32 %v206, %v448
    %v453 = vmul.f32 %v207, %v448
    %v454 = vmul.f32 %v208, %v448
    %v461 = vrot.slane %v449, 2
    %v462 = vrot.slane %v450, 2
    %v463 = vsel %vm424, %v461, %v462
    %v464 = vrot.slane %v451, 2
    %v465 = vsel %vm424, %v462, %v464
    %v466 = vrot.slane %v452, 2
    %v467 = vrot.slane %v453, 2
    %v468 = vsel %vm424, %v466, %v467
    %v469 = vrot.slane %v454, 2
    %v470 = vsel %vm424, %v467, %v469
    %v477 = vadd.f32 %v332, %v463
    %v478 = vadd.f32 %v333, %v465
    %v479 = vadd.f32 %v334, %v464
    %v480 = vadd.f32 %v335, %v468
    %v481 = vadd.f32 %v336, %v470
    %v482 = vadd.f32 %v337, %v469
    %v483 = vld [vmem:[%s1 + $0x18] sm:$0x1]
    %v484 = vperm.slane %v483, 0
    %v485 = vmul.f32 %v203, %v484
    %v486 = vmul.f32 %v204, %v484
    %v487 = vmul.f32 %v205, %v484
    %v488 = vmul.f32 %v206, %v484
    %v489 = vmul.f32 %v207, %v484
    %v490 = vmul.f32 %v208, %v484
    %v497 = vrot.slane %v485, 2
    %v498 = vrot.slane %v486, 2
    %v499 = vsel %vm424, %v497, %v498
    %v500 = vrot.slane %v487, 2
    %v501 = vsel %vm424, %v498, %v500
    %v502 = vrot.slane %v488, 2
    %v503 = vrot.slane %v489, 2
    %v504 = vsel %vm424, %v502, %v503
    %v505 = vrot.slane %v490, 2
    %v506 = vsel %vm424, %v503, %v505
    %v513 = vadd.f32 %v368, %v499
    %v514 = vadd.f32 %v369, %v501
    %v515 = vadd.f32 %v370, %v500
    %v516 = vadd.f32 %v371, %v504
    %v517 = vadd.f32 %v372, %v506
    %v518 = vadd.f32 %v373, %v505
    %v519 = vld [vmem:[%s1 + $0x21] sm:$0x1]
    %v520 = vperm.slane %v519, 0
    %v521 = vmul.f32 %v203, %v520
    %v522 = vmul.f32 %v204, %v520
    %v523 = vmul.f32 %v205, %v520
    %v524 = vmul.f32 %v206, %v520
    %v525 = vmul.f32 %v207, %v520
    %v526 = vmul.f32 %v208, %v520
    %v533 = vrot.slane %v521, 2
    %v534 = vrot.slane %v522, 2
    %v535 = vsel %vm424, %v533, %v534
    %v536 = vrot.slane %v523, 2
    %v537 = vsel %vm424, %v534, %v536
    %v538 = vrot.slane %v524, 2
    %v539 = vrot.slane %v525, 2
    %v540 = vsel %vm424, %v538, %v539
    %v541 = vrot.slane %v526, 2
    %v542 = vsel %vm424, %v539, %v541
    %v549 = vadd.f32 %v404, %v535
    %v550 = vadd.f32 %v405, %v537
    %v551 = vadd.f32 %v406, %v536
    %v552 = vadd.f32 %v407, %v540
    %v553 = vadd.f32 %v408, %v542
    %v554 = vadd.f32 %v409, %v541
    %v555 = vld [vmem:[%s1 + $0x1] sm:$0x1]
    %v556 = vperm.slane %v555, 0
    %558 = vrot.lane.b32.xlu0 %v556, 1
    %v559 = vpop.permute.xlu0 %558
    %v561 = vmul.f32 %v203, %v559
    %v562 = vmul.f32 %v204, %v559
    %v563 = vmul.f32 %v205, %v559
    %v564 = vmul.f32 %v206, %v559
    %v565 = vmul.f32 %v207, %v559
    %v566 = vmul.f32 %v208, %v559
    %573 = vrot.lane.b32.xlu0 %v561, 127
    %v574 = vpop.permute.xlu0 %573
    %575 = vrot.lane.b32.xlu0 %v562, 127
    %v576 = vpop.permute.xlu0 %575
    %577 = vrot.lane.b32.xlu0 %v563, 127
    %v578 = vpop.permute.xlu0 %577
    %579 = vrot.lane.b32.xlu0 %v564, 127
    %v580 = vpop.permute.xlu0 %579
    %581 = vrot.lane.b32.xlu0 %v565, 127
    %v582 = vpop.permute.xlu0 %581
    %583 = vrot.lane.b32.xlu0 %v566, 127
    %v584 = vpop.permute.xlu0 %583
    %v591 = vadd.f32 %v441, %v574
    %v592 = vadd.f32 %v442, %v576
    %v593 = vadd.f32 %v443, %v578
    %v594 = vadd.f32 %v444, %v580
    %v595 = vadd.f32 %v445, %v582
    %v596 = vadd.f32 %v446, %v584
    %v597 = vld [vmem:[%s1 + $0xa] sm:$0x1]
    %v598 = vperm.slane %v597, 0
    %600 = vrot.lane.b32.xlu0 %v598, 1
    %v601 = vpop.permute.xlu0 %600
    %v603 = vmul.f32 %v203, %v601
    %v604 = vmul.f32 %v204, %v601
    %v605 = vmul.f32 %v205, %v601
    %v606 = vmul.f32 %v206, %v601
    %v607 = vmul.f32 %v207, %v601
    %v608 = vmul.f32 %v208, %v601
    %615 = vrot.lane.b32.xlu0 %v603, 127
    %v616 = vpop.permute.xlu0 %615
    %617 = vrot.lane.b32.xlu0 %v604, 127
    %v618 = vpop.permute.xlu0 %617
    %619 = vrot.lane.b32.xlu0 %v605, 127
    %v620 = vpop.permute.xlu0 %619
    %621 = vrot.lane.b32.xlu0 %v606, 127
    %v622 = vpop.permute.xlu0 %621
    %623 = vrot.lane.b32.xlu0 %v607, 127
    %v624 = vpop.permute.xlu0 %623
    %625 = vrot.lane.b32.xlu0 %v608, 127
    %v626 = vpop.permute.xlu0 %625
    %v633 = vadd.f32 %v477, %v616
    %v634 = vadd.f32 %v478, %v618
    %v635 = vadd.f32 %v479, %v620
    %v636 = vadd.f32 %v480, %v622
    %v637 = vadd.f32 %v481, %v624
    %v638 = vadd.f32 %v482, %v626
    %v639 = vld [vmem:[%s1 + $0x13] sm:$0x1]
    %v640 = vperm.slane %v639, 0
    %642 = vrot.lane.b32.xlu0 %v640, 1
    %v643 = vpop.permute.xlu0 %642
    %v645 = vmul.f32 %v203, %v643
    %v646 = vmul.f32 %v204, %v643
    %v647 = vmul.f32 %v205, %v643
    %v648 = vmul.f32 %v206, %v643
    %v649 = vmul.f32 %v207, %v643
    %v650 = vmul.f32 %v208, %v643
    %657 = vrot.lane.b32.xlu0 %v645, 127
    %v658 = vpop.permute.xlu0 %657
    %659 = vrot.lane.b32.xlu0 %v646, 127
    %v660 = vpop.permute.xlu0 %659
    %661 = vrot.lane.b32.xlu0 %v647, 127
    %v662 = vpop.permute.xlu0 %661
    %663 = vrot.lane.b32.xlu0 %v648, 127
    %v664 = vpop.permute.xlu0 %663
    %665 = vrot.lane.b32.xlu0 %v649, 127
    %v666 = vpop.permute.xlu0 %665
    %667 = vrot.lane.b32.xlu0 %v650, 127
    %v668 = vpop.permute.xlu0 %667
    %v675 = vadd.f32 %v513, %v658
    %v676 = vadd.f32 %v514, %v660
    %v677 = vadd.f32 %v515, %v662
    %v678 = vadd.f32 %v516, %v664
    %v679 = vadd.f32 %v517, %v666
    %v680 = vadd.f32 %v518, %v668
    %v681 = vld [vmem:[%s1 + $0x1c] sm:$0x1]
    %v682 = vperm.slane %v681, 0
    %684 = vrot.lane.b32.xlu0 %v682, 1
    %v685 = vpop.permute.xlu0 %684
    %v687 = vmul.f32 %v203, %v685
    %v688 = vmul.f32 %v204, %v685
    %v689 = vmul.f32 %v205, %v685
    %v690 = vmul.f32 %v206, %v685
    %v691 = vmul.f32 %v207, %v685
    %v692 = vmul.f32 %v208, %v685
    %699 = vrot.lane.b32.xlu0 %v687, 127
    %v700 = vpop.permute.xlu0 %699
    %701 = vrot.lane.b32.xlu0 %v688, 127
    %v702 = vpop.permute.xlu0 %701
    %703 = vrot.lane.b32.xlu0 %v689, 127
    %v704 = vpop.permute.xlu0 %703
    %705 = vrot.lane.b32.xlu0 %v690, 127
    %v706 = vpop.permute.xlu0 %705
    %707 = vrot.lane.b32.xlu0 %v691, 127
    %v708 = vpop.permute.xlu0 %707
    %709 = vrot.lane.b32.xlu0 %v692, 127
    %v710 = vpop.permute.xlu0 %709
    %v717 = vadd.f32 %v549, %v700
    %v718 = vadd.f32 %v550, %v702
    %v719 = vadd.f32 %v551, %v704
    %v720 = vadd.f32 %v552, %v706
    %v721 = vadd.f32 %v553, %v708
    %v722 = vadd.f32 %v554, %v710
    %v723 = vld [vmem:[%s1 + $0x4] sm:$0x1]
    %v724 = vperm.slane %v723, 0
    %726 = vrot.lane.b32.xlu0 %v724, 1
    %v727 = vpop.permute.xlu0 %726
    %v729 = vmul.f32 %v203, %v727
    %v730 = vmul.f32 %v204, %v727
    %v731 = vmul.f32 %v205, %v727
    %v732 = vmul.f32 %v206, %v727
    %v733 = vmul.f32 %v207, %v727
    %v734 = vmul.f32 %v208, %v727
    %v741 = vrot.slane %v729, 1
    %v742 = vrot.slane %v730, 1
    %v743 = vsel %vm279, %v741, %v742
    %v744 = vrot.slane %v731, 1
    %v745 = vsel %vm279, %v742, %v744
    %v746 = vrot.slane %v732, 1
    %v747 = vrot.slane %v733, 1
    %v748 = vsel %vm279, %v746, %v747
    %v749 = vrot.slane %v734, 1
    %v750 = vsel %vm279, %v747, %v749
    %751 = vrot.lane.b32.xlu0 %v743, 127
    %v752 = vpop.permute.xlu0 %751
    %753 = vrot.lane.b32.xlu0 %v745, 127
    %v754 = vpop.permute.xlu0 %753
    %755 = vrot.lane.b32.xlu0 %v744, 127
    %v756 = vpop.permute.xlu0 %755
    %757 = vrot.lane.b32.xlu0 %v748, 127
    %v758 = vpop.permute.xlu0 %757
    %759 = vrot.lane.b32.xlu0 %v750, 127
    %v760 = vpop.permute.xlu0 %759
    %761 = vrot.lane.b32.xlu0 %v749, 127
    %v762 = vpop.permute.xlu0 %761
    %v769 = vadd.f32 %v591, %v752
    %v770 = vadd.f32 %v592, %v754
    %v771 = vadd.f32 %v593, %v756
    %v772 = vadd.f32 %v594, %v758
    %v773 = vadd.f32 %v595, %v760
    %v774 = vadd.f32 %v596, %v762
    %v775 = vld [vmem:[%s1 + $0xd] sm:$0x1]
    %v776 = vperm.slane %v775, 0
    %778 = vrot.lane.b32.xlu0 %v776, 1
    %v779 = vpop.permute.xlu0 %778
    %v781 = vmul.f32 %v203, %v779
    %v782 = vmul.f32 %v204, %v779
    %v783 = vmul.f32 %v205, %v779
    %v784 = vmul.f32 %v206, %v779
    %v785 = vmul.f32 %v207, %v779
    %v786 = vmul.f32 %v208, %v779
    %v793 = vrot.slane %v781, 1
    %v794 = vrot.slane %v782, 1
    %v795 = vsel %vm279, %v793, %v794
    %v796 = vrot.slane %v783, 1
    %v797 = vsel %vm279, %v794, %v796
    %v798 = vrot.slane %v784, 1
    %v799 = vrot.slane %v785, 1
    %v800 = vsel %vm279, %v798, %v799
    %v801 = vrot.slane %v786, 1
    %v802 = vsel %vm279, %v799, %v801
    %803 = vrot.lane.b32.xlu0 %v795, 127
    %v804 = vpop.permute.xlu0 %803
    %805 = vrot.lane.b32.xlu0 %v797, 127
    %v806 = vpop.permute.xlu0 %805
    %807 = vrot.lane.b32.xlu0 %v796, 127
    %v808 = vpop.permute.xlu0 %807
    %809 = vrot.lane.b32.xlu0 %v800, 127
    %v810 = vpop.permute.xlu0 %809
    %811 = vrot.lane.b32.xlu0 %v802, 127
    %v812 = vpop.permute.xlu0 %811
    %813 = vrot.lane.b32.xlu0 %v801, 127
    %v814 = vpop.permute.xlu0 %813
    %v821 = vadd.f32 %v633, %v804
    %v822 = vadd.f32 %v634, %v806
    %v823 = vadd.f32 %v635, %v808
    %v824 = vadd.f32 %v636, %v810
    %v825 = vadd.f32 %v637, %v812
    %v826 = vadd.f32 %v638, %v814
    %v827 = vld [vmem:[%s1 + $0x16] sm:$0x1]
    %v828 = vperm.slane %v827, 0
    %830 = vrot.lane.b32.xlu0 %v828, 1
    %v831 = vpop.permute.xlu0 %830
    %v833 = vmul.f32 %v203, %v831
    %v834 = vmul.f32 %v204, %v831
    %v835 = vmul.f32 %v205, %v831
    %v836 = vmul.f32 %v206, %v831
    %v837 = vmul.f32 %v207, %v831
    %v838 = vmul.f32 %v208, %v831
    %v845 = vrot.slane %v833, 1
    %v846 = vrot.slane %v834, 1
    %v847 = vsel %vm279, %v845, %v846
    %v848 = vrot.slane %v835, 1
    %v849 = vsel %vm279, %v846, %v848
    %v850 = vrot.slane %v836, 1
    %v851 = vrot.slane %v837, 1
    %v852 = vsel %vm279, %v850, %v851
    %v853 = vrot.slane %v838, 1
    %v854 = vsel %vm279, %v851, %v853
    %855 = vrot.lane.b32.xlu0 %v847, 127
    %v856 = vpop.permute.xlu0 %855
    %857 = vrot.lane.b32.xlu0 %v849, 127
    %v858 = vpop.permute.xlu0 %857
    %859 = vrot.lane.b32.xlu0 %v848, 127
    %v860 = vpop.permute.xlu0 %859
    %861 = vrot.lane.b32.xlu0 %v852, 127
    %v862 = vpop.permute.xlu0 %861
    %863 = vrot.lane.b32.xlu0 %v854, 127
    %v864 = vpop.permute.xlu0 %863
    %865 = vrot.lane.b32.xlu0 %v853, 127
    %v866 = vpop.permute.xlu0 %865
    %v873 = vadd.f32 %v675, %v856
    %v874 = vadd.f32 %v676, %v858
    %v875 = vadd.f32 %v677, %v860
    %v876 = vadd.f32 %v678, %v862
    %v877 = vadd.f32 %v679, %v864
    %v878 = vadd.f32 %v680, %v866
    %v879 = vld [vmem:[%s1 + $0x1f] sm:$0x1]
    %v880 = vperm.slane %v879, 0
    %882 = vrot.lane.b32.xlu0 %v880, 1
    %v883 = vpop.permute.xlu0 %882
    %v885 = vmul.f32 %v203, %v883
    %v886 = vmul.f32 %v204, %v883
    %v887 = vmul.f32 %v205, %v883
    %v888 = vmul.f32 %v206, %v883
    %v889 = vmul.f32 %v207, %v883
    %v890 = vmul.f32 %v208, %v883
    %v897 = vrot.slane %v885, 1
    %v898 = vrot.slane %v886, 1
    %v899 = vsel %vm279, %v897, %v898
    %v900 = vrot.slane %v887, 1
    %v901 = vsel %vm279, %v898, %v900
    %v902 = vrot.slane %v888, 1
    %v903 = vrot.slane %v889, 1
    %v904 = vsel %vm279, %v902, %v903
    %v905 = vrot.slane %v890, 1
    %v906 = vsel %vm279, %v903, %v905
    %907 = vrot.lane.b32.xlu0 %v899, 127
    %v908 = vpop.permute.xlu0 %907
    %909 = vrot.lane.b32.xlu0 %v901, 127
    %v910 = vpop.permute.xlu0 %909
    %911 = vrot.lane.b32.xlu0 %v900, 127
    %v912 = vpop.permute.xlu0 %911
    %913 = vrot.lane.b32.xlu0 %v904, 127
    %v914 = vpop.permute.xlu0 %913
    %915 = vrot.lane.b32.xlu0 %v906, 127
    %v916 = vpop.permute.xlu0 %915
    %917 = vrot.lane.b32.xlu0 %v905, 127
    %v918 = vpop.permute.xlu0 %917
    %v925 = vadd.f32 %v717, %v908
    %v926 = vadd.f32 %v718, %v910
    %v927 = vadd.f32 %v719, %v912
    %v928 = vadd.f32 %v720, %v914
    %v929 = vadd.f32 %v721, %v916
    %v930 = vadd.f32 %v722, %v918
    %v931 = vld [vmem:[%s1 + $0x7] sm:$0x1]
    %v932 = vperm.slane %v931, 0
    %934 = vrot.lane.b32.xlu0 %v932, 1
    %v935 = vpop.permute.xlu0 %934
    %v937 = vmul.f32 %v203, %v935
    %v938 = vmul.f32 %v204, %v935
    %v939 = vmul.f32 %v205, %v935
    %v940 = vmul.f32 %v206, %v935
    %v941 = vmul.f32 %v207, %v935
    %v942 = vmul.f32 %v208, %v935
    %v949 = vrot.slane %v937, 2
    %v950 = vrot.slane %v938, 2
    %v951 = vsel %vm424, %v949, %v950
    %v952 = vrot.slane %v939, 2
    %v953 = vsel %vm424, %v950, %v952
    %v954 = vrot.slane %v940, 2
    %v955 = vrot.slane %v941, 2
    %v956 = vsel %vm424, %v954, %v955
    %v957 = vrot.slane %v942, 2
    %v958 = vsel %vm424, %v955, %v957
    %959 = vrot.lane.b32.xlu0 %v951, 127
    %v960 = vpop.permute.xlu0 %959
    %961 = vrot.lane.b32.xlu0 %v953, 127
    %v962 = vpop.permute.xlu0 %961
    %963 = vrot.lane.b32.xlu0 %v952, 127
    %v964 = vpop.permute.xlu0 %963
    %965 = vrot.lane.b32.xlu0 %v956, 127
    %v966 = vpop.permute.xlu0 %965
    %967 = vrot.lane.b32.xlu0 %v958, 127
    %v968 = vpop.permute.xlu0 %967
    %969 = vrot.lane.b32.xlu0 %v957, 127
    %v970 = vpop.permute.xlu0 %969
    %v977 = vadd.f32 %v769, %v960
    %v978 = vadd.f32 %v770, %v962
    %v979 = vadd.f32 %v771, %v964
    %v980 = vadd.f32 %v772, %v966
    %v981 = vadd.f32 %v773, %v968
    %v982 = vadd.f32 %v774, %v970
    %v983 = vld [vmem:[%s1 + $0x10] sm:$0x1]
    %v984 = vperm.slane %v983, 0
    %986 = vrot.lane.b32.xlu0 %v984, 1
    %v987 = vpop.permute.xlu0 %986
    %v989 = vmul.f32 %v203, %v987
    %v990 = vmul.f32 %v204, %v987
    %v991 = vmul.f32 %v205, %v987
    %v992 = vmul.f32 %v206, %v987
    %v993 = vmul.f32 %v207, %v987
    %v994 = vmul.f32 %v208, %v987
    %v1001 = vrot.slane %v989, 2
    %v1002 = vrot.slane %v990, 2
    %v1003 = vsel %vm424, %v1001, %v1002
    %v1004 = vrot.slane %v991, 2
    %v1005 = vsel %vm424, %v1002, %v1004
    %v1006 = vrot.slane %v992, 2
    %v1007 = vrot.slane %v993, 2
    %v1008 = vsel %vm424, %v1006, %v1007
    %v1009 = vrot.slane %v994, 2
    %v1010 = vsel %vm424, %v1007, %v1009
    %1011 = vrot.lane.b32.xlu0 %v1003, 127
    %v1012 = vpop.permute.xlu0 %1011
    %1013 = vrot.lane.b32.xlu0 %v1005, 127
    %v1014 = vpop.permute.xlu0 %1013
    %1015 = vrot.lane.b32.xlu0 %v1004, 127
    %v1016 = vpop.permute.xlu0 %1015
    %1017 = vrot.lane.b32.xlu0 %v1008, 127
    %v1018 = vpop.permute.xlu0 %1017
    %1019 = vrot.lane.b32.xlu0 %v1010, 127
    %v1020 = vpop.permute.xlu0 %1019
    %1021 = vrot.lane.b32.xlu0 %v1009, 127
    %v1022 = vpop.permute.xlu0 %1021
    %v1029 = vadd.f32 %v821, %v1012
    %v1030 = vadd.f32 %v822, %v1014
    %v1031 = vadd.f32 %v823, %v1016
    %v1032 = vadd.f32 %v824, %v1018
    %v1033 = vadd.f32 %v825, %v1020
    %v1034 = vadd.f32 %v826, %v1022
    %v1035 = vld [vmem:[%s1 + $0x19] sm:$0x1]
    %v1036 = vperm.slane %v1035, 0
    %1038 = vrot.lane.b32.xlu0 %v1036, 1
    %v1039 = vpop.permute.xlu0 %1038
    %v1041 = vmul.f32 %v203, %v1039
    %v1042 = vmul.f32 %v204, %v1039
    %v1043 = vmul.f32 %v205, %v1039
    %v1044 = vmul.f32 %v206, %v1039
    %v1045 = vmul.f32 %v207, %v1039
    %v1046 = vmul.f32 %v208, %v1039
    %v1053 = vrot.slane %v1041, 2
    %v1054 = vrot.slane %v1042, 2
    %v1055 = vsel %vm424, %v1053, %v1054
    %v1056 = vrot.slane %v1043, 2
    %v1057 = vsel %vm424, %v1054, %v1056
    %v1058 = vrot.slane %v1044, 2
    %v1059 = vrot.slane %v1045, 2
    %v1060 = vsel %vm424, %v1058, %v1059
    %v1061 = vrot.slane %v1046, 2
    %v1062 = vsel %vm424, %v1059, %v1061
    %1063 = vrot.lane.b32.xlu0 %v1055, 127
    %v1064 = vpop.permute.xlu0 %1063
    %1065 = vrot.lane.b32.xlu0 %v1057, 127
    %v1066 = vpop.permute.xlu0 %1065
    %1067 = vrot.lane.b32.xlu0 %v1056, 127
    %v1068 = vpop.permute.xlu0 %1067
    %1069 = vrot.lane.b32.xlu0 %v1060, 127
    %v1070 = vpop.permute.xlu0 %1069
    %1071 = vrot.lane.b32.xlu0 %v1062, 127
    %v1072 = vpop.permute.xlu0 %1071
    %1073 = vrot.lane.b32.xlu0 %v1061, 127
    %v1074 = vpop.permute.xlu0 %1073
    %v1081 = vadd.f32 %v873, %v1064
    %v1082 = vadd.f32 %v874, %v1066
    %v1083 = vadd.f32 %v875, %v1068
    %v1084 = vadd.f32 %v876, %v1070
    %v1085 = vadd.f32 %v877, %v1072
    %v1086 = vadd.f32 %v878, %v1074
    %v1087 = vld [vmem:[%s1 + $0x22] sm:$0x1]
    %v1088 = vperm.slane %v1087, 0
    %1090 = vrot.lane.b32.xlu0 %v1088, 1
    %v1091 = vpop.permute.xlu0 %1090
    %v1093 = vmul.f32 %v203, %v1091
    %v1094 = vmul.f32 %v204, %v1091
    %v1095 = vmul.f32 %v205, %v1091
    %v1096 = vmul.f32 %v206, %v1091
    %v1097 = vmul.f32 %v207, %v1091
    %v1098 = vmul.f32 %v208, %v1091
    %v1105 = vrot.slane %v1093, 2
    %v1106 = vrot.slane %v1094, 2
    %v1107 = vsel %vm424, %v1105, %v1106
    %v1108 = vrot.slane %v1095, 2
    %v1109 = vsel %vm424, %v1106, %v1108
    %v1110 = vrot.slane %v1096, 2
    %v1111 = vrot.slane %v1097, 2
    %v1112 = vsel %vm424, %v1110, %v1111
    %v1113 = vrot.slane %v1098, 2
    %v1114 = vsel %vm424, %v1111, %v1113
    %1115 = vrot.lane.b32.xlu0 %v1107, 127
    %v1116 = vpop.permute.xlu0 %1115
    %1117 = vrot.lane.b32.xlu0 %v1109, 127
    %v1118 = vpop.permute.xlu0 %1117
    %1119 = vrot.lane.b32.xlu0 %v1108, 127
    %v1120 = vpop.permute.xlu0 %1119
    %1121 = vrot.lane.b32.xlu0 %v1112, 127
    %v1122 = vpop.permute.xlu0 %1121
    %1123 = vrot.lane.b32.xlu0 %v1114, 127
    %v1124 = vpop.permute.xlu0 %1123
    %1125 = vrot.lane.b32.xlu0 %v1113, 127
    %v1126 = vpop.permute.xlu0 %1125
    %v1133 = vadd.f32 %v925, %v1116
    %v1134 = vadd.f32 %v926, %v1118
    %v1135 = vadd.f32 %v927, %v1120
    %v1136 = vadd.f32 %v928, %v1122
    %v1137 = vadd.f32 %v929, %v1124
    %v1138 = vadd.f32 %v930, %v1126
    %v1139 = vld [vmem:[%s1 + $0x2] sm:$0x1]
    %v1140 = vperm.slane %v1139, 0
    %1142 = vrot.lane.b32.xlu0 %v1140, 2
    %v1143 = vpop.permute.xlu0 %1142
    %v1145 = vmul.f32 %v203, %v1143
    %v1146 = vmul.f32 %v204, %v1143
    %v1147 = vmul.f32 %v205, %v1143
    %v1148 = vmul.f32 %v206, %v1143
    %v1149 = vmul.f32 %v207, %v1143
    %v1150 = vmul.f32 %v208, %v1143
    %1157 = vrot.lane.b32.xlu0 %v1145, 126
    %v1158 = vpop.permute.xlu0 %1157
    %1159 = vrot.lane.b32.xlu0 %v1146, 126
    %v1160 = vpop.permute.xlu0 %1159
    %1161 = vrot.lane.b32.xlu0 %v1147, 126
    %v1162 = vpop.permute.xlu0 %1161
    %1163 = vrot.lane.b32.xlu0 %v1148, 126
    %v1164 = vpop.permute.xlu0 %1163
    %1165 = vrot.lane.b32.xlu0 %v1149, 126
    %v1166 = vpop.permute.xlu0 %1165
    %1167 = vrot.lane.b32.xlu0 %v1150, 126
    %v1168 = vpop.permute.xlu0 %1167
    %v1175 = vadd.f32 %v977, %v1158
    %v1176 = vadd.f32 %v978, %v1160
    %v1177 = vadd.f32 %v979, %v1162
    %v1178 = vadd.f32 %v980, %v1164
    %v1179 = vadd.f32 %v981, %v1166
    %v1180 = vadd.f32 %v982, %v1168
    %v1181 = vld [vmem:[%s1 + $0xb] sm:$0x1]
    %v1182 = vperm.slane %v1181, 0
    %1184 = vrot.lane.b32.xlu0 %v1182, 2
    %v1185 = vpop.permute.xlu0 %1184
    %v1187 = vmul.f32 %v203, %v1185
    %v1188 = vmul.f32 %v204, %v1185
    %v1189 = vmul.f32 %v205, %v1185
    %v1190 = vmul.f32 %v206, %v1185
    %v1191 = vmul.f32 %v207, %v1185
    %v1192 = vmul.f32 %v208, %v1185
    %1199 = vrot.lane.b32.xlu0 %v1187, 126
    %v1200 = vpop.permute.xlu0 %1199
    %1201 = vrot.lane.b32.xlu0 %v1188, 126
    %v1202 = vpop.permute.xlu0 %1201
    %1203 = vrot.lane.b32.xlu0 %v1189, 126
    %v1204 = vpop.permute.xlu0 %1203
    %1205 = vrot.lane.b32.xlu0 %v1190, 126
    %v1206 = vpop.permute.xlu0 %1205
    %1207 = vrot.lane.b32.xlu0 %v1191, 126
    %v1208 = vpop.permute.xlu0 %1207
    %1209 = vrot.lane.b32.xlu0 %v1192, 126
    %v1210 = vpop.permute.xlu0 %1209
    %v1217 = vadd.f32 %v1029, %v1200
    %v1218 = vadd.f32 %v1030, %v1202
    %v1219 = vadd.f32 %v1031, %v1204
    %v1220 = vadd.f32 %v1032, %v1206
    %v1221 = vadd.f32 %v1033, %v1208
    %v1222 = vadd.f32 %v1034, %v1210
    %v1223 = vld [vmem:[%s1 + $0x14] sm:$0x1]
    %v1224 = vperm.slane %v1223, 0
    %1226 = vrot.lane.b32.xlu0 %v1224, 2
    %v1227 = vpop.permute.xlu0 %1226
    %v1229 = vmul.f32 %v203, %v1227
    %v1230 = vmul.f32 %v204, %v1227
    %v1231 = vmul.f32 %v205, %v1227
    %v1232 = vmul.f32 %v206, %v1227
    %v1233 = vmul.f32 %v207, %v1227
    %v1234 = vmul.f32 %v208, %v1227
    %1241 = vrot.lane.b32.xlu0 %v1229, 126
    %v1242 = vpop.permute.xlu0 %1241
    %1243 = vrot.lane.b32.xlu0 %v1230, 126
    %v1244 = vpop.permute.xlu0 %1243
    %1245 = vrot.lane.b32.xlu0 %v1231, 126
    %v1246 = vpop.permute.xlu0 %1245
    %1247 = vrot.lane.b32.xlu0 %v1232, 126
    %v1248 = vpop.permute.xlu0 %1247
    %1249 = vrot.lane.b32.xlu0 %v1233, 126
    %v1250 = vpop.permute.xlu0 %1249
    %1251 = vrot.lane.b32.xlu0 %v1234, 126
    %v1252 = vpop.permute.xlu0 %1251
    %v1259 = vadd.f32 %v1081, %v1242
    %v1260 = vadd.f32 %v1082, %v1244
    %v1261 = vadd.f32 %v1083, %v1246
    %v1262 = vadd.f32 %v1084, %v1248
    %v1263 = vadd.f32 %v1085, %v1250
    %v1264 = vadd.f32 %v1086, %v1252
    %v1265 = vld [vmem:[%s1 + $0x1d] sm:$0x1]
    %v1266 = vperm.slane %v1265, 0
    %1268 = vrot.lane.b32.xlu0 %v1266, 2
    %v1269 = vpop.permute.xlu0 %1268
    %v1271 = vmul.f32 %v203, %v1269
    %v1272 = vmul.f32 %v204, %v1269
    %v1273 = vmul.f32 %v205, %v1269
    %v1274 = vmul.f32 %v206, %v1269
    %v1275 = vmul.f32 %v207, %v1269
    %v1276 = vmul.f32 %v208, %v1269
    %1283 = vrot.lane.b32.xlu0 %v1271, 126
    %v1284 = vpop.permute.xlu0 %1283
    %1285 = vrot.lane.b32.xlu0 %v1272, 126
    %v1286 = vpop.permute.xlu0 %1285
    %1287 = vrot.lane.b32.xlu0 %v1273, 126
    %v1288 = vpop.permute.xlu0 %1287
    %1289 = vrot.lane.b32.xlu0 %v1274, 126
    %v1290 = vpop.permute.xlu0 %1289
    %1291 = vrot.lane.b32.xlu0 %v1275, 126
    %v1292 = vpop.permute.xlu0 %1291
    %1293 = vrot.lane.b32.xlu0 %v1276, 126
    %v1294 = vpop.permute.xlu0 %1293
    %v1301 = vadd.f32 %v1133, %v1284
    %v1302 = vadd.f32 %v1134, %v1286
    %v1303 = vadd.f32 %v1135, %v1288
    %v1304 = vadd.f32 %v1136, %v1290
    %v1305 = vadd.f32 %v1137, %v1292
    %v1306 = vadd.f32 %v1138, %v1294
    %v1307 = vld [vmem:[%s1 + $0x5] sm:$0x1]
    %v1308 = vperm.slane %v1307, 0
    %1310 = vrot.lane.b32.xlu0 %v1308, 2
    %v1311 = vpop.permute.xlu0 %1310
    %v1313 = vmul.f32 %v203, %v1311
    %v1314 = vmul.f32 %v204, %v1311
    %v1315 = vmul.f32 %v205, %v1311
    %v1316 = vmul.f32 %v206, %v1311
    %v1317 = vmul.f32 %v207, %v1311
    %v1318 = vmul.f32 %v208, %v1311
    %v1325 = vrot.slane %v1313, 1
    %v1326 = vrot.slane %v1314, 1
    %v1327 = vsel %vm279, %v1325, %v1326
    %v1328 = vrot.slane %v1315, 1
    %v1329 = vsel %vm279, %v1326, %v1328
    %v1330 = vrot.slane %v1316, 1
    %v1331 = vrot.slane %v1317, 1
    %v1332 = vsel %vm279, %v1330, %v1331
    %v1333 = vrot.slane %v1318, 1
    %v1334 = vsel %vm279, %v1331, %v1333
    %1335 = vrot.lane.b32.xlu0 %v1327, 126
    %v1336 = vpop.permute.xlu0 %1335
    %1337 = vrot.lane.b32.xlu0 %v1329, 126
    %v1338 = vpop.permute.xlu0 %1337
    %1339 = vrot.lane.b32.xlu0 %v1328, 126
    %v1340 = vpop.permute.xlu0 %1339
    %1341 = vrot.lane.b32.xlu0 %v1332, 126
    %v1342 = vpop.permute.xlu0 %1341
    %1343 = vrot.lane.b32.xlu0 %v1334, 126
    %v1344 = vpop.permute.xlu0 %1343
    %1345 = vrot.lane.b32.xlu0 %v1333, 126
    %v1346 = vpop.permute.xlu0 %1345
    %v1353 = vadd.f32 %v1175, %v1336
    %v1354 = vadd.f32 %v1176, %v1338
    %v1355 = vadd.f32 %v1177, %v1340
    %v1356 = vadd.f32 %v1178, %v1342
    %v1357 = vadd.f32 %v1179, %v1344
    %v1358 = vadd.f32 %v1180, %v1346
    %v1359 = vld [vmem:[%s1 + $0xe] sm:$0x1]
    %v1360 = vperm.slane %v1359, 0
    %1362 = vrot.lane.b32.xlu0 %v1360, 2
    %v1363 = vpop.permute.xlu0 %1362
    %v1365 = vmul.f32 %v203, %v1363
    %v1366 = vmul.f32 %v204, %v1363
    %v1367 = vmul.f32 %v205, %v1363
    %v1368 = vmul.f32 %v206, %v1363
    %v1369 = vmul.f32 %v207, %v1363
    %v1370 = vmul.f32 %v208, %v1363
    %v1377 = vrot.slane %v1365, 1
    %v1378 = vrot.slane %v1366, 1
    %v1379 = vsel %vm279, %v1377, %v1378
    %v1380 = vrot.slane %v1367, 1
    %v1381 = vsel %vm279, %v1378, %v1380
    %v1382 = vrot.slane %v1368, 1
    %v1383 = vrot.slane %v1369, 1
    %v1384 = vsel %vm279, %v1382, %v1383
    %v1385 = vrot.slane %v1370, 1
    %v1386 = vsel %vm279, %v1383, %v1385
    %1387 = vrot.lane.b32.xlu0 %v1379, 126
    %v1388 = vpop.permute.xlu0 %1387
    %1389 = vrot.lane.b32.xlu0 %v1381, 126
    %v1390 = vpop.permute.xlu0 %1389
    %1391 = vrot.lane.b32.xlu0 %v1380, 126
    %v1392 = vpop.permute.xlu0 %1391
    %1393 = vrot.lane.b32.xlu0 %v1384, 126
    %v1394 = vpop.permute.xlu0 %1393
    %1395 = vrot.lane.b32.xlu0 %v1386, 126
    %v1396 = vpop.permute.xlu0 %1395
    %1397 = vrot.lane.b32.xlu0 %v1385, 126
    %v1398 = vpop.permute.xlu0 %1397
    %v1405 = vadd.f32 %v1217, %v1388
    %v1406 = vadd.f32 %v1218, %v1390
    %v1407 = vadd.f32 %v1219, %v1392
    %v1408 = vadd.f32 %v1220, %v1394
    %v1409 = vadd.f32 %v1221, %v1396
    %v1410 = vadd.f32 %v1222, %v1398
    %v1411 = vld [vmem:[%s1 + $0x17] sm:$0x1]
    %v1412 = vperm.slane %v1411, 0
    %1414 = vrot.lane.b32.xlu0 %v1412, 2
    %v1415 = vpop.permute.xlu0 %1414
    %v1417 = vmul.f32 %v203, %v1415
    %v1418 = vmul.f32 %v204, %v1415
    %v1419 = vmul.f32 %v205, %v1415
    %v1420 = vmul.f32 %v206, %v1415
    %v1421 = vmul.f32 %v207, %v1415
    %v1422 = vmul.f32 %v208, %v1415
    %v1429 = vrot.slane %v1417, 1
    %v1430 = vrot.slane %v1418, 1
    %v1431 = vsel %vm279, %v1429, %v1430
    %v1432 = vrot.slane %v1419, 1
    %v1433 = vsel %vm279, %v1430, %v1432
    %v1434 = vrot.slane %v1420, 1
    %v1435 = vrot.slane %v1421, 1
    %v1436 = vsel %vm279, %v1434, %v1435
    %v1437 = vrot.slane %v1422, 1
    %v1438 = vsel %vm279, %v1435, %v1437
    %1439 = vrot.lane.b32.xlu0 %v1431, 126
    %v1440 = vpop.permute.xlu0 %1439
    %1441 = vrot.lane.b32.xlu0 %v1433, 126
    %v1442 = vpop.permute.xlu0 %1441
    %1443 = vrot.lane.b32.xlu0 %v1432, 126
    %v1444 = vpop.permute.xlu0 %1443
    %1445 = vrot.lane.b32.xlu0 %v1436, 126
    %v1446 = vpop.permute.xlu0 %1445
    %1447 = vrot.lane.b32.xlu0 %v1438, 126
    %v1448 = vpop.permute.xlu0 %1447
    %1449 = vrot.lane.b32.xlu0 %v1437, 126
    %v1450 = vpop.permute.xlu0 %1449
    %v1457 = vadd.f32 %v1259, %v1440
    %v1458 = vadd.f32 %v1260, %v1442
    %v1459 = vadd.f32 %v1261, %v1444
    %v1460 = vadd.f32 %v1262, %v1446
    %v1461 = vadd.f32 %v1263, %v1448
    %v1462 = vadd.f32 %v1264, %v1450
    %v1463 = vld [vmem:[%s1 + $0x20] sm:$0x1]
    %v1464 = vperm.slane %v1463, 0
    %1466 = vrot.lane.b32.xlu0 %v1464, 2
    %v1467 = vpop.permute.xlu0 %1466
    %v1469 = vmul.f32 %v203, %v1467
    %v1470 = vmul.f32 %v204, %v1467
    %v1471 = vmul.f32 %v205, %v1467
    %v1472 = vmul.f32 %v206, %v1467
    %v1473 = vmul.f32 %v207, %v1467
    %v1474 = vmul.f32 %v208, %v1467
    %v1481 = vrot.slane %v1469, 1
    %v1482 = vrot.slane %v1470, 1
    %v1483 = vsel %vm279, %v1481, %v1482
    %v1484 = vrot.slane %v1471, 1
    %v1485 = vsel %vm279, %v1482, %v1484
    %v1486 = vrot.slane %v1472, 1
    %v1487 = vrot.slane %v1473, 1
    %v1488 = vsel %vm279, %v1486, %v1487
    %v1489 = vrot.slane %v1474, 1
    %v1490 = vsel %vm279, %v1487, %v1489
    %1491 = vrot.lane.b32.xlu0 %v1483, 126
    %v1492 = vpop.permute.xlu0 %1491
    %1493 = vrot.lane.b32.xlu0 %v1485, 126
    %v1494 = vpop.permute.xlu0 %1493
    %1495 = vrot.lane.b32.xlu0 %v1484, 126
    %v1496 = vpop.permute.xlu0 %1495
    %1497 = vrot.lane.b32.xlu0 %v1488, 126
    %v1498 = vpop.permute.xlu0 %1497
    %1499 = vrot.lane.b32.xlu0 %v1490, 126
    %v1500 = vpop.permute.xlu0 %1499
    %1501 = vrot.lane.b32.xlu0 %v1489, 126
    %v1502 = vpop.permute.xlu0 %1501
    %v1509 = vadd.f32 %v1301, %v1492
    %v1510 = vadd.f32 %v1302, %v1494
    %v1511 = vadd.f32 %v1303, %v1496
    %v1512 = vadd.f32 %v1304, %v1498
    %v1513 = vadd.f32 %v1305, %v1500
    %v1514 = vadd.f32 %v1306, %v1502
    %v1515 = vld [vmem:[%s1 + $0x8] sm:$0x1]
    %v1516 = vperm.slane %v1515, 0
    %1518 = vrot.lane.b32.xlu0 %v1516, 2
    %v1519 = vpop.permute.xlu0 %1518
    %v1521 = vmul.f32 %v203, %v1519
    %v1522 = vmul.f32 %v204, %v1519
    %v1523 = vmul.f32 %v205, %v1519
    %v1524 = vmul.f32 %v206, %v1519
    %v1525 = vmul.f32 %v207, %v1519
    %v1526 = vmul.f32 %v208, %v1519
    %v1533 = vrot.slane %v1521, 2
    %v1534 = vrot.slane %v1522, 2
    %v1535 = vsel %vm424, %v1533, %v1534
    %v1536 = vrot.slane %v1523, 2
    %v1537 = vsel %vm424, %v1534, %v1536
    %v1538 = vrot.slane %v1524, 2
    %v1539 = vrot.slane %v1525, 2
    %v1540 = vsel %vm424, %v1538, %v1539
    %v1541 = vrot.slane %v1526, 2
    %v1542 = vsel %vm424, %v1539, %v1541
    %1543 = vrot.lane.b32.xlu0 %v1535, 126
    %v1544 = vpop.permute.xlu0 %1543
    %1545 = vrot.lane.b32.xlu0 %v1537, 126
    %v1546 = vpop.permute.xlu0 %1545
    %1547 = vrot.lane.b32.xlu0 %v1536, 126
    %v1548 = vpop.permute.xlu0 %1547
    %1549 = vrot.lane.b32.xlu0 %v1540, 126
    %v1550 = vpop.permute.xlu0 %1549
    %1551 = vrot.lane.b32.xlu0 %v1542, 126
    %v1552 = vpop.permute.xlu0 %1551
    %1553 = vrot.lane.b32.xlu0 %v1541, 126
    %v1554 = vpop.permute.xlu0 %1553
    %v1561 = vadd.f32 %v1353, %v1544
    %v1562 = vadd.f32 %v1354, %v1546
    %v1563 = vadd.f32 %v1355, %v1548
    %v1564 = vadd.f32 %v1356, %v1550
    %v1565 = vadd.f32 %v1357, %v1552
    %v1566 = vadd.f32 %v1358, %v1554
    %v1567 = vld [vmem:[%s1 + $0x11] sm:$0x1]
    %v1568 = vperm.slane %v1567, 0
    %1570 = vrot.lane.b32.xlu0 %v1568, 2
    %v1571 = vpop.permute.xlu0 %1570
    %v1573 = vmul.f32 %v203, %v1571
    %v1574 = vmul.f32 %v204, %v1571
    %v1575 = vmul.f32 %v205, %v1571
    %v1576 = vmul.f32 %v206, %v1571
    %v1577 = vmul.f32 %v207, %v1571
    %v1578 = vmul.f32 %v208, %v1571
    %v1585 = vrot.slane %v1573, 2
    %v1586 = vrot.slane %v1574, 2
    %v1587 = vsel %vm424, %v1585, %v1586
    %v1588 = vrot.slane %v1575, 2
    %v1589 = vsel %vm424, %v1586, %v1588
    %v1590 = vrot.slane %v1576, 2
    %v1591 = vrot.slane %v1577, 2
    %v1592 = vsel %vm424, %v1590, %v1591
    %v1593 = vrot.slane %v1578, 2
    %v1594 = vsel %vm424, %v1591, %v1593
    %1595 = vrot.lane.b32.xlu0 %v1587, 126
    %v1596 = vpop.permute.xlu0 %1595
    %1597 = vrot.lane.b32.xlu0 %v1589, 126
    %v1598 = vpop.permute.xlu0 %1597
    %1599 = vrot.lane.b32.xlu0 %v1588, 126
    %v1600 = vpop.permute.xlu0 %1599
    %1601 = vrot.lane.b32.xlu0 %v1592, 126
    %v1602 = vpop.permute.xlu0 %1601
    %1603 = vrot.lane.b32.xlu0 %v1594, 126
    %v1604 = vpop.permute.xlu0 %1603
    %1605 = vrot.lane.b32.xlu0 %v1593, 126
    %v1606 = vpop.permute.xlu0 %1605
    %v1613 = vadd.f32 %v1405, %v1596
    %v1614 = vadd.f32 %v1406, %v1598
    %v1615 = vadd.f32 %v1407, %v1600
    %v1616 = vadd.f32 %v1408, %v1602
    %v1617 = vadd.f32 %v1409, %v1604
    %v1618 = vadd.f32 %v1410, %v1606
    %v1619 = vld [vmem:[%s1 + $0x1a] sm:$0x1]
    %v1620 = vperm.slane %v1619, 0
    %1622 = vrot.lane.b32.xlu0 %v1620, 2
    %v1623 = vpop.permute.xlu0 %1622
    %v1625 = vmul.f32 %v203, %v1623
    %v1626 = vmul.f32 %v204, %v1623
    %v1627 = vmul.f32 %v205, %v1623
    %v1628 = vmul.f32 %v206, %v1623
    %v1629 = vmul.f32 %v207, %v1623
    %v1630 = vmul.f32 %v208, %v1623
    %v1637 = vrot.slane %v1625, 2
    %v1638 = vrot.slane %v1626, 2
    %v1639 = vsel %vm424, %v1637, %v1638
    %v1640 = vrot.slane %v1627, 2
    %v1641 = vsel %vm424, %v1638, %v1640
    %v1642 = vrot.slane %v1628, 2
    %v1643 = vrot.slane %v1629, 2
    %v1644 = vsel %vm424, %v1642, %v1643
    %v1645 = vrot.slane %v1630, 2
    %v1646 = vsel %vm424, %v1643, %v1645
    %1647 = vrot.lane.b32.xlu0 %v1639, 126
    %v1648 = vpop.permute.xlu0 %1647
    %1649 = vrot.lane.b32.xlu0 %v1641, 126
    %v1650 = vpop.permute.xlu0 %1649
    %1651 = vrot.lane.b32.xlu0 %v1640, 126
    %v1652 = vpop.permute.xlu0 %1651
    %1653 = vrot.lane.b32.xlu0 %v1644, 126
    %v1654 = vpop.permute.xlu0 %1653
    %1655 = vrot.lane.b32.xlu0 %v1646, 126
    %v1656 = vpop.permute.xlu0 %1655
    %1657 = vrot.lane.b32.xlu0 %v1645, 126
    %v1658 = vpop.permute.xlu0 %1657
    %v1665 = vadd.f32 %v1457, %v1648
    %v1666 = vadd.f32 %v1458, %v1650
    %v1667 = vadd.f32 %v1459, %v1652
    %v1668 = vadd.f32 %v1460, %v1654
    %v1669 = vadd.f32 %v1461, %v1656
    %v1670 = vadd.f32 %v1462, %v1658
    %v1671 = vld [vmem:[%s1 + $0x23] sm:$0x1]
    %v1672 = vperm.slane %v1671, 0
    %1674 = vrot.lane.b32.xlu0 %v1672, 2
    %v1675 = vpop.permute.xlu0 %1674
    %v1677 = vmul.f32 %v203, %v1675
    %v1678 = vmul.f32 %v204, %v1675
    %v1679 = vmul.f32 %v205, %v1675
    %v1680 = vmul.f32 %v206, %v1675
    %v1681 = vmul.f32 %v207, %v1675
    %v1682 = vmul.f32 %v208, %v1675
    %v1689 = vrot.slane %v1677, 2
    %v1690 = vrot.slane %v1678, 2
    %v1691 = vsel %vm424, %v1689, %v1690
    %v1692 = vrot.slane %v1679, 2
    %v1693 = vsel %vm424, %v1690, %v1692
    %v1694 = vrot.slane %v1680, 2
    %v1695 = vrot.slane %v1681, 2
    %v1696 = vsel %vm424, %v1694, %v1695
    %v1697 = vrot.slane %v1682, 2
    %v1698 = vsel %vm424, %v1695, %v1697
    %1699 = vrot.lane.b32.xlu0 %v1691, 126
    %v1700 = vpop.permute.xlu0 %1699
    %1701 = vrot.lane.b32.xlu0 %v1693, 126
    %v1702 = vpop.permute.xlu0 %1701
    %1703 = vrot.lane.b32.xlu0 %v1692, 126
    %v1704 = vpop.permute.xlu0 %1703
    %1705 = vrot.lane.b32.xlu0 %v1696, 126
    %v1706 = vpop.permute.xlu0 %1705
    %1707 = vrot.lane.b32.xlu0 %v1698, 126
    %v1708 = vpop.permute.xlu0 %1707
    %1709 = vrot.lane.b32.xlu0 %v1697, 126
    %v1710 = vpop.permute.xlu0 %1709
    %v1717 = vadd.f32 %v1509, %v1700
    %v1718 = vadd.f32 %v1510, %v1702
    %v1719 = vadd.f32 %v1511, %v1704
    %v1720 = vadd.f32 %v1512, %v1706
    %v1721 = vadd.f32 %v1513, %v1708
    %v1722 = vadd.f32 %v1514, %v1710
    %s1723 = sld [smem:[#allocation2]]
    %v1724 = vstv %s1723
    %v1725 = vadd.f32 %v1561, %v1724
    %v1726 = vadd.f32 %v1562, %v1724
    %v1727 = vadd.f32 %v1563, %v1724
    %v1728 = vadd.f32 %v1564, %v1724
    %v1729 = vadd.f32 %v1565, %v1724
    %v1730 = vadd.f32 %v1566, %v1724
    %vm1731 = vcmask 146432
    %v1732 = vsel %vm1731, %v1725, 0.0
    %v1733 = vsel %vm1731, %v1726, 0.0
    %v1734 = vadd.f32 %v1732, %v1733
    %vm1735 = vcmask 140288
    %v1736 = vsel %vm1735, %v1727, 0.0
    %v1737 = vadd.f32 %v1734, %v1736
    %v1738 = vsel %vm1731, %v1728, 0.0
    %v1739 = vadd.f32 %v1737, %v1738
    %v1740 = vsel %vm1731, %v1729, 0.0
    %v1741 = vadd.f32 %v1739, %v1740
    %v1742 = vsel %vm1735, %v1730, 0.0
    %v1743 = vadd.f32 %v1741, %v1742
    %1744 = vadd.xlane.f32.xlu0 %v1743
    %v1745 = vpop.xlane.xlu0 %1744
    %v1746 = vrot.slane %v1745, 4
    %v1747 = vadd.f32 %v1745, %v1746
    %v1748 = vrot.slane %v1747, 2
    %v1749 = vadd.f32 %v1747, %v1748
    %v1750 = vrot.slane %v1749, 1
    %v1751 = vadd.f32 %v1749, %v1750
    %s1752 = vtos %v1751
    %v1753 = vmul.f32 %v1725, %v1725
    %v1754 = vmul.f32 %v1726, %v1726
    %v1755 = vmul.f32 %v1727, %v1727
    %v1756 = vmul.f32 %v1728, %v1728
    %v1757 = vmul.f32 %v1729, %v1729
    %v1758 = vmul.f32 %v1730, %v1730
    %v1759 = vsel %vm1731, %v1753, 0.0
    %v1760 = vsel %vm1731, %v1754, 0.0
    %v1761 = vadd.f32 %v1759, %v1760
    %v1762 = vsel %vm1735, %v1755, 0.0
    %v1763 = vadd.f32 %v1761, %v1762
    %v1764 = vsel %vm1731, %v1756, 0.0
    %v1765 = vadd.f32 %v1763, %v1764
    %v1766 = vsel %vm1731, %v1757, 0.0
    %v1767 = vadd.f32 %v1765, %v1766
    %v1768 = vsel %vm1735, %v1758, 0.0
    %v1769 = vadd.f32 %v1767, %v1768
    %1770 = vadd.xlane.f32.xlu0 %v1769
    %v1771 = vpop.xlane.xlu0 %1770
    %v1772 = vrot.slane %v1771, 4
    %v1773 = vadd.f32 %v1771, %v1772
    %v1774 = vrot.slane %v1773, 2
    %v1775 = vadd.f32 %v1773, %v1774
    %v1776 = vrot.slane %v1775, 1
    %v1777 = vadd.f32 %v1775, %v1776
    %s1778 = vtos %v1777
    %s1779 = smul.f32 %s1752, 0.0015432099
    %s1780 = smul.f32 %s1778, 0.0015432099
    %s1781 = smul.f32 %s1779, %s1779
    %s1782 = ssub.f32 %s1780, %s1781
    %s1783 = sld [smem:[#allocation5]]
    %s1784 = sadd.f32 %s1782, 1e-05
    %v1785 = vstv %s1784
    %v1786 = vrsqrt.pop %v1785
    %v1787 = vmul.f32 %v1786, %v1785
    %v1788 = vmul.f32 %v1787, %v1786
    %v1789 = vmul.f32 0.5, %v1788
    %v1790 = vsub.f32 1.5, %v1789
    %v1791 = vmul.f32 %v1786, %v1790
    %vm1792 = vweird.f32 %v1785
    %vm1793 = vweird.f32 %v1786
    %vm1794 = vmor %vm1792, %vm1793
    %v1795 = vsel %vm1794, %v1786, %v1791
    %s1796 = vtos %v1795
    %s1797 = smul.f32 %s1783, %s1796
    %s1798 = sld [smem:[#allocation7]]
    %s1799 = smul.f32 %s1779, %s1797
    %s1800 = ssub.f32 %s1798, %s1799
    %v1801 = vstv %s1797
    %v1802 = vmul.f32 %v1725, %v1801
    %v1803 = vmul.f32 %v1726, %v1801
    %v1804 = vmul.f32 %v1727, %v1801
    %v1805 = vmul.f32 %v1728, %v1801
    %v1806 = vmul.f32 %v1729, %v1801
    %v1807 = vmul.f32 %v1730, %v1801
    %v1808 = vstv %s1800
    %v1809 = vadd.f32 %v1802, %v1808
    %v1810 = vadd.f32 %v1803, %v1808
    %v1811 = vadd.f32 %v1804, %v1808
    %v1812 = vadd.f32 %v1805, %v1808
    %v1813 = vadd.f32 %v1806, %v1808
    %v1814 = vadd.f32 %v1807, %v1808
    %v1815 = vmax.f32 %v1809, 0.0
    %v1816 = vmax.f32 %v1810, 0.0
    %v1817 = vmax.f32 %v1811, 0.0
    %v1818 = vmax.f32 %v1812, 0.0
    %v1819 = vmax.f32 %v1813, 0.0
    %v1820 = vmax.f32 %v1814, 0.0
    %1827 = vrot.lane.b32.xlu0 %v1815, 127
    %v1828 = vpop.permute.xlu0 %1827
    %1829 = vrot.lane.b32.xlu0 %v1816, 127
    %v1830 = vpop.permute.xlu0 %1829
    %1831 = vrot.lane.b32.xlu0 %v1817, 127
    %v1832 = vpop.permute.xlu0 %1831
    %1833 = vrot.lane.b32.xlu0 %v1818, 127
    %v1834 = vpop.permute.xlu0 %1833
    %1835 = vrot.lane.b32.xlu0 %v1819, 127
    %v1836 = vpop.permute.xlu0 %1835
    %1837 = vrot.lane.b32.xlu0 %v1820, 127
    %v1838 = vpop.permute.xlu0 %1837
    %v1845 = vmax.f32 %v1815, %v1828
    %v1846 = vmax.f32 %v1816, %v1830
    %v1847 = vmax.f32 %v1817, %v1832
    %v1848 = vmax.f32 %v1818, %v1834
    %v1849 = vmax.f32 %v1819, %v1836
    %v1850 = vmax.f32 %v1820, %v1838
    %v1857 = vrot.slane %v1845, 1
    %v1858 = vrot.slane %v1846, 1
    %v1859 = vsel %vm279, %v1857, %v1858
    %v1860 = vrot.slane %v1847, 1
    %v1861 = vsel %vm279, %v1858, %v1860
    %v1862 = vrot.slane %v1848, 1
    %v1863 = vrot.slane %v1849, 1
    %v1864 = vsel %vm279, %v1862, %v1863
    %v1865 = vrot.slane %v1850, 1
    %v1866 = vsel %vm279, %v1863, %v1865
    %v1873 = vmax.f32 %v1845, %v1859
    %v1874 = vmax.f32 %v1846, %v1861
    %v1875 = vmax.f32 %v1847, %v1860
    %v1876 = vmax.f32 %v1848, %v1864
    %v1877 = vmax.f32 %v1849, %v1866
    %v1878 = vmax.f32 %v1850, %v1865
    %s1879 = sld [smem:[#allocation2 + $0x1]]
    %v1880 = vstv %s1879
    %v1881 = vadd.f32 %v1613, %v1880
    %v1882 = vadd.f32 %v1614, %v1880
    %v1883 = vadd.f32 %v1615, %v1880
    %v1884 = vadd.f32 %v1616, %v1880
    %v1885 = vadd.f32 %v1617, %v1880
    %v1886 = vadd.f32 %v1618, %v1880
    %v1887 = vsel %vm1731, %v1881, 0.0
    %v1888 = vsel %vm1731, %v1882, 0.0
    %v1889 = vadd.f32 %v1887, %v1888
    %v1890 = vsel %vm1735, %v1883, 0.0
    %v1891 = vadd.f32 %v1889, %v1890
    %v1892 = vsel %vm1731, %v1884, 0.0
    %v1893 = vadd.f32 %v1891, %v1892
    %v1894 = vsel %vm1731, %v1885, 0.0
    %v1895 = vadd.f32 %v1893, %v1894
    %v1896 = vsel %vm1735, %v1886, 0.0
    %v1897 = vadd.f32 %v1895, %v1896
    %1898 = vadd.xlane.f32.xlu0 %v1897
    %v1899 = vpop.xlane.xlu0 %1898
    %v1900 = vrot.slane %v1899, 4
    %v1901 = vadd.f32 %v1899, %v1900
    %v1902 = vrot.slane %v1901, 2
    %v1903 = vadd.f32 %v1901, %v1902
    %v1904 = vrot.slane %v1903, 1
    %v1905 = vadd.f32 %v1903, %v1904
    %s1906 = vtos %v1905
    %v1907 = vmul.f32 %v1881, %v1881
    %v1908 = vmul.f32 %v1882, %v1882
    %v1909 = vmul.f32 %v1883, %v1883
    %v1910 = vmul.f32 %v1884, %v1884
    %v1911 = vmul.f32 %v1885, %v1885
    %v1912 = vmul.f32 %v1886, %v1886
    %v1913 = vsel %vm1731, %v1907, 0.0
    %v1914 = vsel %vm1731, %v1908, 0.0
    %v1915 = vadd.f32 %v1913, %v1914
    %v1916 = vsel %vm1735, %v1909, 0.0
    %v1917 = vadd.f32 %v1915, %v1916
    %v1918 = vsel %vm1731, %v1910, 0.0
    %v1919 = vadd.f32 %v1917, %v1918
    %v1920 = vsel %vm1731, %v1911, 0.0
    %v1921 = vadd.f32 %v1919, %v1920
    %v1922 = vsel %vm1735, %v1912, 0.0
    %v1923 = vadd.f32 %v1921, %v1922
    %1924 = vadd.xlane.f32.xlu0 %v1923
    %v1925 = vpop.xlane.xlu0 %1924
    %v1926 = vrot.slane %v1925, 4
    %v1927 = vadd.f32 %v1925, %v1926
    %v1928 = vrot.slane %v1927, 2
    %v1929 = vadd.f32 %v1927, %v1928
    %v1930 = vrot.slane %v1929, 1
    %v1931 = vadd.f32 %v1929, %v1930
    %s1932 = vtos %v1931
    %s1933 = smul.f32 %s1906, 0.0015432099
    %s1934 = smul.f32 %s1932, 0.0015432099
    %s1935 = smul.f32 %s1933, %s1933
    %s1936 = ssub.f32 %s1934, %s1935
    %s1937 = sld [smem:[#allocation5 + $0x1]]
    %s1938 = sadd.f32 %s1936, 1e-05
    %v1939 = vstv %s1938
    %v1940 = vrsqrt.pop %v1939
    %v1941 = vmul.f32 %v1940, %v1939
    %v1942 = vmul.f32 %v1941, %v1940
    %v1943 = vmul.f32 0.5, %v1942
    %v1944 = vsub.f32 1.5, %v1943
    %v1945 = vmul.f32 %v1940, %v1944
    %vm1946 = vweird.f32 %v1939
    %vm1947 = vweird.f32 %v1940
    %vm1948 = vmor %vm1946, %vm1947
    %v1949 = vsel %vm1948, %v1940, %v1945
    %s1950 = vtos %v1949
    %s1951 = smul.f32 %s1937, %s1950
    %s1952 = sld [smem:[#allocation7 + $0x1]]
    %s1953 = smul.f32 %s1933, %s1951
    %s1954 = ssub.f32 %s1952, %s1953
    %v1955 = vstv %s1951
    %v1956 = vmul.f32 %v1881, %v1955
    %v1957 = vmul.f32 %v1882, %v1955
    %v1958 = vmul.f32 %v1883, %v1955
    %v1959 = vmul.f32 %v1884, %v1955
    %v1960 = vmul.f32 %v1885, %v1955
    %v1961 = vmul.f32 %v1886, %v1955
    %v1962 = vstv %s1954
    %v1963 = vadd.f32 %v1956, %v1962
    %v1964 = vadd.f32 %v1957, %v1962
    %v1965 = vadd.f32 %v1958, %v1962
    %v1966 = vadd.f32 %v1959, %v1962
    %v1967 = vadd.f32 %v1960, %v1962
    %v1968 = vadd.f32 %v1961, %v1962
    %v1969 = vmax.f32 %v1963, 0.0
    %v1970 = vmax.f32 %v1964, 0.0
    %v1971 = vmax.f32 %v1965, 0.0
    %v1972 = vmax.f32 %v1966, 0.0
    %v1973 = vmax.f32 %v1967, 0.0
    %v1974 = vmax.f32 %v1968, 0.0
    %1981 = vrot.lane.b32.xlu0 %v1969, 127
    %v1982 = vpop.permute.xlu0 %1981
    %1983 = vrot.lane.b32.xlu0 %v1970, 127
    %v1984 = vpop.permute.xlu0 %1983
    %1985 = vrot.lane.b32.xlu0 %v1971, 127
    %v1986 = vpop.permute.xlu0 %1985
    %1987 = vrot.lane.b32.xlu0 %v1972, 127
    %v1988 = vpop.permute.xlu0 %1987
    %1989 = vrot.lane.b32.xlu0 %v1973, 127
    %v1990 = vpop.permute.xlu0 %1989
    %1991 = vrot.lane.b32.xlu0 %v1974, 127
    %v1992 = vpop.permute.xlu0 %1991
    %v1999 = vmax.f32 %v1969, %v1982
    %v2000 = vmax.f32 %v1970, %v1984
    %v2001 = vmax.f32 %v1971, %v1986
    %v2002 = vmax.f32 %v1972, %v1988
    %v2003 = vmax.f32 %v1973, %v1990
    %v2004 = vmax.f32 %v1974, %v1992
    %v2011 = vrot.slane %v1999, 1
    %v2012 = vrot.slane %v2000, 1
    %v2013 = vsel %vm279, %v2011, %v2012
    %v2014 = vrot.slane %v2001, 1
    %v2015 = vsel %vm279, %v2012, %v2014
    %v2016 = vrot.slane %v2002, 1
    %v2017 = vrot.slane %v2003, 1
    %v2018 = vsel %vm279, %v2016, %v2017
    %v2019 = vrot.slane %v2004, 1
    %v2020 = vsel %vm279, %v2017, %v2019
    %v2027 = vmax.f32 %v1999, %v2013
    %v2028 = vmax.f32 %v2000, %v2015
    %v2029 = vmax.f32 %v2001, %v2014
    %v2030 = vmax.f32 %v2002, %v2018
    %v2031 = vmax.f32 %v2003, %v2020
    %v2032 = vmax.f32 %v2004, %v2019
    %s2033 = sld [smem:[#allocation2 + $0x2]]
    %v2034 = vstv %s2033
    %v2035 = vadd.f32 %v1665, %v2034
    %v2036 = vadd.f32 %v1666, %v2034
    %v2037 = vadd.f32 %v1667, %v2034
    %v2038 = vadd.f32 %v1668, %v2034
    %v2039 = vadd.f32 %v1669, %v2034
    %v2040 = vadd.f32 %v1670, %v2034
    %v2041 = vsel %vm1731, %v2035, 0.0
    %v2042 = vsel %vm1731, %v2036, 0.0
    %v2043 = vadd.f32 %v2041, %v2042
    %v2044 = vsel %vm1735, %v2037, 0.0
    %v2045 = vadd.f32 %v2043, %v2044
    %v2046 = vsel %vm1731, %v2038, 0.0
    %v2047 = vadd.f32 %v2045, %v2046
    %v2048 = vsel %vm1731, %v2039, 0.0
    %v2049 = vadd.f32 %v2047, %v2048
    %v2050 = vsel %vm1735, %v2040, 0.0
    %v2051 = vadd.f32 %v2049, %v2050
    %2052 = vadd.xlane.f32.xlu0 %v2051
    %v2053 = vpop.xlane.xlu0 %2052
    %v2054 = vrot.slane %v2053, 4
    %v2055 = vadd.f32 %v2053, %v2054
    %v2056 = vrot.slane %v2055, 2
    %v2057 = vadd.f32 %v2055, %v2056
    %v2058 = vrot.slane %v2057, 1
    %v2059 = vadd.f32 %v2057, %v2058
    %s2060 = vtos %v2059
    %v2061 = vmul.f32 %v2035, %v2035
    %v2062 = vmul.f32 %v2036, %v2036
    %v2063 = vmul.f32 %v2037, %v2037
    %v2064 = vmul.f32 %v2038, %v2038
    %v2065 = vmul.f32 %v2039, %v2039
    %v2066 = vmul.f32 %v2040, %v2040
    %v2067 = vsel %vm1731, %v2061, 0.0
    %v2068 = vsel %vm1731, %v2062, 0.0
    %v2069 = vadd.f32 %v2067, %v2068
    %v2070 = vsel %vm1735, %v2063, 0.0
    %v2071 = vadd.f32 %v2069, %v2070
    %v2072 = vsel %vm1731, %v2064, 0.0
    %v2073 = vadd.f32 %v2071, %v2072
    %v2074 = vsel %vm1731, %v2065, 0.0
    %v2075 = vadd.f32 %v2073, %v2074
    %v2076 = vsel %vm1735, %v2066, 0.0
    %v2077 = vadd.f32 %v2075, %v2076
    %2078 = vadd.xlane.f32.xlu0 %v2077
    %v2079 = vpop.xlane.xlu0 %2078
    %v2080 = vrot.slane %v2079, 4
    %v2081 = vadd.f32 %v2079, %v2080
    %v2082 = vrot.slane %v2081, 2
    %v2083 = vadd.f32 %v2081, %v2082
    %v2084 = vrot.slane %v2083, 1
    %v2085 = vadd.f32 %v2083, %v2084
    %s2086 = vtos %v2085
    %s2087 = smul.f32 %s2060, 0.0015432099
    %s2088 = smul.f32 %s2086, 0.0015432099
    %s2089 = smul.f32 %s2087, %s2087
    %s2090 = ssub.f32 %s2088, %s2089
    %s2091 = sld [smem:[#allocation5 + $0x2]]
    %s2092 = sadd.f32 %s2090, 1e-05
    %v2093 = vstv %s2092
    %v2094 = vrsqrt.pop %v2093
    %v2095 = vmul.f32 %v2094, %v2093
    %v2096 = vmul.f32 %v2095, %v2094
    %v2097 = vmul.f32 0.5, %v2096
    %v2098 = vsub.f32 1.5, %v2097
    %v2099 = vmul.f32 %v2094, %v2098
    %vm2100 = vweird.f32 %v2093
    %vm2101 = vweird.f32 %v2094
    %vm2102 = vmor %vm2100, %vm2101
    %v2103 = vsel %vm2102, %v2094, %v2099
    %s2104 = vtos %v2103
    %s2105 = smul.f32 %s2091, %s2104
    %s2106 = sld [smem:[#allocation7 + $0x2]]
    %s2107 = smul.f32 %s2087, %s2105
    %s2108 = ssub.f32 %s2106, %s2107
    %v2109 = vstv %s2105
    %v2110 = vmul.f32 %v2035, %v2109
    %v2111 = vmul.f32 %v2036, %v2109
    %v2112 = vmul.f32 %v2037, %v2109
    %v2113 = vmul.f32 %v2038, %v2109
    %v2114 = vmul.f32 %v2039, %v2109
    %v2115 = vmul.f32 %v2040, %v2109
    %v2116 = vstv %s2108
    %v2117 = vadd.f32 %v2110, %v2116
    %v2118 = vadd.f32 %v2111, %v2116
    %v2119 = vadd.f32 %v2112, %v2116
    %v2120 = vadd.f32 %v2113, %v2116
    %v2121 = vadd.f32 %v2114, %v2116
    %v2122 = vadd.f32 %v2115, %v2116
    %v2123 = vmax.f32 %v2117, 0.0
    %v2124 = vmax.f32 %v2118, 0.0
    %v2125 = vmax.f32 %v2119, 0.0
    %v2126 = vmax.f32 %v2120, 0.0
    %v2127 = vmax.f32 %v2121, 0.0
    %v2128 = vmax.f32 %v2122, 0.0
    %2135 = vrot.lane.b32.xlu0 %v2123, 127
    %v2136 = vpop.permute.xlu0 %2135
    %2137 = vrot.lane.b32.xlu0 %v2124, 127
    %v2138 = vpop.permute.xlu0 %2137
    %2139 = vrot.lane.b32.xlu0 %v2125, 127
    %v2140 = vpop.permute.xlu0 %2139
    %2141 = vrot.lane.b32.xlu0 %v2126, 127
    %v2142 = vpop.permute.xlu0 %2141
    %2143 = vrot.lane.b32.xlu0 %v2127, 127
    %v2144 = vpop.permute.xlu0 %2143
    %2145 = vrot.lane.b32.xlu0 %v2128, 127
    %v2146 = vpop.permute.xlu0 %2145
    %v2153 = vmax.f32 %v2123, %v2136
    %v2154 = vmax.f32 %v2124, %v2138
    %v2155 = vmax.f32 %v2125, %v2140
    %v2156 = vmax.f32 %v2126, %v2142
    %v2157 = vmax.f32 %v2127, %v2144
    %v2158 = vmax.f32 %v2128, %v2146
    %v2165 = vrot.slane %v2153, 1
    %v2166 = vrot.slane %v2154, 1
    %v2167 = vsel %vm279, %v2165, %v2166
    %v2168 = vrot.slane %v2155, 1
    %v2169 = vsel %vm279, %v2166, %v2168
    %v2170 = vrot.slane %v2156, 1
    %v2171 = vrot.slane %v2157, 1
    %v2172 = vsel %vm279, %v2170, %v2171
    %v2173 = vrot.slane %v2158, 1
    %v2174 = vsel %vm279, %v2171, %v2173
    %v2181 = vmax.f32 %v2153, %v2167
    %v2182 = vmax.f32 %v2154, %v2169
    %v2183 = vmax.f32 %v2155, %v2168
    %v2184 = vmax.f32 %v2156, %v2172
    %v2185 = vmax.f32 %v2157, %v2174
    %v2186 = vmax.f32 %v2158, %v2173
    %s2187 = sld [smem:[#allocation2 + $0x3]]
    %v2188 = vstv %s2187
    %v2189 = vadd.f32 %v1717, %v2188
    %v2190 = vadd.f32 %v1718, %v2188
    %v2191 = vadd.f32 %v1719, %v2188
    %v2192 = vadd.f32 %v1720, %v2188
    %v2193 = vadd.f32 %v1721, %v2188
    %v2194 = vadd.f32 %v1722, %v2188
    %v2195 = vsel %vm1731, %v2189, 0.0
    %v2196 = vsel %vm1731, %v2190, 0.0
    %v2197 = vadd.f32 %v2195, %v2196
    %v2198 = vsel %vm1735, %v2191, 0.0
    %v2199 = vadd.f32 %v2197, %v2198
    %v2200 = vsel %vm1731, %v2192, 0.0
    %v2201 = vadd.f32 %v2199, %v2200
    %v2202 = vsel %vm1731, %v2193, 0.0
    %v2203 = vadd.f32 %v2201, %v2202
    %v2204 = vsel %vm1735, %v2194, 0.0
    %v2205 = vadd.f32 %v2203, %v2204
    %2206 = vadd.xlane.f32.xlu0 %v2205
    %v2207 = vpop.xlane.xlu0 %2206
    %v2208 = vrot.slane %v2207, 4
    %v2209 = vadd.f32 %v2207, %v2208
    %v2210 = vrot.slane %v2209, 2
    %v2211 = vadd.f32 %v2209, %v2210
    %v2212 = vrot.slane %v2211, 1
    %v2213 = vadd.f32 %v2211, %v2212
    %s2214 = vtos %v2213
    %v2215 = vmul.f32 %v2189, %v2189
    %v2216 = vmul.f32 %v2190, %v2190
    %v2217 = vmul.f32 %v2191, %v2191
    %v2218 = vmul.f32 %v2192, %v2192
    %v2219 = vmul.f32 %v2193, %v2193
    %v2220 = vmul.f32 %v2194, %v2194
    %v2221 = vsel %vm1731, %v2215, 0.0
    %v2222 = vsel %vm1731, %v2216, 0.0
    %v2223 = vadd.f32 %v2221, %v2222
    %v2224 = vsel %vm1735, %v2217, 0.0
    %v2225 = vadd.f32 %v2223, %v2224
    %v2226 = vsel %vm1731, %v2218, 0.0
    %v2227 = vadd.f32 %v2225, %v2226
    %v2228 = vsel %vm1731, %v2219, 0.0
    %v2229 = vadd.f32 %v2227, %v2228
    %v2230 = vsel %vm1735, %v2220, 0.0
    %v2231 = vadd.f32 %v2229, %v2230
    %2232 = vadd.xlane.f32.xlu0 %v2231
    %v2233 = vpop.xlane.xlu0 %2232
    %v2234 = vrot.slane %v2233, 4
    %v2235 = vadd.f32 %v2233, %v2234
    %v2236 = vrot.slane %v2235, 2
    %v2237 = vadd.f32 %v2235, %v2236
    %v2238 = vrot.slane %v2237, 1
    %v2239 = vadd.f32 %v2237, %v2238
    %s2240 = vtos %v2239
    %s2241 = smul.f32 %s2214, 0.0015432099
    %s2242 = smul.f32 %s2240, 0.0015432099
    %s2243 = smul.f32 %s2241, %s2241
    %s2244 = ssub.f32 %s2242, %s2243
    %s2245 = sld [smem:[#allocation5 + $0x3]]
    %s2246 = sadd.f32 %s2244, 1e-05
    %v2247 = vstv %s2246
    %v2248 = vrsqrt.pop %v2247
    %v2249 = vmul.f32 %v2248, %v2247
    %v2250 = vmul.f32 %v2249, %v2248
    %v2251 = vmul.f32 0.5, %v2250
    %v2252 = vsub.f32 1.5, %v2251
    %v2253 = vmul.f32 %v2248, %v2252
    %vm2254 = vweird.f32 %v2247
    %vm2255 = vweird.f32 %v2248
    %vm2256 = vmor %vm2254, %vm2255
    %v2257 = vsel %vm2256, %v2248, %v2253
    %s2258 = vtos %v2257
    %s2259 = smul.f32 %s2245, %s2258
    %s2260 = sld [smem:[#allocation7 + $0x3]]
    %s2261 = smul.f32 %s2241, %s2259
    %s2262 = ssub.f32 %s2260, %s2261
    %v2263 = vstv %s2259
    %v2264 = vmul.f32 %v2189, %v2263
    %v2265 = vmul.f32 %v2190, %v2263
    %v2266 = vmul.f32 %v2191, %v2263
    %v2267 = vmul.f32 %v2192, %v2263
    %v2268 = vmul.f32 %v2193, %v2263
    %v2269 = vmul.f32 %v2194, %v2263
    %v2270 = vstv %s2262
    %v2271 = vadd.f32 %v2264, %v2270
    %v2272 = vadd.f32 %v2265, %v2270
    %v2273 = vadd.f32 %v2266, %v2270
    %v2274 = vadd.f32 %v2267, %v2270
    %v2275 = vadd.f32 %v2268, %v2270
    %v2276 = vadd.f32 %v2269, %v2270
    %v2277 = vmax.f32 %v2271, 0.0
    %v2278 = vmax.f32 %v2272, 0.0
    %v2279 = vmax.f32 %v2273, 0.0
    %v2280 = vmax.f32 %v2274, 0.0
    %v2281 = vmax.f32 %v2275, 0.0
    %v2282 = vmax.f32 %v2276, 0.0
    %2289 = vrot.lane.b32.xlu0 %v2277, 127
    %v2290 = vpop.permute.xlu0 %2289
    %2291 = vrot.lane.b32.xlu0 %v2278, 127
    %v2292 = vpop.permute.xlu0 %2291
    %2293 = vrot.lane.b32.xlu0 %v2279, 127
    %v2294 = vpop.permute.xlu0 %2293
    %2295 = vrot.lane.b32.xlu0 %v2280, 127
    %v2296 = vpop.permute.xlu0 %2295
    %2297 = vrot.lane.b32.xlu0 %v2281, 127
    %v2298 = vpop.permute.xlu0 %2297
    %2299 = vrot.lane.b32.xlu0 %v2282, 127
    %v2300 = vpop.permute.xlu0 %2299
    %v2307 = vmax.f32 %v2277, %v2290
    %v2308 = vmax.f32 %v2278, %v2292
    %v2309 = vmax.f32 %v2279, %v2294
    %v2310 = vmax.f32 %v2280, %v2296
    %v2311 = vmax.f32 %v2281, %v2298
    %v2312 = vmax.f32 %v2282, %v2300
    %v2319 = vrot.slane %v2307, 1
    %v2320 = vrot.slane %v2308, 1
    %v2321 = vsel %vm279, %v2319, %v2320
    %v2322 = vrot.slane %v2309, 1
    %v2323 = vsel %vm279, %v2320, %v2322
    %v2324 = vrot.slane %v2310, 1
    %v2325 = vrot.slane %v2311, 1
    %v2326 = vsel %vm279, %v2324, %v2325
    %v2327 = vrot.slane %v2312, 1
    %v2328 = vsel %vm279, %v2325, %v2327
    %v2335 = vmax.f32 %v2307, %v2321
    %v2336 = vmax.f32 %v2308, %v2323
    %v2337 = vmax.f32 %v2309, %v2322
    %v2338 = vmax.f32 %v2310, %v2326
    %v2339 = vmax.f32 %v2311, %v2328
    %v2340 = vmax.f32 %v2312, %v2327
    %2347 = vrot.lane.b32.xlu0 %v2027, 17
    %v2348 = vpop.permute.xlu0 %2347
    %2349 = vrot.lane.b32.xlu0 %v2028, 17
    %v2350 = vpop.permute.xlu0 %2349
    %2351 = vrot.lane.b32.xlu0 %v2029, 17
    %v2352 = vpop.permute.xlu0 %2351
    %2353 = vrot.lane.b32.xlu0 %v2030, 17
    %v2354 = vpop.permute.xlu0 %2353
    %2355 = vrot.lane.b32.xlu0 %v2031, 17
    %v2356 = vpop.permute.xlu0 %2355
    %2357 = vrot.lane.b32.xlu0 %v2032, 17
    %v2358 = vpop.permute.xlu0 %2357
    %2371 = vrot.lane.b32.xlu0 %v2181, 34
    %v2372 = vpop.permute.xlu0 %2371
    %2373 = vrot.lane.b32.xlu0 %v2182, 34
    %v2374 = vpop.permute.xlu0 %2373
    %2375 = vrot.lane.b32.xlu0 %v2183, 34
    %v2376 = vpop.permute.xlu0 %2375
    %2377 = vrot.lane.b32.xlu0 %v2184, 34
    %v2378 = vpop.permute.xlu0 %2377
    %2379 = vrot.lane.b32.xlu0 %v2185, 34
    %v2380 = vpop.permute.xlu0 %2379
    %2381 = vrot.lane.b32.xlu0 %v2186, 34
    %v2382 = vpop.permute.xlu0 %2381
    %2395 = vrot.lane.b32.xlu0 %v2335, 51
    %v2396 = vpop.permute.xlu0 %2395
    %2397 = vrot.lane.b32.xlu0 %v2336, 51
    %v2398 = vpop.permute.xlu0 %2397
    %2399 = vrot.lane.b32.xlu0 %v2337, 51
    %v2400 = vpop.permute.xlu0 %2399
    %2401 = vrot.lane.b32.xlu0 %v2338, 51
    %v2402 = vpop.permute.xlu0 %2401
    %2403 = vrot.lane.b32.xlu0 %v2339, 51
    %v2404 = vpop.permute.xlu0 %2403
    %2405 = vrot.lane.b32.xlu0 %v2340, 51
    %v2406 = vpop.permute.xlu0 %2405
    %vm2413 = vcmask 138240
    %v2414 = vsel %vm2413, %v1873, %v2348
    %v2415 = vsel %vm2413, %v1874, %v2350
    %v2416 = vsel %vm2413, %v1875, %v2352
    %v2417 = vsel %vm2413, %v1876, %v2354
    %v2418 = vsel %vm2413, %v1877, %v2356
    %v2419 = vsel %vm2413, %v1878, %v2358
    %vm2420 = vcmask 277504
    %v2421 = vsel %vm2420, %v2414, %v2372
    %v2422 = vsel %vm2420, %v2415, %v2374
    %v2423 = vsel %vm2420, %v2416, %v2376
    %v2424 = vsel %vm2420, %v2417, %v2378
    %v2425 = vsel %vm2420, %v2418, %v2380
    %v2426 = vsel %vm2420, %v2419, %v2382
    %vm2427 = vcmask 416768
    %v2428 = vsel %vm2427, %v2421, %v2396
    %v2429 = vsel %vm2427, %v2422, %v2398
    %v2430 = vsel %vm2427, %v2423, %v2400
    %v2431 = vsel %vm2427, %v2424, %v2402
    %v2432 = vsel %vm2427, %v2425, %v2404
    %v2433 = vsel %vm2427, %v2426, %v2406
    %v2434 = vld [vmem:[%s5] sm:$0x1]
    %v2435 = vperm.slane %v2434, 0
    %v2436 = vmul.f32 %v2428, %v2435
    %v2437 = vmul.f32 %v2429, %v2435
    %v2438 = vmul.f32 %v2431, %v2435
    %v2439 = vmul.f32 %v2432, %v2435
    %v2440 = vadd.f32 %v2436, 0.0
    %v2441 = vadd.f32 %v2437, 0.0
    %v2442 = vadd.f32 %v2438, 0.0
    %v2443 = vadd.f32 %v2439, 0.0
    %v2444 = vld [vmem:[%s5 + $0x9] sm:$0x1]
    %v2445 = vperm.slane %v2444, 0
    %v2446 = vmul.f32 %v2428, %v2445
    %v2447 = vmul.f32 %v2429, %v2445
    %v2448 = vmul.f32 %v2431, %v2445
    %v2449 = vmul.f32 %v2432, %v2445
    %v2450 = vadd.f32 %v2446, 0.0
    %v2451 = vadd.f32 %v2447, 0.0
    %v2452 = vadd.f32 %v2448, 0.0
    %v2453 = vadd.f32 %v2449, 0.0
    %v2454 = vld [vmem:[%s5 + $0x12] sm:$0x1]
    %v2455 = vperm.slane %v2454, 0
    %v2456 = vmul.f32 %v2428, %v2455
    %v2457 = vmul.f32 %v2429, %v2455
    %v2458 = vmul.f32 %v2431, %v2455
    %v2459 = vmul.f32 %v2432, %v2455
    %v2460 = vadd.f32 %v2456, 0.0
    %v2461 = vadd.f32 %v2457, 0.0
    %v2462 = vadd.f32 %v2458, 0.0
    %v2463 = vadd.f32 %v2459, 0.0
    %v2464 = vld [vmem:[%s5 + $0x1b] sm:$0x1]
    %v2465 = vperm.slane %v2464, 0
    %v2466 = vmul.f32 %v2428, %v2465
    %v2467 = vmul.f32 %v2429, %v2465
    %v2468 = vmul.f32 %v2431, %v2465
    %v2469 = vmul.f32 %v2432, %v2465
    %v2470 = vadd.f32 %v2466, 0.0
    %v2471 = vadd.f32 %v2467, 0.0
    %v2472 = vadd.f32 %v2468, 0.0
    %v2473 = vadd.f32 %v2469, 0.0
    %v2474 = vld [vmem:[%s5 + $0x3] sm:$0x1]
    %v2475 = vperm.slane %v2474, 0
    %v2476 = vmul.f32 %v2428, %v2475
    %v2477 = vmul.f32 %v2429, %v2475
    %v2478 = vmul.f32 %v2431, %v2475
    %v2479 = vmul.f32 %v2432, %v2475
    %v2484 = vrot.slane %v2476, 1
    %v2485 = vrot.slane %v2477, 1
    %v2486 = vsel %vm279, %v2484, %v2485
    %v2487 = vrot.slane %v2478, 1
    %v2488 = vrot.slane %v2479, 1
    %v2489 = vsel %vm279, %v2487, %v2488
    %v2494 = vadd.f32 %v2440, %v2486
    %v2495 = vadd.f32 %v2441, %v2485
    %v2496 = vadd.f32 %v2442, %v2489
    %v2497 = vadd.f32 %v2443, %v2488
    %v2498 = vld [vmem:[%s5 + $0xc] sm:$0x1]
    %v2499 = vperm.slane %v2498, 0
    %v2500 = vmul.f32 %v2428, %v2499
    %v2501 = vmul.f32 %v2429, %v2499
    %v2502 = vmul.f32 %v2431, %v2499
    %v2503 = vmul.f32 %v2432, %v2499
    %v2508 = vrot.slane %v2500, 1
    %v2509 = vrot.slane %v2501, 1
    %v2510 = vsel %vm279, %v2508, %v2509
    %v2511 = vrot.slane %v2502, 1
    %v2512 = vrot.slane %v2503, 1
    %v2513 = vsel %vm279, %v2511, %v2512
    %v2518 = vadd.f32 %v2450, %v2510
    %v2519 = vadd.f32 %v2451, %v2509
    %v2520 = vadd.f32 %v2452, %v2513
    %v2521 = vadd.f32 %v2453, %v2512
    %v2522 = vld [vmem:[%s5 + $0x15] sm:$0x1]
    %v2523 = vperm.slane %v2522, 0
    %v2524 = vmul.f32 %v2428, %v2523
    %v2525 = vmul.f32 %v2429, %v2523
    %v2526 = vmul.f32 %v2431, %v2523
    %v2527 = vmul.f32 %v2432, %v2523
    %v2532 = vrot.slane %v2524, 1
    %v2533 = vrot.slane %v2525, 1
    %v2534 = vsel %vm279, %v2532, %v2533
    %v2535 = vrot.slane %v2526, 1
    %v2536 = vrot.slane %v2527, 1
    %v2537 = vsel %vm279, %v2535, %v2536
    %v2542 = vadd.f32 %v2460, %v2534
    %v2543 = vadd.f32 %v2461, %v2533
    %v2544 = vadd.f32 %v2462, %v2537
    %v2545 = vadd.f32 %v2463, %v2536
    %v2546 = vld [vmem:[%s5 + $0x1e] sm:$0x1]
    %v2547 = vperm.slane %v2546, 0
    %v2548 = vmul.f32 %v2428, %v2547
    %v2549 = vmul.f32 %v2429, %v2547
    %v2550 = vmul.f32 %v2431, %v2547
    %v2551 = vmul.f32 %v2432, %v2547
    %v2556 = vrot.slane %v2548, 1
    %v2557 = vrot.slane %v2549, 1
    %v2558 = vsel %vm279, %v2556, %v2557
    %v2559 = vrot.slane %v2550, 1
    %v2560 = vrot.slane %v2551, 1
    %v2561 = vsel %vm279, %v2559, %v2560
    %v2566 = vadd.f32 %v2470, %v2558
    %v2567 = vadd.f32 %v2471, %v2557
    %v2568 = vadd.f32 %v2472, %v2561
    %v2569 = vadd.f32 %v2473, %v2560
    %v2570 = vld [vmem:[%s5 + $0x6] sm:$0x1]
    %v2571 = vperm.slane %v2570, 0
    %v2572 = vmul.f32 %v2428, %v2571
    %v2573 = vmul.f32 %v2429, %v2571
    %v2574 = vmul.f32 %v2430, %v2571
    %v2575 = vmul.f32 %v2431, %v2571
    %v2576 = vmul.f32 %v2432, %v2571
    %v2577 = vmul.f32 %v2433, %v2571
    %v2584 = vrot.slane %v2572, 2
    %v2585 = vrot.slane %v2573, 2
    %v2586 = vsel %vm424, %v2584, %v2585
    %v2587 = vrot.slane %v2574, 2
    %v2588 = vsel %vm424, %v2585, %v2587
    %v2589 = vrot.slane %v2575, 2
    %v2590 = vrot.slane %v2576, 2
    %v2591 = vsel %vm424, %v2589, %v2590
    %v2592 = vrot.slane %v2577, 2
    %v2593 = vsel %vm424, %v2590, %v2592
    %v2598 = vadd.f32 %v2494, %v2586
    %v2599 = vadd.f32 %v2495, %v2588
    %v2600 = vadd.f32 %v2496, %v2591
    %v2601 = vadd.f32 %v2497, %v2593
    %v2602 = vld [vmem:[%s5 + $0xf] sm:$0x1]
    %v2603 = vperm.slane %v2602, 0
    %v2604 = vmul.f32 %v2428, %v2603
    %v2605 = vmul.f32 %v2429, %v2603
    %v2606 = vmul.f32 %v2430, %v2603
    %v2607 = vmul.f32 %v2431, %v2603
    %v2608 = vmul.f32 %v2432, %v2603
    %v2609 = vmul.f32 %v2433, %v2603
    %v2616 = vrot.slane %v2604, 2
    %v2617 = vrot.slane %v2605, 2
    %v2618 = vsel %vm424, %v2616, %v2617
    %v2619 = vrot.slane %v2606, 2
    %v2620 = vsel %vm424, %v2617, %v2619
    %v2621 = vrot.slane %v2607, 2
    %v2622 = vrot.slane %v2608, 2
    %v2623 = vsel %vm424, %v2621, %v2622
    %v2624 = vrot.slane %v2609, 2
    %v2625 = vsel %vm424, %v2622, %v2624
    %v2630 = vadd.f32 %v2518, %v2618
    %v2631 = vadd.f32 %v2519, %v2620
    %v2632 = vadd.f32 %v2520, %v2623
    %v2633 = vadd.f32 %v2521, %v2625
    %v2634 = vld [vmem:[%s5 + $0x18] sm:$0x1]
    %v2635 = vperm.slane %v2634, 0
    %v2636 = vmul.f32 %v2428, %v2635
    %v2637 = vmul.f32 %v2429, %v2635
    %v2638 = vmul.f32 %v2430, %v2635
    %v2639 = vmul.f32 %v2431, %v2635
    %v2640 = vmul.f32 %v2432, %v2635
    %v2641 = vmul.f32 %v2433, %v2635
    %v2648 = vrot.slane %v2636, 2
    %v2649 = vrot.slane %v2637, 2
    %v2650 = vsel %vm424, %v2648, %v2649
    %v2651 = vrot.slane %v2638, 2
    %v2652 = vsel %vm424, %v2649, %v2651
    %v2653 = vrot.slane %v2639, 2
    %v2654 = vrot.slane %v2640, 2
    %v2655 = vsel %vm424, %v2653, %v2654
    %v2656 = vrot.slane %v2641, 2
    %v2657 = vsel %vm424, %v2654, %v2656
    %v2662 = vadd.f32 %v2542, %v2650
    %v2663 = vadd.f32 %v2543, %v2652
    %v2664 = vadd.f32 %v2544, %v2655
    %v2665 = vadd.f32 %v2545, %v2657
    %v2666 = vld [vmem:[%s5 + $0x21] sm:$0x1]
    %v2667 = vperm.slane %v2666, 0
    %v2668 = vmul.f32 %v2428, %v2667
    %v2669 = vmul.f32 %v2429, %v2667
    %v2670 = vmul.f32 %v2430, %v2667
    %v2671 = vmul.f32 %v2431, %v2667
    %v2672 = vmul.f32 %v2432, %v2667
    %v2673 = vmul.f32 %v2433, %v2667
    %v2680 = vrot.slane %v2668, 2
    %v2681 = vrot.slane %v2669, 2
    %v2682 = vsel %vm424, %v2680, %v2681
    %v2683 = vrot.slane %v2670, 2
    %v2684 = vsel %vm424, %v2681, %v2683
    %v2685 = vrot.slane %v2671, 2
    %v2686 = vrot.slane %v2672, 2
    %v2687 = vsel %vm424, %v2685, %v2686
    %v2688 = vrot.slane %v2673, 2
    %v2689 = vsel %vm424, %v2686, %v2688
    %v2694 = vadd.f32 %v2566, %v2682
    %v2695 = vadd.f32 %v2567, %v2684
    %v2696 = vadd.f32 %v2568, %v2687
    %v2697 = vadd.f32 %v2569, %v2689
    %v2698 = vld [vmem:[%s5 + $0x1] sm:$0x1]
    %v2699 = vperm.slane %v2698, 0
    %2701 = vrot.lane.b32.xlu0 %v2699, 1
    %v2702 = vpop.permute.xlu0 %2701
    %v2704 = vmul.f32 %v2428, %v2702
    %v2705 = vmul.f32 %v2429, %v2702
    %v2706 = vmul.f32 %v2431, %v2702
    %v2707 = vmul.f32 %v2432, %v2702
    %2712 = vrot.lane.b32.xlu0 %v2704, 127
    %v2713 = vpop.permute.xlu0 %2712
    %2714 = vrot.lane.b32.xlu0 %v2705, 127
    %v2715 = vpop.permute.xlu0 %2714
    %2716 = vrot.lane.b32.xlu0 %v2706, 127
    %v2717 = vpop.permute.xlu0 %2716
    %2718 = vrot.lane.b32.xlu0 %v2707, 127
    %v2719 = vpop.permute.xlu0 %2718
    %v2724 = vadd.f32 %v2598, %v2713
    %v2725 = vadd.f32 %v2599, %v2715
    %v2726 = vadd.f32 %v2600, %v2717
    %v2727 = vadd.f32 %v2601, %v2719
    %v2728 = vld [vmem:[%s5 + $0xa] sm:$0x1]
    %v2729 = vperm.slane %v2728, 0
    %2731 = vrot.lane.b32.xlu0 %v2729, 1
    %v2732 = vpop.permute.xlu0 %2731
    %v2734 = vmul.f32 %v2428, %v2732
    %v2735 = vmul.f32 %v2429, %v2732
    %v2736 = vmul.f32 %v2431, %v2732
    %v2737 = vmul.f32 %v2432, %v2732
    %2742 = vrot.lane.b32.xlu0 %v2734, 127
    %v2743 = vpop.permute.xlu0 %2742
    %2744 = vrot.lane.b32.xlu0 %v2735, 127
    %v2745 = vpop.permute.xlu0 %2744
    %2746 = vrot.lane.b32.xlu0 %v2736, 127
    %v2747 = vpop.permute.xlu0 %2746
    %2748 = vrot.lane.b32.xlu0 %v2737, 127
    %v2749 = vpop.permute.xlu0 %2748
    %v2754 = vadd.f32 %v2630, %v2743
    %v2755 = vadd.f32 %v2631, %v2745
    %v2756 = vadd.f32 %v2632, %v2747
    %v2757 = vadd.f32 %v2633, %v2749
    %v2758 = vld [vmem:[%s5 + $0x13] sm:$0x1]
    %v2759 = vperm.slane %v2758, 0
    %2761 = vrot.lane.b32.xlu0 %v2759, 1
    %v2762 = vpop.permute.xlu0 %2761
    %v2764 = vmul.f32 %v2428, %v2762
    %v2765 = vmul.f32 %v2429, %v2762
    %v2766 = vmul.f32 %v2431, %v2762
    %v2767 = vmul.f32 %v2432, %v2762
    %2772 = vrot.lane.b32.xlu0 %v2764, 127
    %v2773 = vpop.permute.xlu0 %2772
    %2774 = vrot.lane.b32.xlu0 %v2765, 127
    %v2775 = vpop.permute.xlu0 %2774
    %2776 = vrot.lane.b32.xlu0 %v2766, 127
    %v2777 = vpop.permute.xlu0 %2776
    %2778 = vrot.lane.b32.xlu0 %v2767, 127
    %v2779 = vpop.permute.xlu0 %2778
    %v2784 = vadd.f32 %v2662, %v2773
    %v2785 = vadd.f32 %v2663, %v2775
    %v2786 = vadd.f32 %v2664, %v2777
    %v2787 = vadd.f32 %v2665, %v2779
    %v2788 = vld [vmem:[%s5 + $0x1c] sm:$0x1]
    %v2789 = vperm.slane %v2788, 0
    %2791 = vrot.lane.b32.xlu0 %v2789, 1
    %v2792 = vpop.permute.xlu0 %2791
    %v2794 = vmul.f32 %v2428, %v2792
    %v2795 = vmul.f32 %v2429, %v2792
    %v2796 = vmul.f32 %v2431, %v2792
    %v2797 = vmul.f32 %v2432, %v2792
    %2802 = vrot.lane.b32.xlu0 %v2794, 127
    %v2803 = vpop.permute.xlu0 %2802
    %2804 = vrot.lane.b32.xlu0 %v2795, 127
    %v2805 = vpop.permute.xlu0 %2804
    %2806 = vrot.lane.b32.xlu0 %v2796, 127
    %v2807 = vpop.permute.xlu0 %2806
    %2808 = vrot.lane.b32.xlu0 %v2797, 127
    %v2809 = vpop.permute.xlu0 %2808
    %v2814 = vadd.f32 %v2694, %v2803
    %v2815 = vadd.f32 %v2695, %v2805
    %v2816 = vadd.f32 %v2696, %v2807
    %v2817 = vadd.f32 %v2697, %v2809
    %v2818 = vld [vmem:[%s5 + $0x4] sm:$0x1]
    %v2819 = vperm.slane %v2818, 0
    %2821 = vrot.lane.b32.xlu0 %v2819, 1
    %v2822 = vpop.permute.xlu0 %2821
    %v2824 = vmul.f32 %v2428, %v2822
    %v2825 = vmul.f32 %v2429, %v2822
    %v2826 = vmul.f32 %v2431, %v2822
    %v2827 = vmul.f32 %v2432, %v2822
    %v2832 = vrot.slane %v2824, 1
    %v2833 = vrot.slane %v2825, 1
    %v2834 = vsel %vm279, %v2832, %v2833
    %v2835 = vrot.slane %v2826, 1
    %v2836 = vrot.slane %v2827, 1
    %v2837 = vsel %vm279, %v2835, %v2836
    %2838 = vrot.lane.b32.xlu0 %v2834, 127
    %v2839 = vpop.permute.xlu0 %2838
    %2840 = vrot.lane.b32.xlu0 %v2833, 127
    %v2841 = vpop.permute.xlu0 %2840
    %2842 = vrot.lane.b32.xlu0 %v2837, 127
    %v2843 = vpop.permute.xlu0 %2842
    %2844 = vrot.lane.b32.xlu0 %v2836, 127
    %v2845 = vpop.permute.xlu0 %2844
    %v2850 = vadd.f32 %v2724, %v2839
    %v2851 = vadd.f32 %v2725, %v2841
    %v2852 = vadd.f32 %v2726, %v2843
    %v2853 = vadd.f32 %v2727, %v2845
    %v2854 = vld [vmem:[%s5 + $0xd] sm:$0x1]
    %v2855 = vperm.slane %v2854, 0
    %2857 = vrot.lane.b32.xlu0 %v2855, 1
    %v2858 = vpop.permute.xlu0 %2857
    %v2860 = vmul.f32 %v2428, %v2858
    %v2861 = vmul.f32 %v2429, %v2858
    %v2862 = vmul.f32 %v2431, %v2858
    %v2863 = vmul.f32 %v2432, %v2858
    %v2868 = vrot.slane %v2860, 1
    %v2869 = vrot.slane %v2861, 1
    %v2870 = vsel %vm279, %v2868, %v2869
    %v2871 = vrot.slane %v2862, 1
    %v2872 = vrot.slane %v2863, 1
    %v2873 = vsel %vm279, %v2871, %v2872
    %2874 = vrot.lane.b32.xlu0 %v2870, 127
    %v2875 = vpop.permute.xlu0 %2874
    %2876 = vrot.lane.b32.xlu0 %v2869, 127
    %v2877 = vpop.permute.xlu0 %2876
    %2878 = vrot.lane.b32.xlu0 %v2873, 127
    %v2879 = vpop.permute.xlu0 %2878
    %2880 = vrot.lane.b32.xlu0 %v2872, 127
    %v2881 = vpop.permute.xlu0 %2880
    %v2886 = vadd.f32 %v2754, %v2875
    %v2887 = vadd.f32 %v2755, %v2877
    %v2888 = vadd.f32 %v2756, %v2879
    %v2889 = vadd.f32 %v2757, %v2881
    %v2890 = vld [vmem:[%s5 + $0x16] sm:$0x1]
    %v2891 = vperm.slane %v2890, 0
    %2893 = vrot.lane.b32.xlu0 %v2891, 1
    %v2894 = vpop.permute.xlu0 %2893
    %v2896 = vmul.f32 %v2428, %v2894
    %v2897 = vmul.f32 %v2429, %v2894
    %v2898 = vmul.f32 %v2431, %v2894
    %v2899 = vmul.f32 %v2432, %v2894
    %v2904 = vrot.slane %v2896, 1
    %v2905 = vrot.slane %v2897, 1
    %v2906 = vsel %vm279, %v2904, %v2905
    %v2907 = vrot.slane %v2898, 1
    %v2908 = vrot.slane %v2899, 1
    %v2909 = vsel %vm279, %v2907, %v2908
    %2910 = vrot.lane.b32.xlu0 %v2906, 127
    %v2911 = vpop.permute.xlu0 %2910
    %2912 = vrot.lane.b32.xlu0 %v2905, 127
    %v2913 = vpop.permute.xlu0 %2912
    %2914 = vrot.lane.b32.xlu0 %v2909, 127
    %v2915 = vpop.permute.xlu0 %2914
    %2916 = vrot.lane.b32.xlu0 %v2908, 127
    %v2917 = vpop.permute.xlu0 %2916
    %v2922 = vadd.f32 %v2784, %v2911
    %v2923 = vadd.f32 %v2785, %v2913
    %v2924 = vadd.f32 %v2786, %v2915
    %v2925 = vadd.f32 %v2787, %v2917
    %v2926 = vld [vmem:[%s5 + $0x1f] sm:$0x1]
    %v2927 = vperm.slane %v2926, 0
    %2929 = vrot.lane.b32.xlu0 %v2927, 1
    %v2930 = vpop.permute.xlu0 %2929
    %v2932 = vmul.f32 %v2428, %v2930
    %v2933 = vmul.f32 %v2429, %v2930
    %v2934 = vmul.f32 %v2431, %v2930
    %v2935 = vmul.f32 %v2432, %v2930
    %v2940 = vrot.slane %v2932, 1
    %v2941 = vrot.slane %v2933, 1
    %v2942 = vsel %vm279, %v2940, %v2941
    %v2943 = vrot.slane %v2934, 1
    %v2944 = vrot.slane %v2935, 1
    %v2945 = vsel %vm279, %v2943, %v2944
    %2946 = vrot.lane.b32.xlu0 %v2942, 127
    %v2947 = vpop.permute.xlu0 %2946
    %2948 = vrot.lane.b32.xlu0 %v2941, 127
    %v2949 = vpop.permute.xlu0 %2948
    %2950 = vrot.lane.b32.xlu0 %v2945, 127
    %v2951 = vpop.permute.xlu0 %2950
    %2952 = vrot.lane.b32.xlu0 %v2944, 127
    %v2953 = vpop.permute.xlu0 %2952
    %v2958 = vadd.f32 %v2814, %v2947
    %v2959 = vadd.f32 %v2815, %v2949
    %v2960 = vadd.f32 %v2816, %v2951
    %v2961 = vadd.f32 %v2817, %v2953
    %v2962 = vld [vmem:[%s5 + $0x7] sm:$0x1]
    %v2963 = vperm.slane %v2962, 0
    %2965 = vrot.lane.b32.xlu0 %v2963, 1
    %v2966 = vpop.permute.xlu0 %2965
    %v2968 = vmul.f32 %v2428, %v2966
    %v2969 = vmul.f32 %v2429, %v2966
    %v2970 = vmul.f32 %v2430, %v2966
    %v2971 = vmul.f32 %v2431, %v2966
    %v2972 = vmul.f32 %v2432, %v2966
    %v2973 = vmul.f32 %v2433, %v2966
    %v2980 = vrot.slane %v2968, 2
    %v2981 = vrot.slane %v2969, 2
    %v2982 = vsel %vm424, %v2980, %v2981
    %v2983 = vrot.slane %v2970, 2
    %v2984 = vsel %vm424, %v2981, %v2983
    %v2985 = vrot.slane %v2971, 2
    %v2986 = vrot.slane %v2972, 2
    %v2987 = vsel %vm424, %v2985, %v2986
    %v2988 = vrot.slane %v2973, 2
    %v2989 = vsel %vm424, %v2986, %v2988
    %2990 = vrot.lane.b32.xlu0 %v2982, 127
    %v2991 = vpop.permute.xlu0 %2990
    %2992 = vrot.lane.b32.xlu0 %v2984, 127
    %v2993 = vpop.permute.xlu0 %2992
    %2994 = vrot.lane.b32.xlu0 %v2987, 127
    %v2995 = vpop.permute.xlu0 %2994
    %2996 = vrot.lane.b32.xlu0 %v2989, 127
    %v2997 = vpop.permute.xlu0 %2996
    %v3002 = vadd.f32 %v2850, %v2991
    %v3003 = vadd.f32 %v2851, %v2993
    %v3004 = vadd.f32 %v2852, %v2995
    %v3005 = vadd.f32 %v2853, %v2997
    %v3006 = vld [vmem:[%s5 + $0x10] sm:$0x1]
    %v3007 = vperm.slane %v3006, 0
    %3009 = vrot.lane.b32.xlu0 %v3007, 1
    %v3010 = vpop.permute.xlu0 %3009
    %v3012 = vmul.f32 %v2428, %v3010
    %v3013 = vmul.f32 %v2429, %v3010
    %v3014 = vmul.f32 %v2430, %v3010
    %v3015 = vmul.f32 %v2431, %v3010
    %v3016 = vmul.f32 %v2432, %v3010
    %v3017 = vmul.f32 %v2433, %v3010
    %v3024 = vrot.slane %v3012, 2
    %v3025 = vrot.slane %v3013, 2
    %v3026 = vsel %vm424, %v3024, %v3025
    %v3027 = vrot.slane %v3014, 2
    %v3028 = vsel %vm424, %v3025, %v3027
    %v3029 = vrot.slane %v3015, 2
    %v3030 = vrot.slane %v3016, 2
    %v3031 = vsel %vm424, %v3029, %v3030
    %v3032 = vrot.slane %v3017, 2
    %v3033 = vsel %vm424, %v3030, %v3032
    %3034 = vrot.lane.b32.xlu0 %v3026, 127
    %v3035 = vpop.permute.xlu0 %3034
    %3036 = vrot.lane.b32.xlu0 %v3028, 127
    %v3037 = vpop.permute.xlu0 %3036
    %3038 = vrot.lane.b32.xlu0 %v3031, 127
    %v3039 = vpop.permute.xlu0 %3038
    %3040 = vrot.lane.b32.xlu0 %v3033, 127
    %v3041 = vpop.permute.xlu0 %3040
    %v3046 = vadd.f32 %v2886, %v3035
    %v3047 = vadd.f32 %v2887, %v3037
    %v3048 = vadd.f32 %v2888, %v3039
    %v3049 = vadd.f32 %v2889, %v3041
    %v3050 = vld [vmem:[%s5 + $0x19] sm:$0x1]
    %v3051 = vperm.slane %v3050, 0
    %3053 = vrot.lane.b32.xlu0 %v3051, 1
    %v3054 = vpop.permute.xlu0 %3053
    %v3056 = vmul.f32 %v2428, %v3054
    %v3057 = vmul.f32 %v2429, %v3054
    %v3058 = vmul.f32 %v2430, %v3054
    %v3059 = vmul.f32 %v2431, %v3054
    %v3060 = vmul.f32 %v2432, %v3054
    %v3061 = vmul.f32 %v2433, %v3054
    %v3068 = vrot.slane %v3056, 2
    %v3069 = vrot.slane %v3057, 2
    %v3070 = vsel %vm424, %v3068, %v3069
    %v3071 = vrot.slane %v3058, 2
    %v3072 = vsel %vm424, %v3069, %v3071
    %v3073 = vrot.slane %v3059, 2
    %v3074 = vrot.slane %v3060, 2
    %v3075 = vsel %vm424, %v3073, %v3074
    %v3076 = vrot.slane %v3061, 2
    %v3077 = vsel %vm424, %v3074, %v3076
    %3078 = vrot.lane.b32.xlu0 %v3070, 127
    %v3079 = vpop.permute.xlu0 %3078
    %3080 = vrot.lane.b32.xlu0 %v3072, 127
    %v3081 = vpop.permute.xlu0 %3080
    %3082 = vrot.lane.b32.xlu0 %v3075, 127
    %v3083 = vpop.permute.xlu0 %3082
    %3084 = vrot.lane.b32.xlu0 %v3077, 127
    %v3085 = vpop.permute.xlu0 %3084
    %v3090 = vadd.f32 %v2922, %v3079
    %v3091 = vadd.f32 %v2923, %v3081
    %v3092 = vadd.f32 %v2924, %v3083
    %v3093 = vadd.f32 %v2925, %v3085
    %v3094 = vld [vmem:[%s5 + $0x22] sm:$0x1]
    %v3095 = vperm.slane %v3094, 0
    %3097 = vrot.lane.b32.xlu0 %v3095, 1
    %v3098 = vpop.permute.xlu0 %3097
    %v3100 = vmul.f32 %v2428, %v3098
    %v3101 = vmul.f32 %v2429, %v3098
    %v3102 = vmul.f32 %v2430, %v3098
    %v3103 = vmul.f32 %v2431, %v3098
    %v3104 = vmul.f32 %v2432, %v3098
    %v3105 = vmul.f32 %v2433, %v3098
    %v3112 = vrot.slane %v3100, 2
    %v3113 = vrot.slane %v3101, 2
    %v3114 = vsel %vm424, %v3112, %v3113
    %v3115 = vrot.slane %v3102, 2
    %v3116 = vsel %vm424, %v3113, %v3115
    %v3117 = vrot.slane %v3103, 2
    %v3118 = vrot.slane %v3104, 2
    %v3119 = vsel %vm424, %v3117, %v3118
    %v3120 = vrot.slane %v3105, 2
    %v3121 = vsel %vm424, %v3118, %v3120
    %3122 = vrot.lane.b32.xlu0 %v3114, 127
    %v3123 = vpop.permute.xlu0 %3122
    %3124 = vrot.lane.b32.xlu0 %v3116, 127
    %v3125 = vpop.permute.xlu0 %3124
    %3126 = vrot.lane.b32.xlu0 %v3119, 127
    %v3127 = vpop.permute.xlu0 %3126
    %3128 = vrot.lane.b32.xlu0 %v3121, 127
    %v3129 = vpop.permute.xlu0 %3128
    %v3134 = vadd.f32 %v2958, %v3123
    %v3135 = vadd.f32 %v2959, %v3125
    %v3136 = vadd.f32 %v2960, %v3127
    %v3137 = vadd.f32 %v2961, %v3129
    %v3138 = vld [vmem:[%s5 + $0x2] sm:$0x1]
    %v3139 = vperm.slane %v3138, 0
    %3141 = vrot.lane.b32.xlu0 %v3139, 2
    %v3142 = vpop.permute.xlu0 %3141
    %v3144 = vmul.f32 %v2428, %v3142
    %v3145 = vmul.f32 %v2429, %v3142
    %v3146 = vmul.f32 %v2431, %v3142
    %v3147 = vmul.f32 %v2432, %v3142
    %3152 = vrot.lane.b32.xlu0 %v3144, 126
    %v3153 = vpop.permute.xlu0 %3152
    %3154 = vrot.lane.b32.xlu0 %v3145, 126
    %v3155 = vpop.permute.xlu0 %3154
    %3156 = vrot.lane.b32.xlu0 %v3146, 126
    %v3157 = vpop.permute.xlu0 %3156
    %3158 = vrot.lane.b32.xlu0 %v3147, 126
    %v3159 = vpop.permute.xlu0 %3158
    %v3164 = vadd.f32 %v3002, %v3153
    %v3165 = vadd.f32 %v3003, %v3155
    %v3166 = vadd.f32 %v3004, %v3157
    %v3167 = vadd.f32 %v3005, %v3159
    %v3168 = vld [vmem:[%s5 + $0xb] sm:$0x1]
    %v3169 = vperm.slane %v3168, 0
    %3171 = vrot.lane.b32.xlu0 %v3169, 2
    %v3172 = vpop.permute.xlu0 %3171
    %v3174 = vmul.f32 %v2428, %v3172
    %v3175 = vmul.f32 %v2429, %v3172
    %v3176 = vmul.f32 %v2431, %v3172
    %v3177 = vmul.f32 %v2432, %v3172
    %3182 = vrot.lane.b32.xlu0 %v3174, 126
    %v3183 = vpop.permute.xlu0 %3182
    %3184 = vrot.lane.b32.xlu0 %v3175, 126
    %v3185 = vpop.permute.xlu0 %3184
    %3186 = vrot.lane.b32.xlu0 %v3176, 126
    %v3187 = vpop.permute.xlu0 %3186
    %3188 = vrot.lane.b32.xlu0 %v3177, 126
    %v3189 = vpop.permute.xlu0 %3188
    %v3194 = vadd.f32 %v3046, %v3183
    %v3195 = vadd.f32 %v3047, %v3185
    %v3196 = vadd.f32 %v3048, %v3187
    %v3197 = vadd.f32 %v3049, %v3189
    %v3198 = vld [vmem:[%s5 + $0x14] sm:$0x1]
    %v3199 = vperm.slane %v3198, 0
    %3201 = vrot.lane.b32.xlu0 %v3199, 2
    %v3202 = vpop.permute.xlu0 %3201
    %v3204 = vmul.f32 %v2428, %v3202
    %v3205 = vmul.f32 %v2429, %v3202
    %v3206 = vmul.f32 %v2431, %v3202
    %v3207 = vmul.f32 %v2432, %v3202
    %3212 = vrot.lane.b32.xlu0 %v3204, 126
    %v3213 = vpop.permute.xlu0 %3212
    %3214 = vrot.lane.b32.xlu0 %v3205, 126
    %v3215 = vpop.permute.xlu0 %3214
    %3216 = vrot.lane.b32.xlu0 %v3206, 126
    %v3217 = vpop.permute.xlu0 %3216
    %3218 = vrot.lane.b32.xlu0 %v3207, 126
    %v3219 = vpop.permute.xlu0 %3218
    %v3224 = vadd.f32 %v3090, %v3213
    %v3225 = vadd.f32 %v3091, %v3215
    %v3226 = vadd.f32 %v3092, %v3217
    %v3227 = vadd.f32 %v3093, %v3219
    %v3228 = vld [vmem:[%s5 + $0x1d] sm:$0x1]
    %v3229 = vperm.slane %v3228, 0
    %3231 = vrot.lane.b32.xlu0 %v3229, 2
    %v3232 = vpop.permute.xlu0 %3231
    %v3234 = vmul.f32 %v2428, %v3232
    %v3235 = vmul.f32 %v2429, %v3232
    %v3236 = vmul.f32 %v2431, %v3232
    %v3237 = vmul.f32 %v2432, %v3232
    %3242 = vrot.lane.b32.xlu0 %v3234, 126
    %v3243 = vpop.permute.xlu0 %3242
    %3244 = vrot.lane.b32.xlu0 %v3235, 126
    %v3245 = vpop.permute.xlu0 %3244
    %3246 = vrot.lane.b32.xlu0 %v3236, 126
    %v3247 = vpop.permute.xlu0 %3246
    %3248 = vrot.lane.b32.xlu0 %v3237, 126
    %v3249 = vpop.permute.xlu0 %3248
    %v3254 = vadd.f32 %v3134, %v3243
    %v3255 = vadd.f32 %v3135, %v3245
    %v3256 = vadd.f32 %v3136, %v3247
    %v3257 = vadd.f32 %v3137, %v3249
    %v3258 = vld [vmem:[%s5 + $0x5] sm:$0x1]
    %v3259 = vperm.slane %v3258, 0
    %3261 = vrot.lane.b32.xlu0 %v3259, 2
    %v3262 = vpop.permute.xlu0 %3261
    %v3264 = vmul.f32 %v2428, %v3262
    %v3265 = vmul.f32 %v2429, %v3262
    %v3266 = vmul.f32 %v2431, %v3262
    %v3267 = vmul.f32 %v2432, %v3262
    %v3272 = vrot.slane %v3264, 1
    %v3273 = vrot.slane %v3265, 1
    %v3274 = vsel %vm279, %v3272, %v3273
    %v3275 = vrot.slane %v3266, 1
    %v3276 = vrot.slane %v3267, 1
    %v3277 = vsel %vm279, %v3275, %v3276
    %3278 = vrot.lane.b32.xlu0 %v3274, 126
    %v3279 = vpop.permute.xlu0 %3278
    %3280 = vrot.lane.b32.xlu0 %v3273, 126
    %v3281 = vpop.permute.xlu0 %3280
    %3282 = vrot.lane.b32.xlu0 %v3277, 126
    %v3283 = vpop.permute.xlu0 %3282
    %3284 = vrot.lane.b32.xlu0 %v3276, 126
    %v3285 = vpop.permute.xlu0 %3284
    %v3290 = vadd.f32 %v3164, %v3279
    %v3291 = vadd.f32 %v3165, %v3281
    %v3292 = vadd.f32 %v3166, %v3283
    %v3293 = vadd.f32 %v3167, %v3285
    %v3294 = vld [vmem:[%s5 + $0xe] sm:$0x1]
    %v3295 = vperm.slane %v3294, 0
    %3297 = vrot.lane.b32.xlu0 %v3295, 2
    %v3298 = vpop.permute.xlu0 %3297
    %v3300 = vmul.f32 %v2428, %v3298
    %v3301 = vmul.f32 %v2429, %v3298
    %v3302 = vmul.f32 %v2431, %v3298
    %v3303 = vmul.f32 %v2432, %v3298
    %v3308 = vrot.slane %v3300, 1
    %v3309 = vrot.slane %v3301, 1
    %v3310 = vsel %vm279, %v3308, %v3309
    %v3311 = vrot.slane %v3302, 1
    %v3312 = vrot.slane %v3303, 1
    %v3313 = vsel %vm279, %v3311, %v3312
    %3314 = vrot.lane.b32.xlu0 %v3310, 126
    %v3315 = vpop.permute.xlu0 %3314
    %3316 = vrot.lane.b32.xlu0 %v3309, 126
    %v3317 = vpop.permute.xlu0 %3316
    %3318 = vrot.lane.b32.xlu0 %v3313, 126
    %v3319 = vpop.permute.xlu0 %3318
    %3320 = vrot.lane.b32.xlu0 %v3312, 126
    %v3321 = vpop.permute.xlu0 %3320
    %v3326 = vadd.f32 %v3194, %v3315
    %v3327 = vadd.f32 %v3195, %v3317
    %v3328 = vadd.f32 %v3196, %v3319
    %v3329 = vadd.f32 %v3197, %v3321
    %v3330 = vld [vmem:[%s5 + $0x17] sm:$0x1]
    %v3331 = vperm.slane %v3330, 0
    %3333 = vrot.lane.b32.xlu0 %v3331, 2
    %v3334 = vpop.permute.xlu0 %3333
    %v3336 = vmul.f32 %v2428, %v3334
    %v3337 = vmul.f32 %v2429, %v3334
    %v3338 = vmul.f32 %v2431, %v3334
    %v3339 = vmul.f32 %v2432, %v3334
    %v3344 = vrot.slane %v3336, 1
    %v3345 = vrot.slane %v3337, 1
    %v3346 = vsel %vm279, %v3344, %v3345
    %v3347 = vrot.slane %v3338, 1
    %v3348 = vrot.slane %v3339, 1
    %v3349 = vsel %vm279, %v3347, %v3348
    %3350 = vrot.lane.b32.xlu0 %v3346, 126
    %v3351 = vpop.permute.xlu0 %3350
    %3352 = vrot.lane.b32.xlu0 %v3345, 126
    %v3353 = vpop.permute.xlu0 %3352
    %3354 = vrot.lane.b32.xlu0 %v3349, 126
    %v3355 = vpop.permute.xlu0 %3354
    %3356 = vrot.lane.b32.xlu0 %v3348, 126
    %v3357 = vpop.permute.xlu0 %3356
    %v3362 = vadd.f32 %v3224, %v3351
    %v3363 = vadd.f32 %v3225, %v3353
    %v3364 = vadd.f32 %v3226, %v3355
    %v3365 = vadd.f32 %v3227, %v3357
    %v3366 = vld [vmem:[%s5 + $0x20] sm:$0x1]
    %v3367 = vperm.slane %v3366, 0
    %3369 = vrot.lane.b32.xlu0 %v3367, 2
    %v3370 = vpop.permute.xlu0 %3369
    %v3372 = vmul.f32 %v2428, %v3370
    %v3373 = vmul.f32 %v2429, %v3370
    %v3374 = vmul.f32 %v2431, %v3370
    %v3375 = vmul.f32 %v2432, %v3370
    %v3380 = vrot.slane %v3372, 1
    %v3381 = vrot.slane %v3373, 1
    %v3382 = vsel %vm279, %v3380, %v3381
    %v3383 = vrot.slane %v3374, 1
    %v3384 = vrot.slane %v3375, 1
    %v3385 = vsel %vm279, %v3383, %v3384
    %3386 = vrot.lane.b32.xlu0 %v3382, 126
    %v3387 = vpop.permute.xlu0 %3386
    %3388 = vrot.lane.b32.xlu0 %v3381, 126
    %v3389 = vpop.permute.xlu0 %3388
    %3390 = vrot.lane.b32.xlu0 %v3385, 126
    %v3391 = vpop.permute.xlu0 %3390
    %3392 = vrot.lane.b32.xlu0 %v3384, 126
    %v3393 = vpop.permute.xlu0 %3392
    %v3398 = vadd.f32 %v3254, %v3387
    %v3399 = vadd.f32 %v3255, %v3389
    %v3400 = vadd.f32 %v3256, %v3391
    %v3401 = vadd.f32 %v3257, %v3393
    %v3402 = vld [vmem:[%s5 + $0x8] sm:$0x1]
    %v3403 = vperm.slane %v3402, 0
    %3405 = vrot.lane.b32.xlu0 %v3403, 2
    %v3406 = vpop.permute.xlu0 %3405
    %v3408 = vmul.f32 %v2428, %v3406
    %v3409 = vmul.f32 %v2429, %v3406
    %v3410 = vmul.f32 %v2430, %v3406
    %v3411 = vmul.f32 %v2431, %v3406
    %v3412 = vmul.f32 %v2432, %v3406
    %v3413 = vmul.f32 %v2433, %v3406
    %v3420 = vrot.slane %v3408, 2
    %v3421 = vrot.slane %v3409, 2
    %v3422 = vsel %vm424, %v3420, %v3421
    %v3423 = vrot.slane %v3410, 2
    %v3424 = vsel %vm424, %v3421, %v3423
    %v3425 = vrot.slane %v3411, 2
    %v3426 = vrot.slane %v3412, 2
    %v3427 = vsel %vm424, %v3425, %v3426
    %v3428 = vrot.slane %v3413, 2
    %v3429 = vsel %vm424, %v3426, %v3428
    %3430 = vrot.lane.b32.xlu0 %v3422, 126
    %v3431 = vpop.permute.xlu0 %3430
    %3432 = vrot.lane.b32.xlu0 %v3424, 126
    %v3433 = vpop.permute.xlu0 %3432
    %3434 = vrot.lane.b32.xlu0 %v3427, 126
    %v3435 = vpop.permute.xlu0 %3434
    %3436 = vrot.lane.b32.xlu0 %v3429, 126
    %v3437 = vpop.permute.xlu0 %3436
    %v3442 = vadd.f32 %v3290, %v3431
    %v3443 = vadd.f32 %v3291, %v3433
    %v3444 = vadd.f32 %v3292, %v3435
    %v3445 = vadd.f32 %v3293, %v3437
    %v3446 = vld [vmem:[%s5 + $0x11] sm:$0x1]
    %v3447 = vperm.slane %v3446, 0
    %3449 = vrot.lane.b32.xlu0 %v3447, 2
    %v3450 = vpop.permute.xlu0 %3449
    %v3452 = vmul.f32 %v2428, %v3450
    %v3453 = vmul.f32 %v2429, %v3450
    %v3454 = vmul.f32 %v2430, %v3450
    %v3455 = vmul.f32 %v2431, %v3450
    %v3456 = vmul.f32 %v2432, %v3450
    %v3457 = vmul.f32 %v2433, %v3450
    %v3464 = vrot.slane %v3452, 2
    %v3465 = vrot.slane %v3453, 2
    %v3466 = vsel %vm424, %v3464, %v3465
    %v3467 = vrot.slane %v3454, 2
    %v3468 = vsel %vm424, %v3465, %v3467
    %v3469 = vrot.slane %v3455, 2
    %v3470 = vrot.slane %v3456, 2
    %v3471 = vsel %vm424, %v3469, %v3470
    %v3472 = vrot.slane %v3457, 2
    %v3473 = vsel %vm424, %v3470, %v3472
    %3474 = vrot.lane.b32.xlu0 %v3466, 126
    %v3475 = vpop.permute.xlu0 %3474
    %3476 = vrot.lane.b32.xlu0 %v3468, 126
    %v3477 = vpop.permute.xlu0 %3476
    %3478 = vrot.lane.b32.xlu0 %v3471, 126
    %v3479 = vpop.permute.xlu0 %3478
    %3480 = vrot.lane.b32.xlu0 %v3473, 126
    %v3481 = vpop.permute.xlu0 %3480
    %v3486 = vadd.f32 %v3326, %v3475
    %v3487 = vadd.f32 %v3327, %v3477
    %v3488 = vadd.f32 %v3328, %v3479
    %v3489 = vadd.f32 %v3329, %v3481
    %v3490 = vld [vmem:[%s5 + $0x1a] sm:$0x1]
    %v3491 = vperm.slane %v3490, 0
    %3493 = vrot.lane.b32.xlu0 %v3491, 2
    %v3494 = vpop.permute.xlu0 %3493
    %v3496 = vmul.f32 %v2428, %v3494
    %v3497 = vmul.f32 %v2429, %v3494
    %v3498 = vmul.f32 %v2430, %v3494
    %v3499 = vmul.f32 %v2431, %v3494
    %v3500 = vmul.f32 %v2432, %v3494
    %v3501 = vmul.f32 %v2433, %v3494
    %v3508 = vrot.slane %v3496, 2
    %v3509 = vrot.slane %v3497, 2
    %v3510 = vsel %vm424, %v3508, %v3509
    %v3511 = vrot.slane %v3498, 2
    %v3512 = vsel %vm424, %v3509, %v3511
    %v3513 = vrot.slane %v3499, 2
    %v3514 = vrot.slane %v3500, 2
    %v3515 = vsel %vm424, %v3513, %v3514
    %v3516 = vrot.slane %v3501, 2
    %v3517 = vsel %vm424, %v3514, %v3516
    %3518 = vrot.lane.b32.xlu0 %v3510, 126
    %v3519 = vpop.permute.xlu0 %3518
    %3520 = vrot.lane.b32.xlu0 %v3512, 126
    %v3521 = vpop.permute.xlu0 %3520
    %3522 = vrot.lane.b32.xlu0 %v3515, 126
    %v3523 = vpop.permute.xlu0 %3522
    %3524 = vrot.lane.b32.xlu0 %v3517, 126
    %v3525 = vpop.permute.xlu0 %3524
    %v3530 = vadd.f32 %v3362, %v3519
    %v3531 = vadd.f32 %v3363, %v3521
    %v3532 = vadd.f32 %v3364, %v3523
    %v3533 = vadd.f32 %v3365, %v3525
    %v3534 = vld [vmem:[%s5 + $0x23] sm:$0x1]
    %v3535 = vperm.slane %v3534, 0
    %3537 = vrot.lane.b32.xlu0 %v3535, 2
    %v3538 = vpop.permute.xlu0 %3537
    %v3540 = vmul.f32 %v2428, %v3538
    %v3541 = vmul.f32 %v2429, %v3538
    %v3542 = vmul.f32 %v2430, %v3538
    %v3543 = vmul.f32 %v2431, %v3538
    %v3544 = vmul.f32 %v2432, %v3538
    %v3545 = vmul.f32 %v2433, %v3538
    %v3552 = vrot.slane %v3540, 2
    %v3553 = vrot.slane %v3541, 2
    %v3554 = vsel %vm424, %v3552, %v3553
    %v3555 = vrot.slane %v3542, 2
    %v3556 = vsel %vm424, %v3553, %v3555
    %v3557 = vrot.slane %v3543, 2
    %v3558 = vrot.slane %v3544, 2
    %v3559 = vsel %vm424, %v3557, %v3558
    %v3560 = vrot.slane %v3545, 2
    %v3561 = vsel %vm424, %v3558, %v3560
    %3562 = vrot.lane.b32.xlu0 %v3554, 126
    %v3563 = vpop.permute.xlu0 %3562
    %3564 = vrot.lane.b32.xlu0 %v3556, 126
    %v3565 = vpop.permute.xlu0 %3564
    %3566 = vrot.lane.b32.xlu0 %v3559, 126
    %v3567 = vpop.permute.xlu0 %3566
    %3568 = vrot.lane.b32.xlu0 %v3561, 126
    %v3569 = vpop.permute.xlu0 %3568
    %v3574 = vadd.f32 %v3398, %v3563
    %v3575 = vadd.f32 %v3399, %v3565
    %v3576 = vadd.f32 %v3400, %v3567
    %v3577 = vadd.f32 %v3401, %v3569
    %s3578 = sld [smem:[#allocation8]]
    %v3579 = vstv %s3578
    %v3580 = vadd.f32 %v3442, %v3579
    %v3581 = vadd.f32 %v3443, %v3579
    %v3582 = vadd.f32 %v3444, %v3579
    %v3583 = vadd.f32 %v3445, %v3579
    %3588 = vrot.lane.b32.xlu0 %v3442, 111
    %v3589 = vpop.permute.xlu0 %3588
    %3590 = vrot.lane.b32.xlu0 %v3443, 111
    %v3591 = vpop.permute.xlu0 %3590
    %3592 = vrot.lane.b32.xlu0 %v3444, 111
    %v3593 = vpop.permute.xlu0 %3592
    %3594 = vrot.lane.b32.xlu0 %v3445, 111
    %v3595 = vpop.permute.xlu0 %3594
    %v3600 = vadd.f32 %v3580, %v3589
    %v3601 = vadd.f32 %v3581, %v3591
    %v3602 = vadd.f32 %v3582, %v3593
    %v3603 = vadd.f32 %v3583, %v3595
    %3604 = vrot.lane.b32.xlu0 %v3442, 94
    %v3605 = vpop.permute.xlu0 %3604
    %3606 = vrot.lane.b32.xlu0 %v3443, 94
    %v3607 = vpop.permute.xlu0 %3606
    %3608 = vrot.lane.b32.xlu0 %v3444, 94
    %v3609 = vpop.permute.xlu0 %3608
    %3610 = vrot.lane.b32.xlu0 %v3445, 94
    %v3611 = vpop.permute.xlu0 %3610
    %v3616 = vadd.f32 %v3600, %v3605
    %v3617 = vadd.f32 %v3601, %v3607
    %v3618 = vadd.f32 %v3602, %v3609
    %v3619 = vadd.f32 %v3603, %v3611
    %3620 = vrot.lane.b32.xlu0 %v3442, 77
    %v3621 = vpop.permute.xlu0 %3620
    %3622 = vrot.lane.b32.xlu0 %v3443, 77
    %v3623 = vpop.permute.xlu0 %3622
    %3624 = vrot.lane.b32.xlu0 %v3444, 77
    %v3625 = vpop.permute.xlu0 %3624
    %3626 = vrot.lane.b32.xlu0 %v3445, 77
    %v3627 = vpop.permute.xlu0 %3626
    %v3632 = vadd.f32 %v3616, %v3621
    %v3633 = vadd.f32 %v3617, %v3623
    %v3634 = vadd.f32 %v3618, %v3625
    %v3635 = vadd.f32 %v3619, %v3627
    %vm3636 = vcmask 121856
    %v3637 = vsel %vm3636, %v3632, 0.0
    %vm3638 = vcmask 120832
    %v3639 = vsel %vm3638, %v3633, 0.0
    %v3640 = vadd.f32 %v3637, %v3639
    %v3641 = vsel %vm3636, %v3634, 0.0
    %v3642 = vadd.f32 %v3640, %v3641
    %v3643 = vsel %vm3638, %v3635, 0.0
    %v3644 = vadd.f32 %v3642, %v3643
    %3645 = vadd.xlane.f32.xlu0 %v3644
    %v3646 = vpop.xlane.xlu0 %3645
    %v3647 = vrot.slane %v3646, 4
    %v3648 = vadd.f32 %v3646, %v3647
    %v3649 = vrot.slane %v3648, 2
    %v3650 = vadd.f32 %v3648, %v3649
    %v3651 = vrot.slane %v3650, 1
    %v3652 = vadd.f32 %v3650, %v3651
    %s3653 = vtos %v3652
    %v3654 = vmul.f32 %v3632, %v3632
    %v3655 = vmul.f32 %v3633, %v3633
    %v3656 = vmul.f32 %v3634, %v3634
    %v3657 = vmul.f32 %v3635, %v3635
    %v3658 = vsel %vm3636, %v3654, 0.0
    %v3659 = vsel %vm3638, %v3655, 0.0
    %v3660 = vadd.f32 %v3658, %v3659
    %v3661 = vsel %vm3636, %v3656, 0.0
    %v3662 = vadd.f32 %v3660, %v3661
    %v3663 = vsel %vm3638, %v3657, 0.0
    %v3664 = vadd.f32 %v3662, %v3663
    %3665 = vadd.xlane.f32.xlu0 %v3664
    %v3666 = vpop.xlane.xlu0 %3665
    %v3667 = vrot.slane %v3666, 4
    %v3668 = vadd.f32 %v3666, %v3667
    %v3669 = vrot.slane %v3668, 2
    %v3670 = vadd.f32 %v3668, %v3669
    %v3671 = vrot.slane %v3670, 1
    %v3672 = vadd.f32 %v3670, %v3671
    %s3673 = vtos %v3672
    %s3674 = smul.f32 %s3653, 0.0022222223
    %s3675 = smul.f32 %s3673, 0.0022222223
    %s3676 = smul.f32 %s3674, %s3674
    %s3677 = ssub.f32 %s3675, %s3676
    %s3678 = sld [smem:[#allocation10]]
    %s3679 = sadd.f32 %s3677, 1e-05
    %v3680 = vstv %s3679
    %v3681 = vrsqrt.pop %v3680
    %v3682 = vmul.f32 %v3681, %v3680
    %v3683 = vmul.f32 %v3682, %v3681
    %v3684 = vmul.f32 0.5, %v3683
    %v3685 = vsub.f32 1.5, %v3684
    %v3686 = vmul.f32 %v3681, %v3685
    %vm3687 = vweird.f32 %v3680
    %vm3688 = vweird.f32 %v3681
    %vm3689 = vmor %vm3687, %vm3688
    %v3690 = vsel %vm3689, %v3681, %v3686
    %s3691 = vtos %v3690
    %s3692 = smul.f32 %s3678, %s3691
    %s3693 = sld [smem:[#allocation11]]
    %s3694 = smul.f32 %s3674, %s3692
    %s3695 = ssub.f32 %s3693, %s3694
    %v3696 = vstv %s3692
    %v3697 = vmul.f32 %v3632, %v3696
    %v3698 = vmul.f32 %v3633, %v3696
    %v3699 = vmul.f32 %v3634, %v3696
    %v3700 = vmul.f32 %v3635, %v3696
    %v3701 = vstv %s3695
    %v3702 = vadd.f32 %v3697, %v3701
    %v3703 = vadd.f32 %v3698, %v3701
    %v3704 = vadd.f32 %v3699, %v3701
    %v3705 = vadd.f32 %v3700, %v3701
    %v3706 = vmax.f32 %v3702, 0.0
    %v3707 = vmax.f32 %v3703, 0.0
    %v3708 = vmax.f32 %v3704, 0.0
    %v3709 = vmax.f32 %v3705, 0.0
    %3714 = vrot.lane.b32.xlu0 %v3706, 127
    %v3715 = vpop.permute.xlu0 %3714
    %3716 = vrot.lane.b32.xlu0 %v3707, 127
    %v3717 = vpop.permute.xlu0 %3716
    %3718 = vrot.lane.b32.xlu0 %v3708, 127
    %v3719 = vpop.permute.xlu0 %3718
    %3720 = vrot.lane.b32.xlu0 %v3709, 127
    %v3721 = vpop.permute.xlu0 %3720
    %v3726 = vmax.f32 %v3706, %v3715
    %v3727 = vmax.f32 %v3707, %v3717
    %v3728 = vmax.f32 %v3708, %v3719
    %v3729 = vmax.f32 %v3709, %v3721
    %v3734 = vrot.slane %v3726, 1
    %v3735 = vrot.slane %v3727, 1
    %v3736 = vsel %vm279, %v3734, %v3735
    %v3737 = vrot.slane %v3728, 1
    %v3738 = vrot.slane %v3729, 1
    %v3739 = vsel %vm279, %v3737, %v3738
    %v3744 = vmax.f32 %v3726, %v3736
    %v3745 = vmax.f32 %v3727, %v3735
    %v3746 = vmax.f32 %v3728, %v3739
    %v3747 = vmax.f32 %v3729, %v3738
    %s3748 = sld [smem:[#allocation8 + $0x1]]
    %v3749 = vstv %s3748
    %v3750 = vadd.f32 %v3486, %v3749
    %v3751 = vadd.f32 %v3487, %v3749
    %v3752 = vadd.f32 %v3488, %v3749
    %v3753 = vadd.f32 %v3489, %v3749
    %3758 = vrot.lane.b32.xlu0 %v3486, 111
    %v3759 = vpop.permute.xlu0 %3758
    %3760 = vrot.lane.b32.xlu0 %v3487, 111
    %v3761 = vpop.permute.xlu0 %3760
    %3762 = vrot.lane.b32.xlu0 %v3488, 111
    %v3763 = vpop.permute.xlu0 %3762
    %3764 = vrot.lane.b32.xlu0 %v3489, 111
    %v3765 = vpop.permute.xlu0 %3764
    %v3770 = vadd.f32 %v3750, %v3759
    %v3771 = vadd.f32 %v3751, %v3761
    %v3772 = vadd.f32 %v3752, %v3763
    %v3773 = vadd.f32 %v3753, %v3765
    %3774 = vrot.lane.b32.xlu0 %v3486, 94
    %v3775 = vpop.permute.xlu0 %3774
    %3776 = vrot.lane.b32.xlu0 %v3487, 94
    %v3777 = vpop.permute.xlu0 %3776
    %3778 = vrot.lane.b32.xlu0 %v3488, 94
    %v3779 = vpop.permute.xlu0 %3778
    %3780 = vrot.lane.b32.xlu0 %v3489, 94
    %v3781 = vpop.permute.xlu0 %3780
    %v3786 = vadd.f32 %v3770, %v3775
    %v3787 = vadd.f32 %v3771, %v3777
    %v3788 = vadd.f32 %v3772, %v3779
    %v3789 = vadd.f32 %v3773, %v3781
    %3790 = vrot.lane.b32.xlu0 %v3486, 77
    %v3791 = vpop.permute.xlu0 %3790
    %3792 = vrot.lane.b32.xlu0 %v3487, 77
    %v3793 = vpop.permute.xlu0 %3792
    %3794 = vrot.lane.b32.xlu0 %v3488, 77
    %v3795 = vpop.permute.xlu0 %3794
    %3796 = vrot.lane.b32.xlu0 %v3489, 77
    %v3797 = vpop.permute.xlu0 %3796
    %v3802 = vadd.f32 %v3786, %v3791
    %v3803 = vadd.f32 %v3787, %v3793
    %v3804 = vadd.f32 %v3788, %v3795
    %v3805 = vadd.f32 %v3789, %v3797
    %v3806 = vsel %vm3636, %v3802, 0.0
    %v3807 = vsel %vm3638, %v3803, 0.0
    %v3808 = vadd.f32 %v3806, %v3807
    %v3809 = vsel %vm3636, %v3804, 0.0
    %v3810 = vadd.f32 %v3808, %v3809
    %v3811 = vsel %vm3638, %v3805, 0.0
    %v3812 = vadd.f32 %v3810, %v3811
    %3813 = vadd.xlane.f32.xlu0 %v3812
    %v3814 = vpop.xlane.xlu0 %3813
    %v3815 = vrot.slane %v3814, 4
    %v3816 = vadd.f32 %v3814, %v3815
    %v3817 = vrot.slane %v3816, 2
    %v3818 = vadd.f32 %v3816, %v3817
    %v3819 = vrot.slane %v3818, 1
    %v3820 = vadd.f32 %v3818, %v3819
    %s3821 = vtos %v3820
    %v3822 = vmul.f32 %v3802, %v3802
    %v3823 = vmul.f32 %v3803, %v3803
    %v3824 = vmul.f32 %v3804, %v3804
    %v3825 = vmul.f32 %v3805, %v3805
    %v3826 = vsel %vm3636, %v3822, 0.0
    %v3827 = vsel %vm3638, %v3823, 0.0
    %v3828 = vadd.f32 %v3826, %v3827
    %v3829 = vsel %vm3636, %v3824, 0.0
    %v3830 = vadd.f32 %v3828, %v3829
    %v3831 = vsel %vm3638, %v3825, 0.0
    %v3832 = vadd.f32 %v3830, %v3831
    %3833 = vadd.xlane.f32.xlu0 %v3832
    %v3834 = vpop.xlane.xlu0 %3833
    %v3835 = vrot.slane %v3834, 4
    %v3836 = vadd.f32 %v3834, %v3835
    %v3837 = vrot.slane %v3836, 2
    %v3838 = vadd.f32 %v3836, %v3837
    %v3839 = vrot.slane %v3838, 1
    %v3840 = vadd.f32 %v3838, %v3839
    %s3841 = vtos %v3840
    %s3842 = smul.f32 %s3821, 0.0022222223
    %s3843 = smul.f32 %s3841, 0.0022222223
    %s3844 = smul.f32 %s3842, %s3842
    %s3845 = ssub.f32 %s3843, %s3844
    %s3846 = sld [smem:[#allocation10 + $0x1]]
    %s3847 = sadd.f32 %s3845, 1e-05
    %v3848 = vstv %s3847
    %v3849 = vrsqrt.pop %v3848
    %v3850 = vmul.f32 %v3849, %v3848
    %v3851 = vmul.f32 %v3850, %v3849
    %v3852 = vmul.f32 0.5, %v3851
    %v3853 = vsub.f32 1.5, %v3852
    %v3854 = vmul.f32 %v3849, %v3853
    %vm3855 = vweird.f32 %v3848
    %vm3856 = vweird.f32 %v3849
    %vm3857 = vmor %vm3855, %vm3856
    %v3858 = vsel %vm3857, %v3849, %v3854
    %s3859 = vtos %v3858
    %s3860 = smul.f32 %s3846, %s3859
    %s3861 = sld [smem:[#allocation11 + $0x1]]
    %s3862 = smul.f32 %s3842, %s3860
    %s3863 = ssub.f32 %s3861, %s3862
    %v3864 = vstv %s3860
    %v3865 = vmul.f32 %v3802, %v3864
    %v3866 = vmul.f32 %v3803, %v3864
    %v3867 = vmul.f32 %v3804, %v3864
    %v3868 = vmul.f32 %v3805, %v3864
    %v3869 = vstv %s3863
    %v3870 = vadd.f32 %v3865, %v3869
    %v3871 = vadd.f32 %v3866, %v3869
    %v3872 = vadd.f32 %v3867, %v3869
    %v3873 = vadd.f32 %v3868, %v3869
    %v3874 = vmax.f32 %v3870, 0.0
    %v3875 = vmax.f32 %v3871, 0.0
    %v3876 = vmax.f32 %v3872, 0.0
    %v3877 = vmax.f32 %v3873, 0.0
    %3882 = vrot.lane.b32.xlu0 %v3874, 127
    %v3883 = vpop.permute.xlu0 %3882
    %3884 = vrot.lane.b32.xlu0 %v3875, 127
    %v3885 = vpop.permute.xlu0 %3884
    %3886 = vrot.lane.b32.xlu0 %v3876, 127
    %v3887 = vpop.permute.xlu0 %3886
    %3888 = vrot.lane.b32.xlu0 %v3877, 127
    %v3889 = vpop.permute.xlu0 %3888
    %v3894 = vmax.f32 %v3874, %v3883
    %v3895 = vmax.f32 %v3875, %v3885
    %v3896 = vmax.f32 %v3876, %v3887
    %v3897 = vmax.f32 %v3877, %v3889
    %v3902 = vrot.slane %v3894, 1
    %v3903 = vrot.slane %v3895, 1
    %v3904 = vsel %vm279, %v3902, %v3903
    %v3905 = vrot.slane %v3896, 1
    %v3906 = vrot.slane %v3897, 1
    %v3907 = vsel %vm279, %v3905, %v3906
    %v3912 = vmax.f32 %v3894, %v3904
    %v3913 = vmax.f32 %v3895, %v3903
    %v3914 = vmax.f32 %v3896, %v3907
    %v3915 = vmax.f32 %v3897, %v3906
    %s3916 = sld [smem:[#allocation8 + $0x2]]
    %v3917 = vstv %s3916
    %v3918 = vadd.f32 %v3530, %v3917
    %v3919 = vadd.f32 %v3531, %v3917
    %v3920 = vadd.f32 %v3532, %v3917
    %v3921 = vadd.f32 %v3533, %v3917
    %3926 = vrot.lane.b32.xlu0 %v3530, 111
    %v3927 = vpop.permute.xlu0 %3926
    %3928 = vrot.lane.b32.xlu0 %v3531, 111
    %v3929 = vpop.permute.xlu0 %3928
    %3930 = vrot.lane.b32.xlu0 %v3532, 111
    %v3931 = vpop.permute.xlu0 %3930
    %3932 = vrot.lane.b32.xlu0 %v3533, 111
    %v3933 = vpop.permute.xlu0 %3932
    %v3938 = vadd.f32 %v3918, %v3927
    %v3939 = vadd.f32 %v3919, %v3929
    %v3940 = vadd.f32 %v3920, %v3931
    %v3941 = vadd.f32 %v3921, %v3933
    %3942 = vrot.lane.b32.xlu0 %v3530, 94
    %v3943 = vpop.permute.xlu0 %3942
    %3944 = vrot.lane.b32.xlu0 %v3531, 94
    %v3945 = vpop.permute.xlu0 %3944
    %3946 = vrot.lane.b32.xlu0 %v3532, 94
    %v3947 = vpop.permute.xlu0 %3946
    %3948 = vrot.lane.b32.xlu0 %v3533, 94
    %v3949 = vpop.permute.xlu0 %3948
    %v3954 = vadd.f32 %v3938, %v3943
    %v3955 = vadd.f32 %v3939, %v3945
    %v3956 = vadd.f32 %v3940, %v3947
    %v3957 = vadd.f32 %v3941, %v3949
    %3958 = vrot.lane.b32.xlu0 %v3530, 77
    %v3959 = vpop.permute.xlu0 %3958
    %3960 = vrot.lane.b32.xlu0 %v3531, 77
    %v3961 = vpop.permute.xlu0 %3960
    %3962 = vrot.lane.b32.xlu0 %v3532, 77
    %v3963 = vpop.permute.xlu0 %3962
    %3964 = vrot.lane.b32.xlu0 %v3533, 77
    %v3965 = vpop.permute.xlu0 %3964
    %v3970 = vadd.f32 %v3954, %v3959
    %v3971 = vadd.f32 %v3955, %v3961
    %v3972 = vadd.f32 %v3956, %v3963
    %v3973 = vadd.f32 %v3957, %v3965
    %v3974 = vsel %vm3636, %v3970, 0.0
    %v3975 = vsel %vm3638, %v3971, 0.0
    %v3976 = vadd.f32 %v3974, %v3975
    %v3977 = vsel %vm3636, %v3972, 0.0
    %v3978 = vadd.f32 %v3976, %v3977
    %v3979 = vsel %vm3638, %v3973, 0.0
    %v3980 = vadd.f32 %v3978, %v3979
    %3981 = vadd.xlane.f32.xlu0 %v3980
    %v3982 = vpop.xlane.xlu0 %3981
    %v3983 = vrot.slane %v3982, 4
    %v3984 = vadd.f32 %v3982, %v3983
    %v3985 = vrot.slane %v3984, 2
    %v3986 = vadd.f32 %v3984, %v3985
    %v3987 = vrot.slane %v3986, 1
    %v3988 = vadd.f32 %v3986, %v3987
    %s3989 = vtos %v3988
    %v3990 = vmul.f32 %v3970, %v3970
    %v3991 = vmul.f32 %v3971, %v3971
    %v3992 = vmul.f32 %v3972, %v3972
    %v3993 = vmul.f32 %v3973, %v3973
    %v3994 = vsel %vm3636, %v3990, 0.0
    %v3995 = vsel %vm3638, %v3991, 0.0
    %v3996 = vadd.f32 %v3994, %v3995
    %v3997 = vsel %vm3636, %v3992, 0.0
    %v3998 = vadd.f32 %v3996, %v3997
    %v3999 = vsel %vm3638, %v3993, 0.0
    %v4000 = vadd.f32 %v3998, %v3999
    %4001 = vadd.xlane.f32.xlu0 %v4000
    %v4002 = vpop.xlane.xlu0 %4001
    %v4003 = vrot.slane %v4002, 4
    %v4004 = vadd.f32 %v4002, %v4003
    %v4005 = vrot.slane %v4004, 2
    %v4006 = vadd.f32 %v4004, %v4005
    %v4007 = vrot.slane %v4006, 1
    %v4008 = vadd.f32 %v4006, %v4007
    %s4009 = vtos %v4008
    %s4010 = smul.f32 %s3989, 0.0022222223
    %s4011 = smul.f32 %s4009, 0.0022222223
    %s4012 = smul.f32 %s4010, %s4010
    %s4013 = ssub.f32 %s4011, %s4012
    %s4014 = sld [smem:[#allocation10 + $0x2]]
    %s4015 = sadd.f32 %s4013, 1e-05
    %v4016 = vstv %s4015
    %v4017 = vrsqrt.pop %v4016
    %v4018 = vmul.f32 %v4017, %v4016
    %v4019 = vmul.f32 %v4018, %v4017
    %v4020 = vmul.f32 0.5, %v4019
    %v4021 = vsub.f32 1.5, %v4020
    %v4022 = vmul.f32 %v4017, %v4021
    %vm4023 = vweird.f32 %v4016
    %vm4024 = vweird.f32 %v4017
    %vm4025 = vmor %vm4023, %vm4024
    %v4026 = vsel %vm4025, %v4017, %v4022
    %s4027 = vtos %v4026
    %s4028 = smul.f32 %s4014, %s4027
    %s4029 = sld [smem:[#allocation11 + $0x2]]
    %s4030 = smul.f32 %s4010, %s4028
    %s4031 = ssub.f32 %s4029, %s4030
    %v4032 = vstv %s4028
    %v4033 = vmul.f32 %v3970, %v4032
    %v4034 = vmul.f32 %v3971, %v4032
    %v4035 = vmul.f32 %v3972, %v4032
    %v4036 = vmul.f32 %v3973, %v4032
    %v4037 = vstv %s4031
    %v4038 = vadd.f32 %v4033, %v4037
    %v4039 = vadd.f32 %v4034, %v4037
    %v4040 = vadd.f32 %v4035, %v4037
    %v4041 = vadd.f32 %v4036, %v4037
    %v4042 = vmax.f32 %v4038, 0.0
    %v4043 = vmax.f32 %v4039, 0.0
    %v4044 = vmax.f32 %v4040, 0.0
    %v4045 = vmax.f32 %v4041, 0.0
    %4050 = vrot.lane.b32.xlu0 %v4042, 127
    %v4051 = vpop.permute.xlu0 %4050
    %4052 = vrot.lane.b32.xlu0 %v4043, 127
    %v4053 = vpop.permute.xlu0 %4052
    %4054 = vrot.lane.b32.xlu0 %v4044, 127
    %v4055 = vpop.permute.xlu0 %4054
    %4056 = vrot.lane.b32.xlu0 %v4045, 127
    %v4057 = vpop.permute.xlu0 %4056
    %v4062 = vmax.f32 %v4042, %v4051
    %v4063 = vmax.f32 %v4043, %v4053
    %v4064 = vmax.f32 %v4044, %v4055
    %v4065 = vmax.f32 %v4045, %v4057
    %v4070 = vrot.slane %v4062, 1
    %v4071 = vrot.slane %v4063, 1
    %v4072 = vsel %vm279, %v4070, %v4071
    %v4073 = vrot.slane %v4064, 1
    %v4074 = vrot.slane %v4065, 1
    %v4075 = vsel %vm279, %v4073, %v4074
    %v4080 = vmax.f32 %v4062, %v4072
    %v4081 = vmax.f32 %v4063, %v4071
    %v4082 = vmax.f32 %v4064, %v4075
    %v4083 = vmax.f32 %v4065, %v4074
    %s4084 = sld [smem:[#allocation8 + $0x3]]
    %v4085 = vstv %s4084
    %v4086 = vadd.f32 %v3574, %v4085
    %v4087 = vadd.f32 %v3575, %v4085
    %v4088 = vadd.f32 %v3576, %v4085
    %v4089 = vadd.f32 %v3577, %v4085
    %4094 = vrot.lane.b32.xlu0 %v3574, 111
    %v4095 = vpop.permute.xlu0 %4094
    %4096 = vrot.lane.b32.xlu0 %v3575, 111
    %v4097 = vpop.permute.xlu0 %4096
    %4098 = vrot.lane.b32.xlu0 %v3576, 111
    %v4099 = vpop.permute.xlu0 %4098
    %4100 = vrot.lane.b32.xlu0 %v3577, 111
    %v4101 = vpop.permute.xlu0 %4100
    %v4106 = vadd.f32 %v4086, %v4095
    %v4107 = vadd.f32 %v4087, %v4097
    %v4108 = vadd.f32 %v4088, %v4099
    %v4109 = vadd.f32 %v4089, %v4101
    %4110 = vrot.lane.b32.xlu0 %v3574, 94
    %v4111 = vpop.permute.xlu0 %4110
    %4112 = vrot.lane.b32.xlu0 %v3575, 94
    %v4113 = vpop.permute.xlu0 %4112
    %4114 = vrot.lane.b32.xlu0 %v3576, 94
    %v4115 = vpop.permute.xlu0 %4114
    %4116 = vrot.lane.b32.xlu0 %v3577, 94
    %v4117 = vpop.permute.xlu0 %4116
    %v4122 = vadd.f32 %v4106, %v4111
    %v4123 = vadd.f32 %v4107, %v4113
    %v4124 = vadd.f32 %v4108, %v4115
    %v4125 = vadd.f32 %v4109, %v4117
    %4126 = vrot.lane.b32.xlu0 %v3574, 77
    %v4127 = vpop.permute.xlu0 %4126
    %4128 = vrot.lane.b32.xlu0 %v3575, 77
    %v4129 = vpop.permute.xlu0 %4128
    %4130 = vrot.lane.b32.xlu0 %v3576, 77
    %v4131 = vpop.permute.xlu0 %4130
    %4132 = vrot.lane.b32.xlu0 %v3577, 77
    %v4133 = vpop.permute.xlu0 %4132
    %v4138 = vadd.f32 %v4122, %v4127
    %v4139 = vadd.f32 %v4123, %v4129
    %v4140 = vadd.f32 %v4124, %v4131
    %v4141 = vadd.f32 %v4125, %v4133
    %v4142 = vsel %vm3636, %v4138, 0.0
    %v4143 = vsel %vm3638, %v4139, 0.0
    %v4144 = vadd.f32 %v4142, %v4143
    %v4145 = vsel %vm3636, %v4140, 0.0
    %v4146 = vadd.f32 %v4144, %v4145
    %v4147 = vsel %vm3638, %v4141, 0.0
    %v4148 = vadd.f32 %v4146, %v4147
    %4149 = vadd.xlane.f32.xlu0 %v4148
    %v4150 = vpop.xlane.xlu0 %4149
    %v4151 = vrot.slane %v4150, 4
    %v4152 = vadd.f32 %v4150, %v4151
    %v4153 = vrot.slane %v4152, 2
    %v4154 = vadd.f32 %v4152, %v4153
    %v4155 = vrot.slane %v4154, 1
    %v4156 = vadd.f32 %v4154, %v4155
    %s4157 = vtos %v4156
    %v4158 = vmul.f32 %v4138, %v4138
    %v4159 = vmul.f32 %v4139, %v4139
    %v4160 = vmul.f32 %v4140, %v4140
    %v4161 = vmul.f32 %v4141, %v4141
    %v4162 = vsel %vm3636, %v4158, 0.0
    %v4163 = vsel %vm3638, %v4159, 0.0
    %v4164 = vadd.f32 %v4162, %v4163
    %v4165 = vsel %vm3636, %v4160, 0.0
    %v4166 = vadd.f32 %v4164, %v4165
    %v4167 = vsel %vm3638, %v4161, 0.0
    %v4168 = vadd.f32 %v4166, %v4167
    %4169 = vadd.xlane.f32.xlu0 %v4168
    %v4170 = vpop.xlane.xlu0 %4169
    %v4171 = vrot.slane %v4170, 4
    %v4172 = vadd.f32 %v4170, %v4171
    %v4173 = vrot.slane %v4172, 2
    %v4174 = vadd.f32 %v4172, %v4173
    %v4175 = vrot.slane %v4174, 1
    %v4176 = vadd.f32 %v4174, %v4175
    %s4177 = vtos %v4176
    %s4178 = smul.f32 %s4157, 0.0022222223
    %s4179 = smul.f32 %s4177, 0.0022222223
    %s4180 = smul.f32 %s4178, %s4178
    %s4181 = ssub.f32 %s4179, %s4180
    %s4182 = sld [smem:[#allocation10 + $0x3]]
    %s4183 = sadd.f32 %s4181, 1e-05
    %v4184 = vstv %s4183
    %v4185 = vrsqrt.pop %v4184
    %v4186 = vmul.f32 %v4185, %v4184
    %v4187 = vmul.f32 %v4186, %v4185
    %v4188 = vmul.f32 0.5, %v4187
    %v4189 = vsub.f32 1.5, %v4188
    %v4190 = vmul.f32 %v4185, %v4189
    %vm4191 = vweird.f32 %v4184
    %vm4192 = vweird.f32 %v4185
    %vm4193 = vmor %vm4191, %vm4192
    %v4194 = vsel %vm4193, %v4185, %v4190
    %s4195 = vtos %v4194
    %s4196 = smul.f32 %s4182, %s4195
    %s4197 = sld [smem:[#allocation11 + $0x3]]
    %s4198 = smul.f32 %s4178, %s4196
    %s4199 = ssub.f32 %s4197, %s4198
    %v4200 = vstv %s4196
    %v4201 = vmul.f32 %v4138, %v4200
    %v4202 = vmul.f32 %v4139, %v4200
    %v4203 = vmul.f32 %v4140, %v4200
    %v4204 = vmul.f32 %v4141, %v4200
    %v4205 = vstv %s4199
    %v4206 = vadd.f32 %v4201, %v4205
    %v4207 = vadd.f32 %v4202, %v4205
    %v4208 = vadd.f32 %v4203, %v4205
    %v4209 = vadd.f32 %v4204, %v4205
    %v4210 = vmax.f32 %v4206, 0.0
    %v4211 = vmax.f32 %v4207, 0.0
    %v4212 = vmax.f32 %v4208, 0.0
    %v4213 = vmax.f32 %v4209, 0.0
    %4218 = vrot.lane.b32.xlu0 %v4210, 127
    %v4219 = vpop.permute.xlu0 %4218
    %4220 = vrot.lane.b32.xlu0 %v4211, 127
    %v4221 = vpop.permute.xlu0 %4220
    %4222 = vrot.lane.b32.xlu0 %v4212, 127
    %v4223 = vpop.permute.xlu0 %4222
    %4224 = vrot.lane.b32.xlu0 %v4213, 127
    %v4225 = vpop.permute.xlu0 %4224
    %v4230 = vmax.f32 %v4210, %v4219
    %v4231 = vmax.f32 %v4211, %v4221
    %v4232 = vmax.f32 %v4212, %v4223
    %v4233 = vmax.f32 %v4213, %v4225
    %v4238 = vrot.slane %v4230, 1
    %v4239 = vrot.slane %v4231, 1
    %v4240 = vsel %vm279, %v4238, %v4239
    %v4241 = vrot.slane %v4232, 1
    %v4242 = vrot.slane %v4233, 1
    %v4243 = vsel %vm279, %v4241, %v4242
    %v4248 = vmax.f32 %v4230, %v4240
    %v4249 = vmax.f32 %v4231, %v4239
    %v4250 = vmax.f32 %v4232, %v4243
    %v4251 = vmax.f32 %v4233, %v4242
    %4256 = vrot.lane.b32.xlu0 %v3912, 14
    %v4257 = vpop.permute.xlu0 %4256
    %4258 = vrot.lane.b32.xlu0 %v3913, 14
    %v4259 = vpop.permute.xlu0 %4258
    %4260 = vrot.lane.b32.xlu0 %v3914, 14
    %v4261 = vpop.permute.xlu0 %4260
    %4262 = vrot.lane.b32.xlu0 %v3915, 14
    %v4263 = vpop.permute.xlu0 %4262
    %4272 = vrot.lane.b32.xlu0 %v4080, 28
    %v4273 = vpop.permute.xlu0 %4272
    %4274 = vrot.lane.b32.xlu0 %v4081, 28
    %v4275 = vpop.permute.xlu0 %4274
    %4276 = vrot.lane.b32.xlu0 %v4082, 28
    %v4277 = vpop.permute.xlu0 %4276
    %4278 = vrot.lane.b32.xlu0 %v4083, 28
    %v4279 = vpop.permute.xlu0 %4278
    %4288 = vrot.lane.b32.xlu0 %v4248, 42
    %v4289 = vpop.permute.xlu0 %4288
    %4290 = vrot.lane.b32.xlu0 %v4249, 42
    %v4291 = vpop.permute.xlu0 %4290
    %4292 = vrot.lane.b32.xlu0 %v4250, 42
    %v4293 = vpop.permute.xlu0 %4292
    %4294 = vrot.lane.b32.xlu0 %v4251, 42
    %v4295 = vpop.permute.xlu0 %4294
    %vm4300 = vcmask 113664
    %v4301 = vsel %vm4300, %v3744, %v4257
    %v4302 = vsel %vm4300, %v3745, %v4259
    %v4303 = vsel %vm4300, %v3746, %v4261
    %v4304 = vsel %vm4300, %v3747, %v4263
    %vm4305 = vcmask 228352
    %v4306 = vsel %vm4305, %v4301, %v4273
    %v4307 = vsel %vm4305, %v4302, %v4275
    %v4308 = vsel %vm4305, %v4303, %v4277
    %v4309 = vsel %vm4305, %v4304, %v4279
    %vm4310 = vcmask 343040
    %v4311 = vsel %vm4310, %v4306, %v4289
    %v4312 = vsel %vm4310, %v4307, %v4291
    %v4313 = vsel %vm4310, %v4308, %v4293
    %v4314 = vsel %vm4310, %v4309, %v4295
    %v4315 = vld [vmem:[%s9] sm:$0x1]
    %v4316 = vperm.slane %v4315, 0
    %v4317 = vmul.f32 %v4311, %v4316
    %v4318 = vmul.f32 %v4312, %v4316
    %v4319 = vmul.f32 %v4313, %v4316
    %v4320 = vmul.f32 %v4314, %v4316
    %v4321 = vadd.f32 %v4317, 0.0
    %v4322 = vadd.f32 %v4318, 0.0
    %v4323 = vadd.f32 %v4319, 0.0
    %v4324 = vadd.f32 %v4320, 0.0
    %v4325 = vld [vmem:[%s9 + $0x9] sm:$0x1]
    %v4326 = vperm.slane %v4325, 0
    %v4327 = vmul.f32 %v4311, %v4326
    %v4328 = vmul.f32 %v4312, %v4326
    %v4329 = vmul.f32 %v4313, %v4326
    %v4330 = vmul.f32 %v4314, %v4326
    %v4331 = vadd.f32 %v4327, 0.0
    %v4332 = vadd.f32 %v4328, 0.0
    %v4333 = vadd.f32 %v4329, 0.0
    %v4334 = vadd.f32 %v4330, 0.0
    %v4335 = vld [vmem:[%s9 + $0x12] sm:$0x1]
    %v4336 = vperm.slane %v4335, 0
    %v4337 = vmul.f32 %v4311, %v4336
    %v4338 = vmul.f32 %v4312, %v4336
    %v4339 = vmul.f32 %v4313, %v4336
    %v4340 = vmul.f32 %v4314, %v4336
    %v4341 = vadd.f32 %v4337, 0.0
    %v4342 = vadd.f32 %v4338, 0.0
    %v4343 = vadd.f32 %v4339, 0.0
    %v4344 = vadd.f32 %v4340, 0.0
    %v4345 = vld [vmem:[%s9 + $0x1b] sm:$0x1]
    %v4346 = vperm.slane %v4345, 0
    %v4347 = vmul.f32 %v4311, %v4346
    %v4348 = vmul.f32 %v4312, %v4346
    %v4349 = vmul.f32 %v4313, %v4346
    %v4350 = vmul.f32 %v4314, %v4346
    %v4351 = vadd.f32 %v4347, 0.0
    %v4352 = vadd.f32 %v4348, 0.0
    %v4353 = vadd.f32 %v4349, 0.0
    %v4354 = vadd.f32 %v4350, 0.0
    %v4355 = vld [vmem:[%s9 + $0x3] sm:$0x1]
    %v4356 = vperm.slane %v4355, 0
    %v4357 = vmul.f32 %v4311, %v4356
    %v4358 = vmul.f32 %v4312, %v4356
    %v4359 = vmul.f32 %v4313, %v4356
    %v4360 = vmul.f32 %v4314, %v4356
    %v4365 = vrot.slane %v4357, 1
    %v4366 = vrot.slane %v4358, 1
    %v4367 = vsel %vm279, %v4365, %v4366
    %v4368 = vrot.slane %v4359, 1
    %v4369 = vrot.slane %v4360, 1
    %v4370 = vsel %vm279, %v4368, %v4369
    %v4375 = vadd.f32 %v4321, %v4367
    %v4376 = vadd.f32 %v4322, %v4366
    %v4377 = vadd.f32 %v4323, %v4370
    %v4378 = vadd.f32 %v4324, %v4369
    %v4379 = vld [vmem:[%s9 + $0xc] sm:$0x1]
    %v4380 = vperm.slane %v4379, 0
    %v4381 = vmul.f32 %v4311, %v4380
    %v4382 = vmul.f32 %v4312, %v4380
    %v4383 = vmul.f32 %v4313, %v4380
    %v4384 = vmul.f32 %v4314, %v4380
    %v4389 = vrot.slane %v4381, 1
    %v4390 = vrot.slane %v4382, 1
    %v4391 = vsel %vm279, %v4389, %v4390
    %v4392 = vrot.slane %v4383, 1
    %v4393 = vrot.slane %v4384, 1
    %v4394 = vsel %vm279, %v4392, %v4393
    %v4399 = vadd.f32 %v4331, %v4391
    %v4400 = vadd.f32 %v4332, %v4390
    %v4401 = vadd.f32 %v4333, %v4394
    %v4402 = vadd.f32 %v4334, %v4393
    %v4403 = vld [vmem:[%s9 + $0x15] sm:$0x1]
    %v4404 = vperm.slane %v4403, 0
    %v4405 = vmul.f32 %v4311, %v4404
    %v4406 = vmul.f32 %v4312, %v4404
    %v4407 = vmul.f32 %v4313, %v4404
    %v4408 = vmul.f32 %v4314, %v4404
    %v4413 = vrot.slane %v4405, 1
    %v4414 = vrot.slane %v4406, 1
    %v4415 = vsel %vm279, %v4413, %v4414
    %v4416 = vrot.slane %v4407, 1
    %v4417 = vrot.slane %v4408, 1
    %v4418 = vsel %vm279, %v4416, %v4417
    %v4423 = vadd.f32 %v4341, %v4415
    %v4424 = vadd.f32 %v4342, %v4414
    %v4425 = vadd.f32 %v4343, %v4418
    %v4426 = vadd.f32 %v4344, %v4417
    %v4427 = vld [vmem:[%s9 + $0x1e] sm:$0x1]
    %v4428 = vperm.slane %v4427, 0
    %v4429 = vmul.f32 %v4311, %v4428
    %v4430 = vmul.f32 %v4312, %v4428
    %v4431 = vmul.f32 %v4313, %v4428
    %v4432 = vmul.f32 %v4314, %v4428
    %v4437 = vrot.slane %v4429, 1
    %v4438 = vrot.slane %v4430, 1
    %v4439 = vsel %vm279, %v4437, %v4438
    %v4440 = vrot.slane %v4431, 1
    %v4441 = vrot.slane %v4432, 1
    %v4442 = vsel %vm279, %v4440, %v4441
    %v4447 = vadd.f32 %v4351, %v4439
    %v4448 = vadd.f32 %v4352, %v4438
    %v4449 = vadd.f32 %v4353, %v4442
    %v4450 = vadd.f32 %v4354, %v4441
    %v4451 = vld [vmem:[%s9 + $0x6] sm:$0x1]
    %v4452 = vperm.slane %v4451, 0
    %v4453 = vmul.f32 %v4311, %v4452
    %v4454 = vmul.f32 %v4312, %v4452
    %v4455 = vmul.f32 %v4313, %v4452
    %v4456 = vmul.f32 %v4314, %v4452
    %v4461 = vrot.slane %v4453, 2
    %v4462 = vrot.slane %v4454, 2
    %v4463 = vsel %vm424, %v4461, %v4462
    %v4464 = vrot.slane %v4455, 2
    %v4465 = vrot.slane %v4456, 2
    %v4466 = vsel %vm424, %v4464, %v4465
    %v4471 = vadd.f32 %v4375, %v4463
    %v4472 = vadd.f32 %v4376, %v4462
    %v4473 = vadd.f32 %v4377, %v4466
    %v4474 = vadd.f32 %v4378, %v4465
    %v4475 = vld [vmem:[%s9 + $0xf] sm:$0x1]
    %v4476 = vperm.slane %v4475, 0
    %v4477 = vmul.f32 %v4311, %v4476
    %v4478 = vmul.f32 %v4312, %v4476
    %v4479 = vmul.f32 %v4313, %v4476
    %v4480 = vmul.f32 %v4314, %v4476
    %v4485 = vrot.slane %v4477, 2
    %v4486 = vrot.slane %v4478, 2
    %v4487 = vsel %vm424, %v4485, %v4486
    %v4488 = vrot.slane %v4479, 2
    %v4489 = vrot.slane %v4480, 2
    %v4490 = vsel %vm424, %v4488, %v4489
    %v4495 = vadd.f32 %v4399, %v4487
    %v4496 = vadd.f32 %v4400, %v4486
    %v4497 = vadd.f32 %v4401, %v4490
    %v4498 = vadd.f32 %v4402, %v4489
    %v4499 = vld [vmem:[%s9 + $0x18] sm:$0x1]
    %v4500 = vperm.slane %v4499, 0
    %v4501 = vmul.f32 %v4311, %v4500
    %v4502 = vmul.f32 %v4312, %v4500
    %v4503 = vmul.f32 %v4313, %v4500
    %v4504 = vmul.f32 %v4314, %v4500
    %v4509 = vrot.slane %v4501, 2
    %v4510 = vrot.slane %v4502, 2
    %v4511 = vsel %vm424, %v4509, %v4510
    %v4512 = vrot.slane %v4503, 2
    %v4513 = vrot.slane %v4504, 2
    %v4514 = vsel %vm424, %v4512, %v4513
    %v4519 = vadd.f32 %v4423, %v4511
    %v4520 = vadd.f32 %v4424, %v4510
    %v4521 = vadd.f32 %v4425, %v4514
    %v4522 = vadd.f32 %v4426, %v4513
    %v4523 = vld [vmem:[%s9 + $0x21] sm:$0x1]
    %v4524 = vperm.slane %v4523, 0
    %v4525 = vmul.f32 %v4311, %v4524
    %v4526 = vmul.f32 %v4312, %v4524
    %v4527 = vmul.f32 %v4313, %v4524
    %v4528 = vmul.f32 %v4314, %v4524
    %v4533 = vrot.slane %v4525, 2
    %v4534 = vrot.slane %v4526, 2
    %v4535 = vsel %vm424, %v4533, %v4534
    %v4536 = vrot.slane %v4527, 2
    %v4537 = vrot.slane %v4528, 2
    %v4538 = vsel %vm424, %v4536, %v4537
    %v4543 = vadd.f32 %v4447, %v4535
    %v4544 = vadd.f32 %v4448, %v4534
    %v4545 = vadd.f32 %v4449, %v4538
    %v4546 = vadd.f32 %v4450, %v4537
    %v4547 = vld [vmem:[%s9 + $0x1] sm:$0x1]
    %v4548 = vperm.slane %v4547, 0
    %4550 = vrot.lane.b32.xlu0 %v4548, 1
    %v4551 = vpop.permute.xlu0 %4550
    %v4553 = vmul.f32 %v4311, %v4551
    %v4554 = vmul.f32 %v4312, %v4551
    %v4555 = vmul.f32 %v4313, %v4551
    %v4556 = vmul.f32 %v4314, %v4551
    %4561 = vrot.lane.b32.xlu0 %v4553, 127
    %v4562 = vpop.permute.xlu0 %4561
    %4563 = vrot.lane.b32.xlu0 %v4554, 127
    %v4564 = vpop.permute.xlu0 %4563
    %4565 = vrot.lane.b32.xlu0 %v4555, 127
    %v4566 = vpop.permute.xlu0 %4565
    %4567 = vrot.lane.b32.xlu0 %v4556, 127
    %v4568 = vpop.permute.xlu0 %4567
    %v4573 = vadd.f32 %v4471, %v4562
    %v4574 = vadd.f32 %v4472, %v4564
    %v4575 = vadd.f32 %v4473, %v4566
    %v4576 = vadd.f32 %v4474, %v4568
    %v4577 = vld [vmem:[%s9 + $0xa] sm:$0x1]
    %v4578 = vperm.slane %v4577, 0
    %4580 = vrot.lane.b32.xlu0 %v4578, 1
    %v4581 = vpop.permute.xlu0 %4580
    %v4583 = vmul.f32 %v4311, %v4581
    %v4584 = vmul.f32 %v4312, %v4581
    %v4585 = vmul.f32 %v4313, %v4581
    %v4586 = vmul.f32 %v4314, %v4581
    %4591 = vrot.lane.b32.xlu0 %v4583, 127
    %v4592 = vpop.permute.xlu0 %4591
    %4593 = vrot.lane.b32.xlu0 %v4584, 127
    %v4594 = vpop.permute.xlu0 %4593
    %4595 = vrot.lane.b32.xlu0 %v4585, 127
    %v4596 = vpop.permute.xlu0 %4595
    %4597 = vrot.lane.b32.xlu0 %v4586, 127
    %v4598 = vpop.permute.xlu0 %4597
    %v4603 = vadd.f32 %v4495, %v4592
    %v4604 = vadd.f32 %v4496, %v4594
    %v4605 = vadd.f32 %v4497, %v4596
    %v4606 = vadd.f32 %v4498, %v4598
    %v4607 = vld [vmem:[%s9 + $0x13] sm:$0x1]
    %v4608 = vperm.slane %v4607, 0
    %4610 = vrot.lane.b32.xlu0 %v4608, 1
    %v4611 = vpop.permute.xlu0 %4610
    %v4613 = vmul.f32 %v4311, %v4611
    %v4614 = vmul.f32 %v4312, %v4611
    %v4615 = vmul.f32 %v4313, %v4611
    %v4616 = vmul.f32 %v4314, %v4611
    %4621 = vrot.lane.b32.xlu0 %v4613, 127
    %v4622 = vpop.permute.xlu0 %4621
    %4623 = vrot.lane.b32.xlu0 %v4614, 127
    %v4624 = vpop.permute.xlu0 %4623
    %4625 = vrot.lane.b32.xlu0 %v4615, 127
    %v4626 = vpop.permute.xlu0 %4625
    %4627 = vrot.lane.b32.xlu0 %v4616, 127
    %v4628 = vpop.permute.xlu0 %4627
    %v4633 = vadd.f32 %v4519, %v4622
    %v4634 = vadd.f32 %v4520, %v4624
    %v4635 = vadd.f32 %v4521, %v4626
    %v4636 = vadd.f32 %v4522, %v4628
    %v4637 = vld [vmem:[%s9 + $0x1c] sm:$0x1]
    %v4638 = vperm.slane %v4637, 0
    %4640 = vrot.lane.b32.xlu0 %v4638, 1
    %v4641 = vpop.permute.xlu0 %4640
    %v4643 = vmul.f32 %v4311, %v4641
    %v4644 = vmul.f32 %v4312, %v4641
    %v4645 = vmul.f32 %v4313, %v4641
    %v4646 = vmul.f32 %v4314, %v4641
    %4651 = vrot.lane.b32.xlu0 %v4643, 127
    %v4652 = vpop.permute.xlu0 %4651
    %4653 = vrot.lane.b32.xlu0 %v4644, 127
    %v4654 = vpop.permute.xlu0 %4653
    %4655 = vrot.lane.b32.xlu0 %v4645, 127
    %v4656 = vpop.permute.xlu0 %4655
    %4657 = vrot.lane.b32.xlu0 %v4646, 127
    %v4658 = vpop.permute.xlu0 %4657
    %v4663 = vadd.f32 %v4543, %v4652
    %v4664 = vadd.f32 %v4544, %v4654
    %v4665 = vadd.f32 %v4545, %v4656
    %v4666 = vadd.f32 %v4546, %v4658
    %v4667 = vld [vmem:[%s9 + $0x4] sm:$0x1]
    %v4668 = vperm.slane %v4667, 0
    %4670 = vrot.lane.b32.xlu0 %v4668, 1
    %v4671 = vpop.permute.xlu0 %4670
    %v4673 = vmul.f32 %v4311, %v4671
    %v4674 = vmul.f32 %v4312, %v4671
    %v4675 = vmul.f32 %v4313, %v4671
    %v4676 = vmul.f32 %v4314, %v4671
    %v4681 = vrot.slane %v4673, 1
    %v4682 = vrot.slane %v4674, 1
    %v4683 = vsel %vm279, %v4681, %v4682
    %v4684 = vrot.slane %v4675, 1
    %v4685 = vrot.slane %v4676, 1
    %v4686 = vsel %vm279, %v4684, %v4685
    %4687 = vrot.lane.b32.xlu0 %v4683, 127
    %v4688 = vpop.permute.xlu0 %4687
    %4689 = vrot.lane.b32.xlu0 %v4682, 127
    %v4690 = vpop.permute.xlu0 %4689
    %4691 = vrot.lane.b32.xlu0 %v4686, 127
    %v4692 = vpop.permute.xlu0 %4691
    %4693 = vrot.lane.b32.xlu0 %v4685, 127
    %v4694 = vpop.permute.xlu0 %4693
    %v4699 = vadd.f32 %v4573, %v4688
    %v4700 = vadd.f32 %v4574, %v4690
    %v4701 = vadd.f32 %v4575, %v4692
    %v4702 = vadd.f32 %v4576, %v4694
    %v4703 = vld [vmem:[%s9 + $0xd] sm:$0x1]
    %v4704 = vperm.slane %v4703, 0
    %4706 = vrot.lane.b32.xlu0 %v4704, 1
    %v4707 = vpop.permute.xlu0 %4706
    %v4709 = vmul.f32 %v4311, %v4707
    %v4710 = vmul.f32 %v4312, %v4707
    %v4711 = vmul.f32 %v4313, %v4707
    %v4712 = vmul.f32 %v4314, %v4707
    %v4717 = vrot.slane %v4709, 1
    %v4718 = vrot.slane %v4710, 1
    %v4719 = vsel %vm279, %v4717, %v4718
    %v4720 = vrot.slane %v4711, 1
    %v4721 = vrot.slane %v4712, 1
    %v4722 = vsel %vm279, %v4720, %v4721
    %4723 = vrot.lane.b32.xlu0 %v4719, 127
    %v4724 = vpop.permute.xlu0 %4723
    %4725 = vrot.lane.b32.xlu0 %v4718, 127
    %v4726 = vpop.permute.xlu0 %4725
    %4727 = vrot.lane.b32.xlu0 %v4722, 127
    %v4728 = vpop.permute.xlu0 %4727
    %4729 = vrot.lane.b32.xlu0 %v4721, 127
    %v4730 = vpop.permute.xlu0 %4729
    %v4735 = vadd.f32 %v4603, %v4724
    %v4736 = vadd.f32 %v4604, %v4726
    %v4737 = vadd.f32 %v4605, %v4728
    %v4738 = vadd.f32 %v4606, %v4730
    %v4739 = vld [vmem:[%s9 + $0x16] sm:$0x1]
    %v4740 = vperm.slane %v4739, 0
    %4742 = vrot.lane.b32.xlu0 %v4740, 1
    %v4743 = vpop.permute.xlu0 %4742
    %v4745 = vmul.f32 %v4311, %v4743
    %v4746 = vmul.f32 %v4312, %v4743
    %v4747 = vmul.f32 %v4313, %v4743
    %v4748 = vmul.f32 %v4314, %v4743
    %v4753 = vrot.slane %v4745, 1
    %v4754 = vrot.slane %v4746, 1
    %v4755 = vsel %vm279, %v4753, %v4754
    %v4756 = vrot.slane %v4747, 1
    %v4757 = vrot.slane %v4748, 1
    %v4758 = vsel %vm279, %v4756, %v4757
    %4759 = vrot.lane.b32.xlu0 %v4755, 127
    %v4760 = vpop.permute.xlu0 %4759
    %4761 = vrot.lane.b32.xlu0 %v4754, 127
    %v4762 = vpop.permute.xlu0 %4761
    %4763 = vrot.lane.b32.xlu0 %v4758, 127
    %v4764 = vpop.permute.xlu0 %4763
    %4765 = vrot.lane.b32.xlu0 %v4757, 127
    %v4766 = vpop.permute.xlu0 %4765
    %v4771 = vadd.f32 %v4633, %v4760
    %v4772 = vadd.f32 %v4634, %v4762
    %v4773 = vadd.f32 %v4635, %v4764
    %v4774 = vadd.f32 %v4636, %v4766
    %v4775 = vld [vmem:[%s9 + $0x1f] sm:$0x1]
    %v4776 = vperm.slane %v4775, 0
    %4778 = vrot.lane.b32.xlu0 %v4776, 1
    %v4779 = vpop.permute.xlu0 %4778
    %v4781 = vmul.f32 %v4311, %v4779
    %v4782 = vmul.f32 %v4312, %v4779
    %v4783 = vmul.f32 %v4313, %v4779
    %v4784 = vmul.f32 %v4314, %v4779
    %v4789 = vrot.slane %v4781, 1
    %v4790 = vrot.slane %v4782, 1
    %v4791 = vsel %vm279, %v4789, %v4790
    %v4792 = vrot.slane %v4783, 1
    %v4793 = vrot.slane %v4784, 1
    %v4794 = vsel %vm279, %v4792, %v4793
    %4795 = vrot.lane.b32.xlu0 %v4791, 127
    %v4796 = vpop.permute.xlu0 %4795
    %4797 = vrot.lane.b32.xlu0 %v4790, 127
    %v4798 = vpop.permute.xlu0 %4797
    %4799 = vrot.lane.b32.xlu0 %v4794, 127
    %v4800 = vpop.permute.xlu0 %4799
    %4801 = vrot.lane.b32.xlu0 %v4793, 127
    %v4802 = vpop.permute.xlu0 %4801
    %v4807 = vadd.f32 %v4663, %v4796
    %v4808 = vadd.f32 %v4664, %v4798
    %v4809 = vadd.f32 %v4665, %v4800
    %v4810 = vadd.f32 %v4666, %v4802
    %v4811 = vld [vmem:[%s9 + $0x7] sm:$0x1]
    %v4812 = vperm.slane %v4811, 0
    %4814 = vrot.lane.b32.xlu0 %v4812, 1
    %v4815 = vpop.permute.xlu0 %4814
    %v4817 = vmul.f32 %v4311, %v4815
    %v4818 = vmul.f32 %v4312, %v4815
    %v4819 = vmul.f32 %v4313, %v4815
    %v4820 = vmul.f32 %v4314, %v4815
    %v4825 = vrot.slane %v4817, 2
    %v4826 = vrot.slane %v4818, 2
    %v4827 = vsel %vm424, %v4825, %v4826
    %v4828 = vrot.slane %v4819, 2
    %v4829 = vrot.slane %v4820, 2
    %v4830 = vsel %vm424, %v4828, %v4829
    %4831 = vrot.lane.b32.xlu0 %v4827, 127
    %v4832 = vpop.permute.xlu0 %4831
    %4833 = vrot.lane.b32.xlu0 %v4826, 127
    %v4834 = vpop.permute.xlu0 %4833
    %4835 = vrot.lane.b32.xlu0 %v4830, 127
    %v4836 = vpop.permute.xlu0 %4835
    %4837 = vrot.lane.b32.xlu0 %v4829, 127
    %v4838 = vpop.permute.xlu0 %4837
    %v4843 = vadd.f32 %v4699, %v4832
    %v4844 = vadd.f32 %v4700, %v4834
    %v4845 = vadd.f32 %v4701, %v4836
    %v4846 = vadd.f32 %v4702, %v4838
    %v4847 = vld [vmem:[%s9 + $0x10] sm:$0x1]
    %v4848 = vperm.slane %v4847, 0
    %4850 = vrot.lane.b32.xlu0 %v4848, 1
    %v4851 = vpop.permute.xlu0 %4850
    %v4853 = vmul.f32 %v4311, %v4851
    %v4854 = vmul.f32 %v4312, %v4851
    %v4855 = vmul.f32 %v4313, %v4851
    %v4856 = vmul.f32 %v4314, %v4851
    %v4861 = vrot.slane %v4853, 2
    %v4862 = vrot.slane %v4854, 2
    %v4863 = vsel %vm424, %v4861, %v4862
    %v4864 = vrot.slane %v4855, 2
    %v4865 = vrot.slane %v4856, 2
    %v4866 = vsel %vm424, %v4864, %v4865
    %4867 = vrot.lane.b32.xlu0 %v4863, 127
    %v4868 = vpop.permute.xlu0 %4867
    %4869 = vrot.lane.b32.xlu0 %v4862, 127
    %v4870 = vpop.permute.xlu0 %4869
    %4871 = vrot.lane.b32.xlu0 %v4866, 127
    %v4872 = vpop.permute.xlu0 %4871
    %4873 = vrot.lane.b32.xlu0 %v4865, 127
    %v4874 = vpop.permute.xlu0 %4873
    %v4879 = vadd.f32 %v4735, %v4868
    %v4880 = vadd.f32 %v4736, %v4870
    %v4881 = vadd.f32 %v4737, %v4872
    %v4882 = vadd.f32 %v4738, %v4874
    %v4883 = vld [vmem:[%s9 + $0x19] sm:$0x1]
    %v4884 = vperm.slane %v4883, 0
    %4886 = vrot.lane.b32.xlu0 %v4884, 1
    %v4887 = vpop.permute.xlu0 %4886
    %v4889 = vmul.f32 %v4311, %v4887
    %v4890 = vmul.f32 %v4312, %v4887
    %v4891 = vmul.f32 %v4313, %v4887
    %v4892 = vmul.f32 %v4314, %v4887
    %v4897 = vrot.slane %v4889, 2
    %v4898 = vrot.slane %v4890, 2
    %v4899 = vsel %vm424, %v4897, %v4898
    %v4900 = vrot.slane %v4891, 2
    %v4901 = vrot.slane %v4892, 2
    %v4902 = vsel %vm424, %v4900, %v4901
    %4903 = vrot.lane.b32.xlu0 %v4899, 127
    %v4904 = vpop.permute.xlu0 %4903
    %4905 = vrot.lane.b32.xlu0 %v4898, 127
    %v4906 = vpop.permute.xlu0 %4905
    %4907 = vrot.lane.b32.xlu0 %v4902, 127
    %v4908 = vpop.permute.xlu0 %4907
    %4909 = vrot.lane.b32.xlu0 %v4901, 127
    %v4910 = vpop.permute.xlu0 %4909
    %v4915 = vadd.f32 %v4771, %v4904
    %v4916 = vadd.f32 %v4772, %v4906
    %v4917 = vadd.f32 %v4773, %v4908
    %v4918 = vadd.f32 %v4774, %v4910
    %v4919 = vld [vmem:[%s9 + $0x22] sm:$0x1]
    %v4920 = vperm.slane %v4919, 0
    %4922 = vrot.lane.b32.xlu0 %v4920, 1
    %v4923 = vpop.permute.xlu0 %4922
    %v4925 = vmul.f32 %v4311, %v4923
    %v4926 = vmul.f32 %v4312, %v4923
    %v4927 = vmul.f32 %v4313, %v4923
    %v4928 = vmul.f32 %v4314, %v4923
    %v4933 = vrot.slane %v4925, 2
    %v4934 = vrot.slane %v4926, 2
    %v4935 = vsel %vm424, %v4933, %v4934
    %v4936 = vrot.slane %v4927, 2
    %v4937 = vrot.slane %v4928, 2
    %v4938 = vsel %vm424, %v4936, %v4937
    %4939 = vrot.lane.b32.xlu0 %v4935, 127
    %v4940 = vpop.permute.xlu0 %4939
    %4941 = vrot.lane.b32.xlu0 %v4934, 127
    %v4942 = vpop.permute.xlu0 %4941
    %4943 = vrot.lane.b32.xlu0 %v4938, 127
    %v4944 = vpop.permute.xlu0 %4943
    %4945 = vrot.lane.b32.xlu0 %v4937, 127
    %v4946 = vpop.permute.xlu0 %4945
    %v4951 = vadd.f32 %v4807, %v4940
    %v4952 = vadd.f32 %v4808, %v4942
    %v4953 = vadd.f32 %v4809, %v4944
    %v4954 = vadd.f32 %v4810, %v4946
    %v4955 = vld [vmem:[%s9 + $0x2] sm:$0x1]
    %v4956 = vperm.slane %v4955, 0
    %4958 = vrot.lane.b32.xlu0 %v4956, 2
    %v4959 = vpop.permute.xlu0 %4958
    %v4961 = vmul.f32 %v4311, %v4959
    %v4962 = vmul.f32 %v4312, %v4959
    %v4963 = vmul.f32 %v4313, %v4959
    %v4964 = vmul.f32 %v4314, %v4959
    %4969 = vrot.lane.b32.xlu0 %v4961, 126
    %v4970 = vpop.permute.xlu0 %4969
    %4971 = vrot.lane.b32.xlu0 %v4962, 126
    %v4972 = vpop.permute.xlu0 %4971
    %4973 = vrot.lane.b32.xlu0 %v4963, 126
    %v4974 = vpop.permute.xlu0 %4973
    %4975 = vrot.lane.b32.xlu0 %v4964, 126
    %v4976 = vpop.permute.xlu0 %4975
    %v4981 = vadd.f32 %v4843, %v4970
    %v4982 = vadd.f32 %v4844, %v4972
    %v4983 = vadd.f32 %v4845, %v4974
    %v4984 = vadd.f32 %v4846, %v4976
    %v4985 = vld [vmem:[%s9 + $0xb] sm:$0x1]
    %v4986 = vperm.slane %v4985, 0
    %4988 = vrot.lane.b32.xlu0 %v4986, 2
    %v4989 = vpop.permute.xlu0 %4988
    %v4991 = vmul.f32 %v4311, %v4989
    %v4992 = vmul.f32 %v4312, %v4989
    %v4993 = vmul.f32 %v4313, %v4989
    %v4994 = vmul.f32 %v4314, %v4989
    %4999 = vrot.lane.b32.xlu0 %v4991, 126
    %v5000 = vpop.permute.xlu0 %4999
    %5001 = vrot.lane.b32.xlu0 %v4992, 126
    %v5002 = vpop.permute.xlu0 %5001
    %5003 = vrot.lane.b32.xlu0 %v4993, 126
    %v5004 = vpop.permute.xlu0 %5003
    %5005 = vrot.lane.b32.xlu0 %v4994, 126
    %v5006 = vpop.permute.xlu0 %5005
    %v5011 = vadd.f32 %v4879, %v5000
    %v5012 = vadd.f32 %v4880, %v5002
    %v5013 = vadd.f32 %v4881, %v5004
    %v5014 = vadd.f32 %v4882, %v5006
    %v5015 = vld [vmem:[%s9 + $0x14] sm:$0x1]
    %v5016 = vperm.slane %v5015, 0
    %5018 = vrot.lane.b32.xlu0 %v5016, 2
    %v5019 = vpop.permute.xlu0 %5018
    %v5021 = vmul.f32 %v4311, %v5019
    %v5022 = vmul.f32 %v4312, %v5019
    %v5023 = vmul.f32 %v4313, %v5019
    %v5024 = vmul.f32 %v4314, %v5019
    %5029 = vrot.lane.b32.xlu0 %v5021, 126
    %v5030 = vpop.permute.xlu0 %5029
    %5031 = vrot.lane.b32.xlu0 %v5022, 126
    %v5032 = vpop.permute.xlu0 %5031
    %5033 = vrot.lane.b32.xlu0 %v5023, 126
    %v5034 = vpop.permute.xlu0 %5033
    %5035 = vrot.lane.b32.xlu0 %v5024, 126
    %v5036 = vpop.permute.xlu0 %5035
    %v5041 = vadd.f32 %v4915, %v5030
    %v5042 = vadd.f32 %v4916, %v5032
    %v5043 = vadd.f32 %v4917, %v5034
    %v5044 = vadd.f32 %v4918, %v5036
    %v5045 = vld [vmem:[%s9 + $0x1d] sm:$0x1]
    %v5046 = vperm.slane %v5045, 0
    %5048 = vrot.lane.b32.xlu0 %v5046, 2
    %v5049 = vpop.permute.xlu0 %5048
    %v5051 = vmul.f32 %v4311, %v5049
    %v5052 = vmul.f32 %v4312, %v5049
    %v5053 = vmul.f32 %v4313, %v5049
    %v5054 = vmul.f32 %v4314, %v5049
    %5059 = vrot.lane.b32.xlu0 %v5051, 126
    %v5060 = vpop.permute.xlu0 %5059
    %5061 = vrot.lane.b32.xlu0 %v5052, 126
    %v5062 = vpop.permute.xlu0 %5061
    %5063 = vrot.lane.b32.xlu0 %v5053, 126
    %v5064 = vpop.permute.xlu0 %5063
    %5065 = vrot.lane.b32.xlu0 %v5054, 126
    %v5066 = vpop.permute.xlu0 %5065
    %v5071 = vadd.f32 %v4951, %v5060
    %v5072 = vadd.f32 %v4952, %v5062
    %v5073 = vadd.f32 %v4953, %v5064
    %v5074 = vadd.f32 %v4954, %v5066
    %v5075 = vld [vmem:[%s9 + $0x5] sm:$0x1]
    %v5076 = vperm.slane %v5075, 0
    %5078 = vrot.lane.b32.xlu0 %v5076, 2
    %v5079 = vpop.permute.xlu0 %5078
    %v5081 = vmul.f32 %v4311, %v5079
    %v5082 = vmul.f32 %v4312, %v5079
    %v5083 = vmul.f32 %v4313, %v5079
    %v5084 = vmul.f32 %v4314, %v5079
    %v5089 = vrot.slane %v5081, 1
    %v5090 = vrot.slane %v5082, 1
    %v5091 = vsel %vm279, %v5089, %v5090
    %v5092 = vrot.slane %v5083, 1
    %v5093 = vrot.slane %v5084, 1
    %v5094 = vsel %vm279, %v5092, %v5093
    %5095 = vrot.lane.b32.xlu0 %v5091, 126
    %v5096 = vpop.permute.xlu0 %5095
    %5097 = vrot.lane.b32.xlu0 %v5090, 126
    %v5098 = vpop.permute.xlu0 %5097
    %5099 = vrot.lane.b32.xlu0 %v5094, 126
    %v5100 = vpop.permute.xlu0 %5099
    %5101 = vrot.lane.b32.xlu0 %v5093, 126
    %v5102 = vpop.permute.xlu0 %5101
    %v5107 = vadd.f32 %v4981, %v5096
    %v5108 = vadd.f32 %v4982, %v5098
    %v5109 = vadd.f32 %v4983, %v5100
    %v5110 = vadd.f32 %v4984, %v5102
    %v5111 = vld [vmem:[%s9 + $0xe] sm:$0x1]
    %v5112 = vperm.slane %v5111, 0
    %5114 = vrot.lane.b32.xlu0 %v5112, 2
    %v5115 = vpop.permute.xlu0 %5114
    %v5117 = vmul.f32 %v4311, %v5115
    %v5118 = vmul.f32 %v4312, %v5115
    %v5119 = vmul.f32 %v4313, %v5115
    %v5120 = vmul.f32 %v4314, %v5115
    %v5125 = vrot.slane %v5117, 1
    %v5126 = vrot.slane %v5118, 1
    %v5127 = vsel %vm279, %v5125, %v5126
    %v5128 = vrot.slane %v5119, 1
    %v5129 = vrot.slane %v5120, 1
    %v5130 = vsel %vm279, %v5128, %v5129
    %5131 = vrot.lane.b32.xlu0 %v5127, 126
    %v5132 = vpop.permute.xlu0 %5131
    %5133 = vrot.lane.b32.xlu0 %v5126, 126
    %v5134 = vpop.permute.xlu0 %5133
    %5135 = vrot.lane.b32.xlu0 %v5130, 126
    %v5136 = vpop.permute.xlu0 %5135
    %5137 = vrot.lane.b32.xlu0 %v5129, 126
    %v5138 = vpop.permute.xlu0 %5137
    %v5143 = vadd.f32 %v5011, %v5132
    %v5144 = vadd.f32 %v5012, %v5134
    %v5145 = vadd.f32 %v5013, %v5136
    %v5146 = vadd.f32 %v5014, %v5138
    %v5147 = vld [vmem:[%s9 + $0x17] sm:$0x1]
    %v5148 = vperm.slane %v5147, 0
    %5150 = vrot.lane.b32.xlu0 %v5148, 2
    %v5151 = vpop.permute.xlu0 %5150
    %v5153 = vmul.f32 %v4311, %v5151
    %v5154 = vmul.f32 %v4312, %v5151
    %v5155 = vmul.f32 %v4313, %v5151
    %v5156 = vmul.f32 %v4314, %v5151
    %v5161 = vrot.slane %v5153, 1
    %v5162 = vrot.slane %v5154, 1
    %v5163 = vsel %vm279, %v5161, %v5162
    %v5164 = vrot.slane %v5155, 1
    %v5165 = vrot.slane %v5156, 1
    %v5166 = vsel %vm279, %v5164, %v5165
    %5167 = vrot.lane.b32.xlu0 %v5163, 126
    %v5168 = vpop.permute.xlu0 %5167
    %5169 = vrot.lane.b32.xlu0 %v5162, 126
    %v5170 = vpop.permute.xlu0 %5169
    %5171 = vrot.lane.b32.xlu0 %v5166, 126
    %v5172 = vpop.permute.xlu0 %5171
    %5173 = vrot.lane.b32.xlu0 %v5165, 126
    %v5174 = vpop.permute.xlu0 %5173
    %v5179 = vadd.f32 %v5041, %v5168
    %v5180 = vadd.f32 %v5042, %v5170
    %v5181 = vadd.f32 %v5043, %v5172
    %v5182 = vadd.f32 %v5044, %v5174
    %v5183 = vld [vmem:[%s9 + $0x20] sm:$0x1]
    %v5184 = vperm.slane %v5183, 0
    %5186 = vrot.lane.b32.xlu0 %v5184, 2
    %v5187 = vpop.permute.xlu0 %5186
    %v5189 = vmul.f32 %v4311, %v5187
    %v5190 = vmul.f32 %v4312, %v5187
    %v5191 = vmul.f32 %v4313, %v5187
    %v5192 = vmul.f32 %v4314, %v5187
    %v5197 = vrot.slane %v5189, 1
    %v5198 = vrot.slane %v5190, 1
    %v5199 = vsel %vm279, %v5197, %v5198
    %v5200 = vrot.slane %v5191, 1
    %v5201 = vrot.slane %v5192, 1
    %v5202 = vsel %vm279, %v5200, %v5201
    %5203 = vrot.lane.b32.xlu0 %v5199, 126
    %v5204 = vpop.permute.xlu0 %5203
    %5205 = vrot.lane.b32.xlu0 %v5198, 126
    %v5206 = vpop.permute.xlu0 %5205
    %5207 = vrot.lane.b32.xlu0 %v5202, 126
    %v5208 = vpop.permute.xlu0 %5207
    %5209 = vrot.lane.b32.xlu0 %v5201, 126
    %v5210 = vpop.permute.xlu0 %5209
    %v5215 = vadd.f32 %v5071, %v5204
    %v5216 = vadd.f32 %v5072, %v5206
    %v5217 = vadd.f32 %v5073, %v5208
    %v5218 = vadd.f32 %v5074, %v5210
    %v5219 = vld [vmem:[%s9 + $0x8] sm:$0x1]
    %v5220 = vperm.slane %v5219, 0
    %5222 = vrot.lane.b32.xlu0 %v5220, 2
    %v5223 = vpop.permute.xlu0 %5222
    %v5225 = vmul.f32 %v4311, %v5223
    %v5226 = vmul.f32 %v4312, %v5223
    %v5227 = vmul.f32 %v4313, %v5223
    %v5228 = vmul.f32 %v4314, %v5223
    %v5233 = vrot.slane %v5225, 2
    %v5234 = vrot.slane %v5226, 2
    %v5235 = vsel %vm424, %v5233, %v5234
    %v5236 = vrot.slane %v5227, 2
    %v5237 = vrot.slane %v5228, 2
    %v5238 = vsel %vm424, %v5236, %v5237
    %5239 = vrot.lane.b32.xlu0 %v5235, 126
    %v5240 = vpop.permute.xlu0 %5239
    %5241 = vrot.lane.b32.xlu0 %v5234, 126
    %v5242 = vpop.permute.xlu0 %5241
    %5243 = vrot.lane.b32.xlu0 %v5238, 126
    %v5244 = vpop.permute.xlu0 %5243
    %5245 = vrot.lane.b32.xlu0 %v5237, 126
    %v5246 = vpop.permute.xlu0 %5245
    %v5251 = vadd.f32 %v5107, %v5240
    %v5252 = vadd.f32 %v5108, %v5242
    %v5253 = vadd.f32 %v5109, %v5244
    %v5254 = vadd.f32 %v5110, %v5246
    %v5255 = vld [vmem:[%s9 + $0x11] sm:$0x1]
    %v5256 = vperm.slane %v5255, 0
    %5258 = vrot.lane.b32.xlu0 %v5256, 2
    %v5259 = vpop.permute.xlu0 %5258
    %v5261 = vmul.f32 %v4311, %v5259
    %v5262 = vmul.f32 %v4312, %v5259
    %v5263 = vmul.f32 %v4313, %v5259
    %v5264 = vmul.f32 %v4314, %v5259
    %v5269 = vrot.slane %v5261, 2
    %v5270 = vrot.slane %v5262, 2
    %v5271 = vsel %vm424, %v5269, %v5270
    %v5272 = vrot.slane %v5263, 2
    %v5273 = vrot.slane %v5264, 2
    %v5274 = vsel %vm424, %v5272, %v5273
    %5275 = vrot.lane.b32.xlu0 %v5271, 126
    %v5276 = vpop.permute.xlu0 %5275
    %5277 = vrot.lane.b32.xlu0 %v5270, 126
    %v5278 = vpop.permute.xlu0 %5277
    %5279 = vrot.lane.b32.xlu0 %v5274, 126
    %v5280 = vpop.permute.xlu0 %5279
    %5281 = vrot.lane.b32.xlu0 %v5273, 126
    %v5282 = vpop.permute.xlu0 %5281
    %v5287 = vadd.f32 %v5143, %v5276
    %v5288 = vadd.f32 %v5144, %v5278
    %v5289 = vadd.f32 %v5145, %v5280
    %v5290 = vadd.f32 %v5146, %v5282
    %v5291 = vld [vmem:[%s9 + $0x1a] sm:$0x1]
    %v5292 = vperm.slane %v5291, 0
    %5294 = vrot.lane.b32.xlu0 %v5292, 2
    %v5295 = vpop.permute.xlu0 %5294
    %v5297 = vmul.f32 %v4311, %v5295
    %v5298 = vmul.f32 %v4312, %v5295
    %v5299 = vmul.f32 %v4313, %v5295
    %v5300 = vmul.f32 %v4314, %v5295
    %v5305 = vrot.slane %v5297, 2
    %v5306 = vrot.slane %v5298, 2
    %v5307 = vsel %vm424, %v5305, %v5306
    %v5308 = vrot.slane %v5299, 2
    %v5309 = vrot.slane %v5300, 2
    %v5310 = vsel %vm424, %v5308, %v5309
    %5311 = vrot.lane.b32.xlu0 %v5307, 126
    %v5312 = vpop.permute.xlu0 %5311
    %5313 = vrot.lane.b32.xlu0 %v5306, 126
    %v5314 = vpop.permute.xlu0 %5313
    %5315 = vrot.lane.b32.xlu0 %v5310, 126
    %v5316 = vpop.permute.xlu0 %5315
    %5317 = vrot.lane.b32.xlu0 %v5309, 126
    %v5318 = vpop.permute.xlu0 %5317
    %v5323 = vadd.f32 %v5179, %v5312
    %v5324 = vadd.f32 %v5180, %v5314
    %v5325 = vadd.f32 %v5181, %v5316
    %v5326 = vadd.f32 %v5182, %v5318
    %v5327 = vld [vmem:[%s9 + $0x23] sm:$0x1]
    %v5328 = vperm.slane %v5327, 0
    %5330 = vrot.lane.b32.xlu0 %v5328, 2
    %v5331 = vpop.permute.xlu0 %5330
    %v5333 = vmul.f32 %v4311, %v5331
    %v5334 = vmul.f32 %v4312, %v5331
    %v5335 = vmul.f32 %v4313, %v5331
    %v5336 = vmul.f32 %v4314, %v5331
    %v5341 = vrot.slane %v5333, 2
    %v5342 = vrot.slane %v5334, 2
    %v5343 = vsel %vm424, %v5341, %v5342
    %v5344 = vrot.slane %v5335, 2
    %v5345 = vrot.slane %v5336, 2
    %v5346 = vsel %vm424, %v5344, %v5345
    %5347 = vrot.lane.b32.xlu0 %v5343, 126
    %v5348 = vpop.permute.xlu0 %5347
    %5349 = vrot.lane.b32.xlu0 %v5342, 126
    %v5350 = vpop.permute.xlu0 %5349
    %5351 = vrot.lane.b32.xlu0 %v5346, 126
    %v5352 = vpop.permute.xlu0 %5351
    %5353 = vrot.lane.b32.xlu0 %v5345, 126
    %v5354 = vpop.permute.xlu0 %5353
    %v5359 = vadd.f32 %v5215, %v5348
    %v5360 = vadd.f32 %v5216, %v5350
    %v5361 = vadd.f32 %v5217, %v5352
    %v5362 = vadd.f32 %v5218, %v5354
    %s5363 = sld [smem:[#allocation13]]
    %v5364 = vstv %s5363
    %v5365 = vadd.f32 %v5251, %v5364
    %v5366 = vadd.f32 %v5252, %v5364
    %v5367 = vadd.f32 %v5253, %v5364
    %v5368 = vadd.f32 %v5254, %v5364
    %5373 = vrot.lane.b32.xlu0 %v5251, 114
    %v5374 = vpop.permute.xlu0 %5373
    %5375 = vrot.lane.b32.xlu0 %v5252, 114
    %v5376 = vpop.permute.xlu0 %5375
    %5377 = vrot.lane.b32.xlu0 %v5253, 114
    %v5378 = vpop.permute.xlu0 %5377
    %5379 = vrot.lane.b32.xlu0 %v5254, 114
    %v5380 = vpop.permute.xlu0 %5379
    %v5385 = vadd.f32 %v5365, %v5374
    %v5386 = vadd.f32 %v5366, %v5376
    %v5387 = vadd.f32 %v5367, %v5378
    %v5388 = vadd.f32 %v5368, %v5380
    %5389 = vrot.lane.b32.xlu0 %v5251, 100
    %v5390 = vpop.permute.xlu0 %5389
    %5391 = vrot.lane.b32.xlu0 %v5252, 100
    %v5392 = vpop.permute.xlu0 %5391
    %5393 = vrot.lane.b32.xlu0 %v5253, 100
    %v5394 = vpop.permute.xlu0 %5393
    %5395 = vrot.lane.b32.xlu0 %v5254, 100
    %v5396 = vpop.permute.xlu0 %5395
    %v5401 = vadd.f32 %v5385, %v5390
    %v5402 = vadd.f32 %v5386, %v5392
    %v5403 = vadd.f32 %v5387, %v5394
    %v5404 = vadd.f32 %v5388, %v5396
    %5405 = vrot.lane.b32.xlu0 %v5251, 86
    %v5406 = vpop.permute.xlu0 %5405
    %5407 = vrot.lane.b32.xlu0 %v5252, 86
    %v5408 = vpop.permute.xlu0 %5407
    %5409 = vrot.lane.b32.xlu0 %v5253, 86
    %v5410 = vpop.permute.xlu0 %5409
    %5411 = vrot.lane.b32.xlu0 %v5254, 86
    %v5412 = vpop.permute.xlu0 %5411
    %v5417 = vadd.f32 %v5401, %v5406
    %v5418 = vadd.f32 %v5402, %v5408
    %v5419 = vadd.f32 %v5403, %v5410
    %v5420 = vadd.f32 %v5404, %v5412
    %vm5421 = vcmask 97280
    %v5422 = vsel %vm5421, %v5417, 0.0
    %vm5423 = vcmask 93184
    %v5424 = vsel %vm5423, %v5418, 0.0
    %v5425 = vadd.f32 %v5422, %v5424
    %v5426 = vsel %vm5421, %v5419, 0.0
    %v5427 = vadd.f32 %v5425, %v5426
    %v5428 = vsel %vm5423, %v5420, 0.0
    %v5429 = vadd.f32 %v5427, %v5428
    %5430 = vadd.xlane.f32.xlu0 %v5429
    %v5431 = vpop.xlane.xlu0 %5430
    %v5432 = vrot.slane %v5431, 4
    %v5433 = vadd.f32 %v5431, %v5432
    %v5434 = vrot.slane %v5433, 2
    %v5435 = vadd.f32 %v5433, %v5434
    %v5436 = vrot.slane %v5435, 1
    %v5437 = vadd.f32 %v5435, %v5436
    %s5438 = vtos %v5437
    %v5439 = vmul.f32 %v5417, %v5417
    %v5440 = vmul.f32 %v5418, %v5418
    %v5441 = vmul.f32 %v5419, %v5419
    %v5442 = vmul.f32 %v5420, %v5420
    %v5443 = vsel %vm5421, %v5439, 0.0
    %v5444 = vsel %vm5423, %v5440, 0.0
    %v5445 = vadd.f32 %v5443, %v5444
    %v5446 = vsel %vm5421, %v5441, 0.0
    %v5447 = vadd.f32 %v5445, %v5446
    %v5448 = vsel %vm5423, %v5442, 0.0
    %v5449 = vadd.f32 %v5447, %v5448
    %5450 = vadd.xlane.f32.xlu0 %v5449
    %v5451 = vpop.xlane.xlu0 %5450
    %v5452 = vrot.slane %v5451, 4
    %v5453 = vadd.f32 %v5451, %v5452
    %v5454 = vrot.slane %v5453, 2
    %v5455 = vadd.f32 %v5453, %v5454
    %v5456 = vrot.slane %v5455, 1
    %v5457 = vadd.f32 %v5455, %v5456
    %s5458 = vtos %v5457
    %s5459 = smul.f32 %s5438, 0.0034722222
    %s5460 = smul.f32 %s5458, 0.0034722222
    %s5461 = smul.f32 %s5459, %s5459
    %s5462 = ssub.f32 %s5460, %s5461
    %s5463 = sld [smem:[#allocation14]]
    %s5464 = sadd.f32 %s5462, 1e-05
    %v5465 = vstv %s5464
    %v5466 = vrsqrt.pop %v5465
    %v5467 = vmul.f32 %v5466, %v5465
    %v5468 = vmul.f32 %v5467, %v5466
    %v5469 = vmul.f32 0.5, %v5468
    %v5470 = vsub.f32 1.5, %v5469
    %v5471 = vmul.f32 %v5466, %v5470
    %vm5472 = vweird.f32 %v5465
    %vm5473 = vweird.f32 %v5466
    %vm5474 = vmor %vm5472, %vm5473
    %v5475 = vsel %vm5474, %v5466, %v5471
    %s5476 = vtos %v5475
    %s5477 = smul.f32 %s5463, %s5476
    %s5478 = sld [smem:[#allocation16]]
    %s5479 = smul.f32 %s5459, %s5477
    %s5480 = ssub.f32 %s5478, %s5479
    %v5481 = vstv %s5477
    %v5482 = vmul.f32 %v5417, %v5481
    %v5483 = vmul.f32 %v5418, %v5481
    %v5484 = vmul.f32 %v5419, %v5481
    %v5485 = vmul.f32 %v5420, %v5481
    %v5486 = vstv %s5480
    %v5487 = vadd.f32 %v5482, %v5486
    %v5488 = vadd.f32 %v5483, %v5486
    %v5489 = vadd.f32 %v5484, %v5486
    %v5490 = vadd.f32 %v5485, %v5486
    %v5491 = vmax.f32 %v5487, 0.0
    %v5492 = vmax.f32 %v5488, 0.0
    %v5493 = vmax.f32 %v5489, 0.0
    %v5494 = vmax.f32 %v5490, 0.0
    %5499 = vrot.lane.b32.xlu0 %v5491, 127
    %v5500 = vpop.permute.xlu0 %5499
    %5501 = vrot.lane.b32.xlu0 %v5492, 127
    %v5502 = vpop.permute.xlu0 %5501
    %5503 = vrot.lane.b32.xlu0 %v5493, 127
    %v5504 = vpop.permute.xlu0 %5503
    %5505 = vrot.lane.b32.xlu0 %v5494, 127
    %v5506 = vpop.permute.xlu0 %5505
    %v5511 = vmax.f32 %v5491, %v5500
    %v5512 = vmax.f32 %v5492, %v5502
    %v5513 = vmax.f32 %v5493, %v5504
    %v5514 = vmax.f32 %v5494, %v5506
    %v5519 = vrot.slane %v5511, 1
    %v5520 = vrot.slane %v5512, 1
    %v5521 = vsel %vm279, %v5519, %v5520
    %v5522 = vrot.slane %v5513, 1
    %v5523 = vrot.slane %v5514, 1
    %v5524 = vsel %vm279, %v5522, %v5523
    %v5529 = vmax.f32 %v5511, %v5521
    %v5530 = vmax.f32 %v5512, %v5520
    %v5531 = vmax.f32 %v5513, %v5524
    %v5532 = vmax.f32 %v5514, %v5523
    %s5533 = sld [smem:[#allocation13 + $0x1]]
    %v5534 = vstv %s5533
    %v5535 = vadd.f32 %v5287, %v5534
    %v5536 = vadd.f32 %v5288, %v5534
    %v5537 = vadd.f32 %v5289, %v5534
    %v5538 = vadd.f32 %v5290, %v5534
    %5543 = vrot.lane.b32.xlu0 %v5287, 114
    %v5544 = vpop.permute.xlu0 %5543
    %5545 = vrot.lane.b32.xlu0 %v5288, 114
    %v5546 = vpop.permute.xlu0 %5545
    %5547 = vrot.lane.b32.xlu0 %v5289, 114
    %v5548 = vpop.permute.xlu0 %5547
    %5549 = vrot.lane.b32.xlu0 %v5290, 114
    %v5550 = vpop.permute.xlu0 %5549
    %v5555 = vadd.f32 %v5535, %v5544
    %v5556 = vadd.f32 %v5536, %v5546
    %v5557 = vadd.f32 %v5537, %v5548
    %v5558 = vadd.f32 %v5538, %v5550
    %5559 = vrot.lane.b32.xlu0 %v5287, 100
    %v5560 = vpop.permute.xlu0 %5559
    %5561 = vrot.lane.b32.xlu0 %v5288, 100
    %v5562 = vpop.permute.xlu0 %5561
    %5563 = vrot.lane.b32.xlu0 %v5289, 100
    %v5564 = vpop.permute.xlu0 %5563
    %5565 = vrot.lane.b32.xlu0 %v5290, 100
    %v5566 = vpop.permute.xlu0 %5565
    %v5571 = vadd.f32 %v5555, %v5560
    %v5572 = vadd.f32 %v5556, %v5562
    %v5573 = vadd.f32 %v5557, %v5564
    %v5574 = vadd.f32 %v5558, %v5566
    %5575 = vrot.lane.b32.xlu0 %v5287, 86
    %v5576 = vpop.permute.xlu0 %5575
    %5577 = vrot.lane.b32.xlu0 %v5288, 86
    %v5578 = vpop.permute.xlu0 %5577
    %5579 = vrot.lane.b32.xlu0 %v5289, 86
    %v5580 = vpop.permute.xlu0 %5579
    %5581 = vrot.lane.b32.xlu0 %v5290, 86
    %v5582 = vpop.permute.xlu0 %5581
    %v5587 = vadd.f32 %v5571, %v5576
    %v5588 = vadd.f32 %v5572, %v5578
    %v5589 = vadd.f32 %v5573, %v5580
    %v5590 = vadd.f32 %v5574, %v5582
    %v5591 = vsel %vm5421, %v5587, 0.0
    %v5592 = vsel %vm5423, %v5588, 0.0
    %v5593 = vadd.f32 %v5591, %v5592
    %v5594 = vsel %vm5421, %v5589, 0.0
    %v5595 = vadd.f32 %v5593, %v5594
    %v5596 = vsel %vm5423, %v5590, 0.0
    %v5597 = vadd.f32 %v5595, %v5596
    %5598 = vadd.xlane.f32.xlu0 %v5597
    %v5599 = vpop.xlane.xlu0 %5598
    %v5600 = vrot.slane %v5599, 4
    %v5601 = vadd.f32 %v5599, %v5600
    %v5602 = vrot.slane %v5601, 2
    %v5603 = vadd.f32 %v5601, %v5602
    %v5604 = vrot.slane %v5603, 1
    %v5605 = vadd.f32 %v5603, %v5604
    %s5606 = vtos %v5605
    %v5607 = vmul.f32 %v5587, %v5587
    %v5608 = vmul.f32 %v5588, %v5588
    %v5609 = vmul.f32 %v5589, %v5589
    %v5610 = vmul.f32 %v5590, %v5590
    %v5611 = vsel %vm5421, %v5607, 0.0
    %v5612 = vsel %vm5423, %v5608, 0.0
    %v5613 = vadd.f32 %v5611, %v5612
    %v5614 = vsel %vm5421, %v5609, 0.0
    %v5615 = vadd.f32 %v5613, %v5614
    %v5616 = vsel %vm5423, %v5610, 0.0
    %v5617 = vadd.f32 %v5615, %v5616
    %5618 = vadd.xlane.f32.xlu0 %v5617
    %v5619 = vpop.xlane.xlu0 %5618
    %v5620 = vrot.slane %v5619, 4
    %v5621 = vadd.f32 %v5619, %v5620
    %v5622 = vrot.slane %v5621, 2
    %v5623 = vadd.f32 %v5621, %v5622
    %v5624 = vrot.slane %v5623, 1
    %v5625 = vadd.f32 %v5623, %v5624
    %s5626 = vtos %v5625
    %s5627 = smul.f32 %s5606, 0.0034722222
    %s5628 = smul.f32 %s5626, 0.0034722222
    %s5629 = smul.f32 %s5627, %s5627
    %s5630 = ssub.f32 %s5628, %s5629
    %s5631 = sld [smem:[#allocation14 + $0x1]]
    %s5632 = sadd.f32 %s5630, 1e-05
    %v5633 = vstv %s5632
    %v5634 = vrsqrt.pop %v5633
    %v5635 = vmul.f32 %v5634, %v5633
    %v5636 = vmul.f32 %v5635, %v5634
    %v5637 = vmul.f32 0.5, %v5636
    %v5638 = vsub.f32 1.5, %v5637
    %v5639 = vmul.f32 %v5634, %v5638
    %vm5640 = vweird.f32 %v5633
    %vm5641 = vweird.f32 %v5634
    %vm5642 = vmor %vm5640, %vm5641
    %v5643 = vsel %vm5642, %v5634, %v5639
    %s5644 = vtos %v5643
    %s5645 = smul.f32 %s5631, %s5644
    %s5646 = sld [smem:[#allocation16 + $0x1]]
    %s5647 = smul.f32 %s5627, %s5645
    %s5648 = ssub.f32 %s5646, %s5647
    %v5649 = vstv %s5645
    %v5650 = vmul.f32 %v5587, %v5649
    %v5651 = vmul.f32 %v5588, %v5649
    %v5652 = vmul.f32 %v5589, %v5649
    %v5653 = vmul.f32 %v5590, %v5649
    %v5654 = vstv %s5648
    %v5655 = vadd.f32 %v5650, %v5654
    %v5656 = vadd.f32 %v5651, %v5654
    %v5657 = vadd.f32 %v5652, %v5654
    %v5658 = vadd.f32 %v5653, %v5654
    %v5659 = vmax.f32 %v5655, 0.0
    %v5660 = vmax.f32 %v5656, 0.0
    %v5661 = vmax.f32 %v5657, 0.0
    %v5662 = vmax.f32 %v5658, 0.0
    %5667 = vrot.lane.b32.xlu0 %v5659, 127
    %v5668 = vpop.permute.xlu0 %5667
    %5669 = vrot.lane.b32.xlu0 %v5660, 127
    %v5670 = vpop.permute.xlu0 %5669
    %5671 = vrot.lane.b32.xlu0 %v5661, 127
    %v5672 = vpop.permute.xlu0 %5671
    %5673 = vrot.lane.b32.xlu0 %v5662, 127
    %v5674 = vpop.permute.xlu0 %5673
    %v5679 = vmax.f32 %v5659, %v5668
    %v5680 = vmax.f32 %v5660, %v5670
    %v5681 = vmax.f32 %v5661, %v5672
    %v5682 = vmax.f32 %v5662, %v5674
    %v5687 = vrot.slane %v5679, 1
    %v5688 = vrot.slane %v5680, 1
    %v5689 = vsel %vm279, %v5687, %v5688
    %v5690 = vrot.slane %v5681, 1
    %v5691 = vrot.slane %v5682, 1
    %v5692 = vsel %vm279, %v5690, %v5691
    %v5697 = vmax.f32 %v5679, %v5689
    %v5698 = vmax.f32 %v5680, %v5688
    %v5699 = vmax.f32 %v5681, %v5692
    %v5700 = vmax.f32 %v5682, %v5691
    %s5701 = sld [smem:[#allocation13 + $0x2]]
    %v5702 = vstv %s5701
    %v5703 = vadd.f32 %v5323, %v5702
    %v5704 = vadd.f32 %v5324, %v5702
    %v5705 = vadd.f32 %v5325, %v5702
    %v5706 = vadd.f32 %v5326, %v5702
    %5711 = vrot.lane.b32.xlu0 %v5323, 114
    %v5712 = vpop.permute.xlu0 %5711
    %5713 = vrot.lane.b32.xlu0 %v5324, 114
    %v5714 = vpop.permute.xlu0 %5713
    %5715 = vrot.lane.b32.xlu0 %v5325, 114
    %v5716 = vpop.permute.xlu0 %5715
    %5717 = vrot.lane.b32.xlu0 %v5326, 114
    %v5718 = vpop.permute.xlu0 %5717
    %v5723 = vadd.f32 %v5703, %v5712
    %v5724 = vadd.f32 %v5704, %v5714
    %v5725 = vadd.f32 %v5705, %v5716
    %v5726 = vadd.f32 %v5706, %v5718
    %5727 = vrot.lane.b32.xlu0 %v5323, 100
    %v5728 = vpop.permute.xlu0 %5727
    %5729 = vrot.lane.b32.xlu0 %v5324, 100
    %v5730 = vpop.permute.xlu0 %5729
    %5731 = vrot.lane.b32.xlu0 %v5325, 100
    %v5732 = vpop.permute.xlu0 %5731
    %5733 = vrot.lane.b32.xlu0 %v5326, 100
    %v5734 = vpop.permute.xlu0 %5733
    %v5739 = vadd.f32 %v5723, %v5728
    %v5740 = vadd.f32 %v5724, %v5730
    %v5741 = vadd.f32 %v5725, %v5732
    %v5742 = vadd.f32 %v5726, %v5734
    %5743 = vrot.lane.b32.xlu0 %v5323, 86
    %v5744 = vpop.permute.xlu0 %5743
    %5745 = vrot.lane.b32.xlu0 %v5324, 86
    %v5746 = vpop.permute.xlu0 %5745
    %5747 = vrot.lane.b32.xlu0 %v5325, 86
    %v5748 = vpop.permute.xlu0 %5747
    %5749 = vrot.lane.b32.xlu0 %v5326, 86
    %v5750 = vpop.permute.xlu0 %5749
    %v5755 = vadd.f32 %v5739, %v5744
    %v5756 = vadd.f32 %v5740, %v5746
    %v5757 = vadd.f32 %v5741, %v5748
    %v5758 = vadd.f32 %v5742, %v5750
    %v5759 = vsel %vm5421, %v5755, 0.0
    %v5760 = vsel %vm5423, %v5756, 0.0
    %v5761 = vadd.f32 %v5759, %v5760
    %v5762 = vsel %vm5421, %v5757, 0.0
    %v5763 = vadd.f32 %v5761, %v5762
    %v5764 = vsel %vm5423, %v5758, 0.0
    %v5765 = vadd.f32 %v5763, %v5764
    %5766 = vadd.xlane.f32.xlu0 %v5765
    %v5767 = vpop.xlane.xlu0 %5766
    %v5768 = vrot.slane %v5767, 4
    %v5769 = vadd.f32 %v5767, %v5768
    %v5770 = vrot.slane %v5769, 2
    %v5771 = vadd.f32 %v5769, %v5770
    %v5772 = vrot.slane %v5771, 1
    %v5773 = vadd.f32 %v5771, %v5772
    %s5774 = vtos %v5773
    %v5775 = vmul.f32 %v5755, %v5755
    %v5776 = vmul.f32 %v5756, %v5756
    %v5777 = vmul.f32 %v5757, %v5757
    %v5778 = vmul.f32 %v5758, %v5758
    %v5779 = vsel %vm5421, %v5775, 0.0
    %v5780 = vsel %vm5423, %v5776, 0.0
    %v5781 = vadd.f32 %v5779, %v5780
    %v5782 = vsel %vm5421, %v5777, 0.0
    %v5783 = vadd.f32 %v5781, %v5782
    %v5784 = vsel %vm5423, %v5778, 0.0
    %v5785 = vadd.f32 %v5783, %v5784
    %5786 = vadd.xlane.f32.xlu0 %v5785
    %v5787 = vpop.xlane.xlu0 %5786
    %v5788 = vrot.slane %v5787, 4
    %v5789 = vadd.f32 %v5787, %v5788
    %v5790 = vrot.slane %v5789, 2
    %v5791 = vadd.f32 %v5789, %v5790
    %v5792 = vrot.slane %v5791, 1
    %v5793 = vadd.f32 %v5791, %v5792
    %s5794 = vtos %v5793
    %s5795 = smul.f32 %s5774, 0.0034722222
    %s5796 = smul.f32 %s5794, 0.0034722222
    %s5797 = smul.f32 %s5795, %s5795
    %s5798 = ssub.f32 %s5796, %s5797
    %s5799 = sld [smem:[#allocation14 + $0x2]]
    %s5800 = sadd.f32 %s5798, 1e-05
    %v5801 = vstv %s5800
    %v5802 = vrsqrt.pop %v5801
    %v5803 = vmul.f32 %v5802, %v5801
    %v5804 = vmul.f32 %v5803, %v5802
    %v5805 = vmul.f32 0.5, %v5804
    %v5806 = vsub.f32 1.5, %v5805
    %v5807 = vmul.f32 %v5802, %v5806
    %vm5808 = vweird.f32 %v5801
    %vm5809 = vweird.f32 %v5802
    %vm5810 = vmor %vm5808, %vm5809
    %v5811 = vsel %vm5810, %v5802, %v5807
    %s5812 = vtos %v5811
    %s5813 = smul.f32 %s5799, %s5812
    %s5814 = sld [smem:[#allocation16 + $0x2]]
    %s5815 = smul.f32 %s5795, %s5813
    %s5816 = ssub.f32 %s5814, %s5815
    %v5817 = vstv %s5813
    %v5818 = vmul.f32 %v5755, %v5817
    %v5819 = vmul.f32 %v5756, %v5817
    %v5820 = vmul.f32 %v5757, %v5817
    %v5821 = vmul.f32 %v5758, %v5817
    %v5822 = vstv %s5816
    %v5823 = vadd.f32 %v5818, %v5822
    %v5824 = vadd.f32 %v5819, %v5822
    %v5825 = vadd.f32 %v5820, %v5822
    %v5826 = vadd.f32 %v5821, %v5822
    %v5827 = vmax.f32 %v5823, 0.0
    %v5828 = vmax.f32 %v5824, 0.0
    %v5829 = vmax.f32 %v5825, 0.0
    %v5830 = vmax.f32 %v5826, 0.0
    %5835 = vrot.lane.b32.xlu0 %v5827, 127
    %v5836 = vpop.permute.xlu0 %5835
    %5837 = vrot.lane.b32.xlu0 %v5828, 127
    %v5838 = vpop.permute.xlu0 %5837
    %5839 = vrot.lane.b32.xlu0 %v5829, 127
    %v5840 = vpop.permute.xlu0 %5839
    %5841 = vrot.lane.b32.xlu0 %v5830, 127
    %v5842 = vpop.permute.xlu0 %5841
    %v5847 = vmax.f32 %v5827, %v5836
    %v5848 = vmax.f32 %v5828, %v5838
    %v5849 = vmax.f32 %v5829, %v5840
    %v5850 = vmax.f32 %v5830, %v5842
    %v5855 = vrot.slane %v5847, 1
    %v5856 = vrot.slane %v5848, 1
    %v5857 = vsel %vm279, %v5855, %v5856
    %v5858 = vrot.slane %v5849, 1
    %v5859 = vrot.slane %v5850, 1
    %v5860 = vsel %vm279, %v5858, %v5859
    %v5865 = vmax.f32 %v5847, %v5857
    %v5866 = vmax.f32 %v5848, %v5856
    %v5867 = vmax.f32 %v5849, %v5860
    %v5868 = vmax.f32 %v5850, %v5859
    %s5869 = sld [smem:[#allocation13 + $0x3]]
    %v5870 = vstv %s5869
    %v5871 = vadd.f32 %v5359, %v5870
    %v5872 = vadd.f32 %v5360, %v5870
    %v5873 = vadd.f32 %v5361, %v5870
    %v5874 = vadd.f32 %v5362, %v5870
    %5879 = vrot.lane.b32.xlu0 %v5359, 114
    %v5880 = vpop.permute.xlu0 %5879
    %5881 = vrot.lane.b32.xlu0 %v5360, 114
    %v5882 = vpop.permute.xlu0 %5881
    %5883 = vrot.lane.b32.xlu0 %v5361, 114
    %v5884 = vpop.permute.xlu0 %5883
    %5885 = vrot.lane.b32.xlu0 %v5362, 114
    %v5886 = vpop.permute.xlu0 %5885
    %v5891 = vadd.f32 %v5871, %v5880
    %v5892 = vadd.f32 %v5872, %v5882
    %v5893 = vadd.f32 %v5873, %v5884
    %v5894 = vadd.f32 %v5874, %v5886
    %5895 = vrot.lane.b32.xlu0 %v5359, 100
    %v5896 = vpop.permute.xlu0 %5895
    %5897 = vrot.lane.b32.xlu0 %v5360, 100
    %v5898 = vpop.permute.xlu0 %5897
    %5899 = vrot.lane.b32.xlu0 %v5361, 100
    %v5900 = vpop.permute.xlu0 %5899
    %5901 = vrot.lane.b32.xlu0 %v5362, 100
    %v5902 = vpop.permute.xlu0 %5901
    %v5907 = vadd.f32 %v5891, %v5896
    %v5908 = vadd.f32 %v5892, %v5898
    %v5909 = vadd.f32 %v5893, %v5900
    %v5910 = vadd.f32 %v5894, %v5902
    %5911 = vrot.lane.b32.xlu0 %v5359, 86
    %v5912 = vpop.permute.xlu0 %5911
    %5913 = vrot.lane.b32.xlu0 %v5360, 86
    %v5914 = vpop.permute.xlu0 %5913
    %5915 = vrot.lane.b32.xlu0 %v5361, 86
    %v5916 = vpop.permute.xlu0 %5915
    %5917 = vrot.lane.b32.xlu0 %v5362, 86
    %v5918 = vpop.permute.xlu0 %5917
    %v5923 = vadd.f32 %v5907, %v5912
    %v5924 = vadd.f32 %v5908, %v5914
    %v5925 = vadd.f32 %v5909, %v5916
    %v5926 = vadd.f32 %v5910, %v5918
    %v5927 = vsel %vm5421, %v5923, 0.0
    %v5928 = vsel %vm5423, %v5924, 0.0
    %v5929 = vadd.f32 %v5927, %v5928
    %v5930 = vsel %vm5421, %v5925, 0.0
    %v5931 = vadd.f32 %v5929, %v5930
    %v5932 = vsel %vm5423, %v5926, 0.0
    %v5933 = vadd.f32 %v5931, %v5932
    %5934 = vadd.xlane.f32.xlu0 %v5933
    %v5935 = vpop.xlane.xlu0 %5934
    %v5936 = vrot.slane %v5935, 4
    %v5937 = vadd.f32 %v5935, %v5936
    %v5938 = vrot.slane %v5937, 2
    %v5939 = vadd.f32 %v5937, %v5938
    %v5940 = vrot.slane %v5939, 1
    %v5941 = vadd.f32 %v5939, %v5940
    %s5942 = vtos %v5941
    %v5943 = vmul.f32 %v5923, %v5923
    %v5944 = vmul.f32 %v5924, %v5924
    %v5945 = vmul.f32 %v5925, %v5925
    %v5946 = vmul.f32 %v5926, %v5926
    %v5947 = vsel %vm5421, %v5943, 0.0
    %v5948 = vsel %vm5423, %v5944, 0.0
    %v5949 = vadd.f32 %v5947, %v5948
    %v5950 = vsel %vm5421, %v5945, 0.0
    %v5951 = vadd.f32 %v5949, %v5950
    %v5952 = vsel %vm5423, %v5946, 0.0
    %v5953 = vadd.f32 %v5951, %v5952
    %5954 = vadd.xlane.f32.xlu0 %v5953
    %v5955 = vpop.xlane.xlu0 %5954
    %v5956 = vrot.slane %v5955, 4
    %v5957 = vadd.f32 %v5955, %v5956
    %v5958 = vrot.slane %v5957, 2
    %v5959 = vadd.f32 %v5957, %v5958
    %v5960 = vrot.slane %v5959, 1
    %v5961 = vadd.f32 %v5959, %v5960
    %s5962 = vtos %v5961
    %s5963 = smul.f32 %s5942, 0.0034722222
    %s5964 = smul.f32 %s5962, 0.0034722222
    %s5965 = smul.f32 %s5963, %s5963
    %s5966 = ssub.f32 %s5964, %s5965
    %s5967 = sld [smem:[#allocation14 + $0x3]]
    %s5968 = sadd.f32 %s5966, 1e-05
    %v5969 = vstv %s5968
    %v5970 = vrsqrt.pop %v5969
    %v5971 = vmul.f32 %v5970, %v5969
    %v5972 = vmul.f32 %v5971, %v5970
    %v5973 = vmul.f32 0.5, %v5972
    %v5974 = vsub.f32 1.5, %v5973
    %v5975 = vmul.f32 %v5970, %v5974
    %vm5976 = vweird.f32 %v5969
    %vm5977 = vweird.f32 %v5970
    %vm5978 = vmor %vm5976, %vm5977
    %v5979 = vsel %vm5978, %v5970, %v5975
    %s5980 = vtos %v5979
    %s5981 = smul.f32 %s5967, %s5980
    %s5982 = sld [smem:[#allocation16 + $0x3]]
    %s5983 = smul.f32 %s5963, %s5981
    %s5984 = ssub.f32 %s5982, %s5983
    %v5985 = vstv %s5981
    %v5986 = vmul.f32 %v5923, %v5985
    %v5987 = vmul.f32 %v5924, %v5985
    %v5988 = vmul.f32 %v5925, %v5985
    %v5989 = vmul.f32 %v5926, %v5985
    %v5990 = vstv %s5984
    %v5991 = vadd.f32 %v5986, %v5990
    %v5992 = vadd.f32 %v5987, %v5990
    %v5993 = vadd.f32 %v5988, %v5990
    %v5994 = vadd.f32 %v5989, %v5990
    %v5995 = vmax.f32 %v5991, 0.0
    %v5996 = vmax.f32 %v5992, 0.0
    %v5997 = vmax.f32 %v5993, 0.0
    %v5998 = vmax.f32 %v5994, 0.0
    %6003 = vrot.lane.b32.xlu0 %v5995, 127
    %v6004 = vpop.permute.xlu0 %6003
    %6005 = vrot.lane.b32.xlu0 %v5996, 127
    %v6006 = vpop.permute.xlu0 %6005
    %6007 = vrot.lane.b32.xlu0 %v5997, 127
    %v6008 = vpop.permute.xlu0 %6007
    %6009 = vrot.lane.b32.xlu0 %v5998, 127
    %v6010 = vpop.permute.xlu0 %6009
    %v6015 = vmax.f32 %v5995, %v6004
    %v6016 = vmax.f32 %v5996, %v6006
    %v6017 = vmax.f32 %v5997, %v6008
    %v6018 = vmax.f32 %v5998, %v6010
    %v6023 = vrot.slane %v6015, 1
    %v6024 = vrot.slane %v6016, 1
    %v6025 = vsel %vm279, %v6023, %v6024
    %v6026 = vrot.slane %v6017, 1
    %v6027 = vrot.slane %v6018, 1
    %v6028 = vsel %vm279, %v6026, %v6027
    %v6033 = vmax.f32 %v6015, %v6025
    %v6034 = vmax.f32 %v6016, %v6024
    %v6035 = vmax.f32 %v6017, %v6028
    %v6036 = vmax.f32 %v6018, %v6027
    %6041 = vrot.lane.b32.xlu0 %v5697, 11
    %v6042 = vpop.permute.xlu0 %6041
    %6043 = vrot.lane.b32.xlu0 %v5698, 11
    %v6044 = vpop.permute.xlu0 %6043
    %6045 = vrot.lane.b32.xlu0 %v5699, 11
    %v6046 = vpop.permute.xlu0 %6045
    %6047 = vrot.lane.b32.xlu0 %v5700, 11
    %v6048 = vpop.permute.xlu0 %6047
    %6057 = vrot.lane.b32.xlu0 %v5865, 22
    %v6058 = vpop.permute.xlu0 %6057
    %6059 = vrot.lane.b32.xlu0 %v5866, 22
    %v6060 = vpop.permute.xlu0 %6059
    %6061 = vrot.lane.b32.xlu0 %v5867, 22
    %v6062 = vpop.permute.xlu0 %6061
    %6063 = vrot.lane.b32.xlu0 %v5868, 22
    %v6064 = vpop.permute.xlu0 %6063
    %6073 = vrot.lane.b32.xlu0 %v6033, 33
    %v6074 = vpop.permute.xlu0 %6073
    %6075 = vrot.lane.b32.xlu0 %v6034, 33
    %v6076 = vpop.permute.xlu0 %6075
    %6077 = vrot.lane.b32.xlu0 %v6035, 33
    %v6078 = vpop.permute.xlu0 %6077
    %6079 = vrot.lane.b32.xlu0 %v6036, 33
    %v6080 = vpop.permute.xlu0 %6079
    %vm6085 = vcmask 89088
    %v6086 = vsel %vm6085, %v5529, %v6042
    %v6087 = vsel %vm6085, %v5530, %v6044
    %v6088 = vsel %vm6085, %v5531, %v6046
    %v6089 = vsel %vm6085, %v5532, %v6048
    %vm6090 = vcmask 179200
    %v6091 = vsel %vm6090, %v6086, %v6058
    %v6092 = vsel %vm6090, %v6087, %v6060
    %v6093 = vsel %vm6090, %v6088, %v6062
    %v6094 = vsel %vm6090, %v6089, %v6064
    %vm6095 = vcmask 269312
    %v6096 = vsel %vm6095, %v6091, %v6074
    %v6097 = vsel %vm6095, %v6092, %v6076
    %v6098 = vsel %vm6095, %v6093, %v6078
    %v6099 = vsel %vm6095, %v6094, %v6080
    %v6100 = vld [vmem:[%s13] sm:$0x1]
    %v6101 = vperm.slane %v6100, 0
    %v6102 = vmul.f32 %v6096, %v6101
    %v6103 = vmul.f32 %v6097, %v6101
    %v6104 = vmul.f32 %v6098, %v6101
    %v6105 = vmul.f32 %v6099, %v6101
    %v6106 = vadd.f32 %v6102, 0.0
    %v6107 = vadd.f32 %v6103, 0.0
    %v6108 = vadd.f32 %v6104, 0.0
    %v6109 = vadd.f32 %v6105, 0.0
    %v6110 = vld [vmem:[%s13 + $0x9] sm:$0x1]
    %v6111 = vperm.slane %v6110, 0
    %v6112 = vmul.f32 %v6096, %v6111
    %v6113 = vmul.f32 %v6097, %v6111
    %v6114 = vmul.f32 %v6098, %v6111
    %v6115 = vmul.f32 %v6099, %v6111
    %v6116 = vadd.f32 %v6112, 0.0
    %v6117 = vadd.f32 %v6113, 0.0
    %v6118 = vadd.f32 %v6114, 0.0
    %v6119 = vadd.f32 %v6115, 0.0
    %v6120 = vld [vmem:[%s13 + $0x12] sm:$0x1]
    %v6121 = vperm.slane %v6120, 0
    %v6122 = vmul.f32 %v6096, %v6121
    %v6123 = vmul.f32 %v6097, %v6121
    %v6124 = vmul.f32 %v6098, %v6121
    %v6125 = vmul.f32 %v6099, %v6121
    %v6126 = vadd.f32 %v6122, 0.0
    %v6127 = vadd.f32 %v6123, 0.0
    %v6128 = vadd.f32 %v6124, 0.0
    %v6129 = vadd.f32 %v6125, 0.0
    %v6130 = vld [vmem:[%s13 + $0x1b] sm:$0x1]
    %v6131 = vperm.slane %v6130, 0
    %v6132 = vmul.f32 %v6096, %v6131
    %v6133 = vmul.f32 %v6097, %v6131
    %v6134 = vmul.f32 %v6098, %v6131
    %v6135 = vmul.f32 %v6099, %v6131
    %v6136 = vadd.f32 %v6132, 0.0
    %v6137 = vadd.f32 %v6133, 0.0
    %v6138 = vadd.f32 %v6134, 0.0
    %v6139 = vadd.f32 %v6135, 0.0
    %v6140 = vld [vmem:[%s13 + $0x3] sm:$0x1]
    %v6141 = vperm.slane %v6140, 0
    %v6142 = vmul.f32 %v6096, %v6141
    %v6143 = vmul.f32 %v6097, %v6141
    %v6144 = vmul.f32 %v6098, %v6141
    %v6145 = vmul.f32 %v6099, %v6141
    %v6150 = vrot.slane %v6142, 1
    %v6151 = vrot.slane %v6143, 1
    %v6152 = vsel %vm279, %v6150, %v6151
    %v6153 = vrot.slane %v6144, 1
    %v6154 = vrot.slane %v6145, 1
    %v6155 = vsel %vm279, %v6153, %v6154
    %v6160 = vadd.f32 %v6106, %v6152
    %v6161 = vadd.f32 %v6107, %v6151
    %v6162 = vadd.f32 %v6108, %v6155
    %v6163 = vadd.f32 %v6109, %v6154
    %v6164 = vld [vmem:[%s13 + $0xc] sm:$0x1]
    %v6165 = vperm.slane %v6164, 0
    %v6166 = vmul.f32 %v6096, %v6165
    %v6167 = vmul.f32 %v6097, %v6165
    %v6168 = vmul.f32 %v6098, %v6165
    %v6169 = vmul.f32 %v6099, %v6165
    %v6174 = vrot.slane %v6166, 1
    %v6175 = vrot.slane %v6167, 1
    %v6176 = vsel %vm279, %v6174, %v6175
    %v6177 = vrot.slane %v6168, 1
    %v6178 = vrot.slane %v6169, 1
    %v6179 = vsel %vm279, %v6177, %v6178
    %v6184 = vadd.f32 %v6116, %v6176
    %v6185 = vadd.f32 %v6117, %v6175
    %v6186 = vadd.f32 %v6118, %v6179
    %v6187 = vadd.f32 %v6119, %v6178
    %v6188 = vld [vmem:[%s13 + $0x15] sm:$0x1]
    %v6189 = vperm.slane %v6188, 0
    %v6190 = vmul.f32 %v6096, %v6189
    %v6191 = vmul.f32 %v6097, %v6189
    %v6192 = vmul.f32 %v6098, %v6189
    %v6193 = vmul.f32 %v6099, %v6189
    %v6198 = vrot.slane %v6190, 1
    %v6199 = vrot.slane %v6191, 1
    %v6200 = vsel %vm279, %v6198, %v6199
    %v6201 = vrot.slane %v6192, 1
    %v6202 = vrot.slane %v6193, 1
    %v6203 = vsel %vm279, %v6201, %v6202
    %v6208 = vadd.f32 %v6126, %v6200
    %v6209 = vadd.f32 %v6127, %v6199
    %v6210 = vadd.f32 %v6128, %v6203
    %v6211 = vadd.f32 %v6129, %v6202
    %v6212 = vld [vmem:[%s13 + $0x1e] sm:$0x1]
    %v6213 = vperm.slane %v6212, 0
    %v6214 = vmul.f32 %v6096, %v6213
    %v6215 = vmul.f32 %v6097, %v6213
    %v6216 = vmul.f32 %v6098, %v6213
    %v6217 = vmul.f32 %v6099, %v6213
    %v6222 = vrot.slane %v6214, 1
    %v6223 = vrot.slane %v6215, 1
    %v6224 = vsel %vm279, %v6222, %v6223
    %v6225 = vrot.slane %v6216, 1
    %v6226 = vrot.slane %v6217, 1
    %v6227 = vsel %vm279, %v6225, %v6226
    %v6232 = vadd.f32 %v6136, %v6224
    %v6233 = vadd.f32 %v6137, %v6223
    %v6234 = vadd.f32 %v6138, %v6227
    %v6235 = vadd.f32 %v6139, %v6226
    %v6236 = vld [vmem:[%s13 + $0x6] sm:$0x1]
    %v6237 = vperm.slane %v6236, 0
    %v6238 = vmul.f32 %v6096, %v6237
    %v6239 = vmul.f32 %v6097, %v6237
    %v6240 = vmul.f32 %v6098, %v6237
    %v6241 = vmul.f32 %v6099, %v6237
    %v6246 = vrot.slane %v6238, 2
    %v6247 = vrot.slane %v6239, 2
    %v6248 = vsel %vm424, %v6246, %v6247
    %v6249 = vrot.slane %v6240, 2
    %v6250 = vrot.slane %v6241, 2
    %v6251 = vsel %vm424, %v6249, %v6250
    %v6256 = vadd.f32 %v6160, %v6248
    %v6257 = vadd.f32 %v6161, %v6247
    %v6258 = vadd.f32 %v6162, %v6251
    %v6259 = vadd.f32 %v6163, %v6250
    %v6260 = vld [vmem:[%s13 + $0xf] sm:$0x1]
    %v6261 = vperm.slane %v6260, 0
    %v6262 = vmul.f32 %v6096, %v6261
    %v6263 = vmul.f32 %v6097, %v6261
    %v6264 = vmul.f32 %v6098, %v6261
    %v6265 = vmul.f32 %v6099, %v6261
    %v6270 = vrot.slane %v6262, 2
    %v6271 = vrot.slane %v6263, 2
    %v6272 = vsel %vm424, %v6270, %v6271
    %v6273 = vrot.slane %v6264, 2
    %v6274 = vrot.slane %v6265, 2
    %v6275 = vsel %vm424, %v6273, %v6274
    %v6280 = vadd.f32 %v6184, %v6272
    %v6281 = vadd.f32 %v6185, %v6271
    %v6282 = vadd.f32 %v6186, %v6275
    %v6283 = vadd.f32 %v6187, %v6274
    %v6284 = vld [vmem:[%s13 + $0x18] sm:$0x1]
    %v6285 = vperm.slane %v6284, 0
    %v6286 = vmul.f32 %v6096, %v6285
    %v6287 = vmul.f32 %v6097, %v6285
    %v6288 = vmul.f32 %v6098, %v6285
    %v6289 = vmul.f32 %v6099, %v6285
    %v6294 = vrot.slane %v6286, 2
    %v6295 = vrot.slane %v6287, 2
    %v6296 = vsel %vm424, %v6294, %v6295
    %v6297 = vrot.slane %v6288, 2
    %v6298 = vrot.slane %v6289, 2
    %v6299 = vsel %vm424, %v6297, %v6298
    %v6304 = vadd.f32 %v6208, %v6296
    %v6305 = vadd.f32 %v6209, %v6295
    %v6306 = vadd.f32 %v6210, %v6299
    %v6307 = vadd.f32 %v6211, %v6298
    %v6308 = vld [vmem:[%s13 + $0x21] sm:$0x1]
    %v6309 = vperm.slane %v6308, 0
    %v6310 = vmul.f32 %v6096, %v6309
    %v6311 = vmul.f32 %v6097, %v6309
    %v6312 = vmul.f32 %v6098, %v6309
    %v6313 = vmul.f32 %v6099, %v6309
    %v6318 = vrot.slane %v6310, 2
    %v6319 = vrot.slane %v6311, 2
    %v6320 = vsel %vm424, %v6318, %v6319
    %v6321 = vrot.slane %v6312, 2
    %v6322 = vrot.slane %v6313, 2
    %v6323 = vsel %vm424, %v6321, %v6322
    %v6328 = vadd.f32 %v6232, %v6320
    %v6329 = vadd.f32 %v6233, %v6319
    %v6330 = vadd.f32 %v6234, %v6323
    %v6331 = vadd.f32 %v6235, %v6322
    %v6332 = vld [vmem:[%s13 + $0x1] sm:$0x1]
    %v6333 = vperm.slane %v6332, 0
    %6335 = vrot.lane.b32.xlu0 %v6333, 1
    %v6336 = vpop.permute.xlu0 %6335
    %v6338 = vmul.f32 %v6096, %v6336
    %v6339 = vmul.f32 %v6097, %v6336
    %v6340 = vmul.f32 %v6098, %v6336
    %v6341 = vmul.f32 %v6099, %v6336
    %6346 = vrot.lane.b32.xlu0 %v6338, 127
    %v6347 = vpop.permute.xlu0 %6346
    %6348 = vrot.lane.b32.xlu0 %v6339, 127
    %v6349 = vpop.permute.xlu0 %6348
    %6350 = vrot.lane.b32.xlu0 %v6340, 127
    %v6351 = vpop.permute.xlu0 %6350
    %6352 = vrot.lane.b32.xlu0 %v6341, 127
    %v6353 = vpop.permute.xlu0 %6352
    %v6358 = vadd.f32 %v6256, %v6347
    %v6359 = vadd.f32 %v6257, %v6349
    %v6360 = vadd.f32 %v6258, %v6351
    %v6361 = vadd.f32 %v6259, %v6353
    %v6362 = vld [vmem:[%s13 + $0xa] sm:$0x1]
    %v6363 = vperm.slane %v6362, 0
    %6365 = vrot.lane.b32.xlu0 %v6363, 1
    %v6366 = vpop.permute.xlu0 %6365
    %v6368 = vmul.f32 %v6096, %v6366
    %v6369 = vmul.f32 %v6097, %v6366
    %v6370 = vmul.f32 %v6098, %v6366
    %v6371 = vmul.f32 %v6099, %v6366
    %6376 = vrot.lane.b32.xlu0 %v6368, 127
    %v6377 = vpop.permute.xlu0 %6376
    %6378 = vrot.lane.b32.xlu0 %v6369, 127
    %v6379 = vpop.permute.xlu0 %6378
    %6380 = vrot.lane.b32.xlu0 %v6370, 127
    %v6381 = vpop.permute.xlu0 %6380
    %6382 = vrot.lane.b32.xlu0 %v6371, 127
    %v6383 = vpop.permute.xlu0 %6382
    %v6388 = vadd.f32 %v6280, %v6377
    %v6389 = vadd.f32 %v6281, %v6379
    %v6390 = vadd.f32 %v6282, %v6381
    %v6391 = vadd.f32 %v6283, %v6383
    %v6392 = vld [vmem:[%s13 + $0x13] sm:$0x1]
    %v6393 = vperm.slane %v6392, 0
    %6395 = vrot.lane.b32.xlu0 %v6393, 1
    %v6396 = vpop.permute.xlu0 %6395
    %v6398 = vmul.f32 %v6096, %v6396
    %v6399 = vmul.f32 %v6097, %v6396
    %v6400 = vmul.f32 %v6098, %v6396
    %v6401 = vmul.f32 %v6099, %v6396
    %6406 = vrot.lane.b32.xlu0 %v6398, 127
    %v6407 = vpop.permute.xlu0 %6406
    %6408 = vrot.lane.b32.xlu0 %v6399, 127
    %v6409 = vpop.permute.xlu0 %6408
    %6410 = vrot.lane.b32.xlu0 %v6400, 127
    %v6411 = vpop.permute.xlu0 %6410
    %6412 = vrot.lane.b32.xlu0 %v6401, 127
    %v6413 = vpop.permute.xlu0 %6412
    %v6418 = vadd.f32 %v6304, %v6407
    %v6419 = vadd.f32 %v6305, %v6409
    %v6420 = vadd.f32 %v6306, %v6411
    %v6421 = vadd.f32 %v6307, %v6413
    %v6422 = vld [vmem:[%s13 + $0x1c] sm:$0x1]
    %v6423 = vperm.slane %v6422, 0
    %6425 = vrot.lane.b32.xlu0 %v6423, 1
    %v6426 = vpop.permute.xlu0 %6425
    %v6428 = vmul.f32 %v6096, %v6426
    %v6429 = vmul.f32 %v6097, %v6426
    %v6430 = vmul.f32 %v6098, %v6426
    %v6431 = vmul.f32 %v6099, %v6426
    %6436 = vrot.lane.b32.xlu0 %v6428, 127
    %v6437 = vpop.permute.xlu0 %6436
    %6438 = vrot.lane.b32.xlu0 %v6429, 127
    %v6439 = vpop.permute.xlu0 %6438
    %6440 = vrot.lane.b32.xlu0 %v6430, 127
    %v6441 = vpop.permute.xlu0 %6440
    %6442 = vrot.lane.b32.xlu0 %v6431, 127
    %v6443 = vpop.permute.xlu0 %6442
    %v6448 = vadd.f32 %v6328, %v6437
    %v6449 = vadd.f32 %v6329, %v6439
    %v6450 = vadd.f32 %v6330, %v6441
    %v6451 = vadd.f32 %v6331, %v6443
    %v6452 = vld [vmem:[%s13 + $0x4] sm:$0x1]
    %v6453 = vperm.slane %v6452, 0
    %6455 = vrot.lane.b32.xlu0 %v6453, 1
    %v6456 = vpop.permute.xlu0 %6455
    %v6458 = vmul.f32 %v6096, %v6456
    %v6459 = vmul.f32 %v6097, %v6456
    %v6460 = vmul.f32 %v6098, %v6456
    %v6461 = vmul.f32 %v6099, %v6456
    %v6466 = vrot.slane %v6458, 1
    %v6467 = vrot.slane %v6459, 1
    %v6468 = vsel %vm279, %v6466, %v6467
    %v6469 = vrot.slane %v6460, 1
    %v6470 = vrot.slane %v6461, 1
    %v6471 = vsel %vm279, %v6469, %v6470
    %6472 = vrot.lane.b32.xlu0 %v6468, 127
    %v6473 = vpop.permute.xlu0 %6472
    %6474 = vrot.lane.b32.xlu0 %v6467, 127
    %v6475 = vpop.permute.xlu0 %6474
    %6476 = vrot.lane.b32.xlu0 %v6471, 127
    %v6477 = vpop.permute.xlu0 %6476
    %6478 = vrot.lane.b32.xlu0 %v6470, 127
    %v6479 = vpop.permute.xlu0 %6478
    %v6484 = vadd.f32 %v6358, %v6473
    %v6485 = vadd.f32 %v6359, %v6475
    %v6486 = vadd.f32 %v6360, %v6477
    %v6487 = vadd.f32 %v6361, %v6479
    %v6488 = vld [vmem:[%s13 + $0xd] sm:$0x1]
    %v6489 = vperm.slane %v6488, 0
    %6491 = vrot.lane.b32.xlu0 %v6489, 1
    %v6492 = vpop.permute.xlu0 %6491
    %v6494 = vmul.f32 %v6096, %v6492
    %v6495 = vmul.f32 %v6097, %v6492
    %v6496 = vmul.f32 %v6098, %v6492
    %v6497 = vmul.f32 %v6099, %v6492
    %v6502 = vrot.slane %v6494, 1
    %v6503 = vrot.slane %v6495, 1
    %v6504 = vsel %vm279, %v6502, %v6503
    %v6505 = vrot.slane %v6496, 1
    %v6506 = vrot.slane %v6497, 1
    %v6507 = vsel %vm279, %v6505, %v6506
    %6508 = vrot.lane.b32.xlu0 %v6504, 127
    %v6509 = vpop.permute.xlu0 %6508
    %6510 = vrot.lane.b32.xlu0 %v6503, 127
    %v6511 = vpop.permute.xlu0 %6510
    %6512 = vrot.lane.b32.xlu0 %v6507, 127
    %v6513 = vpop.permute.xlu0 %6512
    %6514 = vrot.lane.b32.xlu0 %v6506, 127
    %v6515 = vpop.permute.xlu0 %6514
    %v6520 = vadd.f32 %v6388, %v6509
    %v6521 = vadd.f32 %v6389, %v6511
    %v6522 = vadd.f32 %v6390, %v6513
    %v6523 = vadd.f32 %v6391, %v6515
    %v6524 = vld [vmem:[%s13 + $0x16] sm:$0x1]
    %v6525 = vperm.slane %v6524, 0
    %6527 = vrot.lane.b32.xlu0 %v6525, 1
    %v6528 = vpop.permute.xlu0 %6527
    %v6530 = vmul.f32 %v6096, %v6528
    %v6531 = vmul.f32 %v6097, %v6528
    %v6532 = vmul.f32 %v6098, %v6528
    %v6533 = vmul.f32 %v6099, %v6528
    %v6538 = vrot.slane %v6530, 1
    %v6539 = vrot.slane %v6531, 1
    %v6540 = vsel %vm279, %v6538, %v6539
    %v6541 = vrot.slane %v6532, 1
    %v6542 = vrot.slane %v6533, 1
    %v6543 = vsel %vm279, %v6541, %v6542
    %6544 = vrot.lane.b32.xlu0 %v6540, 127
    %v6545 = vpop.permute.xlu0 %6544
    %6546 = vrot.lane.b32.xlu0 %v6539, 127
    %v6547 = vpop.permute.xlu0 %6546
    %6548 = vrot.lane.b32.xlu0 %v6543, 127
    %v6549 = vpop.permute.xlu0 %6548
    %6550 = vrot.lane.b32.xlu0 %v6542, 127
    %v6551 = vpop.permute.xlu0 %6550
    %v6556 = vadd.f32 %v6418, %v6545
    %v6557 = vadd.f32 %v6419, %v6547
    %v6558 = vadd.f32 %v6420, %v6549
    %v6559 = vadd.f32 %v6421, %v6551
    %v6560 = vld [vmem:[%s13 + $0x1f] sm:$0x1]
    %v6561 = vperm.slane %v6560, 0
    %6563 = vrot.lane.b32.xlu0 %v6561, 1
    %v6564 = vpop.permute.xlu0 %6563
    %v6566 = vmul.f32 %v6096, %v6564
    %v6567 = vmul.f32 %v6097, %v6564
    %v6568 = vmul.f32 %v6098, %v6564
    %v6569 = vmul.f32 %v6099, %v6564
    %v6574 = vrot.slane %v6566, 1
    %v6575 = vrot.slane %v6567, 1
    %v6576 = vsel %vm279, %v6574, %v6575
    %v6577 = vrot.slane %v6568, 1
    %v6578 = vrot.slane %v6569, 1
    %v6579 = vsel %vm279, %v6577, %v6578
    %6580 = vrot.lane.b32.xlu0 %v6576, 127
    %v6581 = vpop.permute.xlu0 %6580
    %6582 = vrot.lane.b32.xlu0 %v6575, 127
    %v6583 = vpop.permute.xlu0 %6582
    %6584 = vrot.lane.b32.xlu0 %v6579, 127
    %v6585 = vpop.permute.xlu0 %6584
    %6586 = vrot.lane.b32.xlu0 %v6578, 127
    %v6587 = vpop.permute.xlu0 %6586
    %v6592 = vadd.f32 %v6448, %v6581
    %v6593 = vadd.f32 %v6449, %v6583
    %v6594 = vadd.f32 %v6450, %v6585
    %v6595 = vadd.f32 %v6451, %v6587
    %v6596 = vld [vmem:[%s13 + $0x7] sm:$0x1]
    %v6597 = vperm.slane %v6596, 0
    %6599 = vrot.lane.b32.xlu0 %v6597, 1
    %v6600 = vpop.permute.xlu0 %6599
    %v6602 = vmul.f32 %v6096, %v6600
    %v6603 = vmul.f32 %v6097, %v6600
    %v6604 = vmul.f32 %v6098, %v6600
    %v6605 = vmul.f32 %v6099, %v6600
    %v6610 = vrot.slane %v6602, 2
    %v6611 = vrot.slane %v6603, 2
    %v6612 = vsel %vm424, %v6610, %v6611
    %v6613 = vrot.slane %v6604, 2
    %v6614 = vrot.slane %v6605, 2
    %v6615 = vsel %vm424, %v6613, %v6614
    %6616 = vrot.lane.b32.xlu0 %v6612, 127
    %v6617 = vpop.permute.xlu0 %6616
    %6618 = vrot.lane.b32.xlu0 %v6611, 127
    %v6619 = vpop.permute.xlu0 %6618
    %6620 = vrot.lane.b32.xlu0 %v6615, 127
    %v6621 = vpop.permute.xlu0 %6620
    %6622 = vrot.lane.b32.xlu0 %v6614, 127
    %v6623 = vpop.permute.xlu0 %6622
    %v6628 = vadd.f32 %v6484, %v6617
    %v6629 = vadd.f32 %v6485, %v6619
    %v6630 = vadd.f32 %v6486, %v6621
    %v6631 = vadd.f32 %v6487, %v6623
    %v6632 = vld [vmem:[%s13 + $0x10] sm:$0x1]
    %v6633 = vperm.slane %v6632, 0
    %6635 = vrot.lane.b32.xlu0 %v6633, 1
    %v6636 = vpop.permute.xlu0 %6635
    %v6638 = vmul.f32 %v6096, %v6636
    %v6639 = vmul.f32 %v6097, %v6636
    %v6640 = vmul.f32 %v6098, %v6636
    %v6641 = vmul.f32 %v6099, %v6636
    %v6646 = vrot.slane %v6638, 2
    %v6647 = vrot.slane %v6639, 2
    %v6648 = vsel %vm424, %v6646, %v6647
    %v6649 = vrot.slane %v6640, 2
    %v6650 = vrot.slane %v6641, 2
    %v6651 = vsel %vm424, %v6649, %v6650
    %6652 = vrot.lane.b32.xlu0 %v6648, 127
    %v6653 = vpop.permute.xlu0 %6652
    %6654 = vrot.lane.b32.xlu0 %v6647, 127
    %v6655 = vpop.permute.xlu0 %6654
    %6656 = vrot.lane.b32.xlu0 %v6651, 127
    %v6657 = vpop.permute.xlu0 %6656
    %6658 = vrot.lane.b32.xlu0 %v6650, 127
    %v6659 = vpop.permute.xlu0 %6658
    %v6664 = vadd.f32 %v6520, %v6653
    %v6665 = vadd.f32 %v6521, %v6655
    %v6666 = vadd.f32 %v6522, %v6657
    %v6667 = vadd.f32 %v6523, %v6659
    %v6668 = vld [vmem:[%s13 + $0x19] sm:$0x1]
    %v6669 = vperm.slane %v6668, 0
    %6671 = vrot.lane.b32.xlu0 %v6669, 1
    %v6672 = vpop.permute.xlu0 %6671
    %v6674 = vmul.f32 %v6096, %v6672
    %v6675 = vmul.f32 %v6097, %v6672
    %v6676 = vmul.f32 %v6098, %v6672
    %v6677 = vmul.f32 %v6099, %v6672
    %v6682 = vrot.slane %v6674, 2
    %v6683 = vrot.slane %v6675, 2
    %v6684 = vsel %vm424, %v6682, %v6683
    %v6685 = vrot.slane %v6676, 2
    %v6686 = vrot.slane %v6677, 2
    %v6687 = vsel %vm424, %v6685, %v6686
    %6688 = vrot.lane.b32.xlu0 %v6684, 127
    %v6689 = vpop.permute.xlu0 %6688
    %6690 = vrot.lane.b32.xlu0 %v6683, 127
    %v6691 = vpop.permute.xlu0 %6690
    %6692 = vrot.lane.b32.xlu0 %v6687, 127
    %v6693 = vpop.permute.xlu0 %6692
    %6694 = vrot.lane.b32.xlu0 %v6686, 127
    %v6695 = vpop.permute.xlu0 %6694
    %v6700 = vadd.f32 %v6556, %v6689
    %v6701 = vadd.f32 %v6557, %v6691
    %v6702 = vadd.f32 %v6558, %v6693
    %v6703 = vadd.f32 %v6559, %v6695
    %v6704 = vld [vmem:[%s13 + $0x22] sm:$0x1]
    %v6705 = vperm.slane %v6704, 0
    %6707 = vrot.lane.b32.xlu0 %v6705, 1
    %v6708 = vpop.permute.xlu0 %6707
    %v6710 = vmul.f32 %v6096, %v6708
    %v6711 = vmul.f32 %v6097, %v6708
    %v6712 = vmul.f32 %v6098, %v6708
    %v6713 = vmul.f32 %v6099, %v6708
    %v6718 = vrot.slane %v6710, 2
    %v6719 = vrot.slane %v6711, 2
    %v6720 = vsel %vm424, %v6718, %v6719
    %v6721 = vrot.slane %v6712, 2
    %v6722 = vrot.slane %v6713, 2
    %v6723 = vsel %vm424, %v6721, %v6722
    %6724 = vrot.lane.b32.xlu0 %v6720, 127
    %v6725 = vpop.permute.xlu0 %6724
    %6726 = vrot.lane.b32.xlu0 %v6719, 127
    %v6727 = vpop.permute.xlu0 %6726
    %6728 = vrot.lane.b32.xlu0 %v6723, 127
    %v6729 = vpop.permute.xlu0 %6728
    %6730 = vrot.lane.b32.xlu0 %v6722, 127
    %v6731 = vpop.permute.xlu0 %6730
    %v6736 = vadd.f32 %v6592, %v6725
    %v6737 = vadd.f32 %v6593, %v6727
    %v6738 = vadd.f32 %v6594, %v6729
    %v6739 = vadd.f32 %v6595, %v6731
    %v6740 = vld [vmem:[%s13 + $0x2] sm:$0x1]
    %v6741 = vperm.slane %v6740, 0
    %6743 = vrot.lane.b32.xlu0 %v6741, 2
    %v6744 = vpop.permute.xlu0 %6743
    %v6746 = vmul.f32 %v6096, %v6744
    %v6747 = vmul.f32 %v6097, %v6744
    %v6748 = vmul.f32 %v6098, %v6744
    %v6749 = vmul.f32 %v6099, %v6744
    %6754 = vrot.lane.b32.xlu0 %v6746, 126
    %v6755 = vpop.permute.xlu0 %6754
    %6756 = vrot.lane.b32.xlu0 %v6747, 126
    %v6757 = vpop.permute.xlu0 %6756
    %6758 = vrot.lane.b32.xlu0 %v6748, 126
    %v6759 = vpop.permute.xlu0 %6758
    %6760 = vrot.lane.b32.xlu0 %v6749, 126
    %v6761 = vpop.permute.xlu0 %6760
    %v6766 = vadd.f32 %v6628, %v6755
    %v6767 = vadd.f32 %v6629, %v6757
    %v6768 = vadd.f32 %v6630, %v6759
    %v6769 = vadd.f32 %v6631, %v6761
    %v6770 = vld [vmem:[%s13 + $0xb] sm:$0x1]
    %v6771 = vperm.slane %v6770, 0
    %6773 = vrot.lane.b32.xlu0 %v6771, 2
    %v6774 = vpop.permute.xlu0 %6773
    %v6776 = vmul.f32 %v6096, %v6774
    %v6777 = vmul.f32 %v6097, %v6774
    %v6778 = vmul.f32 %v6098, %v6774
    %v6779 = vmul.f32 %v6099, %v6774
    %6784 = vrot.lane.b32.xlu0 %v6776, 126
    %v6785 = vpop.permute.xlu0 %6784
    %6786 = vrot.lane.b32.xlu0 %v6777, 126
    %v6787 = vpop.permute.xlu0 %6786
    %6788 = vrot.lane.b32.xlu0 %v6778, 126
    %v6789 = vpop.permute.xlu0 %6788
    %6790 = vrot.lane.b32.xlu0 %v6779, 126
    %v6791 = vpop.permute.xlu0 %6790
    %v6796 = vadd.f32 %v6664, %v6785
    %v6797 = vadd.f32 %v6665, %v6787
    %v6798 = vadd.f32 %v6666, %v6789
    %v6799 = vadd.f32 %v6667, %v6791
    %v6800 = vld [vmem:[%s13 + $0x14] sm:$0x1]
    %v6801 = vperm.slane %v6800, 0
    %6803 = vrot.lane.b32.xlu0 %v6801, 2
    %v6804 = vpop.permute.xlu0 %6803
    %v6806 = vmul.f32 %v6096, %v6804
    %v6807 = vmul.f32 %v6097, %v6804
    %v6808 = vmul.f32 %v6098, %v6804
    %v6809 = vmul.f32 %v6099, %v6804
    %6814 = vrot.lane.b32.xlu0 %v6806, 126
    %v6815 = vpop.permute.xlu0 %6814
    %6816 = vrot.lane.b32.xlu0 %v6807, 126
    %v6817 = vpop.permute.xlu0 %6816
    %6818 = vrot.lane.b32.xlu0 %v6808, 126
    %v6819 = vpop.permute.xlu0 %6818
    %6820 = vrot.lane.b32.xlu0 %v6809, 126
    %v6821 = vpop.permute.xlu0 %6820
    %v6826 = vadd.f32 %v6700, %v6815
    %v6827 = vadd.f32 %v6701, %v6817
    %v6828 = vadd.f32 %v6702, %v6819
    %v6829 = vadd.f32 %v6703, %v6821
    %v6830 = vld [vmem:[%s13 + $0x1d] sm:$0x1]
    %v6831 = vperm.slane %v6830, 0
    %6833 = vrot.lane.b32.xlu0 %v6831, 2
    %v6834 = vpop.permute.xlu0 %6833
    %v6836 = vmul.f32 %v6096, %v6834
    %v6837 = vmul.f32 %v6097, %v6834
    %v6838 = vmul.f32 %v6098, %v6834
    %v6839 = vmul.f32 %v6099, %v6834
    %6844 = vrot.lane.b32.xlu0 %v6836, 126
    %v6845 = vpop.permute.xlu0 %6844
    %6846 = vrot.lane.b32.xlu0 %v6837, 126
    %v6847 = vpop.permute.xlu0 %6846
    %6848 = vrot.lane.b32.xlu0 %v6838, 126
    %v6849 = vpop.permute.xlu0 %6848
    %6850 = vrot.lane.b32.xlu0 %v6839, 126
    %v6851 = vpop.permute.xlu0 %6850
    %v6856 = vadd.f32 %v6736, %v6845
    %v6857 = vadd.f32 %v6737, %v6847
    %v6858 = vadd.f32 %v6738, %v6849
    %v6859 = vadd.f32 %v6739, %v6851
    %v6860 = vld [vmem:[%s13 + $0x5] sm:$0x1]
    %v6861 = vperm.slane %v6860, 0
    %6863 = vrot.lane.b32.xlu0 %v6861, 2
    %v6864 = vpop.permute.xlu0 %6863
    %v6866 = vmul.f32 %v6096, %v6864
    %v6867 = vmul.f32 %v6097, %v6864
    %v6868 = vmul.f32 %v6098, %v6864
    %v6869 = vmul.f32 %v6099, %v6864
    %v6874 = vrot.slane %v6866, 1
    %v6875 = vrot.slane %v6867, 1
    %v6876 = vsel %vm279, %v6874, %v6875
    %v6877 = vrot.slane %v6868, 1
    %v6878 = vrot.slane %v6869, 1
    %v6879 = vsel %vm279, %v6877, %v6878
    %6880 = vrot.lane.b32.xlu0 %v6876, 126
    %v6881 = vpop.permute.xlu0 %6880
    %6882 = vrot.lane.b32.xlu0 %v6875, 126
    %v6883 = vpop.permute.xlu0 %6882
    %6884 = vrot.lane.b32.xlu0 %v6879, 126
    %v6885 = vpop.permute.xlu0 %6884
    %6886 = vrot.lane.b32.xlu0 %v6878, 126
    %v6887 = vpop.permute.xlu0 %6886
    %v6892 = vadd.f32 %v6766, %v6881
    %v6893 = vadd.f32 %v6767, %v6883
    %v6894 = vadd.f32 %v6768, %v6885
    %v6895 = vadd.f32 %v6769, %v6887
    %v6896 = vld [vmem:[%s13 + $0xe] sm:$0x1]
    %v6897 = vperm.slane %v6896, 0
    %6899 = vrot.lane.b32.xlu0 %v6897, 2
    %v6900 = vpop.permute.xlu0 %6899
    %v6902 = vmul.f32 %v6096, %v6900
    %v6903 = vmul.f32 %v6097, %v6900
    %v6904 = vmul.f32 %v6098, %v6900
    %v6905 = vmul.f32 %v6099, %v6900
    %v6910 = vrot.slane %v6902, 1
    %v6911 = vrot.slane %v6903, 1
    %v6912 = vsel %vm279, %v6910, %v6911
    %v6913 = vrot.slane %v6904, 1
    %v6914 = vrot.slane %v6905, 1
    %v6915 = vsel %vm279, %v6913, %v6914
    %6916 = vrot.lane.b32.xlu0 %v6912, 126
    %v6917 = vpop.permute.xlu0 %6916
    %6918 = vrot.lane.b32.xlu0 %v6911, 126
    %v6919 = vpop.permute.xlu0 %6918
    %6920 = vrot.lane.b32.xlu0 %v6915, 126
    %v6921 = vpop.permute.xlu0 %6920
    %6922 = vrot.lane.b32.xlu0 %v6914, 126
    %v6923 = vpop.permute.xlu0 %6922
    %v6928 = vadd.f32 %v6796, %v6917
    %v6929 = vadd.f32 %v6797, %v6919
    %v6930 = vadd.f32 %v6798, %v6921
    %v6931 = vadd.f32 %v6799, %v6923
    %v6932 = vld [vmem:[%s13 + $0x17] sm:$0x1]
    %v6933 = vperm.slane %v6932, 0
    %6935 = vrot.lane.b32.xlu0 %v6933, 2
    %v6936 = vpop.permute.xlu0 %6935
    %v6938 = vmul.f32 %v6096, %v6936
    %v6939 = vmul.f32 %v6097, %v6936
    %v6940 = vmul.f32 %v6098, %v6936
    %v6941 = vmul.f32 %v6099, %v6936
    %v6946 = vrot.slane %v6938, 1
    %v6947 = vrot.slane %v6939, 1
    %v6948 = vsel %vm279, %v6946, %v6947
    %v6949 = vrot.slane %v6940, 1
    %v6950 = vrot.slane %v6941, 1
    %v6951 = vsel %vm279, %v6949, %v6950
    %6952 = vrot.lane.b32.xlu0 %v6948, 126
    %v6953 = vpop.permute.xlu0 %6952
    %6954 = vrot.lane.b32.xlu0 %v6947, 126
    %v6955 = vpop.permute.xlu0 %6954
    %6956 = vrot.lane.b32.xlu0 %v6951, 126
    %v6957 = vpop.permute.xlu0 %6956
    %6958 = vrot.lane.b32.xlu0 %v6950, 126
    %v6959 = vpop.permute.xlu0 %6958
    %v6964 = vadd.f32 %v6826, %v6953
    %v6965 = vadd.f32 %v6827, %v6955
    %v6966 = vadd.f32 %v6828, %v6957
    %v6967 = vadd.f32 %v6829, %v6959
    %v6968 = vld [vmem:[%s13 + $0x20] sm:$0x1]
    %v6969 = vperm.slane %v6968, 0
    %6971 = vrot.lane.b32.xlu0 %v6969, 2
    %v6972 = vpop.permute.xlu0 %6971
    %v6974 = vmul.f32 %v6096, %v6972
    %v6975 = vmul.f32 %v6097, %v6972
    %v6976 = vmul.f32 %v6098, %v6972
    %v6977 = vmul.f32 %v6099, %v6972
    %v6982 = vrot.slane %v6974, 1
    %v6983 = vrot.slane %v6975, 1
    %v6984 = vsel %vm279, %v6982, %v6983
    %v6985 = vrot.slane %v6976, 1
    %v6986 = vrot.slane %v6977, 1
    %v6987 = vsel %vm279, %v6985, %v6986
    %6988 = vrot.lane.b32.xlu0 %v6984, 126
    %v6989 = vpop.permute.xlu0 %6988
    %6990 = vrot.lane.b32.xlu0 %v6983, 126
    %v6991 = vpop.permute.xlu0 %6990
    %6992 = vrot.lane.b32.xlu0 %v6987, 126
    %v6993 = vpop.permute.xlu0 %6992
    %6994 = vrot.lane.b32.xlu0 %v6986, 126
    %v6995 = vpop.permute.xlu0 %6994
    %v7000 = vadd.f32 %v6856, %v6989
    %v7001 = vadd.f32 %v6857, %v6991
    %v7002 = vadd.f32 %v6858, %v6993
    %v7003 = vadd.f32 %v6859, %v6995
    %v7004 = vld [vmem:[%s13 + $0x8] sm:$0x1]
    %v7005 = vperm.slane %v7004, 0
    %7007 = vrot.lane.b32.xlu0 %v7005, 2
    %v7008 = vpop.permute.xlu0 %7007
    %v7010 = vmul.f32 %v6096, %v7008
    %v7011 = vmul.f32 %v6097, %v7008
    %v7012 = vmul.f32 %v6098, %v7008
    %v7013 = vmul.f32 %v6099, %v7008
    %v7018 = vrot.slane %v7010, 2
    %v7019 = vrot.slane %v7011, 2
    %v7020 = vsel %vm424, %v7018, %v7019
    %v7021 = vrot.slane %v7012, 2
    %v7022 = vrot.slane %v7013, 2
    %v7023 = vsel %vm424, %v7021, %v7022
    %7024 = vrot.lane.b32.xlu0 %v7020, 126
    %v7025 = vpop.permute.xlu0 %7024
    %7026 = vrot.lane.b32.xlu0 %v7019, 126
    %v7027 = vpop.permute.xlu0 %7026
    %7028 = vrot.lane.b32.xlu0 %v7023, 126
    %v7029 = vpop.permute.xlu0 %7028
    %7030 = vrot.lane.b32.xlu0 %v7022, 126
    %v7031 = vpop.permute.xlu0 %7030
    %v7036 = vadd.f32 %v6892, %v7025
    %v7037 = vadd.f32 %v6893, %v7027
    %v7038 = vadd.f32 %v6894, %v7029
    %v7039 = vadd.f32 %v6895, %v7031
    %v7040 = vld [vmem:[%s13 + $0x11] sm:$0x1]
    %v7041 = vperm.slane %v7040, 0
    %7043 = vrot.lane.b32.xlu0 %v7041, 2
    %v7044 = vpop.permute.xlu0 %7043
    %v7046 = vmul.f32 %v6096, %v7044
    %v7047 = vmul.f32 %v6097, %v7044
    %v7048 = vmul.f32 %v6098, %v7044
    %v7049 = vmul.f32 %v6099, %v7044
    %v7054 = vrot.slane %v7046, 2
    %v7055 = vrot.slane %v7047, 2
    %v7056 = vsel %vm424, %v7054, %v7055
    %v7057 = vrot.slane %v7048, 2
    %v7058 = vrot.slane %v7049, 2
    %v7059 = vsel %vm424, %v7057, %v7058
    %7060 = vrot.lane.b32.xlu0 %v7056, 126
    %v7061 = vpop.permute.xlu0 %7060
    %7062 = vrot.lane.b32.xlu0 %v7055, 126
    %v7063 = vpop.permute.xlu0 %7062
    %7064 = vrot.lane.b32.xlu0 %v7059, 126
    %v7065 = vpop.permute.xlu0 %7064
    %7066 = vrot.lane.b32.xlu0 %v7058, 126
    %v7067 = vpop.permute.xlu0 %7066
    %v7072 = vadd.f32 %v6928, %v7061
    %v7073 = vadd.f32 %v6929, %v7063
    %v7074 = vadd.f32 %v6930, %v7065
    %v7075 = vadd.f32 %v6931, %v7067
    %v7076 = vld [vmem:[%s13 + $0x1a] sm:$0x1]
    %v7077 = vperm.slane %v7076, 0
    %7079 = vrot.lane.b32.xlu0 %v7077, 2
    %v7080 = vpop.permute.xlu0 %7079
    %v7082 = vmul.f32 %v6096, %v7080
    %v7083 = vmul.f32 %v6097, %v7080
    %v7084 = vmul.f32 %v6098, %v7080
    %v7085 = vmul.f32 %v6099, %v7080
    %v7090 = vrot.slane %v7082, 2
    %v7091 = vrot.slane %v7083, 2
    %v7092 = vsel %vm424, %v7090, %v7091
    %v7093 = vrot.slane %v7084, 2
    %v7094 = vrot.slane %v7085, 2
    %v7095 = vsel %vm424, %v7093, %v7094
    %7096 = vrot.lane.b32.xlu0 %v7092, 126
    %v7097 = vpop.permute.xlu0 %7096
    %7098 = vrot.lane.b32.xlu0 %v7091, 126
    %v7099 = vpop.permute.xlu0 %7098
    %7100 = vrot.lane.b32.xlu0 %v7095, 126
    %v7101 = vpop.permute.xlu0 %7100
    %7102 = vrot.lane.b32.xlu0 %v7094, 126
    %v7103 = vpop.permute.xlu0 %7102
    %v7108 = vadd.f32 %v6964, %v7097
    %v7109 = vadd.f32 %v6965, %v7099
    %v7110 = vadd.f32 %v6966, %v7101
    %v7111 = vadd.f32 %v6967, %v7103
    %v7112 = vld [vmem:[%s13 + $0x23] sm:$0x1]
    %v7113 = vperm.slane %v7112, 0
    %7115 = vrot.lane.b32.xlu0 %v7113, 2
    %v7116 = vpop.permute.xlu0 %7115
    %v7118 = vmul.f32 %v6096, %v7116
    %v7119 = vmul.f32 %v6097, %v7116
    %v7120 = vmul.f32 %v6098, %v7116
    %v7121 = vmul.f32 %v6099, %v7116
    %v7126 = vrot.slane %v7118, 2
    %v7127 = vrot.slane %v7119, 2
    %v7128 = vsel %vm424, %v7126, %v7127
    %v7129 = vrot.slane %v7120, 2
    %v7130 = vrot.slane %v7121, 2
    %v7131 = vsel %vm424, %v7129, %v7130
    %7132 = vrot.lane.b32.xlu0 %v7128, 126
    %v7133 = vpop.permute.xlu0 %7132
    %7134 = vrot.lane.b32.xlu0 %v7127, 126
    %v7135 = vpop.permute.xlu0 %7134
    %7136 = vrot.lane.b32.xlu0 %v7131, 126
    %v7137 = vpop.permute.xlu0 %7136
    %7138 = vrot.lane.b32.xlu0 %v7130, 126
    %v7139 = vpop.permute.xlu0 %7138
    %v7144 = vadd.f32 %v7000, %v7133
    %v7145 = vadd.f32 %v7001, %v7135
    %v7146 = vadd.f32 %v7002, %v7137
    %v7147 = vadd.f32 %v7003, %v7139
    %s7148 = sld [smem:[#allocation17]]
    %v7149 = vstv %s7148
    %v7150 = vadd.f32 %v7036, %v7149
    %v7151 = vadd.f32 %v7037, %v7149
    %v7152 = vadd.f32 %v7038, %v7149
    %v7153 = vadd.f32 %v7039, %v7149
    %7158 = vrot.lane.b32.xlu0 %v7036, 117
    %v7159 = vpop.permute.xlu0 %7158
    %7160 = vrot.lane.b32.xlu0 %v7037, 117
    %v7161 = vpop.permute.xlu0 %7160
    %7162 = vrot.lane.b32.xlu0 %v7038, 117
    %v7163 = vpop.permute.xlu0 %7162
    %7164 = vrot.lane.b32.xlu0 %v7039, 117
    %v7165 = vpop.permute.xlu0 %7164
    %v7170 = vadd.f32 %v7150, %v7159
    %v7171 = vadd.f32 %v7151, %v7161
    %v7172 = vadd.f32 %v7152, %v7163
    %v7173 = vadd.f32 %v7153, %v7165
    %7174 = vrot.lane.b32.xlu0 %v7036, 106
    %v7175 = vpop.permute.xlu0 %7174
    %7176 = vrot.lane.b32.xlu0 %v7037, 106
    %v7177 = vpop.permute.xlu0 %7176
    %7178 = vrot.lane.b32.xlu0 %v7038, 106
    %v7179 = vpop.permute.xlu0 %7178
    %7180 = vrot.lane.b32.xlu0 %v7039, 106
    %v7181 = vpop.permute.xlu0 %7180
    %v7186 = vadd.f32 %v7170, %v7175
    %v7187 = vadd.f32 %v7171, %v7177
    %v7188 = vadd.f32 %v7172, %v7179
    %v7189 = vadd.f32 %v7173, %v7181
    %7190 = vrot.lane.b32.xlu0 %v7036, 95
    %v7191 = vpop.permute.xlu0 %7190
    %7192 = vrot.lane.b32.xlu0 %v7037, 95
    %v7193 = vpop.permute.xlu0 %7192
    %7194 = vrot.lane.b32.xlu0 %v7038, 95
    %v7195 = vpop.permute.xlu0 %7194
    %7196 = vrot.lane.b32.xlu0 %v7039, 95
    %v7197 = vpop.permute.xlu0 %7196
    %v7202 = vadd.f32 %v7186, %v7191
    %v7203 = vadd.f32 %v7187, %v7193
    %v7204 = vadd.f32 %v7188, %v7195
    %v7205 = vadd.f32 %v7189, %v7197
    %vm7206 = vcmask 72704
    %v7207 = vsel %vm7206, %v7202, 0.0
    %vm7208 = vcmask 65536
    %v7209 = vsel %vm7208, %v7203, 0.0
    %v7210 = vadd.f32 %v7207, %v7209
    %v7211 = vsel %vm7206, %v7204, 0.0
    %v7212 = vadd.f32 %v7210, %v7211
    %v7213 = vsel %vm7208, %v7205, 0.0
    %v7214 = vadd.f32 %v7212, %v7213
    %7215 = vadd.xlane.f32.xlu0 %v7214
    %v7216 = vpop.xlane.xlu0 %7215
    %v7217 = vrot.slane %v7216, 4
    %v7218 = vadd.f32 %v7216, %v7217
    %v7219 = vrot.slane %v7218, 2
    %v7220 = vadd.f32 %v7218, %v7219
    %v7221 = vrot.slane %v7220, 1
    %v7222 = vadd.f32 %v7220, %v7221
    %s7223 = vtos %v7222
    %v7224 = vmul.f32 %v7202, %v7202
    %v7225 = vmul.f32 %v7203, %v7203
    %v7226 = vmul.f32 %v7204, %v7204
    %v7227 = vmul.f32 %v7205, %v7205
    %v7228 = vsel %vm7206, %v7224, 0.0
    %v7229 = vsel %vm7208, %v7225, 0.0
    %v7230 = vadd.f32 %v7228, %v7229
    %v7231 = vsel %vm7206, %v7226, 0.0
    %v7232 = vadd.f32 %v7230, %v7231
    %v7233 = vsel %vm7208, %v7227, 0.0
    %v7234 = vadd.f32 %v7232, %v7233
    %7235 = vadd.xlane.f32.xlu0 %v7234
    %v7236 = vpop.xlane.xlu0 %7235
    %v7237 = vrot.slane %v7236, 4
    %v7238 = vadd.f32 %v7236, %v7237
    %v7239 = vrot.slane %v7238, 2
    %v7240 = vadd.f32 %v7238, %v7239
    %v7241 = vrot.slane %v7240, 1
    %v7242 = vadd.f32 %v7240, %v7241
    %s7243 = vtos %v7242
    %s7244 = smul.f32 %s7223, 0.0061728396
    %s7245 = smul.f32 %s7243, 0.0061728396
    %s7246 = smul.f32 %s7244, %s7244
    %s7247 = ssub.f32 %s7245, %s7246
    %s7248 = sld [smem:[#allocation19]]
    %s7249 = sadd.f32 %s7247, 1e-05
    %v7250 = vstv %s7249
    %v7251 = vrsqrt.pop %v7250
    %v7252 = vmul.f32 %v7251, %v7250
    %v7253 = vmul.f32 %v7252, %v7251
    %v7254 = vmul.f32 0.5, %v7253
    %v7255 = vsub.f32 1.5, %v7254
    %v7256 = vmul.f32 %v7251, %v7255
    %vm7257 = vweird.f32 %v7250
    %vm7258 = vweird.f32 %v7251
    %vm7259 = vmor %vm7257, %vm7258
    %v7260 = vsel %vm7259, %v7251, %v7256
    %s7261 = vtos %v7260
    %s7262 = smul.f32 %s7248, %s7261
    %s7263 = sld [smem:[#allocation20]]
    %s7264 = smul.f32 %s7244, %s7262
    %s7265 = ssub.f32 %s7263, %s7264
    %v7266 = vstv %s7262
    %v7267 = vmul.f32 %v7202, %v7266
    %v7268 = vmul.f32 %v7203, %v7266
    %v7269 = vmul.f32 %v7204, %v7266
    %v7270 = vmul.f32 %v7205, %v7266
    %v7271 = vstv %s7265
    %v7272 = vadd.f32 %v7267, %v7271
    %v7273 = vadd.f32 %v7268, %v7271
    %v7274 = vadd.f32 %v7269, %v7271
    %v7275 = vadd.f32 %v7270, %v7271
    %v7276 = vmax.f32 %v7272, 0.0
    %v7277 = vmax.f32 %v7273, 0.0
    %v7278 = vmax.f32 %v7274, 0.0
    %v7279 = vmax.f32 %v7275, 0.0
    %7284 = vrot.lane.b32.xlu0 %v7276, 127
    %v7285 = vpop.permute.xlu0 %7284
    %7286 = vrot.lane.b32.xlu0 %v7277, 127
    %v7287 = vpop.permute.xlu0 %7286
    %7288 = vrot.lane.b32.xlu0 %v7278, 127
    %v7289 = vpop.permute.xlu0 %7288
    %7290 = vrot.lane.b32.xlu0 %v7279, 127
    %v7291 = vpop.permute.xlu0 %7290
    %v7296 = vmax.f32 %v7276, %v7285
    %v7297 = vmax.f32 %v7277, %v7287
    %v7298 = vmax.f32 %v7278, %v7289
    %v7299 = vmax.f32 %v7279, %v7291
    %v7304 = vrot.slane %v7296, 1
    %v7305 = vrot.slane %v7297, 1
    %v7306 = vsel %vm279, %v7304, %v7305
    %v7307 = vrot.slane %v7298, 1
    %v7308 = vrot.slane %v7299, 1
    %v7309 = vsel %vm279, %v7307, %v7308
    %v7312 = vmax.f32 %v7296, %v7306
    %v7313 = vmax.f32 %v7298, %v7309
    %s7314 = sld [smem:[#allocation17 + $0x1]]
    %v7315 = vstv %s7314
    %v7316 = vadd.f32 %v7072, %v7315
    %v7317 = vadd.f32 %v7073, %v7315
    %v7318 = vadd.f32 %v7074, %v7315
    %v7319 = vadd.f32 %v7075, %v7315
    %7324 = vrot.lane.b32.xlu0 %v7072, 117
    %v7325 = vpop.permute.xlu0 %7324
    %7326 = vrot.lane.b32.xlu0 %v7073, 117
    %v7327 = vpop.permute.xlu0 %7326
    %7328 = vrot.lane.b32.xlu0 %v7074, 117
    %v7329 = vpop.permute.xlu0 %7328
    %7330 = vrot.lane.b32.xlu0 %v7075, 117
    %v7331 = vpop.permute.xlu0 %7330
    %v7336 = vadd.f32 %v7316, %v7325
    %v7337 = vadd.f32 %v7317, %v7327
    %v7338 = vadd.f32 %v7318, %v7329
    %v7339 = vadd.f32 %v7319, %v7331
    %7340 = vrot.lane.b32.xlu0 %v7072, 106
    %v7341 = vpop.permute.xlu0 %7340
    %7342 = vrot.lane.b32.xlu0 %v7073, 106
    %v7343 = vpop.permute.xlu0 %7342
    %7344 = vrot.lane.b32.xlu0 %v7074, 106
    %v7345 = vpop.permute.xlu0 %7344
    %7346 = vrot.lane.b32.xlu0 %v7075, 106
    %v7347 = vpop.permute.xlu0 %7346
    %v7352 = vadd.f32 %v7336, %v7341
    %v7353 = vadd.f32 %v7337, %v7343
    %v7354 = vadd.f32 %v7338, %v7345
    %v7355 = vadd.f32 %v7339, %v7347
    %7356 = vrot.lane.b32.xlu0 %v7072, 95
    %v7357 = vpop.permute.xlu0 %7356
    %7358 = vrot.lane.b32.xlu0 %v7073, 95
    %v7359 = vpop.permute.xlu0 %7358
    %7360 = vrot.lane.b32.xlu0 %v7074, 95
    %v7361 = vpop.permute.xlu0 %7360
    %7362 = vrot.lane.b32.xlu0 %v7075, 95
    %v7363 = vpop.permute.xlu0 %7362
    %v7368 = vadd.f32 %v7352, %v7357
    %v7369 = vadd.f32 %v7353, %v7359
    %v7370 = vadd.f32 %v7354, %v7361
    %v7371 = vadd.f32 %v7355, %v7363
    %v7372 = vsel %vm7206, %v7368, 0.0
    %v7373 = vsel %vm7208, %v7369, 0.0
    %v7374 = vadd.f32 %v7372, %v7373
    %v7375 = vsel %vm7206, %v7370, 0.0
    %v7376 = vadd.f32 %v7374, %v7375
    %v7377 = vsel %vm7208, %v7371, 0.0
    %v7378 = vadd.f32 %v7376, %v7377
    %7379 = vadd.xlane.f32.xlu0 %v7378
    %v7380 = vpop.xlane.xlu0 %7379
    %v7381 = vrot.slane %v7380, 4
    %v7382 = vadd.f32 %v7380, %v7381
    %v7383 = vrot.slane %v7382, 2
    %v7384 = vadd.f32 %v7382, %v7383
    %v7385 = vrot.slane %v7384, 1
    %v7386 = vadd.f32 %v7384, %v7385
    %s7387 = vtos %v7386
    %v7388 = vmul.f32 %v7368, %v7368
    %v7389 = vmul.f32 %v7369, %v7369
    %v7390 = vmul.f32 %v7370, %v7370
    %v7391 = vmul.f32 %v7371, %v7371
    %v7392 = vsel %vm7206, %v7388, 0.0
    %v7393 = vsel %vm7208, %v7389, 0.0
    %v7394 = vadd.f32 %v7392, %v7393
    %v7395 = vsel %vm7206, %v7390, 0.0
    %v7396 = vadd.f32 %v7394, %v7395
    %v7397 = vsel %vm7208, %v7391, 0.0
    %v7398 = vadd.f32 %v7396, %v7397
    %7399 = vadd.xlane.f32.xlu0 %v7398
    %v7400 = vpop.xlane.xlu0 %7399
    %v7401 = vrot.slane %v7400, 4
    %v7402 = vadd.f32 %v7400, %v7401
    %v7403 = vrot.slane %v7402, 2
    %v7404 = vadd.f32 %v7402, %v7403
    %v7405 = vrot.slane %v7404, 1
    %v7406 = vadd.f32 %v7404, %v7405
    %s7407 = vtos %v7406
    %s7408 = smul.f32 %s7387, 0.0061728396
    %s7409 = smul.f32 %s7407, 0.0061728396
    %s7410 = smul.f32 %s7408, %s7408
    %s7411 = ssub.f32 %s7409, %s7410
    %s7412 = sld [smem:[#allocation19 + $0x1]]
    %s7413 = sadd.f32 %s7411, 1e-05
    %v7414 = vstv %s7413
    %v7415 = vrsqrt.pop %v7414
    %v7416 = vmul.f32 %v7415, %v7414
    %v7417 = vmul.f32 %v7416, %v7415
    %v7418 = vmul.f32 0.5, %v7417
    %v7419 = vsub.f32 1.5, %v7418
    %v7420 = vmul.f32 %v7415, %v7419
    %vm7421 = vweird.f32 %v7414
    %vm7422 = vweird.f32 %v7415
    %vm7423 = vmor %vm7421, %vm7422
    %v7424 = vsel %vm7423, %v7415, %v7420
    %s7425 = vtos %v7424
    %s7426 = smul.f32 %s7412, %s7425
    %s7427 = sld [smem:[#allocation20 + $0x1]]
    %s7428 = smul.f32 %s7408, %s7426
    %s7429 = ssub.f32 %s7427, %s7428
    %v7430 = vstv %s7426
    %v7431 = vmul.f32 %v7368, %v7430
    %v7432 = vmul.f32 %v7369, %v7430
    %v7433 = vmul.f32 %v7370, %v7430
    %v7434 = vmul.f32 %v7371, %v7430
    %v7435 = vstv %s7429
    %v7436 = vadd.f32 %v7431, %v7435
    %v7437 = vadd.f32 %v7432, %v7435
    %v7438 = vadd.f32 %v7433, %v7435
    %v7439 = vadd.f32 %v7434, %v7435
    %v7440 = vmax.f32 %v7436, 0.0
    %v7441 = vmax.f32 %v7437, 0.0
    %v7442 = vmax.f32 %v7438, 0.0
    %v7443 = vmax.f32 %v7439, 0.0
    %7448 = vrot.lane.b32.xlu0 %v7440, 127
    %v7449 = vpop.permute.xlu0 %7448
    %7450 = vrot.lane.b32.xlu0 %v7441, 127
    %v7451 = vpop.permute.xlu0 %7450
    %7452 = vrot.lane.b32.xlu0 %v7442, 127
    %v7453 = vpop.permute.xlu0 %7452
    %7454 = vrot.lane.b32.xlu0 %v7443, 127
    %v7455 = vpop.permute.xlu0 %7454
    %v7460 = vmax.f32 %v7440, %v7449
    %v7461 = vmax.f32 %v7441, %v7451
    %v7462 = vmax.f32 %v7442, %v7453
    %v7463 = vmax.f32 %v7443, %v7455
    %v7468 = vrot.slane %v7460, 1
    %v7469 = vrot.slane %v7461, 1
    %v7470 = vsel %vm279, %v7468, %v7469
    %v7471 = vrot.slane %v7462, 1
    %v7472 = vrot.slane %v7463, 1
    %v7473 = vsel %vm279, %v7471, %v7472
    %v7476 = vmax.f32 %v7460, %v7470
    %v7477 = vmax.f32 %v7462, %v7473
    %s7478 = sld [smem:[#allocation17 + $0x2]]
    %v7479 = vstv %s7478
    %v7480 = vadd.f32 %v7108, %v7479
    %v7481 = vadd.f32 %v7109, %v7479
    %v7482 = vadd.f32 %v7110, %v7479
    %v7483 = vadd.f32 %v7111, %v7479
    %7488 = vrot.lane.b32.xlu0 %v7108, 117
    %v7489 = vpop.permute.xlu0 %7488
    %7490 = vrot.lane.b32.xlu0 %v7109, 117
    %v7491 = vpop.permute.xlu0 %7490
    %7492 = vrot.lane.b32.xlu0 %v7110, 117
    %v7493 = vpop.permute.xlu0 %7492
    %7494 = vrot.lane.b32.xlu0 %v7111, 117
    %v7495 = vpop.permute.xlu0 %7494
    %v7500 = vadd.f32 %v7480, %v7489
    %v7501 = vadd.f32 %v7481, %v7491
    %v7502 = vadd.f32 %v7482, %v7493
    %v7503 = vadd.f32 %v7483, %v7495
    %7504 = vrot.lane.b32.xlu0 %v7108, 106
    %v7505 = vpop.permute.xlu0 %7504
    %7506 = vrot.lane.b32.xlu0 %v7109, 106
    %v7507 = vpop.permute.xlu0 %7506
    %7508 = vrot.lane.b32.xlu0 %v7110, 106
    %v7509 = vpop.permute.xlu0 %7508
    %7510 = vrot.lane.b32.xlu0 %v7111, 106
    %v7511 = vpop.permute.xlu0 %7510
    %v7516 = vadd.f32 %v7500, %v7505
    %v7517 = vadd.f32 %v7501, %v7507
    %v7518 = vadd.f32 %v7502, %v7509
    %v7519 = vadd.f32 %v7503, %v7511
    %7520 = vrot.lane.b32.xlu0 %v7108, 95
    %v7521 = vpop.permute.xlu0 %7520
    %7522 = vrot.lane.b32.xlu0 %v7109, 95
    %v7523 = vpop.permute.xlu0 %7522
    %7524 = vrot.lane.b32.xlu0 %v7110, 95
    %v7525 = vpop.permute.xlu0 %7524
    %7526 = vrot.lane.b32.xlu0 %v7111, 95
    %v7527 = vpop.permute.xlu0 %7526
    %v7532 = vadd.f32 %v7516, %v7521
    %v7533 = vadd.f32 %v7517, %v7523
    %v7534 = vadd.f32 %v7518, %v7525
    %v7535 = vadd.f32 %v7519, %v7527
    %v7536 = vsel %vm7206, %v7532, 0.0
    %v7537 = vsel %vm7208, %v7533, 0.0
    %v7538 = vadd.f32 %v7536, %v7537
    %v7539 = vsel %vm7206, %v7534, 0.0
    %v7540 = vadd.f32 %v7538, %v7539
    %v7541 = vsel %vm7208, %v7535, 0.0
    %v7542 = vadd.f32 %v7540, %v7541
    %7543 = vadd.xlane.f32.xlu0 %v7542
    %v7544 = vpop.xlane.xlu0 %7543
    %v7545 = vrot.slane %v7544, 4
    %v7546 = vadd.f32 %v7544, %v7545
    %v7547 = vrot.slane %v7546, 2
    %v7548 = vadd.f32 %v7546, %v7547
    %v7549 = vrot.slane %v7548, 1
    %v7550 = vadd.f32 %v7548, %v7549
    %s7551 = vtos %v7550
    %v7552 = vmul.f32 %v7532, %v7532
    %v7553 = vmul.f32 %v7533, %v7533
    %v7554 = vmul.f32 %v7534, %v7534
    %v7555 = vmul.f32 %v7535, %v7535
    %v7556 = vsel %vm7206, %v7552, 0.0
    %v7557 = vsel %vm7208, %v7553, 0.0
    %v7558 = vadd.f32 %v7556, %v7557
    %v7559 = vsel %vm7206, %v7554, 0.0
    %v7560 = vadd.f32 %v7558, %v7559
    %v7561 = vsel %vm7208, %v7555, 0.0
    %v7562 = vadd.f32 %v7560, %v7561
    %7563 = vadd.xlane.f32.xlu0 %v7562
    %v7564 = vpop.xlane.xlu0 %7563
    %v7565 = vrot.slane %v7564, 4
    %v7566 = vadd.f32 %v7564, %v7565
    %v7567 = vrot.slane %v7566, 2
    %v7568 = vadd.f32 %v7566, %v7567
    %v7569 = vrot.slane %v7568, 1
    %v7570 = vadd.f32 %v7568, %v7569
    %s7571 = vtos %v7570
    %s7572 = smul.f32 %s7551, 0.0061728396
    %s7573 = smul.f32 %s7571, 0.0061728396
    %s7574 = smul.f32 %s7572, %s7572
    %s7575 = ssub.f32 %s7573, %s7574
    %s7576 = sld [smem:[#allocation19 + $0x2]]
    %s7577 = sadd.f32 %s7575, 1e-05
    %v7578 = vstv %s7577
    %v7579 = vrsqrt.pop %v7578
    %v7580 = vmul.f32 %v7579, %v7578
    %v7581 = vmul.f32 %v7580, %v7579
    %v7582 = vmul.f32 0.5, %v7581
    %v7583 = vsub.f32 1.5, %v7582
    %v7584 = vmul.f32 %v7579, %v7583
    %vm7585 = vweird.f32 %v7578
    %vm7586 = vweird.f32 %v7579
    %vm7587 = vmor %vm7585, %vm7586
    %v7588 = vsel %vm7587, %v7579, %v7584
    %s7589 = vtos %v7588
    %s7590 = smul.f32 %s7576, %s7589
    %s7591 = sld [smem:[#allocation20 + $0x2]]
    %s7592 = smul.f32 %s7572, %s7590
    %s7593 = ssub.f32 %s7591, %s7592
    %v7594 = vstv %s7590
    %v7595 = vmul.f32 %v7532, %v7594
    %v7596 = vmul.f32 %v7533, %v7594
    %v7597 = vmul.f32 %v7534, %v7594
    %v7598 = vmul.f32 %v7535, %v7594
    %v7599 = vstv %s7593
    %v7600 = vadd.f32 %v7595, %v7599
    %v7601 = vadd.f32 %v7596, %v7599
    %v7602 = vadd.f32 %v7597, %v7599
    %v7603 = vadd.f32 %v7598, %v7599
    %v7604 = vmax.f32 %v7600, 0.0
    %v7605 = vmax.f32 %v7601, 0.0
    %v7606 = vmax.f32 %v7602, 0.0
    %v7607 = vmax.f32 %v7603, 0.0
    %7612 = vrot.lane.b32.xlu0 %v7604, 127
    %v7613 = vpop.permute.xlu0 %7612
    %7614 = vrot.lane.b32.xlu0 %v7605, 127
    %v7615 = vpop.permute.xlu0 %7614
    %7616 = vrot.lane.b32.xlu0 %v7606, 127
    %v7617 = vpop.permute.xlu0 %7616
    %7618 = vrot.lane.b32.xlu0 %v7607, 127
    %v7619 = vpop.permute.xlu0 %7618
    %v7624 = vmax.f32 %v7604, %v7613
    %v7625 = vmax.f32 %v7605, %v7615
    %v7626 = vmax.f32 %v7606, %v7617
    %v7627 = vmax.f32 %v7607, %v7619
    %v7632 = vrot.slane %v7624, 1
    %v7633 = vrot.slane %v7625, 1
    %v7634 = vsel %vm279, %v7632, %v7633
    %v7635 = vrot.slane %v7626, 1
    %v7636 = vrot.slane %v7627, 1
    %v7637 = vsel %vm279, %v7635, %v7636
    %v7640 = vmax.f32 %v7624, %v7634
    %v7641 = vmax.f32 %v7626, %v7637
    %s7642 = sld [smem:[#allocation17 + $0x3]]
    %v7643 = vstv %s7642
    %v7644 = vadd.f32 %v7144, %v7643
    %v7645 = vadd.f32 %v7145, %v7643
    %v7646 = vadd.f32 %v7146, %v7643
    %v7647 = vadd.f32 %v7147, %v7643
    %7652 = vrot.lane.b32.xlu0 %v7144, 117
    %v7653 = vpop.permute.xlu0 %7652
    %7654 = vrot.lane.b32.xlu0 %v7145, 117
    %v7655 = vpop.permute.xlu0 %7654
    %7656 = vrot.lane.b32.xlu0 %v7146, 117
    %v7657 = vpop.permute.xlu0 %7656
    %7658 = vrot.lane.b32.xlu0 %v7147, 117
    %v7659 = vpop.permute.xlu0 %7658
    %v7664 = vadd.f32 %v7644, %v7653
    %v7665 = vadd.f32 %v7645, %v7655
    %v7666 = vadd.f32 %v7646, %v7657
    %v7667 = vadd.f32 %v7647, %v7659
    %7668 = vrot.lane.b32.xlu0 %v7144, 106
    %v7669 = vpop.permute.xlu0 %7668
    %7670 = vrot.lane.b32.xlu0 %v7145, 106
    %v7671 = vpop.permute.xlu0 %7670
    %7672 = vrot.lane.b32.xlu0 %v7146, 106
    %v7673 = vpop.permute.xlu0 %7672
    %7674 = vrot.lane.b32.xlu0 %v7147, 106
    %v7675 = vpop.permute.xlu0 %7674
    %v7680 = vadd.f32 %v7664, %v7669
    %v7681 = vadd.f32 %v7665, %v7671
    %v7682 = vadd.f32 %v7666, %v7673
    %v7683 = vadd.f32 %v7667, %v7675
    %7684 = vrot.lane.b32.xlu0 %v7144, 95
    %v7685 = vpop.permute.xlu0 %7684
    %7686 = vrot.lane.b32.xlu0 %v7145, 95
    %v7687 = vpop.permute.xlu0 %7686
    %7688 = vrot.lane.b32.xlu0 %v7146, 95
    %v7689 = vpop.permute.xlu0 %7688
    %7690 = vrot.lane.b32.xlu0 %v7147, 95
    %v7691 = vpop.permute.xlu0 %7690
    %v7696 = vadd.f32 %v7680, %v7685
    %v7697 = vadd.f32 %v7681, %v7687
    %v7698 = vadd.f32 %v7682, %v7689
    %v7699 = vadd.f32 %v7683, %v7691
    %v7700 = vsel %vm7206, %v7696, 0.0
    %v7701 = vsel %vm7208, %v7697, 0.0
    %v7702 = vadd.f32 %v7700, %v7701
    %v7703 = vsel %vm7206, %v7698, 0.0
    %v7704 = vadd.f32 %v7702, %v7703
    %v7705 = vsel %vm7208, %v7699, 0.0
    %v7706 = vadd.f32 %v7704, %v7705
    %7707 = vadd.xlane.f32.xlu0 %v7706
    %v7708 = vpop.xlane.xlu0 %7707
    %v7709 = vrot.slane %v7708, 4
    %v7710 = vadd.f32 %v7708, %v7709
    %v7711 = vrot.slane %v7710, 2
    %v7712 = vadd.f32 %v7710, %v7711
    %v7713 = vrot.slane %v7712, 1
    %v7714 = vadd.f32 %v7712, %v7713
    %s7715 = vtos %v7714
    %v7716 = vmul.f32 %v7696, %v7696
    %v7717 = vmul.f32 %v7697, %v7697
    %v7718 = vmul.f32 %v7698, %v7698
    %v7719 = vmul.f32 %v7699, %v7699
    %v7720 = vsel %vm7206, %v7716, 0.0
    %v7721 = vsel %vm7208, %v7717, 0.0
    %v7722 = vadd.f32 %v7720, %v7721
    %v7723 = vsel %vm7206, %v7718, 0.0
    %v7724 = vadd.f32 %v7722, %v7723
    %v7725 = vsel %vm7208, %v7719, 0.0
    %v7726 = vadd.f32 %v7724, %v7725
    %7727 = vadd.xlane.f32.xlu0 %v7726
    %v7728 = vpop.xlane.xlu0 %7727
    %v7729 = vrot.slane %v7728, 4
    %v7730 = vadd.f32 %v7728, %v7729
    %v7731 = vrot.slane %v7730, 2
    %v7732 = vadd.f32 %v7730, %v7731
    %v7733 = vrot.slane %v7732, 1
    %v7734 = vadd.f32 %v7732, %v7733
    %s7735 = vtos %v7734
    %s7736 = smul.f32 %s7715, 0.0061728396
    %s7737 = smul.f32 %s7735, 0.0061728396
    %s7738 = smul.f32 %s7736, %s7736
    %s7739 = ssub.f32 %s7737, %s7738
    %s7740 = sld [smem:[#allocation19 + $0x3]]
    %s7741 = sadd.f32 %s7739, 1e-05
    %v7742 = vstv %s7741
    %v7743 = vrsqrt.pop %v7742
    %v7744 = vmul.f32 %v7743, %v7742
    %v7745 = vmul.f32 %v7744, %v7743
    %v7746 = vmul.f32 0.5, %v7745
    %v7747 = vsub.f32 1.5, %v7746
    %v7748 = vmul.f32 %v7743, %v7747
    %vm7749 = vweird.f32 %v7742
    %vm7750 = vweird.f32 %v7743
    %vm7751 = vmor %vm7749, %vm7750
    %v7752 = vsel %vm7751, %v7743, %v7748
    %s7753 = vtos %v7752
    %s7754 = smul.f32 %s7740, %s7753
    %s7755 = sld [smem:[#allocation20 + $0x3]]
    %s7756 = smul.f32 %s7736, %s7754
    %s7757 = ssub.f32 %s7755, %s7756
    %v7758 = vstv %s7754
    %v7759 = vmul.f32 %v7696, %v7758
    %v7760 = vmul.f32 %v7697, %v7758
    %v7761 = vmul.f32 %v7698, %v7758
    %v7762 = vmul.f32 %v7699, %v7758
    %v7763 = vstv %s7757
    %v7764 = vadd.f32 %v7759, %v7763
    %v7765 = vadd.f32 %v7760, %v7763
    %v7766 = vadd.f32 %v7761, %v7763
    %v7767 = vadd.f32 %v7762, %v7763
    %v7768 = vmax.f32 %v7764, 0.0
    %v7769 = vmax.f32 %v7765, 0.0
    %v7770 = vmax.f32 %v7766, 0.0
    %v7771 = vmax.f32 %v7767, 0.0
    %7776 = vrot.lane.b32.xlu0 %v7768, 127
    %v7777 = vpop.permute.xlu0 %7776
    %7778 = vrot.lane.b32.xlu0 %v7769, 127
    %v7779 = vpop.permute.xlu0 %7778
    %7780 = vrot.lane.b32.xlu0 %v7770, 127
    %v7781 = vpop.permute.xlu0 %7780
    %7782 = vrot.lane.b32.xlu0 %v7771, 127
    %v7783 = vpop.permute.xlu0 %7782
    %v7788 = vmax.f32 %v7768, %v7777
    %v7789 = vmax.f32 %v7769, %v7779
    %v7790 = vmax.f32 %v7770, %v7781
    %v7791 = vmax.f32 %v7771, %v7783
    %v7796 = vrot.slane %v7788, 1
    %v7797 = vrot.slane %v7789, 1
    %v7798 = vsel %vm279, %v7796, %v7797
    %v7799 = vrot.slane %v7790, 1
    %v7800 = vrot.slane %v7791, 1
    %v7801 = vsel %vm279, %v7799, %v7800
    %v7804 = vmax.f32 %v7788, %v7798
    %v7805 = vmax.f32 %v7790, %v7801
    %7808 = vrot.lane.b32.xlu0 %v7476, 8
    %v7809 = vpop.permute.xlu0 %7808
    %7810 = vrot.lane.b32.xlu0 %v7477, 8
    %v7811 = vpop.permute.xlu0 %7810
    %7816 = vrot.lane.b32.xlu0 %v7640, 16
    %v7817 = vpop.permute.xlu0 %7816
    %7818 = vrot.lane.b32.xlu0 %v7641, 16
    %v7819 = vpop.permute.xlu0 %7818
    %7824 = vrot.lane.b32.xlu0 %v7804, 24
    %v7825 = vpop.permute.xlu0 %7824
    %7826 = vrot.lane.b32.xlu0 %v7805, 24
    %v7827 = vpop.permute.xlu0 %7826
    %vm7830 = vcmask 64512
    %v7831 = vsel %vm7830, %v7312, %v7809
    %v7832 = vsel %vm7830, %v7313, %v7811
    %vm7833 = vcmask 130048
    %v7834 = vsel %vm7833, %v7831, %v7817
    %v7835 = vsel %vm7833, %v7832, %v7819
    %vm7836 = vcmask 195584
    %v7837 = vsel %vm7836, %v7834, %v7825
    %v7838 = vsel %vm7836, %v7835, %v7827
    %v7839 = vld [vmem:[%s17] sm:$0x3f]
    %v7840 = vld [vmem:[%s17 + $0x6] sm:$0x3f]
    %v7843 = vrot.slane %v7837, 1
    %vm7844 = vcmask 1041409
    %v7845 = vsel %vm7844, %v7838, %v7843
    %vm7846 = vcmask 261120
    %v7847 = vsel %vm7846, %v7845, 0
    %v7850 = vsel %vm7846, %v7840, 0
    %7852 = vmatpush.xpose.msra.mxu0 0.0
    %7853 = vmatpush.xpose.msra.mxu0 0.0
    %7854 = vmatpush.xpose.msra.mxu0 0.0
    %7855 = vmatpush.xpose.msra.mxu0 0.0
    %7856 = vmatpush.xpose.msra.mxu0 0.0
    %7857 = vmatpush.xpose.msra.mxu0 0.0
    %7858 = vmatpush.xpose.msra.mxu0 0.0
    %7859 = vmatpush.xpose.msra.mxu0 0.0
    %7860 = vmatpush.xpose.msra.mxu0 0.0
    %7861 = vmatpush.xpose.msra.mxu0 0.0
    %7862 = vmatpush.xpose.msra.mxu0 0.0
    %7863 = vmatpush.xpose.msra.mxu0 0.0
    %7864 = vmatpush.xpose.msra.mxu0 0.0
    %7865 = vmatpush.xpose.msra.mxu0 0.0
    %7866 = vmatpush.xpose.msra.mxu0 0.0
    %7867 = vmatpush.xpose.msra.mxu0 %v7850
    %7868 = vmatmul.f32.gmra.mxu0 %v7847
    %v7869 = vpop.f32.mrf.mxu0
    %v7870 = vadd.f32 0.0, %v7869
    %7871 = vdwg.mxu0
    %v7872 = vrot.slane %v7838, 7
    %v7873 = vsel %vm7844, %v7872, %v7837
    %v7874 = vsel %vm7846, %v7873, 0
    %v7877 = vsel %vm7846, %v7839, 0
    %7879 = vmatpush.xpose.msra.mxu0 0.0
    %7880 = vmatpush.xpose.msra.mxu0 0.0
    %7881 = vmatpush.xpose.msra.mxu0 0.0
    %7882 = vmatpush.xpose.msra.mxu0 0.0
    %7883 = vmatpush.xpose.msra.mxu0 0.0
    %7884 = vmatpush.xpose.msra.mxu0 0.0
    %7885 = vmatpush.xpose.msra.mxu0 0.0
    %7886 = vmatpush.xpose.msra.mxu0 0.0
    %7887 = vmatpush.xpose.msra.mxu0 0.0
    %7888 = vmatpush.xpose.msra.mxu0 0.0
    %7889 = vmatpush.xpose.msra.mxu0 0.0
    %7890 = vmatpush.xpose.msra.mxu0 0.0
    %7891 = vmatpush.xpose.msra.mxu0 0.0
    %7892 = vmatpush.xpose.msra.mxu0 0.0
    %7893 = vmatpush.xpose.msra.mxu0 0.0
    %7894 = vmatpush.xpose.msra.mxu0 %v7877
    %7895 = vmatmul.f32.gmra.mxu0 %v7874
    %v7896 = vpop.f32.mrf.mxu0
    %v7897 = vadd.f32 %v7870, %v7896
    %7898 = vdwg.mxu0
    %v7899 = vld [vmem:[%s17 + $0xc] sm:$0x3f]
    %v7900 = vrot.slane %v7837, 2
    %v7901 = vrot.slane %v7838, 1
    %v7902 = vsel %vm7844, %v7901, %v7900
    %v7903 = vsel %vm7846, %v7902, 0
    %v7906 = vsel %vm7846, %v7899, 0
    %7908 = vmatpush.xpose.msra.mxu0 0.0
    %7909 = vmatpush.xpose.msra.mxu0 0.0
    %7910 = vmatpush.xpose.msra.mxu0 0.0
    %7911 = vmatpush.xpose.msra.mxu0 0.0
    %7912 = vmatpush.xpose.msra.mxu0 0.0
    %7913 = vmatpush.xpose.msra.mxu0 0.0
    %7914 = vmatpush.xpose.msra.mxu0 0.0
    %7915 = vmatpush.xpose.msra.mxu0 0.0
    %7916 = vmatpush.xpose.msra.mxu0 0.0
    %7917 = vmatpush.xpose.msra.mxu0 0.0
    %7918 = vmatpush.xpose.msra.mxu0 0.0
    %7919 = vmatpush.xpose.msra.mxu0 0.0
    %7920 = vmatpush.xpose.msra.mxu0 0.0
    %7921 = vmatpush.xpose.msra.mxu0 0.0
    %7922 = vmatpush.xpose.msra.mxu0 0.0
    %7923 = vmatpush.xpose.msra.mxu0 %v7906
    %7924 = vmatmul.f32.gmra.mxu0 %v7903
    %v7925 = vpop.f32.mrf.mxu0
    %v7926 = vadd.f32 0.0, %v7925
    %7927 = vdwg.mxu0
    %v7928 = vadd.f32 %v7897, %v7926
    %v7929 = vld [vmem:[%s17 + $0x12] sm:$0x3f]
    %v7930 = vrot.slane %v7837, 3
    %v7931 = vrot.slane %v7838, 2
    %v7932 = vsel %vm7844, %v7931, %v7930
    %v7933 = vsel %vm7846, %v7932, 0
    %v7936 = vsel %vm7846, %v7929, 0
    %7938 = vmatpush.xpose.msra.mxu0 0.0
    %7939 = vmatpush.xpose.msra.mxu0 0.0
    %7940 = vmatpush.xpose.msra.mxu0 0.0
    %7941 = vmatpush.xpose.msra.mxu0 0.0
    %7942 = vmatpush.xpose.msra.mxu0 0.0
    %7943 = vmatpush.xpose.msra.mxu0 0.0
    %7944 = vmatpush.xpose.msra.mxu0 0.0
    %7945 = vmatpush.xpose.msra.mxu0 0.0
    %7946 = vmatpush.xpose.msra.mxu0 0.0
    %7947 = vmatpush.xpose.msra.mxu0 0.0
    %7948 = vmatpush.xpose.msra.mxu0 0.0
    %7949 = vmatpush.xpose.msra.mxu0 0.0
    %7950 = vmatpush.xpose.msra.mxu0 0.0
    %7951 = vmatpush.xpose.msra.mxu0 0.0
    %7952 = vmatpush.xpose.msra.mxu0 0.0
    %7953 = vmatpush.xpose.msra.mxu0 %v7936
    %7954 = vmatmul.f32.gmra.mxu0 %v7933
    %v7955 = vpop.f32.mrf.mxu0
    %v7956 = vadd.f32 0.0, %v7955
    %7957 = vdwg.mxu0
    %v7958 = vadd.f32 %v7928, %v7956
    %v7959 = vld [vmem:[%s17 + $0x18] sm:$0x3f]
    %v7960 = vrot.slane %v7837, 4
    %v7961 = vrot.slane %v7838, 3
    %v7962 = vsel %vm7844, %v7961, %v7960
    %v7963 = vsel %vm7846, %v7962, 0
    %v7966 = vsel %vm7846, %v7959, 0
    %7968 = vmatpush.xpose.msra.mxu0 0.0
    %7969 = vmatpush.xpose.msra.mxu0 0.0
    %7970 = vmatpush.xpose.msra.mxu0 0.0
    %7971 = vmatpush.xpose.msra.mxu0 0.0
    %7972 = vmatpush.xpose.msra.mxu0 0.0
    %7973 = vmatpush.xpose.msra.mxu0 0.0
    %7974 = vmatpush.xpose.msra.mxu0 0.0
    %7975 = vmatpush.xpose.msra.mxu0 0.0
    %7976 = vmatpush.xpose.msra.mxu0 0.0
    %7977 = vmatpush.xpose.msra.mxu0 0.0
    %7978 = vmatpush.xpose.msra.mxu0 0.0
    %7979 = vmatpush.xpose.msra.mxu0 0.0
    %7980 = vmatpush.xpose.msra.mxu0 0.0
    %7981 = vmatpush.xpose.msra.mxu0 0.0
    %7982 = vmatpush.xpose.msra.mxu0 0.0
    %7983 = vmatpush.xpose.msra.mxu0 %v7966
    %7984 = vmatmul.f32.gmra.mxu0 %v7963
    %v7985 = vpop.f32.mrf.mxu0
    %v7986 = vadd.f32 0.0, %v7985
    %7987 = vdwg.mxu0
    %v7988 = vadd.f32 %v7958, %v7986
    %v7989 = vld [vmem:[%s17 + $0x1e] sm:$0x3f]
    %v7990 = vrot.slane %v7837, 5
    %v7991 = vrot.slane %v7838, 4
    %v7992 = vsel %vm7844, %v7991, %v7990
    %v7993 = vsel %vm7846, %v7992, 0
    %v7996 = vsel %vm7846, %v7989, 0
    %7998 = vmatpush.xpose.msra.mxu0 0.0
    %7999 = vmatpush.xpose.msra.mxu0 0.0
    %8000 = vmatpush.xpose.msra.mxu0 0.0
    %8001 = vmatpush.xpose.msra.mxu0 0.0
    %8002 = vmatpush.xpose.msra.mxu0 0.0
    %8003 = vmatpush.xpose.msra.mxu0 0.0
    %8004 = vmatpush.xpose.msra.mxu0 0.0
    %8005 = vmatpush.xpose.msra.mxu0 0.0
    %8006 = vmatpush.xpose.msra.mxu0 0.0
    %8007 = vmatpush.xpose.msra.mxu0 0.0
    %8008 = vmatpush.xpose.msra.mxu0 0.0
    %8009 = vmatpush.xpose.msra.mxu0 0.0
    %8010 = vmatpush.xpose.msra.mxu0 0.0
    %8011 = vmatpush.xpose.msra.mxu0 0.0
    %8012 = vmatpush.xpose.msra.mxu0 0.0
    %8013 = vmatpush.xpose.msra.mxu0 %v7996
    %8014 = vmatmul.f32.gmra.mxu0 %v7993
    %v8015 = vpop.f32.mrf.mxu0
    %v8016 = vadd.f32 0.0, %v8015
    %8017 = vdwg.mxu0
    %v8018 = vadd.f32 %v7988, %v8016
    %v8019 = vld [vmem:[%s17 + $0x24] sm:$0x3f]
    %v8020 = vrot.slane %v7837, 6
    %v8021 = vrot.slane %v7838, 5
    %v8022 = vsel %vm7844, %v8021, %v8020
    %v8023 = vsel %vm7846, %v8022, 0
    %v8026 = vsel %vm7846, %v8019, 0
    %8028 = vmatpush.xpose.msra.mxu0 0.0
    %8029 = vmatpush.xpose.msra.mxu0 0.0
    %8030 = vmatpush.xpose.msra.mxu0 0.0
    %8031 = vmatpush.xpose.msra.mxu0 0.0
    %8032 = vmatpush.xpose.msra.mxu0 0.0
    %8033 = vmatpush.xpose.msra.mxu0 0.0
    %8034 = vmatpush.xpose.msra.mxu0 0.0
    %8035 = vmatpush.xpose.msra.mxu0 0.0
    %8036 = vmatpush.xpose.msra.mxu0 0.0
    %8037 = vmatpush.xpose.msra.mxu0 0.0
    %8038 = vmatpush.xpose.msra.mxu0 0.0
    %8039 = vmatpush.xpose.msra.mxu0 0.0
    %8040 = vmatpush.xpose.msra.mxu0 0.0
    %8041 = vmatpush.xpose.msra.mxu0 0.0
    %8042 = vmatpush.xpose.msra.mxu0 0.0
    %8043 = vmatpush.xpose.msra.mxu0 %v8026
    %8044 = vmatmul.f32.gmra.mxu0 %v8023
    %v8045 = vpop.f32.mrf.mxu0
    %v8046 = vadd.f32 0.0, %v8045
    %8047 = vdwg.mxu0
    %v8048 = vadd.f32 %v8018, %v8046
    %v8049 = vld [vmem:[%s17 + $0x2a] sm:$0x3f]
    %v8050 = vrot.slane %v7837, 7
    %v8051 = vrot.slane %v7838, 6
    %v8052 = vsel %vm7844, %v8051, %v8050
    %v8053 = vsel %vm7846, %v8052, 0
    %v8056 = vsel %vm7846, %v8049, 0
    %8058 = vmatpush.xpose.msra.mxu0 0.0
    %8059 = vmatpush.xpose.msra.mxu0 0.0
    %8060 = vmatpush.xpose.msra.mxu0 0.0
    %8061 = vmatpush.xpose.msra.mxu0 0.0
    %8062 = vmatpush.xpose.msra.mxu0 0.0
    %8063 = vmatpush.xpose.msra.mxu0 0.0
    %8064 = vmatpush.xpose.msra.mxu0 0.0
    %8065 = vmatpush.xpose.msra.mxu0 0.0
    %8066 = vmatpush.xpose.msra.mxu0 0.0
    %8067 = vmatpush.xpose.msra.mxu0 0.0
    %8068 = vmatpush.xpose.msra.mxu0 0.0
    %8069 = vmatpush.xpose.msra.mxu0 0.0
    %8070 = vmatpush.xpose.msra.mxu0 0.0
    %8071 = vmatpush.xpose.msra.mxu0 0.0
    %8072 = vmatpush.xpose.msra.mxu0 0.0
    %8073 = vmatpush.xpose.msra.mxu0 %v8056
    %8074 = vmatmul.f32.gmra.mxu0 %v8053
    %v8075 = vpop.f32.mrf.mxu0
    %v8076 = vadd.f32 0.0, %v8075
    %8077 = vdwg.mxu0
    %v8078 = vadd.f32 %v8048, %v8076
    %v8079 = vld [vmem:[%s18] sm:$0x1]
    %v8081 = vperm.slane %v8079, 0
    %v8083 = vadd.f32 %v8078, %v8081
    %vm8084 = vcmask 41984
    %8085 = vst.msk [vmem:[#allocation22] sm:$0x3] %vm8084, %v8083
    // Predicated region
    $region126: #{convnet_forward.1} parent=1 // pred_check
      _
    $region127: #{convnet_forward.1} parent=1 // pred_check_branch
      %8087 = sbr.rel (0) target = $region129
    $region128: #{convnet_forward.1} parent=1 // pred_region
      %8089 = vsyncadd [#allocation3], 0
      %s8091 = sshll.u32 [#allocation22], 4
      %s8092 = int_to_ptr.vmem [resolvable:$true] %s8091
      %s8093 = sshll.u32 %s19, 4
      %s8094 = int_to_ptr.hbm [resolvable:$true] %s8093
      %8096 = dma.vmem_to_hbm [thread:$0]  %s8092, 32, %s8094, [#allocation3]
    $region129: #{convnet_forward.1} parent=1 // pred_fallthru
      _
    // Predicated region
    $region130: #{convnet_forward.1} parent=1 // pred_check
      _
    $region131: #{convnet_forward.1} parent=1 // pred_check_branch
      %8098 = sbr.rel (0) target = $region133
    $region132: #{convnet_forward.1} parent=1 // pred_region
      %8100 = dma.done [#allocation3], 32
    $region133: #{convnet_forward.1} parent=1 // pred_fallthru
      _
    %8101 = vsyncpa [#allocation3], 1
    %8102 = vsyncpa [#allocation4], 1
    %8103 = vsyncpa [#allocation6], 1
    %8104 = vsyncpa [#allocation9], 1
    %8105 = vsyncpa [#allocation12], 1
    %8106 = vsyncpa [#allocation15], 1
    %8107 = vsyncpa [#allocation18], 1
    %8108 = vsyncpa [#allocation21], 1

</llo_original>
